<compile_context>
chip_gen: v7x
topology: tpu7x:2x2x1
jax: 0.10.0
libtpu: 0.0.40
codegen_flags: <defaults>
</compile_context>

<pallas_src>
import functools

import jax
import jax.numpy as jnp
from jax.experimental import pallas as pl
from jax.experimental.pallas import tpu as pltpu


def _round_up(x, m):
    return ((x + m - 1) // m) * m


# ----------------------------------------------------------------------------
# Pallas kernel 1: fused  out = act(x @ w + b)   (bf16 in, f32 acc/epilogue)
# ----------------------------------------------------------------------------
def _gemm_bias_act_kernel(x_ref, w_ref, b_ref, o_ref, *, act):
    acc = jnp.dot(x_ref[...], w_ref[...], preferred_element_type=jnp.float32)
    acc = acc + b_ref[...]
    if act == "relu":
        acc = jnp.maximum(acc, 0.0)
    o_ref[...] = acc.astype(o_ref.dtype)


def _pick_tm(M, max_rows=512):
    """Pick tm as a multiple-of-8 divisor of round_up(M, 8): no dead padded rows,
    and >=2 grid steps whenever M >= 16 so both v7x TensorCores get work."""
    Mp = _round_up(max(M, 8), 8)
    nb = Mp // 8
    if M < 16 or nb < 2:
        return Mp, Mp
    best = 0
    for d in range(1, nb // 2 + 1):          # d <= nb//2 guarantees >=2 grid steps
        if nb % d == 0 and d * 8 <= max_rows:
            best = d
    if best == 0 or (best * 8 < 64 and Mp > 512):
        # pathological M (e.g. large prime): accept a little row padding instead
        tm = min(max_rows, 256)
        return tm, _round_up(Mp, tm)
    return best * 8, Mp


def gemm_bias_act(x, w, b, act="none", out_dtype=jnp.float32):
    """x: (M, K) float, w: (Kp, N) bf16 (K padded to mult-of-8 at prep time),
    b: (1, N) f32.  Output is (M, N) at the true width N (no dead lanes)."""
    M, K = x.shape
    Kp, N = w.shape
    x = x.astype(jnp.bfloat16)
    if Kp != K:
        x = jnp.pad(x, ((0, 0), (0, Kp - K)))
    tm, Mp = _pick_tm(M)
    if Mp != M:
        x = jnp.pad(x, ((0, Mp - M), (0, 0)))
    out = pl.pallas_call(
        functools.partial(_gemm_bias_act_kernel, act=act),
        out_shape=jax.ShapeDtypeStruct((Mp, N), out_dtype),
        grid=(Mp // tm,),
        in_specs=[
            pl.BlockSpec((tm, Kp), lambda i: (i, 0)),
            pl.BlockSpec((Kp, N), lambda i: (0, 0)),
            pl.BlockSpec((1, N), lambda i: (0, 0)),
        ],
        out_specs=pl.BlockSpec((tm, N), lambda i: (i, 0)),
        compiler_params=pltpu.CompilerParams(
            dimension_semantics=("parallel",),
            vmem_limit_bytes=32 * 1024 * 1024,  # explicit: v5e default is 16 MiB
        ),
    )(x, w, b)
    return out[:M] if Mp != M else out


# ----------------------------------------------------------------------------
# Pallas kernel 2: fused bottleneck
#   conv5 (full-window == matmul) -> fc1_0 -> fc1_1 -> fc_mean / fc_log_var
#   -> reparameterize -> fc2_0 -> fc2_1 -> fc2_2 -> dconv5 (1x1 input == matmul)
# ----------------------------------------------------------------------------
def _bottleneck_kernel(x_ref, eps_ref,
                       w5_ref, b5_ref,
                       w10_ref, b10_ref, w11_ref, b11_ref,
                       wm_ref, bm_ref, wv_ref, bv_ref,
                       w20_ref, b20_ref, w21_ref, b21_ref, w22_ref, b22_ref,
                       wd5_ref, bd5_ref,
                       mean_ref, logvar_ref, zdec_ref, d5_ref):
    f32 = jnp.float32
    bf16 = jnp.bfloat16

    def mm(a, w_ref, b_ref):
        return jnp.dot(a.astype(bf16), w_ref[...],
                       preferred_element_type=f32) + b_ref[...]

    x = x_ref[...]
    h = jnp.maximum(mm(x, w5_ref, b5_ref), 0.0)        # conv5 + relu
    h = jnp.maximum(mm(h, w10_ref, b10_ref), 0.0)      # fc1_0 + relu
    h = mm(h, w11_ref, b11_ref)                        # fc1_1 (no relu, as in ref)
    mean = mm(h, wm_ref, bm_ref)                       # fc_mean
    log_var = mm(h, wv_ref, bv_ref)                    # fc_log_var
    z = mean + eps_ref[...] * jnp.exp(0.5 * log_var)   # reparameterize
    d = jnp.maximum(mm(z, w20_ref, b20_ref), 0.0)      # fc2_0 + relu
    d = jnp.maximum(mm(d, w21_ref, b21_ref), 0.0)      # fc2_1 + relu
    d = mm(d, w22_ref, b22_ref)                        # fc2_2 (returned `z`)
    d5 = jnp.maximum(mm(d, wd5_ref, bd5_ref), 0.0)     # dconv5 + relu

    mean_ref[...] = mean
    logvar_ref[...] = log_var
    zdec_ref[...] = d
    d5_ref[...] = d5.astype(d5_ref.dtype)


def bottleneck(prep, feat, eps):
    """feat: (B, 4*4*C8) flattened conv4 output (NHWC order == conv5 patch order)."""
    B, F4 = feat.shape
    L = prep["fc_mean_b"].shape[1]
    C8 = prep["fc2_2_b"].shape[1]
    D5 = prep["dconv5_w"].shape[1]
    Bp = _round_up(max(B, 8), 8)
    xp = jnp.pad(feat.astype(jnp.bfloat16), ((0, Bp - B), (0, 0)))
    ep = jnp.pad(eps.astype(jnp.float32), ((0, Bp - B), (0, 0)))
    mean, log_var, zdec, d5 = pl.pallas_call(
        _bottleneck_kernel,
        out_shape=(jax.ShapeDtypeStruct((Bp, L), jnp.float32),
                   jax.ShapeDtypeStruct((Bp, L), jnp.float32),
                   jax.ShapeDtypeStruct((Bp, C8), jnp.float32),
                   jax.ShapeDtypeStruct((Bp, D5), jnp.bfloat16)),
        compiler_params=pltpu.CompilerParams(vmem_limit_bytes=32 * 1024 * 1024),
    )(xp, ep,
      prep["conv5_w"], prep["conv5_b"],
      prep["fc1_0_w"], prep["fc1_0_b"], prep["fc1_1_w"], prep["fc1_1_b"],
      prep["fc_mean_w"], prep["fc_mean_b"],
      prep["fc_log_var_w"], prep["fc_log_var_b"],
      prep["fc2_0_w"], prep["fc2_0_b"], prep["fc2_1_w"], prep["fc2_1_b"],
      prep["fc2_2_w"], prep["fc2_2_b"],
      prep["dconv5_w"], prep["dconv5_b"])
    return mean[:B], log_var[:B], zdec[:B], d5[:B]


# ----------------------------------------------------------------------------
# Conv glue (im2col + Pallas GEMM)
# ----------------------------------------------------------------------------
def _im2col(x, k, stride):
    """x: (B, H, W, C) -> cols (B*oh*ow, k*k*C) in (kh, kw, Cin) order."""
    B, H, W, C = x.shape
    oh = (H - k) // stride + 1
    ow = (W - k) // stride + 1
    patches = []
    for i in range(k):
        for j in range(k):
            patches.append(x[:, i:i + stride * oh:stride,
                             j:j + stride * ow:stride, :])
    cols = jnp.stack(patches, axis=3)                # (B, oh, ow, k*k, C)
    # TODO(synk): fuse im2col into the Pallas GEMM (k^2 strided reads from a
    # VMEM-resident input block) for conv1/conv2 to remove this XLA fusion.
    return cols.reshape(B * oh * ow, k * k * C), oh, ow


def conv2d(x, wmat, bvec, k, stride, cout, act):
    """x: NHWC bf16; wmat: (Kp, cout) bf16; bvec: (1, cout) f32."""
    B = x.shape[0]
    cols, oh, ow = _im2col(x, k, stride)
    y = gemm_bias_act(cols, wmat, bvec, act=act, out_dtype=jnp.bfloat16)
    return y.reshape(B, oh, ow, cout)


# ----------------------------------------------------------------------------
# ConvTranspose glue (Pallas GEMM -> bf16 cols -> dense f32 col2im overlap-add)
# ----------------------------------------------------------------------------
def _dilate_hw(x, s):
    """Insert s-1 zeros between elements along H and W via pad+reshape (dense)."""
    if s == 1:
        return x
    B, h, w, C = x.shape
    x = x[:, :, None, :, None, :]
    x = jnp.pad(x, ((0, 0), (0, 0), (0, s - 1), (0, 0), (0, s - 1), (0, 0)))
    x = x.reshape(B, h * s, w * s, C)
    return x[:, :(h - 1) * s + 1, :(w - 1) * s + 1, :]


def conv_transpose2d(x, wmat, bias, k, stride, cout, act, out_dtype=jnp.float32):
    """PyTorch ConvTranspose2d (padding=0, output_padding=0).
    x: (B, ih, iw, Cin) bf16; wmat: (Cin, k*k*cout) bf16 in (ky, kx, co) order;
    bias: (cout,) f32.  out[b, s*iy+ky, s*ix+kx, co] += x[b,iy,ix,ci]*w[ci,co,ky,kx]."""
    B, ih, iw, cin = x.shape
    oh = (ih - 1) * stride + k
    ow = (iw - 1) * stride + k
    n = k * k * cout
    zero_bias = jnp.zeros((1, n), jnp.float32)
    cols = gemm_bias_act(x.reshape(B * ih * iw, cin), wmat, zero_bias,
                         act="none", out_dtype=jnp.bfloat16)   # bf16 cols (half HBM)
    cols = cols.reshape(B, ih, iw, k, k, cout)
    dh = (ih - 1) * stride + 1
    dw = (iw - 1) * stride + 1
    # TODO(synk): move this overlap-add into a Pallas kernel with a VMEM-resident
    # f32 accumulator (fused with the GEMM above) to cut decoder HBM traffic.
    out = jnp.zeros((B, oh, ow, cout), jnp.float32)
    for ky in range(k):
        for kx in range(k):
            d = _dilate_hw(cols[:, :, :, ky, kx, :].astype(jnp.float32), stride)
            d = jnp.pad(d, ((0, 0), (ky, oh - dh - ky), (kx, ow - dw - kx), (0, 0)))
            out = out + d
    out = out + bias.reshape(1, 1, 1, cout)
    if act == "relu":
        out = jnp.maximum(out, 0.0)
    elif act == "relu_sigmoid":        # relu(deconv1) then sigmoid, as in reference
        out = jax.nn.sigmoid(jnp.maximum(out, 0.0))
    return out.astype(out_dtype)


# ----------------------------------------------------------------------------
# VAE parameters, weight prep, forward
# ----------------------------------------------------------------------------
def _arch(enc_in, enc_out):
    convs = [("conv1", enc_in, enc_out, 5, 3),
             ("conv2", enc_out, enc_out * 2, 4, 2),
             ("conv3", enc_out * 2, enc_out * 4, 4, 2),
             ("conv4", enc_out * 4, enc_out * 8, 3, 2),
             ("conv5", enc_out * 8, enc_out * 8, 4, 1)]
    deconvs = [("dconv5", enc_out * 8, enc_out * 8, 4, 1),
               ("dconv4", enc_out * 8, enc_out * 4, 3, 2),
               ("dconv3", enc_out * 4, enc_out * 2, 4, 2),
               ("dconv2", enc_out * 2, enc_out, 4, 2),
               ("dconv1", enc_out, enc_in, 5, 3)]
    return convs, deconvs


def init_params(key, enc_in=3, enc_out=8, latent=16):
    convs, deconvs = _arch(enc_in, enc_out)
    shapes = {}
    for name, cin, cout, k, _s in convs:
        shapes[name + "_w"] = (cout, cin, k, k)           # Conv2d layout
        shapes[name + "_b"] = (cout,)
    for name, cin, cout, k, _s in deconvs:
        shapes[name + "_w"] = (cin, cout, k, k)           # ConvTranspose2d layout
        shapes[name + "_b"] = (cout,)
    fcs = {"fc1_0": (enc_out * 8, 64), "fc1_1": (64, 64),
           "fc_mean": (64, latent), "fc_log_var": (64, latent),
           "fc2_0": (latent, 64), "fc2_1": (64, 64), "fc2_2": (64, enc_out * 8)}
    for name, (fin, fout) in fcs.items():
        shapes[name + "_w"] = (fout, fin)                 # Linear layout (out, in)
        shapes[name + "_b"] = (fout,)
    params = {}
    keys = jax.random.split(key, len(shapes))
    for (name, shp), kk in zip(sorted(shapes.items()), keys):
        if name.endswith("_b"):
            params[name] = jnp.zeros(shp, jnp.float32)
        else:
            fan_in = 1
            for d in shp[1:]:
                fan_in *= d
            params[name] = (1.0 / jnp.sqrt(jnp.float32(fan_in))) * \
                jax.random.normal(kk, shp, jnp.float32)
    return params


def prepare_params(params, enc_in=3, enc_out=8):
    """Pack weights once into kernel-ready layouts (bf16, true output widths)."""
    convs, deconvs = _arch(enc_in, enc_out)
    prep = {}
    for name, cin, cout, k, _s in convs:
        w = params[name + "_w"]                            # (Cout, Cin, k, k)
        K = k * k * cin
        Kp = _round_up(K, 8)                               # sublane-clean contraction
        wm = jnp.transpose(w, (2, 3, 1, 0)).reshape(K, cout)   # (kh,kw,cin) x cout
        prep[name + "_w"] = jnp.pad(wm, ((0, Kp - K), (0, 0))).astype(jnp.bfloat16)
        prep[name + "_b"] = params[name + "_b"].reshape(1, cout).astype(jnp.float32)
    for name, cin, cout, k, _s in deconvs:
        w = params[name + "_w"]                            # (Cin, Cout, k, k)
        N = k * k * cout
        wm = jnp.transpose(w, (0, 2, 3, 1)).reshape(cin, N)  # cin x (ky,kx,co)
        prep[name + "_w"] = wm.astype(jnp.bfloat16)
        if name == "dconv5":
            # dconv5 runs inside the fused bottleneck kernel on a 1x1 spatial
            # input: its bias broadcasts over all k*k output positions.
            prep[name + "_b"] = jnp.tile(params[name + "_b"], k * k) \
                .reshape(1, N).astype(jnp.float32)
        else:
            prep[name + "_b"] = params[name + "_b"].astype(jnp.float32)
    for name in ("fc1_0", "fc1_1", "fc_mean", "fc_log_var", "fc2_0", "fc2_1", "fc2_2"):
        prep[name + "_w"] = jnp.transpose(params[name + "_w"]).astype(jnp.bfloat16)
        prep[name + "_b"] = params[name + "_b"].reshape(1, -1).astype(jnp.float32)
    return prep


def vae_forward(prep, x_nchw, eps_key, enc_in=3, enc_out=8):
    """Mirrors VAE.forward(mode='train'): returns (reconstruction, mean, log_var, z)."""
    convs, deconvs = _arch(enc_in, enc_out)
    B = x_nchw.shape[0]
    x = jnp.transpose(x_nchw, (0, 2, 3, 1)).astype(jnp.bfloat16)   # NCHW -> NHWC bf16

    # --- encoder conv1..conv4 (conv + relu fused into the Pallas GEMM) ---
    for name, _cin, cout, k, stride in convs[:-1]:
        x = conv2d(x, prep[name + "_w"], prep[name + "_b"], k, stride, cout, act="relu")

    # conv4 output is (B, 4, 4, 8*enc_out); NHWC flatten == conv5 patch order
    feat = x.reshape(B, -1)

    # --- fused bottleneck: conv5 + encoder MLP + reparameterize + decoder MLP + dconv5 ---
    latent = prep["fc_mean_b"].shape[1]
    eps = jax.random.normal(eps_key, (B, latent), jnp.float32)
    mean, log_var, zdec, d5 = bottleneck(prep, feat, eps)

    z_img_nchw = zdec.reshape(B, enc_out * 8, 1, 1)     # returned `z`, as in PyTorch
    k5 = deconvs[0][3]
    d = d5.reshape(B, k5, k5, enc_out * 8)              # dconv5 output, NHWC bf16

    # --- decoder dconv4..dconv1 (ConvTranspose as GEMM + dense col2im overlap-add) ---
    nlayers = len(deconvs)
    for idx in range(1, nlayers):
        name, _cin, cout, k, stride = deconvs[idx]
        last = idx == nlayers - 1
        d = conv_transpose2d(
            d, prep[name + "_w"], prep[name + "_b"], k, stride, cout,
            act="relu_sigmoid" if last else "relu",
            out_dtype=jnp.float32 if last else jnp.bfloat16)

    reconstruction = jnp.transpose(d, (0, 3, 1, 2)).astype(jnp.float32)  # back to NCHW
    return reconstruction, mean, log_var, z_img_nchw


if __name__ == "__main__":
    ENC_IN, ENC_OUT, LATENT = 3, 8, 16
    B, H, W = 2, 128, 128  # spatial size is fixed by the conv stack / fc1_0

    root = jax.random.PRNGKey(0)
    k_params, k_input, k_eps = jax.random.split(root, 3)

    params = init_params(k_params, ENC_IN, ENC_OUT, LATENT)
    prep = prepare_params(params, ENC_IN, ENC_OUT)
    x = jax.random.uniform(k_input, (B, ENC_IN, H, W), jnp.float32)

    fwd = jax.jit(functools.partial(vae_forward, enc_in=ENC_IN, enc_out=ENC_OUT))
    recon, mean, log_var, z = fwd(prep, x, k_eps)
    jax.block_until_ready((recon, mean, log_var, z))

    assert recon.shape == (B, ENC_IN, H, W)
    assert mean.shape == (B, LATENT) and log_var.shape == (B, LATENT)
    assert z.shape == (B, ENC_OUT * 8, 1, 1)
    assert bool(jnp.all(jnp.isfinite(recon)))
    assert bool(jnp.all(jnp.isfinite(mean))) and bool(jnp.all(jnp.isfinite(log_var)))
    assert bool(jnp.all(recon >= 0.0)) and bool(jnp.all(recon <= 1.0))
    print("KERNEL_OK")
</pallas_src>

<mosaic_0001>
module attributes {stable_mosaic.version = 11 : i64} {
  func.func @_gemm_bias_act_kernel(%arg0: i32, %arg1: memref<504x80xbf16, #tpu.memory_space<vmem>>, %arg2: memref<80x8xbf16, #tpu.memory_space<vmem>>, %arg3: memref<1x8xf32, #tpu.memory_space<vmem>>, %arg4: memref<504x8xbf16, #tpu.memory_space<vmem>>) attributes {dimension_semantics = [#tpu.dimension_semantics<parallel>], iteration_bounds = array<i64: 7>, scalar_prefetch = 0 : i64, scratch_operands = 0 : i64, tpu.core_type = #tpu.core_type<tc>, window_params = [{transform_indices = @transform_0, window_bounds = array<i64: 504, 80>}, {pipeline_mode = #tpu.pipeline_mode<synchronous>, transform_indices = @transform_1, window_bounds = array<i64: 80, 8>}, {pipeline_mode = #tpu.pipeline_mode<synchronous>, transform_indices = @transform_2, window_bounds = array<i64: 1, 8>}, {transform_indices = @transform_3, window_bounds = array<i64: 504, 8>}]} {
    %c0 = arith.constant 0 : index
    %c0_0 = arith.constant 0 : index
    %0 = vector.load %arg1[%c0, %c0_0] : memref<504x80xbf16, #tpu.memory_space<vmem>>, vector<504x80xbf16>
    %c0_1 = arith.constant 0 : index
    %c0_2 = arith.constant 0 : index
    %1 = vector.load %arg2[%c0_1, %c0_2] : memref<80x8xbf16, #tpu.memory_space<vmem>>, vector<80x8xbf16>
    %cst = arith.constant dense<0.000000e+00> : vector<504x8xf32>
    %2 = tpu.matmul %0, %1, %cst {dimension_numbers = #tpu.dot_dimension_numbers<[1], [0], [0], [1], [0, 0, 1, 1], [], []>} : vector<504x80xbf16>, vector<80x8xbf16>, vector<504x8xf32> -> vector<504x8xf32>
    %c0_3 = arith.constant 0 : index
    %c0_4 = arith.constant 0 : index
    %3 = vector.load %arg3[%c0_3, %c0_4] : memref<1x8xf32, #tpu.memory_space<vmem>>, vector<1x8xf32>
    %4 = vector.broadcast %3 : vector<1x8xf32> to vector<504x8xf32>
    %5 = arith.addf %2, %4 : vector<504x8xf32>
    %cst_5 = arith.constant 0.000000e+00 : f32
    %6 = vector.broadcast %cst_5 : f32 to vector<504x8xf32>
    %7 = arith.maximumf %5, %6 : vector<504x8xf32>
    %8 = arith.truncf %7 : vector<504x8xf32> to vector<504x8xbf16>
    %c0_6 = arith.constant 0 : index
    %c0_7 = arith.constant 0 : index
    %9 = vector.load %arg4[%c0_6, %c0_7] : memref<504x8xbf16, #tpu.memory_space<vmem>>, vector<504x8xbf16>
    tpu.vector_store %arg4[%c0_6, %c0_7], %8 {strides = array<i32>} : memref<504x8xbf16, #tpu.memory_space<vmem>>, vector<504x8xbf16>,
    return
  }
  func.func @transform_0(%arg0: i32) -> (i32, i32) {
    %c0_i32 = arith.constant 0 : i32
    %c0_i32_0 = arith.constant 0 : i32
    return %arg0, %c0_i32 : i32, i32
  }
  func.func @transform_1(%arg0: i32) -> (i32, i32) {
    %c0_i32 = arith.constant 0 : i32
    %c0_i32_0 = arith.constant 0 : i32
    %c0_i32_1 = arith.constant 0 : i32
    return %c0_i32, %c0_i32_0 : i32, i32
  }
  func.func @transform_2(%arg0: i32) -> (i32, i32) {
    %c0_i32 = arith.constant 0 : i32
    %c0_i32_0 = arith.constant 0 : i32
    %c0_i32_1 = arith.constant 0 : i32
    return %c0_i32, %c0_i32_0 : i32, i32
  }
  func.func @transform_3(%arg0: i32) -> (i32, i32) {
    %c0_i32 = arith.constant 0 : i32
    %c0_i32_0 = arith.constant 0 : i32
    return %arg0, %c0_i32 : i32, i32
  }
}

module attributes {stable_mosaic.version = 11 : i64} {
  func.func @_gemm_bias_act_kernel(%arg0: i32, %arg1: memref<400x128xbf16, #tpu.memory_space<vmem>>, %arg2: memref<128x16xbf16, #tpu.memory_space<vmem>>, %arg3: memref<1x16xf32, #tpu.memory_space<vmem>>, %arg4: memref<400x16xbf16, #tpu.memory_space<vmem>>) attributes {dimension_semantics = [#tpu.dimension_semantics<parallel>], iteration_bounds = array<i64: 2>, scalar_prefetch = 0 : i64, scratch_operands = 0 : i64, tpu.core_type = #tpu.core_type<tc>, window_params = [{transform_indices = @transform_0, window_bounds = array<i64: 400, 128>}, {pipeline_mode = #tpu.pipeline_mode<synchronous>, transform_indices = @transform_1, window_bounds = array<i64: 128, 16>}, {pipeline_mode = #tpu.pipeline_mode<synchronous>, transform_indices = @transform_2, window_bounds = array<i64: 1, 16>}, {transform_indices = @transform_3, window_bounds = array<i64: 400, 16>}]} {
    %c0 = arith.constant 0 : index
    %c0_0 = arith.constant 0 : index
    %0 = vector.load %arg1[%c0, %c0_0] : memref<400x128xbf16, #tpu.memory_space<vmem>>, vector<400x128xbf16>
    %c0_1 = arith.constant 0 : index
    %c0_2 = arith.constant 0 : index
    %1 = vector.load %arg2[%c0_1, %c0_2] : memref<128x16xbf16, #tpu.memory_space<vmem>>, vector<128x16xbf16>
    %cst = arith.constant dense<0.000000e+00> : vector<400x16xf32>
    %2 = tpu.matmul %0, %1, %cst {dimension_numbers = #tpu.dot_dimension_numbers<[1], [0], [0], [1], [0, 0, 1, 1], [], []>} : vector<400x128xbf16>, vector<128x16xbf16>, vector<400x16xf32> -> vector<400x16xf32>
    %c0_3 = arith.constant 0 : index
    %c0_4 = arith.constant 0 : index
    %3 = vector.load %arg3[%c0_3, %c0_4] : memref<1x16xf32, #tpu.memory_space<vmem>>, vector<1x16xf32>
    %4 = vector.broadcast %3 : vector<1x16xf32> to vector<400x16xf32>
    %5 = arith.addf %2, %4 : vector<400x16xf32>
    %cst_5 = arith.constant 0.000000e+00 : f32
    %6 = vector.broadcast %cst_5 : f32 to vector<400x16xf32>
    %7 = arith.maximumf %5, %6 : vector<400x16xf32>
    %8 = arith.truncf %7 : vector<400x16xf32> to vector<400x16xbf16>
    %c0_6 = arith.constant 0 : index
    %c0_7 = arith.constant 0 : index
    %9 = vector.load %arg4[%c0_6, %c0_7] : memref<400x16xbf16, #tpu.memory_space<vmem>>, vector<400x16xbf16>
    tpu.vector_store %arg4[%c0_6, %c0_7], %8 {strides = array<i32>} : memref<400x16xbf16, #tpu.memory_space<vmem>>, vector<400x16xbf16>,
    return
  }
  func.func @transform_0(%arg0: i32) -> (i32, i32) {
    %c0_i32 = arith.constant 0 : i32
    %c0_i32_0 = arith.constant 0 : i32
    return %arg0, %c0_i32 : i32, i32
  }
  func.func @transform_1(%arg0: i32) -> (i32, i32) {
    %c0_i32 = arith.constant 0 : i32
    %c0_i32_0 = arith.constant 0 : i32
    %c0_i32_1 = arith.constant 0 : i32
    return %c0_i32, %c0_i32_0 : i32, i32
  }
  func.func @transform_2(%arg0: i32) -> (i32, i32) {
    %c0_i32 = arith.constant 0 : i32
    %c0_i32_0 = arith.constant 0 : i32
    %c0_i32_1 = arith.constant 0 : i32
    return %c0_i32, %c0_i32_0 : i32, i32
  }
  func.func @transform_3(%arg0: i32) -> (i32, i32) {
    %c0_i32 = arith.constant 0 : i32
    %c0_i32_0 = arith.constant 0 : i32
    return %arg0, %c0_i32 : i32, i32
  }
}

module attributes {stable_mosaic.version = 11 : i64} {
  func.func @_gemm_bias_act_kernel(%arg0: i32, %arg1: memref<56x256xbf16, #tpu.memory_space<vmem>>, %arg2: memref<256x32xbf16, #tpu.memory_space<vmem>>, %arg3: memref<1x32xf32, #tpu.memory_space<vmem>>, %arg4: memref<56x32xbf16, #tpu.memory_space<vmem>>) attributes {dimension_semantics = [#tpu.dimension_semantics<parallel>], iteration_bounds = array<i64: 3>, scalar_prefetch = 0 : i64, scratch_operands = 0 : i64, tpu.core_type = #tpu.core_type<tc>, window_params = [{transform_indices = @transform_0, window_bounds = array<i64: 56, 256>}, {pipeline_mode = #tpu.pipeline_mode<synchronous>, transform_indices = @transform_1, window_bounds = array<i64: 256, 32>}, {pipeline_mode = #tpu.pipeline_mode<synchronous>, transform_indices = @transform_2, window_bounds = array<i64: 1, 32>}, {transform_indices = @transform_3, window_bounds = array<i64: 56, 32>}]} {
    %c0 = arith.constant 0 : index
    %c0_0 = arith.constant 0 : index
    %0 = vector.load %arg1[%c0, %c0_0] : memref<56x256xbf16, #tpu.memory_space<vmem>>, vector<56x256xbf16>
    %c0_1 = arith.constant 0 : index
    %c0_2 = arith.constant 0 : index
    %1 = vector.load %arg2[%c0_1, %c0_2] : memref<256x32xbf16, #tpu.memory_space<vmem>>, vector<256x32xbf16>
    %cst = arith.constant dense<0.000000e+00> : vector<56x32xf32>
    %2 = tpu.matmul %0, %1, %cst {dimension_numbers = #tpu.dot_dimension_numbers<[1], [0], [0], [1], [0, 0, 1, 1], [], []>} : vector<56x256xbf16>, vector<256x32xbf16>, vector<56x32xf32> -> vector<56x32xf32>
    %c0_3 = arith.constant 0 : index
    %c0_4 = arith.constant 0 : index
    %3 = vector.load %arg3[%c0_3, %c0_4] : memref<1x32xf32, #tpu.memory_space<vmem>>, vector<1x32xf32>
    %4 = vector.broadcast %3 : vector<1x32xf32> to vector<56x32xf32>
    %5 = arith.addf %2, %4 : vector<56x32xf32>
    %cst_5 = arith.constant 0.000000e+00 : f32
    %6 = vector.broadcast %cst_5 : f32 to vector<56x32xf32>
    %7 = arith.maximumf %5, %6 : vector<56x32xf32>
    %8 = arith.truncf %7 : vector<56x32xf32> to vector<56x32xbf16>
    %c0_6 = arith.constant 0 : index
    %c0_7 = arith.constant 0 : index
    %9 = vector.load %arg4[%c0_6, %c0_7] : memref<56x32xbf16, #tpu.memory_space<vmem>>, vector<56x32xbf16>
    tpu.vector_store %arg4[%c0_6, %c0_7], %8 {strides = array<i32>} : memref<56x32xbf16, #tpu.memory_space<vmem>>, vector<56x32xbf16>,
    return
  }
  func.func @transform_0(%arg0: i32) -> (i32, i32) {
    %c0_i32 = arith.constant 0 : i32
    %c0_i32_0 = arith.constant 0 : i32
    return %arg0, %c0_i32 : i32, i32
  }
  func.func @transform_1(%arg0: i32) -> (i32, i32) {
    %c0_i32 = arith.constant 0 : i32
    %c0_i32_0 = arith.constant 0 : i32
    %c0_i32_1 = arith.constant 0 : i32
    return %c0_i32, %c0_i32_0 : i32, i32
  }
  func.func @transform_2(%arg0: i32) -> (i32, i32) {
    %c0_i32 = arith.constant 0 : i32
    %c0_i32_0 = arith.constant 0 : i32
    %c0_i32_1 = arith.constant 0 : i32
    return %c0_i32, %c0_i32_0 : i32, i32
  }
  func.func @transform_3(%arg0: i32) -> (i32, i32) {
    %c0_i32 = arith.constant 0 : i32
    %c0_i32_0 = arith.constant 0 : i32
    return %arg0, %c0_i32 : i32, i32
  }
}

module attributes {stable_mosaic.version = 11 : i64} {
  func.func @_gemm_bias_act_kernel(%arg0: i32, %arg1: memref<16x288xbf16, #tpu.memory_space<vmem>>, %arg2: memref<288x64xbf16, #tpu.memory_space<vmem>>, %arg3: memref<1x64xf32, #tpu.memory_space<vmem>>, %arg4: memref<16x64xbf16, #tpu.memory_space<vmem>>) attributes {dimension_semantics = [#tpu.dimension_semantics<parallel>], iteration_bounds = array<i64: 2>, scalar_prefetch = 0 : i64, scratch_operands = 0 : i64, tpu.core_type = #tpu.core_type<tc>, window_params = [{transform_indices = @transform_0, window_bounds = array<i64: 16, 288>}, {pipeline_mode = #tpu.pipeline_mode<synchronous>, transform_indices = @transform_1, window_bounds = array<i64: 288, 64>}, {pipeline_mode = #tpu.pipeline_mode<synchronous>, transform_indices = @transform_2, window_bounds = array<i64: 1, 64>}, {transform_indices = @transform_3, window_bounds = array<i64: 16, 64>}]} {
    %c0 = arith.constant 0 : index
    %c0_0 = arith.constant 0 : index
    %0 = vector.load %arg1[%c0, %c0_0] : memref<16x288xbf16, #tpu.memory_space<vmem>>, vector<16x288xbf16>
    %c0_1 = arith.constant 0 : index
    %c0_2 = arith.constant 0 : index
    %1 = vector.load %arg2[%c0_1, %c0_2] : memref<288x64xbf16, #tpu.memory_space<vmem>>, vector<288x64xbf16>
    %cst = arith.constant dense<0.000000e+00> : vector<16x64xf32>
    %2 = tpu.matmul %0, %1, %cst {dimension_numbers = #tpu.dot_dimension_numbers<[1], [0], [0], [1], [0, 0, 1, 1], [], []>} : vector<16x288xbf16>, vector<288x64xbf16>, vector<16x64xf32> -> vector<16x64xf32>
    %c0_3 = arith.constant 0 : index
    %c0_4 = arith.constant 0 : index
    %3 = vector.load %arg3[%c0_3, %c0_4] : memref<1x64xf32, #tpu.memory_space<vmem>>, vector<1x64xf32>
    %4 = vector.broadcast %3 : vector<1x64xf32> to vector<16x64xf32>
    %5 = arith.addf %2, %4 : vector<16x64xf32>
    %cst_5 = arith.constant 0.000000e+00 : f32
    %6 = vector.broadcast %cst_5 : f32 to vector<16x64xf32>
    %7 = arith.maximumf %5, %6 : vector<16x64xf32>
    %8 = arith.truncf %7 : vector<16x64xf32> to vector<16x64xbf16>
    %c0_6 = arith.constant 0 : index
    %c0_7 = arith.constant 0 : index
    %9 = vector.load %arg4[%c0_6, %c0_7] : memref<16x64xbf16, #tpu.memory_space<vmem>>, vector<16x64xbf16>
    tpu.vector_store %arg4[%c0_6, %c0_7], %8 {strides = array<i32>} : memref<16x64xbf16, #tpu.memory_space<vmem>>, vector<16x64xbf16>,
    return
  }
  func.func @transform_0(%arg0: i32) -> (i32, i32) {
    %c0_i32 = arith.constant 0 : i32
    %c0_i32_0 = arith.constant 0 : i32
    return %arg0, %c0_i32 : i32, i32
  }
  func.func @transform_1(%arg0: i32) -> (i32, i32) {
    %c0_i32 = arith.constant 0 : i32
    %c0_i32_0 = arith.constant 0 : i32
    %c0_i32_1 = arith.constant 0 : i32
    return %c0_i32, %c0_i32_0 : i32, i32
  }
  func.func @transform_2(%arg0: i32) -> (i32, i32) {
    %c0_i32 = arith.constant 0 : i32
    %c0_i32_0 = arith.constant 0 : i32
    %c0_i32_1 = arith.constant 0 : i32
    return %c0_i32, %c0_i32_0 : i32, i32
  }
  func.func @transform_3(%arg0: i32) -> (i32, i32) {
    %c0_i32 = arith.constant 0 : i32
    %c0_i32_0 = arith.constant 0 : i32
    return %arg0, %c0_i32 : i32, i32
  }
}

module attributes {stable_mosaic.version = 11 : i64} {
  func.func @_bottleneck_kernel(%arg0: memref<8x1024xbf16, #tpu.memory_space<vmem>>, %arg1: memref<8x16xf32, #tpu.memory_space<vmem>>, %arg2: memref<1024x64xbf16, #tpu.memory_space<vmem>>, %arg3: memref<1x64xf32, #tpu.memory_space<vmem>>, %arg4: memref<64x64xbf16, #tpu.memory_space<vmem>>, %arg5: memref<1x64xf32, #tpu.memory_space<vmem>>, %arg6: memref<64x64xbf16, #tpu.memory_space<vmem>>, %arg7: memref<1x64xf32, #tpu.memory_space<vmem>>, %arg8: memref<64x16xbf16, #tpu.memory_space<vmem>>, %arg9: memref<1x16xf32, #tpu.memory_space<vmem>>, %arg10: memref<64x16xbf16, #tpu.memory_space<vmem>>, %arg11: memref<1x16xf32, #tpu.memory_space<vmem>>, %arg12: memref<16x64xbf16, #tpu.memory_space<vmem>>, %arg13: memref<1x64xf32, #tpu.memory_space<vmem>>, %arg14: memref<64x64xbf16, #tpu.memory_space<vmem>>, %arg15: memref<1x64xf32, #tpu.memory_space<vmem>>, %arg16: memref<64x64xbf16, #tpu.memory_space<vmem>>, %arg17: memref<1x64xf32, #tpu.memory_space<vmem>>, %arg18: memref<64x1024xbf16, #tpu.memory_space<vmem>>, %arg19: memref<1x1024xf32, #tpu.memory_space<vmem>>, %arg20: memref<8x16xf32, #tpu.memory_space<vmem>>, %arg21: memref<8x16xf32, #tpu.memory_space<vmem>>, %arg22: memref<8x64xf32, #tpu.memory_space<vmem>>, %arg23: memref<8x1024xbf16, #tpu.memory_space<vmem>>) attributes {dimension_semantics = [], scalar_prefetch = 0 : i64, scratch_operands = 0 : i64, tpu.core_type = #tpu.core_type<tc>} {
    %c0 = arith.constant 0 : index
    %c0_0 = arith.constant 0 : index
    %0 = vector.load %arg0[%c0, %c0_0] : memref<8x1024xbf16, #tpu.memory_space<vmem>>, vector<8x1024xbf16>
    %c0_1 = arith.constant 0 : index
    %c0_2 = arith.constant 0 : index
    %1 = vector.load %arg2[%c0_1, %c0_2] : memref<1024x64xbf16, #tpu.memory_space<vmem>>, vector<1024x64xbf16>
    %cst = arith.constant dense<0.000000e+00> : vector<8x64xf32>
    %2 = tpu.matmul %0, %1, %cst {dimension_numbers = #tpu.dot_dimension_numbers<[1], [0], [0], [1], [0, 0, 1, 1], [], []>} : vector<8x1024xbf16>, vector<1024x64xbf16>, vector<8x64xf32> -> vector<8x64xf32>
    %c0_3 = arith.constant 0 : index
    %c0_4 = arith.constant 0 : index
    %3 = vector.load %arg3[%c0_3, %c0_4] : memref<1x64xf32, #tpu.memory_space<vmem>>, vector<1x64xf32>
    %4 = vector.broadcast %3 : vector<1x64xf32> to vector<8x64xf32>
    %5 = arith.addf %2, %4 : vector<8x64xf32>
    %cst_5 = arith.constant 0.000000e+00 : f32
    %6 = vector.broadcast %cst_5 : f32 to vector<8x64xf32>
    %7 = arith.maximumf %5, %6 : vector<8x64xf32>
    %8 = arith.truncf %7 : vector<8x64xf32> to vector<8x64xbf16>
    %c0_6 = arith.constant 0 : index
    %c0_7 = arith.constant 0 : index
    %9 = vector.load %arg4[%c0_6, %c0_7] : memref<64x64xbf16, #tpu.memory_space<vmem>>, vector<64x64xbf16>
    %cst_8 = arith.constant dense<0.000000e+00> : vector<8x64xf32>
    %10 = tpu.matmul %8, %9, %cst_8 {dimension_numbers = #tpu.dot_dimension_numbers<[1], [0], [0], [1], [0, 0, 1, 1], [], []>} : vector<8x64xbf16>, vector<64x64xbf16>, vector<8x64xf32> -> vector<8x64xf32>
    %c0_9 = arith.constant 0 : index
    %c0_10 = arith.constant 0 : index
    %11 = vector.load %arg5[%c0_9, %c0_10] : memref<1x64xf32, #tpu.memory_space<vmem>>, vector<1x64xf32>
    %12 = vector.broadcast %11 : vector<1x64xf32> to vector<8x64xf32>
    %13 = arith.addf %10, %12 : vector<8x64xf32>
    %cst_11 = arith.constant 0.000000e+00 : f32
    %14 = vector.broadcast %cst_11 : f32 to vector<8x64xf32>
    %15 = arith.maximumf %13, %14 : vector<8x64xf32>
    %16 = arith.truncf %15 : vector<8x64xf32> to vector<8x64xbf16>
    %c0_12 = arith.constant 0 : index
    %c0_13 = arith.constant 0 : index
    %17 = vector.load %arg6[%c0_12, %c0_13] : memref<64x64xbf16, #tpu.memory_space<vmem>>, vector<64x64xbf16>
    %cst_14 = arith.constant dense<0.000000e+00> : vector<8x64xf32>
    %18 = tpu.matmul %16, %17, %cst_14 {dimension_numbers = #tpu.dot_dimension_numbers<[1], [0], [0], [1], [0, 0, 1, 1], [], []>} : vector<8x64xbf16>, vector<64x64xbf16>, vector<8x64xf32> -> vector<8x64xf32>
    %c0_15 = arith.constant 0 : index
    %c0_16 = arith.constant 0 : index
    %19 = vector.load %arg7[%c0_15, %c0_16] : memref<1x64xf32, #tpu.memory_space<vmem>>, vector<1x64xf32>
    %20 = vector.broadcast %19 : vector<1x64xf32> to vector<8x64xf32>
    %21 = arith.addf %18, %20 : vector<8x64xf32>
    %22 = arith.truncf %21 : vector<8x64xf32> to vector<8x64xbf16>
    %c0_17 = arith.constant 0 : index
    %c0_18 = arith.constant 0 : index
    %23 = vector.load %arg8[%c0_17, %c0_18] : memref<64x16xbf16, #tpu.memory_space<vmem>>, vector<64x16xbf16>
    %cst_19 = arith.constant dense<0.000000e+00> : vector<8x16xf32>
    %24 = tpu.matmul %22, %23, %cst_19 {dimension_numbers = #tpu.dot_dimension_numbers<[1], [0], [0], [1], [0, 0, 1, 1], [], []>} : vector<8x64xbf16>, vector<64x16xbf16>, vector<8x16xf32> -> vector<8x16xf32>
    %c0_20 = arith.constant 0 : index
    %c0_21 = arith.constant 0 : index
    %25 = vector.load %arg9[%c0_20, %c0_21] : memref<1x16xf32, #tpu.memory_space<vmem>>, vector<1x16xf32>
    %26 = vector.broadcast %25 : vector<1x16xf32> to vector<8x16xf32>
    %27 = arith.addf %24, %26 : vector<8x16xf32>
    %28 = arith.truncf %21 : vector<8x64xf32> to vector<8x64xbf16>
    %c0_22 = arith.constant 0 : index
    %c0_23 = arith.constant 0 : index
    %29 = vector.load %arg10[%c0_22, %c0_23] : memref<64x16xbf16, #tpu.memory_space<vmem>>, vector<64x16xbf16>
    %cst_24 = arith.constant dense<0.000000e+00> : vector<8x16xf32>
    %30 = tpu.matmul %28, %29, %cst_24 {dimension_numbers = #tpu.dot_dimension_numbers<[1], [0], [0], [1], [0, 0, 1, 1], [], []>} : vector<8x64xbf16>, vector<64x16xbf16>, vector<8x16xf32> -> vector<8x16xf32>
    %c0_25 = arith.constant 0 : index
    %c0_26 = arith.constant 0 : index
    %31 = vector.load %arg11[%c0_25, %c0_26] : memref<1x16xf32, #tpu.memory_space<vmem>>, vector<1x16xf32>
    %32 = vector.broadcast %31 : vector<1x16xf32> to vector<8x16xf32>
    %33 = arith.addf %30, %32 : vector<8x16xf32>
    %c0_27 = arith.constant 0 : index
    %c0_28 = arith.constant 0 : index
    %34 = vector.load %arg1[%c0_27, %c0_28] : memref<8x16xf32, #tpu.memory_space<vmem>>, vector<8x16xf32>
    %cst_29 = arith.constant 5.000000e-01 : f32
    %35 = vector.broadcast %cst_29 : f32 to vector<8x16xf32>
    %36 = arith.mulf %35, %33 : vector<8x16xf32>
    %37 = math.exp %36 : vector<8x16xf32>
    %38 = arith.mulf %34, %37 : vector<8x16xf32>
    %39 = arith.addf %27, %38 : vector<8x16xf32>
    %40 = arith.truncf %39 : vector<8x16xf32> to vector<8x16xbf16>
    %c0_30 = arith.constant 0 : index
    %c0_31 = arith.constant 0 : index
    %41 = vector.load %arg12[%c0_30, %c0_31] : memref<16x64xbf16, #tpu.memory_space<vmem>>, vector<16x64xbf16>
    %cst_32 = arith.constant dense<0.000000e+00> : vector<8x64xf32>
    %42 = tpu.matmul %40, %41, %cst_32 {dimension_numbers = #tpu.dot_dimension_numbers<[1], [0], [0], [1], [0, 0, 1, 1], [], []>} : vector<8x16xbf16>, vector<16x64xbf16>, vector<8x64xf32> -> vector<8x64xf32>
    %c0_33 = arith.constant 0 : index
    %c0_34 = arith.constant 0 : index
    %43 = vector.load %arg13[%c0_33, %c0_34] : memref<1x64xf32, #tpu.memory_space<vmem>>, vector<1x64xf32>
    %44 = vector.broadcast %43 : vector<1x64xf32> to vector<8x64xf32>
    %45 = arith.addf %42, %44 : vector<8x64xf32>
    %cst_35 = arith.constant 0.000000e+00 : f32
    %46 = vector.broadcast %cst_35 : f32 to vector<8x64xf32>
    %47 = arith.maximumf %45, %46 : vector<8x64xf32>
    %48 = arith.truncf %47 : vector<8x64xf32> to vector<8x64xbf16>
    %c0_36 = arith.constant 0 : index
    %c0_37 = arith.constant 0 : index
    %49 = vector.load %arg14[%c0_36, %c0_37] : memref<64x64xbf16, #tpu.memory_space<vmem>>, vector<64x64xbf16>
    %cst_38 = arith.constant dense<0.000000e+00> : vector<8x64xf32>
    %50 = tpu.matmul %48, %49, %cst_38 {dimension_numbers = #tpu.dot_dimension_numbers<[1], [0], [0], [1], [0, 0, 1, 1], [], []>} : vector<8x64xbf16>, vector<64x64xbf16>, vector<8x64xf32> -> vector<8x64xf32>
    %c0_39 = arith.constant 0 : index
    %c0_40 = arith.constant 0 : index
    %51 = vector.load %arg15[%c0_39, %c0_40] : memref<1x64xf32, #tpu.memory_space<vmem>>, vector<1x64xf32>
    %52 = vector.broadcast %51 : vector<1x64xf32> to vector<8x64xf32>
    %53 = arith.addf %50, %52 : vector<8x64xf32>
    %cst_41 = arith.constant 0.000000e+00 : f32
    %54 = vector.broadcast %cst_41 : f32 to vector<8x64xf32>
    %55 = arith.maximumf %53, %54 : vector<8x64xf32>
    %56 = arith.truncf %55 : vector<8x64xf32> to vector<8x64xbf16>
    %c0_42 = arith.constant 0 : index
    %c0_43 = arith.constant 0 : index
    %57 = vector.load %arg16[%c0_42, %c0_43] : memref<64x64xbf16, #tpu.memory_space<vmem>>, vector<64x64xbf16>
    %cst_44 = arith.constant dense<0.000000e+00> : vector<8x64xf32>
    %58 = tpu.matmul %56, %57, %cst_44 {dimension_numbers = #tpu.dot_dimension_numbers<[1], [0], [0], [1], [0, 0, 1, 1], [], []>} : vector<8x64xbf16>, vector<64x64xbf16>, vector<8x64xf32> -> vector<8x64xf32>
    %c0_45 = arith.constant 0 : index
    %c0_46 = arith.constant 0 : index
    %59 = vector.load %arg17[%c0_45, %c0_46] : memref<1x64xf32, #tpu.memory_space<vmem>>, vector<1x64xf32>
    %60 = vector.broadcast %59 : vector<1x64xf32> to vector<8x64xf32>
    %61 = arith.addf %58, %60 : vector<8x64xf32>
    %62 = arith.truncf %61 : vector<8x64xf32> to vector<8x64xbf16>
    %c0_47 = arith.constant 0 : index
    %c0_48 = arith.constant 0 : index
    %63 = vector.load %arg18[%c0_47, %c0_48] : memref<64x1024xbf16, #tpu.memory_space<vmem>>, vector<64x1024xbf16>
    %cst_49 = arith.constant dense<0.000000e+00> : vector<8x1024xf32>
    %64 = tpu.matmul %62, %63, %cst_49 {dimension_numbers = #tpu.dot_dimension_numbers<[1], [0], [0], [1], [0, 0, 1, 1], [], []>} : vector<8x64xbf16>, vector<64x1024xbf16>, vector<8x1024xf32> -> vector<8x1024xf32>
    %c0_50 = arith.constant 0 : index
    %c0_51 = arith.constant 0 : index
    %65 = vector.load %arg19[%c0_50, %c0_51] : memref<1x1024xf32, #tpu.memory_space<vmem>>, vector<1x1024xf32>
    %66 = vector.broadcast %65 : vector<1x1024xf32> to vector<8x1024xf32>
    %67 = arith.addf %64, %66 : vector<8x1024xf32>
    %cst_52 = arith.constant 0.000000e+00 : f32
    %68 = vector.broadcast %cst_52 : f32 to vector<8x1024xf32>
    %69 = arith.maximumf %67, %68 : vector<8x1024xf32>
    %c0_53 = arith.constant 0 : index
    %c0_54 = arith.constant 0 : index
    %70 = vector.load %arg20[%c0_53, %c0_54] : memref<8x16xf32, #tpu.memory_space<vmem>>, vector<8x16xf32>
    tpu.vector_store %arg20[%c0_53, %c0_54], %27 {strides = array<i32>} : memref<8x16xf32, #tpu.memory_space<vmem>>, vector<8x16xf32>,
    %c0_55 = arith.constant 0 : index
    %c0_56 = arith.constant 0 : index
    %71 = vector.load %arg21[%c0_55, %c0_56] : memref<8x16xf32, #tpu.memory_space<vmem>>, vector<8x16xf32>
    tpu.vector_store %arg21[%c0_55, %c0_56], %33 {strides = array<i32>} : memref<8x16xf32, #tpu.memory_space<vmem>>, vector<8x16xf32>,
    %c0_57 = arith.constant 0 : index
    %c0_58 = arith.constant 0 : index
    %72 = vector.load %arg22[%c0_57, %c0_58] : memref<8x64xf32, #tpu.memory_space<vmem>>, vector<8x64xf32>
    tpu.vector_store %arg22[%c0_57, %c0_58], %61 {strides = array<i32>} : memref<8x64xf32, #tpu.memory_space<vmem>>, vector<8x64xf32>,
    %73 = arith.truncf %69 : vector<8x1024xf32> to vector<8x1024xbf16>
    %c0_59 = arith.constant 0 : index
    %c0_60 = arith.constant 0 : index
    %74 = vector.load %arg23[%c0_59, %c0_60] : memref<8x1024xbf16, #tpu.memory_space<vmem>>, vector<8x1024xbf16>
    tpu.vector_store %arg23[%c0_59, %c0_60], %73 {strides = array<i32>} : memref<8x1024xbf16, #tpu.memory_space<vmem>>, vector<8x1024xbf16>,
    return
  }
}

module attributes {stable_mosaic.version = 11 : i64} {
  func.func @_gemm_bias_act_kernel(%arg0: i32, %arg1: memref<16x64xbf16, #tpu.memory_space<vmem>>, %arg2: memref<64x288xbf16, #tpu.memory_space<vmem>>, %arg3: memref<1x288xf32, #tpu.memory_space<vmem>>, %arg4: memref<16x288xbf16, #tpu.memory_space<vmem>>) attributes {dimension_semantics = [#tpu.dimension_semantics<parallel>], iteration_bounds = array<i64: 2>, scalar_prefetch = 0 : i64, scratch_operands = 0 : i64, tpu.core_type = #tpu.core_type<tc>, window_params = [{transform_indices = @transform_0, window_bounds = array<i64: 16, 64>}, {pipeline_mode = #tpu.pipeline_mode<synchronous>, transform_indices = @transform_1, window_bounds = array<i64: 64, 288>}, {pipeline_mode = #tpu.pipeline_mode<synchronous>, transform_indices = @transform_2, window_bounds = array<i64: 1, 288>}, {transform_indices = @transform_3, window_bounds = array<i64: 16, 288>}]} {
    %c0 = arith.constant 0 : index
    %c0_0 = arith.constant 0 : index
    %0 = vector.load %arg1[%c0, %c0_0] : memref<16x64xbf16, #tpu.memory_space<vmem>>, vector<16x64xbf16>
    %c0_1 = arith.constant 0 : index
    %c0_2 = arith.constant 0 : index
    %1 = vector.load %arg2[%c0_1, %c0_2] : memref<64x288xbf16, #tpu.memory_space<vmem>>, vector<64x288xbf16>
    %cst = arith.constant dense<0.000000e+00> : vector<16x288xf32>
    %2 = tpu.matmul %0, %1, %cst {dimension_numbers = #tpu.dot_dimension_numbers<[1], [0], [0], [1], [0, 0, 1, 1], [], []>} : vector<16x64xbf16>, vector<64x288xbf16>, vector<16x288xf32> -> vector<16x288xf32>
    %c0_3 = arith.constant 0 : index
    %c0_4 = arith.constant 0 : index
    %3 = vector.load %arg3[%c0_3, %c0_4] : memref<1x288xf32, #tpu.memory_space<vmem>>, vector<1x288xf32>
    %4 = vector.broadcast %3 : vector<1x288xf32> to vector<16x288xf32>
    %5 = arith.addf %2, %4 : vector<16x288xf32>
    %6 = arith.truncf %5 : vector<16x288xf32> to vector<16x288xbf16>
    %c0_5 = arith.constant 0 : index
    %c0_6 = arith.constant 0 : index
    %7 = vector.load %arg4[%c0_5, %c0_6] : memref<16x288xbf16, #tpu.memory_space<vmem>>, vector<16x288xbf16>
    tpu.vector_store %arg4[%c0_5, %c0_6], %6 {strides = array<i32>} : memref<16x288xbf16, #tpu.memory_space<vmem>>, vector<16x288xbf16>,
    return
  }
  func.func @transform_0(%arg0: i32) -> (i32, i32) {
    %c0_i32 = arith.constant 0 : i32
    %c0_i32_0 = arith.constant 0 : i32
    return %arg0, %c0_i32 : i32, i32
  }
  func.func @transform_1(%arg0: i32) -> (i32, i32) {
    %c0_i32 = arith.constant 0 : i32
    %c0_i32_0 = arith.constant 0 : i32
    %c0_i32_1 = arith.constant 0 : i32
    return %c0_i32, %c0_i32_0 : i32, i32
  }
  func.func @transform_2(%arg0: i32) -> (i32, i32) {
    %c0_i32 = arith.constant 0 : i32
    %c0_i32_0 = arith.constant 0 : i32
    %c0_i32_1 = arith.constant 0 : i32
    return %c0_i32, %c0_i32_0 : i32, i32
  }
  func.func @transform_3(%arg0: i32) -> (i32, i32) {
    %c0_i32 = arith.constant 0 : i32
    %c0_i32_0 = arith.constant 0 : i32
    return %arg0, %c0_i32 : i32, i32
  }
}

module attributes {stable_mosaic.version = 11 : i64} {
  func.func @_gemm_bias_act_kernel(%arg0: i32, %arg1: memref<56x32xbf16, #tpu.memory_space<vmem>>, %arg2: memref<32x256xbf16, #tpu.memory_space<vmem>>, %arg3: memref<1x256xf32, #tpu.memory_space<vmem>>, %arg4: memref<56x256xbf16, #tpu.memory_space<vmem>>) attributes {dimension_semantics = [#tpu.dimension_semantics<parallel>], iteration_bounds = array<i64: 3>, scalar_prefetch = 0 : i64, scratch_operands = 0 : i64, tpu.core_type = #tpu.core_type<tc>, window_params = [{transform_indices = @transform_0, window_bounds = array<i64: 56, 32>}, {pipeline_mode = #tpu.pipeline_mode<synchronous>, transform_indices = @transform_1, window_bounds = array<i64: 32, 256>}, {pipeline_mode = #tpu.pipeline_mode<synchronous>, transform_indices = @transform_2, window_bounds = array<i64: 1, 256>}, {transform_indices = @transform_3, window_bounds = array<i64: 56, 256>}]} {
    %c0 = arith.constant 0 : index
    %c0_0 = arith.constant 0 : index
    %0 = vector.load %arg1[%c0, %c0_0] : memref<56x32xbf16, #tpu.memory_space<vmem>>, vector<56x32xbf16>
    %c0_1 = arith.constant 0 : index
    %c0_2 = arith.constant 0 : index
    %1 = vector.load %arg2[%c0_1, %c0_2] : memref<32x256xbf16, #tpu.memory_space<vmem>>, vector<32x256xbf16>
    %cst = arith.constant dense<0.000000e+00> : vector<56x256xf32>
    %2 = tpu.matmul %0, %1, %cst {dimension_numbers = #tpu.dot_dimension_numbers<[1], [0], [0], [1], [0, 0, 1, 1], [], []>} : vector<56x32xbf16>, vector<32x256xbf16>, vector<56x256xf32> -> vector<56x256xf32>
    %c0_3 = arith.constant 0 : index
    %c0_4 = arith.constant 0 : index
    %3 = vector.load %arg3[%c0_3, %c0_4] : memref<1x256xf32, #tpu.memory_space<vmem>>, vector<1x256xf32>
    %4 = vector.broadcast %3 : vector<1x256xf32> to vector<56x256xf32>
    %5 = arith.addf %2, %4 : vector<56x256xf32>
    %6 = arith.truncf %5 : vector<56x256xf32> to vector<56x256xbf16>
    %c0_5 = arith.constant 0 : index
    %c0_6 = arith.constant 0 : index
    %7 = vector.load %arg4[%c0_5, %c0_6] : memref<56x256xbf16, #tpu.memory_space<vmem>>, vector<56x256xbf16>
    tpu.vector_store %arg4[%c0_5, %c0_6], %6 {strides = array<i32>} : memref<56x256xbf16, #tpu.memory_space<vmem>>, vector<56x256xbf16>,
    return
  }
  func.func @transform_0(%arg0: i32) -> (i32, i32) {
    %c0_i32 = arith.constant 0 : i32
    %c0_i32_0 = arith.constant 0 : i32
    return %arg0, %c0_i32 : i32, i32
  }
  func.func @transform_1(%arg0: i32) -> (i32, i32) {
    %c0_i32 = arith.constant 0 : i32
    %c0_i32_0 = arith.constant 0 : i32
    %c0_i32_1 = arith.constant 0 : i32
    return %c0_i32, %c0_i32_0 : i32, i32
  }
  func.func @transform_2(%arg0: i32) -> (i32, i32) {
    %c0_i32 = arith.constant 0 : i32
    %c0_i32_0 = arith.constant 0 : i32
    %c0_i32_1 = arith.constant 0 : i32
    return %c0_i32, %c0_i32_0 : i32, i32
  }
  func.func @transform_3(%arg0: i32) -> (i32, i32) {
    %c0_i32 = arith.constant 0 : i32
    %c0_i32_0 = arith.constant 0 : i32
    return %arg0, %c0_i32 : i32, i32
  }
}

module attributes {stable_mosaic.version = 11 : i64} {
  func.func @_gemm_bias_act_kernel(%arg0: i32, %arg1: memref<400x16xbf16, #tpu.memory_space<vmem>>, %arg2: memref<16x128xbf16, #tpu.memory_space<vmem>>, %arg3: memref<1x128xf32, #tpu.memory_space<vmem>>, %arg4: memref<400x128xbf16, #tpu.memory_space<vmem>>) attributes {dimension_semantics = [#tpu.dimension_semantics<parallel>], iteration_bounds = array<i64: 2>, scalar_prefetch = 0 : i64, scratch_operands = 0 : i64, tpu.core_type = #tpu.core_type<tc>, window_params = [{transform_indices = @transform_0, window_bounds = array<i64: 400, 16>}, {pipeline_mode = #tpu.pipeline_mode<synchronous>, transform_indices = @transform_1, window_bounds = array<i64: 16, 128>}, {pipeline_mode = #tpu.pipeline_mode<synchronous>, transform_indices = @transform_2, window_bounds = array<i64: 1, 128>}, {transform_indices = @transform_3, window_bounds = array<i64: 400, 128>}]} {
    %c0 = arith.constant 0 : index
    %c0_0 = arith.constant 0 : index
    %0 = vector.load %arg1[%c0, %c0_0] : memref<400x16xbf16, #tpu.memory_space<vmem>>, vector<400x16xbf16>
    %c0_1 = arith.constant 0 : index
    %c0_2 = arith.constant 0 : index
    %1 = vector.load %arg2[%c0_1, %c0_2] : memref<16x128xbf16, #tpu.memory_space<vmem>>, vector<16x128xbf16>
    %cst = arith.constant dense<0.000000e+00> : vector<400x128xf32>
    %2 = tpu.matmul %0, %1, %cst {dimension_numbers = #tpu.dot_dimension_numbers<[1], [0], [0], [1], [0, 0, 1, 1], [], []>} : vector<400x16xbf16>, vector<16x128xbf16>, vector<400x128xf32> -> vector<400x128xf32>
    %c0_3 = arith.constant 0 : index
    %c0_4 = arith.constant 0 : index
    %3 = vector.load %arg3[%c0_3, %c0_4] : memref<1x128xf32, #tpu.memory_space<vmem>>, vector<1x128xf32>
    %4 = vector.broadcast %3 : vector<1x128xf32> to vector<400x128xf32>
    %5 = arith.addf %2, %4 : vector<400x128xf32>
    %6 = arith.truncf %5 : vector<400x128xf32> to vector<400x128xbf16>
    %c0_5 = arith.constant 0 : index
    %c0_6 = arith.constant 0 : index
    %7 = vector.load %arg4[%c0_5, %c0_6] : memref<400x128xbf16, #tpu.memory_space<vmem>>, vector<400x128xbf16>
    tpu.vector_store %arg4[%c0_5, %c0_6], %6 {strides = array<i32>} : memref<400x128xbf16, #tpu.memory_space<vmem>>, vector<400x128xbf16>,
    return
  }
  func.func @transform_0(%arg0: i32) -> (i32, i32) {
    %c0_i32 = arith.constant 0 : i32
    %c0_i32_0 = arith.constant 0 : i32
    return %arg0, %c0_i32 : i32, i32
  }
  func.func @transform_1(%arg0: i32) -> (i32, i32) {
    %c0_i32 = arith.constant 0 : i32
    %c0_i32_0 = arith.constant 0 : i32
    %c0_i32_1 = arith.constant 0 : i32
    return %c0_i32, %c0_i32_0 : i32, i32
  }
  func.func @transform_2(%arg0: i32) -> (i32, i32) {
    %c0_i32 = arith.constant 0 : i32
    %c0_i32_0 = arith.constant 0 : i32
    %c0_i32_1 = arith.constant 0 : i32
    return %c0_i32, %c0_i32_0 : i32, i32
  }
  func.func @transform_3(%arg0: i32) -> (i32, i32) {
    %c0_i32 = arith.constant 0 : i32
    %c0_i32_0 = arith.constant 0 : i32
    return %arg0, %c0_i32 : i32, i32
  }
}

module attributes {stable_mosaic.version = 11 : i64} {
  func.func @_gemm_bias_act_kernel(%arg0: i32, %arg1: memref<504x8xbf16, #tpu.memory_space<vmem>>, %arg2: memref<8x75xbf16, #tpu.memory_space<vmem>>, %arg3: memref<1x75xf32, #tpu.memory_space<vmem>>, %arg4: memref<504x75xbf16, #tpu.memory_space<vmem>>) attributes {dimension_semantics = [#tpu.dimension_semantics<parallel>], iteration_bounds = array<i64: 7>, scalar_prefetch = 0 : i64, scratch_operands = 0 : i64, tpu.core_type = #tpu.core_type<tc>, window_params = [{transform_indices = @transform_0, window_bounds = array<i64: 504, 8>}, {pipeline_mode = #tpu.pipeline_mode<synchronous>, transform_indices = @transform_1, window_bounds = array<i64: 8, 75>}, {pipeline_mode = #tpu.pipeline_mode<synchronous>, transform_indices = @transform_2, window_bounds = array<i64: 1, 75>}, {transform_indices = @transform_3, window_bounds = array<i64: 504, 75>}]} {
    %c0 = arith.constant 0 : index
    %c0_0 = arith.constant 0 : index
    %0 = vector.load %arg1[%c0, %c0_0] : memref<504x8xbf16, #tpu.memory_space<vmem>>, vector<504x8xbf16>
    %c0_1 = arith.constant 0 : index
    %c0_2 = arith.constant 0 : index
    %1 = vector.load %arg2[%c0_1, %c0_2] : memref<8x75xbf16, #tpu.memory_space<vmem>>, vector<8x75xbf16>
    %cst = arith.constant dense<0.000000e+00> : vector<504x75xf32>
    %2 = tpu.matmul %0, %1, %cst {dimension_numbers = #tpu.dot_dimension_numbers<[1], [0], [0], [1], [0, 0, 1, 1], [], []>} : vector<504x8xbf16>, vector<8x75xbf16>, vector<504x75xf32> -> vector<504x75xf32>
    %c0_3 = arith.constant 0 : index
    %c0_4 = arith.constant 0 : index
    %3 = vector.load %arg3[%c0_3, %c0_4] : memref<1x75xf32, #tpu.memory_space<vmem>>, vector<1x75xf32>
    %4 = vector.broadcast %3 : vector<1x75xf32> to vector<504x75xf32>
    %5 = arith.addf %2, %4 : vector<504x75xf32>
    %6 = arith.truncf %5 : vector<504x75xf32> to vector<504x75xbf16>
    %c0_5 = arith.constant 0 : index
    %c0_6 = arith.constant 0 : index
    %7 = vector.load %arg4[%c0_5, %c0_6] : memref<504x75xbf16, #tpu.memory_space<vmem>>, vector<504x75xbf16>
    tpu.vector_store %arg4[%c0_5, %c0_6], %6 {strides = array<i32>} : memref<504x75xbf16, #tpu.memory_space<vmem>>, vector<504x75xbf16>,
    return
  }
  func.func @transform_0(%arg0: i32) -> (i32, i32) {
    %c0_i32 = arith.constant 0 : i32
    %c0_i32_0 = arith.constant 0 : i32
    return %arg0, %c0_i32 : i32, i32
  }
  func.func @transform_1(%arg0: i32) -> (i32, i32) {
    %c0_i32 = arith.constant 0 : i32
    %c0_i32_0 = arith.constant 0 : i32
    %c0_i32_1 = arith.constant 0 : i32
    return %c0_i32, %c0_i32_0 : i32, i32
  }
  func.func @transform_2(%arg0: i32) -> (i32, i32) {
    %c0_i32 = arith.constant 0 : i32
    %c0_i32_0 = arith.constant 0 : i32
    %c0_i32_1 = arith.constant 0 : i32
    return %c0_i32, %c0_i32_0 : i32, i32
  }
  func.func @transform_3(%arg0: i32) -> (i32, i32) {
    %c0_i32 = arith.constant 0 : i32
    %c0_i32_0 = arith.constant 0 : i32
    return %arg0, %c0_i32 : i32, i32
  }
}

</mosaic_0001>

<llo_original>
// kernel: vae_forward.9
$region0: #{vae_forward.9}
  #allocation0 [shape = 'u32[]', space=smem, size = 0x4, offset = 0x4, fixed_abs, tag = 'smem constant byte address 0x4 - core index']
  #allocation1 [shape = 'u32[144,128]{1,0:T(1,128)}', space=vmem, size = 0x12000, scoped, tag = 'internal scratch']
  %s0 = inlined_call_operand.vmem [shape: bf16[3528,80], index: 0, kind: input, shape index: {}]
  %s1 = inlined_call_operand.vmem [shape: bf16[80,8], index: 1, kind: input, shape index: {}]
  %s2 = inlined_call_operand.vmem [shape: f32[1,8], index: 2, kind: input, shape index: {}]
  %s3 = inlined_call_operand.vmem [shape: bf16[3528,8], index: 3, kind: output, shape index: {}]
  %s4 = sld [smem:[#allocation0]]
  $region45: #{vae_forward.9} parent=0
    _
  %s6 = ssub.s32 1, %s4
  %s7 = scalar_select 0, %s6, %s4
  loop: start=0, step=1, limit=9
  $region2: #{vae_forward.9} parent=0 // loop_pre_header
    _
  $region3: #{vae_forward.9} parent=0 // loop_header
    %s9 = sphi 0, %s13
    %p10 = scmp.ge.s32.totalorder %s9, 9
    %s19 = sphi 0, %s21
    %s22 = sphi 0, %s19
    %s23 = sphi 0, %s22
    %s39 = sphi 0, %s23
    %s43 = sphi 0, %s43
    %s45 = sphi 0, %s43
    %s46 = sphi 0, %s45
    %s60 = sphi 0, %s46
    %s64 = sphi 0, %s64
    %s66 = sphi 0, %s64
    %s67 = sphi 0, %s66
    %s81 = sphi 0, %s67
    %s87 = sphi 0, %s89
    %s90 = sphi 0, %s87
    %s91 = sphi 0, %s90
    %s107 = sphi 0, %s91
  $region4: #{vae_forward.9} parent=0 // loop_header_branch
    %12 = sbr.rel (%p10) target = $region8
  $region5: #{vae_forward.9} parent=0 // loop_body
    %s14 = ssub.s32 %s9, 1
    %s15 = ssub.s32 %s9, 2
    %s16 = sadd.s32 %s9, 1
    %s17 = ssub.s32 %s9, %s16
    %p18 = scmp.eq.s32.totalorder %s17, 0
    %s20 = sadd.s32 %s19, 1
    %s21 = scalar_select %p18, %s19, %s20
    %p24 = pneg %p18
    %p25 = scmp.eq.s32.totalorder %s9, 6
    %p26 = por %p24, %p25
    %p27 = scmp.ne.s32.totalorder %s19, %s22
    %p28 = scmp.eq.s32.totalorder %s9, 0
    %p29 = por %p27, %p28
    %p30 = scmp.ne.s32.totalorder %s19, %s22
    %p31 = scmp.eq.s32.totalorder %s14, 6
    %p32 = por %p30, %p31
    %p33 = scmp.ne.s32.totalorder %s22, %s23
    %p34 = scmp.eq.s32.totalorder %s14, 0
    %p35 = por %p33, %p34
    %p36 = scmp.ne.s32.totalorder %s22, %s23
    %p37 = scmp.eq.s32.totalorder %s15, 6
    %p38 = por %p36, %p37
    %p40 = scmp.ne.s32.totalorder %s23, %s39
    %p41 = scmp.eq.s32.totalorder %s15, 0
    %p42 = por %p40, %p41
    %s44 = sadd.s32 %s43, 1
    %p47 = scmp.eq.s32.totalorder %s9, 6
    %p48 = scmp.ne.s32.totalorder %s43, %s45
    %p49 = scmp.eq.s32.totalorder %s9, 0
    %p50 = por %p48, %p49
    %p51 = scmp.ne.s32.totalorder %s43, %s45
    %p52 = scmp.eq.s32.totalorder %s14, 6
    %p53 = por %p51, %p52
    %p54 = scmp.ne.s32.totalorder %s45, %s46
    %p55 = scmp.eq.s32.totalorder %s14, 0
    %p56 = por %p54, %p55
    %p57 = scmp.ne.s32.totalorder %s45, %s46
    %p58 = scmp.eq.s32.totalorder %s15, 6
    %p59 = por %p57, %p58
    %p61 = scmp.ne.s32.totalorder %s46, %s60
    %p62 = scmp.eq.s32.totalorder %s15, 0
    %p63 = por %p61, %p62
    %s65 = sadd.s32 %s64, 1
    %p68 = scmp.eq.s32.totalorder %s9, 6
    %p69 = scmp.ne.s32.totalorder %s64, %s66
    %p70 = scmp.eq.s32.totalorder %s9, 0
    %p71 = por %p69, %p70
    %p72 = scmp.ne.s32.totalorder %s64, %s66
    %p73 = scmp.eq.s32.totalorder %s14, 6
    %p74 = por %p72, %p73
    %p75 = scmp.ne.s32.totalorder %s66, %s67
    %p76 = scmp.eq.s32.totalorder %s14, 0
    %p77 = por %p75, %p76
    %p78 = scmp.ne.s32.totalorder %s66, %s67
    %p79 = scmp.eq.s32.totalorder %s15, 6
    %p80 = por %p78, %p79
    %p82 = scmp.ne.s32.totalorder %s67, %s81
    %p83 = scmp.eq.s32.totalorder %s15, 0
    %p84 = por %p82, %p83
    %s85 = ssub.s32 %s9, %s16
    %p86 = scmp.eq.s32.totalorder %s85, 0
    %s88 = sadd.s32 %s87, 1
    %s89 = scalar_select %p86, %s87, %s88
    %p92 = pneg %p86
    %p93 = scmp.eq.s32.totalorder %s9, 6
    %p94 = por %p92, %p93
    %p95 = scmp.ne.s32.totalorder %s87, %s90
    %p96 = scmp.eq.s32.totalorder %s9, 0
    %p97 = por %p95, %p96
    %p98 = scmp.ne.s32.totalorder %s87, %s90
    %p99 = scmp.eq.s32.totalorder %s14, 6
    %p100 = por %p98, %p99
    %p101 = scmp.ne.s32.totalorder %s90, %s91
    %p102 = scmp.eq.s32.totalorder %s14, 0
    %p103 = por %p101, %p102
    %p104 = scmp.ne.s32.totalorder %s90, %s91
    %p105 = scmp.eq.s32.totalorder %s15, 6
    %p106 = por %p104, %p105
    %p108 = scmp.ne.s32.totalorder %s91, %s107
    %p109 = scmp.eq.s32.totalorder %s15, 0
    %p110 = por %p108, %p109
    %p111 = scmp.le.s32.totalorder 1, %s9
    %p112 = scmp.lt.s32.totalorder %s9, 8
    %p113 = pnand %p111, %p112
    %p114 = pneg %p113
    // Predicated region
    $region9: #{vae_forward.9} parent=5 // pred_check
      _
    $region10: #{vae_forward.9} parent=5 // pred_check_branch
      %116 = sbr.rel (%p113) target = $region12
    $region11: #{vae_forward.9} parent=5 // pred_region
      %s117 = ssub.s32 %s9, 1
      // Predicated region
      $region13: #{vae_forward.9} parent=11 // pred_check
        %p118 = pneg %p56
      $region14: #{vae_forward.9} parent=11 // pred_check_branch
        %120 = sbr.rel (%p118) target = $region16
      $region15: #{vae_forward.9} parent=11 // pred_region
        _
      $region16: #{vae_forward.9} parent=11 // pred_fallthru
        _
      // Predicated region
      $region17: #{vae_forward.9} parent=11 // pred_check
        %p121 = pneg %p77
      $region18: #{vae_forward.9} parent=11 // pred_check_branch
        %123 = sbr.rel (%p121) target = $region20
      $region19: #{vae_forward.9} parent=11 // pred_region
        _
      $region20: #{vae_forward.9} parent=11 // pred_fallthru
        _
    $region12: #{vae_forward.9} parent=5 // pred_fallthru
      _
    %p124 = scmp.lt.s32.totalorder %s9, 7
    // Predicated region
    $region21: #{vae_forward.9} parent=5 // pred_check
      %p125 = pneg %p124
    $region22: #{vae_forward.9} parent=5 // pred_check_branch
      %127 = sbr.rel (%p125) target = $region24
    $region23: #{vae_forward.9} parent=5 // pred_region
      // Predicated region
      $region25: #{vae_forward.9} parent=23 // pred_check
        %p128 = pneg %p29
      $region26: #{vae_forward.9} parent=23 // pred_check_branch
        %130 = sbr.rel (%p128) target = $region28
      $region27: #{vae_forward.9} parent=23 // pred_region
        %s131 = smul.u32 63, %s9
        %p132 = scmp.lt.s32.totalorder %s131, 440
        %s133 = scalar_select %p132, %s131, 440
        %s134 = smul.addr %s133, 4
        %s135 = scalar_lea.vmem %s0, %s134
        %s136 = smul.u32 63, %s9
      $region28: #{vae_forward.9} parent=23 // pred_fallthru
        _
    $region24: #{vae_forward.9} parent=5 // pred_fallthru
      _
    %p137 = scmp.le.s32.totalorder 1, %s9
    %p138 = scmp.lt.s32.totalorder %s9, 8
    %p139 = pnand %p137, %p138
    %p140 = pneg %p139
    // Predicated region
    $region29: #{vae_forward.9} parent=5 // pred_check
      _
    $region30: #{vae_forward.9} parent=5 // pred_check_branch
      %142 = sbr.rel (%p139) target = $region32
    $region31: #{vae_forward.9} parent=5 // pred_region
      %s143 = ssub.s32 %s9, 1
      %s144 = smul.u32 63, %s14
      %p145 = scmp.lt.s32.totalorder %s144, 440
      %s146 = scalar_select %p145, %s144, 440
      %s147 = smul.addr %s146, 4
      %s148 = scalar_lea.vmem %s0, %s147
      %p149 = pneg %p35
      %p150 = pneg %p32
      %p151 = pneg %p56
      %p152 = pneg %p53
      %p153 = pneg %p77
      %p154 = pneg %p74
      %p155 = pneg %p103
      %p156 = pneg %p100
      %s157 = smul.u32 63, %s14
      %p158 = scmp.lt.s32.totalorder %s157, 440
      %s159 = scalar_select %p158, %s157, 440
      %s160 = smul.addr %s159, 4
      %s161 = scalar_lea.vmem %s3, %s160
      %s162 = smul.u32 63, %s14
      %p163 = scmp.lt.s32.totalorder %s162, 440
      %s164 = scalar_select %p163, %s162, 440
      %s165 = smul.addr %s164, 4
      %s166 = scalar_lea.vmem %s0, %s165
      %s167 = smul.u32 63, %s14
      %s168 = smul.u32 63, %s14
      %p169 = scmp.lt.s32.totalorder %s168, 440
      %s170 = scalar_select %p169, %s168, 440
      %s171 = smul.addr %s170, 4
      %s172 = scalar_lea.vmem %s3, %s171
      %s173 = smul.u32 63, %s14
      %v175 = vld [vmem:[%s166] sm:$0xf]
      %v176 = vld [vmem:[%s166 + $0x4] sm:$0xf]
      %v177 = vld [vmem:[%s166 + $0x8] sm:$0xf]
      %v178 = vld [vmem:[%s166 + $0xc] sm:$0xf]
      %v179 = vld [vmem:[%s166 + $0x10] sm:$0xf]
      %v180 = vld [vmem:[%s166 + $0x14] sm:$0xf]
      %v181 = vld [vmem:[%s166 + $0x18] sm:$0xf]
      %v182 = vld [vmem:[%s166 + $0x1c] sm:$0xf]
      %v183 = vld [vmem:[%s166 + $0x20] sm:$0xf]
      %v184 = vld [vmem:[%s166 + $0x24] sm:$0xf]
      %v185 = vld [vmem:[%s166 + $0x28] sm:$0xf]
      %v186 = vld [vmem:[%s166 + $0x2c] sm:$0xf]
      %v187 = vld [vmem:[%s166 + $0x30] sm:$0xf]
      %v188 = vld [vmem:[%s166 + $0x34] sm:$0xf]
      %v189 = vld [vmem:[%s166 + $0x38] sm:$0xf]
      %v190 = vld [vmem:[%s166 + $0x3c] sm:$0xf]
      %v191 = vld [vmem:[%s166 + $0x40] sm:$0xf]
      %v192 = vld [vmem:[%s166 + $0x44] sm:$0xf]
      %v193 = vld [vmem:[%s166 + $0x48] sm:$0xf]
      %v194 = vld [vmem:[%s166 + $0x4c] sm:$0xf]
      %v195 = vld [vmem:[%s166 + $0x50] sm:$0xf]
      %v196 = vld [vmem:[%s166 + $0x54] sm:$0xf]
      %v197 = vld [vmem:[%s166 + $0x58] sm:$0xf]
      %v198 = vld [vmem:[%s166 + $0x5c] sm:$0xf]
      %v199 = vld [vmem:[%s166 + $0x60] sm:$0xf]
      %v200 = vld [vmem:[%s166 + $0x64] sm:$0xf]
      %v201 = vld [vmem:[%s166 + $0x68] sm:$0xf]
      %v202 = vld [vmem:[%s166 + $0x6c] sm:$0xf]
      %v203 = vld [vmem:[%s166 + $0x70] sm:$0xf]
      %v204 = vld [vmem:[%s166 + $0x74] sm:$0xf]
      %v205 = vld [vmem:[%s166 + $0x78] sm:$0xf]
      %v206 = vld [vmem:[%s166 + $0x7c] sm:$0xf]
      %v207 = vld [vmem:[%s166 + $0x80] sm:$0xf]
      %v208 = vld [vmem:[%s166 + $0x84] sm:$0xf]
      %v209 = vld [vmem:[%s166 + $0x88] sm:$0xf]
      %v210 = vld [vmem:[%s166 + $0x8c] sm:$0xf]
      %v211 = vld [vmem:[%s166 + $0x90] sm:$0xf]
      %v212 = vld [vmem:[%s166 + $0x94] sm:$0xf]
      %v213 = vld [vmem:[%s166 + $0x98] sm:$0xf]
      %v214 = vld [vmem:[%s166 + $0x9c] sm:$0xf]
      %v215 = vld [vmem:[%s166 + $0xa0] sm:$0xf]
      %v216 = vld [vmem:[%s166 + $0xa4] sm:$0xf]
      %v217 = vld [vmem:[%s166 + $0xa8] sm:$0xf]
      %v218 = vld [vmem:[%s166 + $0xac] sm:$0xf]
      %v219 = vld [vmem:[%s166 + $0xb0] sm:$0xf]
      %v220 = vld [vmem:[%s166 + $0xb4] sm:$0xf]
      %v221 = vld [vmem:[%s166 + $0xb8] sm:$0xf]
      %v222 = vld [vmem:[%s166 + $0xbc] sm:$0xf]
      %v223 = vld [vmem:[%s166 + $0xc0] sm:$0xf]
      %v224 = vld [vmem:[%s166 + $0xc4] sm:$0xf]
      %v225 = vld [vmem:[%s166 + $0xc8] sm:$0xf]
      %v226 = vld [vmem:[%s166 + $0xcc] sm:$0xf]
      %v227 = vld [vmem:[%s166 + $0xd0] sm:$0xf]
      %v228 = vld [vmem:[%s166 + $0xd4] sm:$0xf]
      %v229 = vld [vmem:[%s166 + $0xd8] sm:$0xf]
      %v230 = vld [vmem:[%s166 + $0xdc] sm:$0xf]
      %v231 = vld [vmem:[%s166 + $0xe0] sm:$0xf]
      %v232 = vld [vmem:[%s166 + $0xe4] sm:$0xf]
      %v233 = vld [vmem:[%s166 + $0xe8] sm:$0xf]
      %v234 = vld [vmem:[%s166 + $0xec] sm:$0xf]
      %v235 = vld [vmem:[%s166 + $0xf0] sm:$0xf]
      %v236 = vld [vmem:[%s166 + $0xf4] sm:$0xf]
      %v237 = vld [vmem:[%s166 + $0xf8] sm:$0xf]
      %v238 = vld [vmem:[%s1] sm:$0xf]
      %v239 = vld [vmem:[%s1 + $0x4] sm:$0xf]
      %v240 = vld [vmem:[%s1 + $0x8] sm:$0xf]
      %v241 = vld [vmem:[%s1 + $0xc] sm:$0xf]
      %v242 = vld [vmem:[%s1 + $0x10] sm:$0xf]
      %v243 = vld [vmem:[%s1 + $0x14] sm:$0xf]
      %v244 = vld [vmem:[%s1 + $0x18] sm:$0xf]
      %v245 = vld [vmem:[%s1 + $0x1c] sm:$0xf]
      %v246 = vld [vmem:[%s1 + $0x20] sm:$0xf]
      %v247 = vld [vmem:[%s1 + $0x24] sm:$0xf]
      %v248 = vld [vmem:[%s2] sm:$0x1]
      %v250 = vlaneseq
      %v251 = vshrl.u32 %v250, 7
      %v252 = vsub.s32 0, %v251
      %v253 = vrot.slane %v248, %v252
      %v318 = vunpack.c.l.b16 %v175
      %v319 = vunpack.c.l.b16 %v176
      %v320 = vunpack.c.l.b16 %v177
      %v321 = vunpack.c.l.b16 %v178
      %v322 = vunpack.c.l.b16 %v179
      %v323 = vunpack.c.l.b16 %v180
      %v324 = vunpack.c.l.b16 %v181
      %v325 = vunpack.c.l.b16 %v182
      %v326 = vunpack.c.l.b16 %v183
      %v327 = vunpack.c.l.b16 %v184
      %v328 = vunpack.c.l.b16 %v185
      %v329 = vunpack.c.l.b16 %v186
      %v330 = vunpack.c.l.b16 %v187
      %v331 = vunpack.c.l.b16 %v188
      %v332 = vunpack.c.l.b16 %v189
      %v333 = vunpack.c.l.b16 %v190
      %v334 = vunpack.c.l.b16 %v191
      %v335 = vunpack.c.l.b16 %v192
      %v336 = vunpack.c.l.b16 %v193
      %v337 = vunpack.c.l.b16 %v194
      %v338 = vunpack.c.l.b16 %v195
      %v339 = vunpack.c.l.b16 %v196
      %v340 = vunpack.c.l.b16 %v197
      %v341 = vunpack.c.l.b16 %v198
      %v342 = vunpack.c.l.b16 %v199
      %v343 = vunpack.c.l.b16 %v200
      %v344 = vunpack.c.l.b16 %v201
      %v345 = vunpack.c.l.b16 %v202
      %v346 = vunpack.c.l.b16 %v203
      %v347 = vunpack.c.l.b16 %v204
      %v348 = vunpack.c.l.b16 %v205
      %v349 = vunpack.c.l.b16 %v206
      %v350 = vunpack.c.l.b16 %v207
      %v351 = vunpack.c.l.b16 %v208
      %v352 = vunpack.c.l.b16 %v209
      %v353 = vunpack.c.l.b16 %v210
      %v354 = vunpack.c.l.b16 %v211
      %v355 = vunpack.c.l.b16 %v212
      %v356 = vunpack.c.l.b16 %v213
      %v357 = vunpack.c.l.b16 %v214
      %v358 = vunpack.c.l.b16 %v215
      %v359 = vunpack.c.l.b16 %v216
      %v360 = vunpack.c.l.b16 %v217
      %v361 = vunpack.c.l.b16 %v218
      %v362 = vunpack.c.l.b16 %v219
      %v363 = vunpack.c.l.b16 %v220
      %v364 = vunpack.c.l.b16 %v221
      %v365 = vunpack.c.l.b16 %v222
      %v366 = vunpack.c.l.b16 %v223
      %v367 = vunpack.c.l.b16 %v224
      %v368 = vunpack.c.l.b16 %v225
      %v369 = vunpack.c.l.b16 %v226
      %v370 = vunpack.c.l.b16 %v227
      %v371 = vunpack.c.l.b16 %v228
      %v372 = vunpack.c.l.b16 %v229
      %v373 = vunpack.c.l.b16 %v230
      %v374 = vunpack.c.l.b16 %v231
      %v375 = vunpack.c.l.b16 %v232
      %v376 = vunpack.c.l.b16 %v233
      %v377 = vunpack.c.l.b16 %v234
      %v378 = vunpack.c.l.b16 %v235
      %v379 = vunpack.c.l.b16 %v236
      %v380 = vunpack.c.l.b16 %v237
      %v381 = vpack.c.b16 %v319, %v318
      %v382 = vpack.c.b16 %v321, %v320
      %v383 = vpack.c.b16 %v323, %v322
      %v384 = vpack.c.b16 %v325, %v324
      %v385 = vpack.c.b16 %v327, %v326
      %v386 = vpack.c.b16 %v329, %v328
      %v387 = vpack.c.b16 %v331, %v330
      %v388 = vpack.c.b16 %v333, %v332
      %v389 = vpack.c.b16 %v335, %v334
      %v390 = vpack.c.b16 %v337, %v336
      %v391 = vpack.c.b16 %v339, %v338
      %v392 = vpack.c.b16 %v341, %v340
      %v393 = vpack.c.b16 %v343, %v342
      %v394 = vpack.c.b16 %v345, %v344
      %v395 = vpack.c.b16 %v347, %v346
      %v396 = vpack.c.b16 %v349, %v348
      %v397 = vpack.c.b16 %v351, %v350
      %v398 = vpack.c.b16 %v353, %v352
      %v399 = vpack.c.b16 %v355, %v354
      %v400 = vpack.c.b16 %v357, %v356
      %v401 = vpack.c.b16 %v359, %v358
      %v402 = vpack.c.b16 %v361, %v360
      %v403 = vpack.c.b16 %v363, %v362
      %v404 = vpack.c.b16 %v365, %v364
      %v405 = vpack.c.b16 %v367, %v366
      %v406 = vpack.c.b16 %v369, %v368
      %v407 = vpack.c.b16 %v371, %v370
      %v408 = vpack.c.b16 %v373, %v372
      %v409 = vpack.c.b16 %v375, %v374
      %v410 = vpack.c.b16 %v377, %v376
      %v411 = vpack.c.b16 %v379, %v378
      %v412 = vpack.c.b16 %v380, %v380
      %v423 = vunpack.c.l.b16 %v238
      %v424 = vunpack.c.l.b16 %v239
      %v425 = vunpack.c.l.b16 %v240
      %v426 = vunpack.c.l.b16 %v241
      %v427 = vunpack.c.l.b16 %v242
      %v428 = vunpack.c.l.b16 %v243
      %v429 = vunpack.c.l.b16 %v244
      %v430 = vunpack.c.l.b16 %v245
      %v431 = vunpack.c.l.b16 %v246
      %v432 = vunpack.c.l.b16 %v247
      %v433 = vpack.c.b16 %v424, %v423
      %v434 = vpack.c.b16 %v426, %v425
      %v435 = vpack.c.b16 %v428, %v427
      %v436 = vpack.c.b16 %v430, %v429
      %v437 = vpack.c.b16 %v432, %v431
      %vm443 = vcmask 654336
      %v445 = vsel %vm443, %v381, 0
      %v448 = vsel %vm443, %v382, 0
      %v451 = vsel %vm443, %v383, 0
      %v454 = vsel %vm443, %v384, 0
      %v457 = vsel %vm443, %v385, 0
      %v460 = vsel %vm443, %v386, 0
      %v463 = vsel %vm443, %v387, 0
      %v466 = vsel %vm443, %v388, 0
      %v469 = vsel %vm443, %v389, 0
      %v472 = vsel %vm443, %v390, 0
      %v475 = vsel %vm443, %v391, 0
      %v478 = vsel %vm443, %v392, 0
      %v481 = vsel %vm443, %v393, 0
      %v484 = vsel %vm443, %v394, 0
      %v487 = vsel %vm443, %v395, 0
      %v490 = vsel %vm443, %v396, 0
      %v493 = vsel %vm443, %v397, 0
      %v496 = vsel %vm443, %v398, 0
      %v499 = vsel %vm443, %v399, 0
      %v502 = vsel %vm443, %v400, 0
      %v505 = vsel %vm443, %v401, 0
      %v508 = vsel %vm443, %v402, 0
      %v511 = vsel %vm443, %v403, 0
      %v514 = vsel %vm443, %v404, 0
      %v517 = vsel %vm443, %v405, 0
      %v520 = vsel %vm443, %v406, 0
      %v523 = vsel %vm443, %v407, 0
      %v526 = vsel %vm443, %v408, 0
      %v529 = vsel %vm443, %v409, 0
      %v532 = vsel %vm443, %v410, 0
      %v535 = vsel %vm443, %v411, 0
      %v538 = vsel %vm443, %v412, 0
      %540 = vmatprep.subr.bf16.mxu0 0
      %541 = vmatpush1.bf16.msra.mxu0 %v433
      %542 = vmatprep.subr.bf16.mxu0 0
      %543 = vmatpush1.bf16.msra.mxu0 %v434
      %544 = vmatprep.subr.bf16.mxu0 0
      %545 = vmatpush1.bf16.msra.mxu0 %v435
      %546 = vmatprep.subr.bf16.mxu0 0
      %547 = vmatpush1.bf16.msra.mxu0 %v436
      %548 = vmatprep.subr.bf16.mxu0 0
      %549 = vmatpush1.bf16.msra.mxu0 %v437
      %550 = vmatprep.subr.bf16.mxu0 0
      %551 = vmatpush1.bf16.msra.mxu0 0
      %552 = vmatprep.subr.bf16.mxu0 0
      %553 = vmatpush1.bf16.msra.mxu0 0
      %554 = vmatprep.subr.bf16.mxu0 0
      %555 = vmatpush1.bf16.msra.mxu0 0
      %556 = vmatprep.subr.bf16.mxu0 0
      %557 = vmatpush1.bf16.msra.mxu0 0
      %558 = vmatprep.subr.bf16.mxu0 0
      %559 = vmatpush1.bf16.msra.mxu0 0
      %560 = vmatprep.subr.bf16.mxu0 0
      %561 = vmatpush1.bf16.msra.mxu0 0
      %562 = vmatprep.subr.bf16.mxu0 0
      %563 = vmatpush1.bf16.msra.mxu0 0
      %564 = vmatprep.subr.bf16.mxu0 0
      %565 = vmatpush1.bf16.msra.mxu0 0
      %566 = vmatprep.subr.bf16.mxu0 0
      %567 = vmatpush1.bf16.msra.mxu0 0
      %568 = vmatprep.subr.bf16.mxu0 0
      %569 = vmatpush1.bf16.msra.mxu0 0
      %570 = vmatprep.subr.bf16.mxu0 0
      %571 = vmatpush1.bf16.msra.mxu0 0
      %572 = vmatprep.mubr.bf16.mxu0 0
      %573 = vmatmul.mubr.bf16.gmra.mrb[0].mxu0 %v445
      %v574 = vpop.f32.mrb[0].mxu0
      %v575 = vadd.f32 %v253, %v574
      %v576 = vpop.f32.mrb[0].mxu0
      %v577 = vpop.f32.mrb[0].mxu0
      %v578 = vadd.f32 %v253, %v577
      %v579 = vpop.f32.mrb[0].mxu0
      %580 = vmatprep.mubr.bf16.mxu0 0
      %581 = vmatmul.mubr.bf16.gmra.mrb[0].mxu0 %v448
      %v582 = vpop.f32.mrb[0].mxu0
      %v583 = vadd.f32 %v253, %v582
      %v584 = vpop.f32.mrb[0].mxu0
      %v585 = vpop.f32.mrb[0].mxu0
      %v586 = vadd.f32 %v253, %v585
      %v587 = vpop.f32.mrb[0].mxu0
      %588 = vmatprep.mubr.bf16.mxu0 0
      %589 = vmatmul.mubr.bf16.gmra.mrb[0].mxu0 %v451
      %v590 = vpop.f32.mrb[0].mxu0
      %v591 = vadd.f32 %v253, %v590
      %v592 = vpop.f32.mrb[0].mxu0
      %v593 = vpop.f32.mrb[0].mxu0
      %v594 = vadd.f32 %v253, %v593
      %v595 = vpop.f32.mrb[0].mxu0
      %596 = vmatprep.mubr.bf16.mxu0 0
      %597 = vmatmul.mubr.bf16.gmra.mrb[0].mxu0 %v454
      %v598 = vpop.f32.mrb[0].mxu0
      %v599 = vadd.f32 %v253, %v598
      %v600 = vpop.f32.mrb[0].mxu0
      %v601 = vpop.f32.mrb[0].mxu0
      %v602 = vadd.f32 %v253, %v601
      %v603 = vpop.f32.mrb[0].mxu0
      %604 = vmatprep.mubr.bf16.mxu0 0
      %605 = vmatmul.mubr.bf16.gmra.mrb[0].mxu0 %v457
      %v606 = vpop.f32.mrb[0].mxu0
      %v607 = vadd.f32 %v253, %v606
      %v608 = vpop.f32.mrb[0].mxu0
      %v609 = vpop.f32.mrb[0].mxu0
      %v610 = vadd.f32 %v253, %v609
      %v611 = vpop.f32.mrb[0].mxu0
      %612 = vmatprep.mubr.bf16.mxu0 0
      %613 = vmatmul.mubr.bf16.gmra.mrb[0].mxu0 %v460
      %v614 = vpop.f32.mrb[0].mxu0
      %v615 = vadd.f32 %v253, %v614
      %v616 = vpop.f32.mrb[0].mxu0
      %v617 = vpop.f32.mrb[0].mxu0
      %v618 = vadd.f32 %v253, %v617
      %v619 = vpop.f32.mrb[0].mxu0
      %620 = vmatprep.mubr.bf16.mxu0 0
      %621 = vmatmul.mubr.bf16.gmra.mrb[0].mxu0 %v463
      %v622 = vpop.f32.mrb[0].mxu0
      %v623 = vadd.f32 %v253, %v622
      %v624 = vpop.f32.mrb[0].mxu0
      %v625 = vpop.f32.mrb[0].mxu0
      %v626 = vadd.f32 %v253, %v625
      %v627 = vpop.f32.mrb[0].mxu0
      %628 = vmatprep.mubr.bf16.mxu0 0
      %629 = vmatmul.mubr.bf16.gmra.mrb[0].mxu0 %v466
      %v630 = vpop.f32.mrb[0].mxu0
      %v631 = vadd.f32 %v253, %v630
      %v632 = vpop.f32.mrb[0].mxu0
      %v633 = vpop.f32.mrb[0].mxu0
      %v634 = vadd.f32 %v253, %v633
      %v635 = vpop.f32.mrb[0].mxu0
      %636 = vmatprep.mubr.bf16.mxu0 0
      %637 = vmatmul.mubr.bf16.gmra.mrb[0].mxu0 %v469
      %v638 = vpop.f32.mrb[0].mxu0
      %v639 = vadd.f32 %v253, %v638
      %v640 = vpop.f32.mrb[0].mxu0
      %v641 = vpop.f32.mrb[0].mxu0
      %v642 = vadd.f32 %v253, %v641
      %v643 = vpop.f32.mrb[0].mxu0
      %644 = vmatprep.mubr.bf16.mxu0 0
      %645 = vmatmul.mubr.bf16.gmra.mrb[0].mxu0 %v472
      %v646 = vpop.f32.mrb[0].mxu0
      %v647 = vadd.f32 %v253, %v646
      %v648 = vpop.f32.mrb[0].mxu0
      %v649 = vpop.f32.mrb[0].mxu0
      %v650 = vadd.f32 %v253, %v649
      %v651 = vpop.f32.mrb[0].mxu0
      %652 = vmatprep.mubr.bf16.mxu0 0
      %653 = vmatmul.mubr.bf16.gmra.mrb[0].mxu0 %v475
      %v654 = vpop.f32.mrb[0].mxu0
      %v655 = vadd.f32 %v253, %v654
      %v656 = vpop.f32.mrb[0].mxu0
      %v657 = vpop.f32.mrb[0].mxu0
      %v658 = vadd.f32 %v253, %v657
      %v659 = vpop.f32.mrb[0].mxu0
      %660 = vmatprep.mubr.bf16.mxu0 0
      %661 = vmatmul.mubr.bf16.gmra.mrb[0].mxu0 %v478
      %v662 = vpop.f32.mrb[0].mxu0
      %v663 = vadd.f32 %v253, %v662
      %v664 = vpop.f32.mrb[0].mxu0
      %v665 = vpop.f32.mrb[0].mxu0
      %v666 = vadd.f32 %v253, %v665
      %v667 = vpop.f32.mrb[0].mxu0
      %668 = vmatprep.mubr.bf16.mxu0 0
      %669 = vmatmul.mubr.bf16.gmra.mrb[0].mxu0 %v481
      %v670 = vpop.f32.mrb[0].mxu0
      %v671 = vadd.f32 %v253, %v670
      %v672 = vpop.f32.mrb[0].mxu0
      %v673 = vpop.f32.mrb[0].mxu0
      %v674 = vadd.f32 %v253, %v673
      %v675 = vpop.f32.mrb[0].mxu0
      %676 = vmatprep.mubr.bf16.mxu0 0
      %677 = vmatmul.mubr.bf16.gmra.mrb[0].mxu0 %v484
      %v678 = vpop.f32.mrb[0].mxu0
      %v679 = vadd.f32 %v253, %v678
      %v680 = vpop.f32.mrb[0].mxu0
      %v681 = vpop.f32.mrb[0].mxu0
      %v682 = vadd.f32 %v253, %v681
      %v683 = vpop.f32.mrb[0].mxu0
      %684 = vmatprep.mubr.bf16.mxu0 0
      %685 = vmatmul.mubr.bf16.gmra.mrb[0].mxu0 %v487
      %v686 = vpop.f32.mrb[0].mxu0
      %v687 = vadd.f32 %v253, %v686
      %v688 = vpop.f32.mrb[0].mxu0
      %v689 = vpop.f32.mrb[0].mxu0
      %v690 = vadd.f32 %v253, %v689
      %v691 = vpop.f32.mrb[0].mxu0
      %692 = vmatprep.mubr.bf16.mxu0 0
      %693 = vmatmul.mubr.bf16.gmra.mrb[0].mxu0 %v490
      %v694 = vpop.f32.mrb[0].mxu0
      %v695 = vadd.f32 %v253, %v694
      %v696 = vpop.f32.mrb[0].mxu0
      %v697 = vpop.f32.mrb[0].mxu0
      %v698 = vadd.f32 %v253, %v697
      %v699 = vpop.f32.mrb[0].mxu0
      %700 = vmatprep.mubr.bf16.mxu0 0
      %701 = vmatmul.mubr.bf16.gmra.mrb[0].mxu0 %v493
      %v702 = vpop.f32.mrb[0].mxu0
      %v703 = vadd.f32 %v253, %v702
      %v704 = vpop.f32.mrb[0].mxu0
      %v705 = vpop.f32.mrb[0].mxu0
      %v706 = vadd.f32 %v253, %v705
      %v707 = vpop.f32.mrb[0].mxu0
      %708 = vmatprep.mubr.bf16.mxu0 0
      %709 = vmatmul.mubr.bf16.gmra.mrb[0].mxu0 %v496
      %v710 = vpop.f32.mrb[0].mxu0
      %v711 = vadd.f32 %v253, %v710
      %v712 = vpop.f32.mrb[0].mxu0
      %v713 = vpop.f32.mrb[0].mxu0
      %v714 = vadd.f32 %v253, %v713
      %v715 = vpop.f32.mrb[0].mxu0
      %716 = vmatprep.mubr.bf16.mxu0 0
      %717 = vmatmul.mubr.bf16.gmra.mrb[0].mxu0 %v499
      %v718 = vpop.f32.mrb[0].mxu0
      %v719 = vadd.f32 %v253, %v718
      %v720 = vpop.f32.mrb[0].mxu0
      %v721 = vpop.f32.mrb[0].mxu0
      %v722 = vadd.f32 %v253, %v721
      %v723 = vpop.f32.mrb[0].mxu0
      %724 = vmatprep.mubr.bf16.mxu0 0
      %725 = vmatmul.mubr.bf16.gmra.mrb[0].mxu0 %v502
      %v726 = vpop.f32.mrb[0].mxu0
      %v727 = vadd.f32 %v253, %v726
      %v728 = vpop.f32.mrb[0].mxu0
      %v729 = vpop.f32.mrb[0].mxu0
      %v730 = vadd.f32 %v253, %v729
      %v731 = vpop.f32.mrb[0].mxu0
      %732 = vmatprep.mubr.bf16.mxu0 0
      %733 = vmatmul.mubr.bf16.gmra.mrb[0].mxu0 %v505
      %v734 = vpop.f32.mrb[0].mxu0
      %v735 = vadd.f32 %v253, %v734
      %v736 = vpop.f32.mrb[0].mxu0
      %v737 = vpop.f32.mrb[0].mxu0
      %v738 = vadd.f32 %v253, %v737
      %v739 = vpop.f32.mrb[0].mxu0
      %740 = vmatprep.mubr.bf16.mxu0 0
      %741 = vmatmul.mubr.bf16.gmra.mrb[0].mxu0 %v508
      %v742 = vpop.f32.mrb[0].mxu0
      %v743 = vadd.f32 %v253, %v742
      %v744 = vpop.f32.mrb[0].mxu0
      %v745 = vpop.f32.mrb[0].mxu0
      %v746 = vadd.f32 %v253, %v745
      %v747 = vpop.f32.mrb[0].mxu0
      %748 = vmatprep.mubr.bf16.mxu0 0
      %749 = vmatmul.mubr.bf16.gmra.mrb[0].mxu0 %v511
      %v750 = vpop.f32.mrb[0].mxu0
      %v751 = vadd.f32 %v253, %v750
      %v752 = vpop.f32.mrb[0].mxu0
      %v753 = vpop.f32.mrb[0].mxu0
      %v754 = vadd.f32 %v253, %v753
      %v755 = vpop.f32.mrb[0].mxu0
      %756 = vmatprep.mubr.bf16.mxu0 0
      %757 = vmatmul.mubr.bf16.gmra.mrb[0].mxu0 %v514
      %v758 = vpop.f32.mrb[0].mxu0
      %v759 = vadd.f32 %v253, %v758
      %v760 = vpop.f32.mrb[0].mxu0
      %v761 = vpop.f32.mrb[0].mxu0
      %v762 = vadd.f32 %v253, %v761
      %v763 = vpop.f32.mrb[0].mxu0
      %764 = vmatprep.mubr.bf16.mxu0 0
      %765 = vmatmul.mubr.bf16.gmra.mrb[0].mxu0 %v517
      %v766 = vpop.f32.mrb[0].mxu0
      %v767 = vadd.f32 %v253, %v766
      %v768 = vpop.f32.mrb[0].mxu0
      %v769 = vpop.f32.mrb[0].mxu0
      %v770 = vadd.f32 %v253, %v769
      %v771 = vpop.f32.mrb[0].mxu0
      %772 = vmatprep.mubr.bf16.mxu0 0
      %773 = vmatmul.mubr.bf16.gmra.mrb[0].mxu0 %v520
      %v774 = vpop.f32.mrb[0].mxu0
      %v775 = vadd.f32 %v253, %v774
      %v776 = vpop.f32.mrb[0].mxu0
      %v777 = vpop.f32.mrb[0].mxu0
      %v778 = vadd.f32 %v253, %v777
      %v779 = vpop.f32.mrb[0].mxu0
      %780 = vmatprep.mubr.bf16.mxu0 0
      %781 = vmatmul.mubr.bf16.gmra.mrb[0].mxu0 %v523
      %v782 = vpop.f32.mrb[0].mxu0
      %v783 = vadd.f32 %v253, %v782
      %v784 = vpop.f32.mrb[0].mxu0
      %v785 = vpop.f32.mrb[0].mxu0
      %v786 = vadd.f32 %v253, %v785
      %v787 = vpop.f32.mrb[0].mxu0
      %788 = vmatprep.mubr.bf16.mxu0 0
      %789 = vmatmul.mubr.bf16.gmra.mrb[0].mxu0 %v526
      %v790 = vpop.f32.mrb[0].mxu0
      %v791 = vadd.f32 %v253, %v790
      %v792 = vpop.f32.mrb[0].mxu0
      %v793 = vpop.f32.mrb[0].mxu0
      %v794 = vadd.f32 %v253, %v793
      %v795 = vpop.f32.mrb[0].mxu0
      %796 = vmatprep.mubr.bf16.mxu0 0
      %797 = vmatmul.mubr.bf16.gmra.mrb[0].mxu0 %v529
      %v798 = vpop.f32.mrb[0].mxu0
      %v799 = vadd.f32 %v253, %v798
      %v800 = vpop.f32.mrb[0].mxu0
      %v801 = vpop.f32.mrb[0].mxu0
      %v802 = vadd.f32 %v253, %v801
      %v803 = vpop.f32.mrb[0].mxu0
      %804 = vmatprep.mubr.bf16.mxu0 0
      %805 = vmatmul.mubr.bf16.gmra.mrb[0].mxu0 %v532
      %v806 = vpop.f32.mrb[0].mxu0
      %v807 = vadd.f32 %v253, %v806
      %v808 = vpop.f32.mrb[0].mxu0
      %v809 = vpop.f32.mrb[0].mxu0
      %v810 = vadd.f32 %v253, %v809
      %v811 = vpop.f32.mrb[0].mxu0
      %812 = vmatprep.mubr.bf16.mxu0 0
      %813 = vmatmul.mubr.bf16.gmra.mrb[0].mxu0 %v535
      %v814 = vpop.f32.mrb[0].mxu0
      %v815 = vadd.f32 %v253, %v814
      %v816 = vpop.f32.mrb[0].mxu0
      %v817 = vpop.f32.mrb[0].mxu0
      %v818 = vadd.f32 %v253, %v817
      %v819 = vpop.f32.mrb[0].mxu0
      %820 = vmatprep.mubr.bf16.mxu0 0
      %821 = vmatmul.mubr.bf16.gmra.mrb[0].mxu0 %v538
      %v822 = vpop.f32.mrb[0].mxu0
      %v823 = vadd.f32 %v253, %v822
      %v824 = vpop.f32.mrb[0].mxu0
      %v825 = vpop.f32.mrb[0].mxu0
      %v826 = vpop.f32.mrb[0].mxu0
      %827 = vdwg.mxu0
      %v828 = vmax.f32 %v575, 0.0
      %v829 = vmax.f32 %v578, 0.0
      %v830 = vmax.f32 %v583, 0.0
      %v831 = vmax.f32 %v586, 0.0
      %v832 = vmax.f32 %v591, 0.0
      %v833 = vmax.f32 %v594, 0.0
      %v834 = vmax.f32 %v599, 0.0
      %v835 = vmax.f32 %v602, 0.0
      %v836 = vmax.f32 %v607, 0.0
      %v837 = vmax.f32 %v610, 0.0
      %v838 = vmax.f32 %v615, 0.0
      %v839 = vmax.f32 %v618, 0.0
      %v840 = vmax.f32 %v623, 0.0
      %v841 = vmax.f32 %v626, 0.0
      %v842 = vmax.f32 %v631, 0.0
      %v843 = vmax.f32 %v634, 0.0
      %v844 = vmax.f32 %v639, 0.0
      %v845 = vmax.f32 %v642, 0.0
      %v846 = vmax.f32 %v647, 0.0
      %v847 = vmax.f32 %v650, 0.0
      %v848 = vmax.f32 %v655, 0.0
      %v849 = vmax.f32 %v658, 0.0
      %v850 = vmax.f32 %v663, 0.0
      %v851 = vmax.f32 %v666, 0.0
      %v852 = vmax.f32 %v671, 0.0
      %v853 = vmax.f32 %v674, 0.0
      %v854 = vmax.f32 %v679, 0.0
      %v855 = vmax.f32 %v682, 0.0
      %v856 = vmax.f32 %v687, 0.0
      %v857 = vmax.f32 %v690, 0.0
      %v858 = vmax.f32 %v695, 0.0
      %v859 = vmax.f32 %v698, 0.0
      %v860 = vmax.f32 %v703, 0.0
      %v861 = vmax.f32 %v706, 0.0
      %v862 = vmax.f32 %v711, 0.0
      %v863 = vmax.f32 %v714, 0.0
      %v864 = vmax.f32 %v719, 0.0
      %v865 = vmax.f32 %v722, 0.0
      %v866 = vmax.f32 %v727, 0.0
      %v867 = vmax.f32 %v730, 0.0
      %v868 = vmax.f32 %v735, 0.0
      %v869 = vmax.f32 %v738, 0.0
      %v870 = vmax.f32 %v743, 0.0
      %v871 = vmax.f32 %v746, 0.0
      %v872 = vmax.f32 %v751, 0.0
      %v873 = vmax.f32 %v754, 0.0
      %v874 = vmax.f32 %v759, 0.0
      %v875 = vmax.f32 %v762, 0.0
      %v876 = vmax.f32 %v767, 0.0
      %v877 = vmax.f32 %v770, 0.0
      %v878 = vmax.f32 %v775, 0.0
      %v879 = vmax.f32 %v778, 0.0
      %v880 = vmax.f32 %v783, 0.0
      %v881 = vmax.f32 %v786, 0.0
      %v882 = vmax.f32 %v791, 0.0
      %v883 = vmax.f32 %v794, 0.0
      %v884 = vmax.f32 %v799, 0.0
      %v885 = vmax.f32 %v802, 0.0
      %v886 = vmax.f32 %v807, 0.0
      %v887 = vmax.f32 %v810, 0.0
      %v888 = vmax.f32 %v815, 0.0
      %v889 = vmax.f32 %v818, 0.0
      %v890 = vmax.f32 %v823, 0.0
      %v891 = vpack.c.bf16 %v829, %v828
      %v892 = vpack.c.bf16 %v831, %v830
      %v893 = vpack.c.bf16 %v833, %v832
      %v894 = vpack.c.bf16 %v835, %v834
      %v895 = vpack.c.bf16 %v837, %v836
      %v896 = vpack.c.bf16 %v839, %v838
      %v897 = vpack.c.bf16 %v841, %v840
      %v898 = vpack.c.bf16 %v843, %v842
      %v899 = vpack.c.bf16 %v845, %v844
      %v900 = vpack.c.bf16 %v847, %v846
      %v901 = vpack.c.bf16 %v849, %v848
      %v902 = vpack.c.bf16 %v851, %v850
      %v903 = vpack.c.bf16 %v853, %v852
      %v904 = vpack.c.bf16 %v855, %v854
      %v905 = vpack.c.bf16 %v857, %v856
      %v906 = vpack.c.bf16 %v859, %v858
      %v907 = vpack.c.bf16 %v861, %v860
      %v908 = vpack.c.bf16 %v863, %v862
      %v909 = vpack.c.bf16 %v865, %v864
      %v910 = vpack.c.bf16 %v867, %v866
      %v911 = vpack.c.bf16 %v869, %v868
      %v912 = vpack.c.bf16 %v871, %v870
      %v913 = vpack.c.bf16 %v873, %v872
      %v914 = vpack.c.bf16 %v875, %v874
      %v915 = vpack.c.bf16 %v877, %v876
      %v916 = vpack.c.bf16 %v879, %v878
      %v917 = vpack.c.bf16 %v881, %v880
      %v918 = vpack.c.bf16 %v883, %v882
      %v919 = vpack.c.bf16 %v885, %v884
      %v920 = vpack.c.bf16 %v887, %v886
      %v921 = vpack.c.bf16 %v889, %v888
      %v922 = vpack.c.bf16 %v890, %v890
      %v955 = vunpack.c.l.b16 %v891
      %v956 = vunpack.c.h.b16 %v891
      %v957 = vunpack.c.l.b16 %v892
      %v958 = vunpack.c.h.b16 %v892
      %v959 = vunpack.c.l.b16 %v893
      %v960 = vunpack.c.h.b16 %v893
      %v961 = vunpack.c.l.b16 %v894
      %v962 = vunpack.c.h.b16 %v894
      %v963 = vunpack.c.l.b16 %v895
      %v964 = vunpack.c.h.b16 %v895
      %v965 = vunpack.c.l.b16 %v896
      %v966 = vunpack.c.h.b16 %v896
      %v967 = vunpack.c.l.b16 %v897
      %v968 = vunpack.c.h.b16 %v897
      %v969 = vunpack.c.l.b16 %v898
      %v970 = vunpack.c.h.b16 %v898
      %v971 = vunpack.c.l.b16 %v899
      %v972 = vunpack.c.h.b16 %v899
      %v973 = vunpack.c.l.b16 %v900
      %v974 = vunpack.c.h.b16 %v900
      %v975 = vunpack.c.l.b16 %v901
      %v976 = vunpack.c.h.b16 %v901
      %v977 = vunpack.c.l.b16 %v902
      %v978 = vunpack.c.h.b16 %v902
      %v979 = vunpack.c.l.b16 %v903
      %v980 = vunpack.c.h.b16 %v903
      %v981 = vunpack.c.l.b16 %v904
      %v982 = vunpack.c.h.b16 %v904
      %v983 = vunpack.c.l.b16 %v905
      %v984 = vunpack.c.h.b16 %v905
      %v985 = vunpack.c.l.b16 %v906
      %v986 = vunpack.c.h.b16 %v906
      %v987 = vunpack.c.l.b16 %v907
      %v988 = vunpack.c.h.b16 %v907
      %v989 = vunpack.c.l.b16 %v908
      %v990 = vunpack.c.h.b16 %v908
      %v991 = vunpack.c.l.b16 %v909
      %v992 = vunpack.c.h.b16 %v909
      %v993 = vunpack.c.l.b16 %v910
      %v994 = vunpack.c.h.b16 %v910
      %v995 = vunpack.c.l.b16 %v911
      %v996 = vunpack.c.h.b16 %v911
      %v997 = vunpack.c.l.b16 %v912
      %v998 = vunpack.c.h.b16 %v912
      %v999 = vunpack.c.l.b16 %v913
      %v1000 = vunpack.c.h.b16 %v913
      %v1001 = vunpack.c.l.b16 %v914
      %v1002 = vunpack.c.h.b16 %v914
      %v1003 = vunpack.c.l.b16 %v915
      %v1004 = vunpack.c.h.b16 %v915
      %v1005 = vunpack.c.l.b16 %v916
      %v1006 = vunpack.c.h.b16 %v916
      %v1007 = vunpack.c.l.b16 %v917
      %v1008 = vunpack.c.h.b16 %v917
      %v1009 = vunpack.c.l.b16 %v918
      %v1010 = vunpack.c.h.b16 %v918
      %v1011 = vunpack.c.l.b16 %v919
      %v1012 = vunpack.c.h.b16 %v919
      %v1013 = vunpack.c.l.b16 %v920
      %v1014 = vunpack.c.h.b16 %v920
      %v1015 = vunpack.c.l.b16 %v921
      %v1016 = vunpack.c.h.b16 %v921
      %v1017 = vunpack.c.l.b16 %v922
      %v1018 = vpack.c.b16 %v955, %v955
      %v1019 = vpack.c.b16 %v956, %v956
      %v1020 = vpack.c.b16 %v957, %v957
      %v1021 = vpack.c.b16 %v958, %v958
      %v1022 = vpack.c.b16 %v959, %v959
      %v1023 = vpack.c.b16 %v960, %v960
      %v1024 = vpack.c.b16 %v961, %v961
      %v1025 = vpack.c.b16 %v962, %v962
      %v1026 = vpack.c.b16 %v963, %v963
      %v1027 = vpack.c.b16 %v964, %v964
      %v1028 = vpack.c.b16 %v965, %v965
      %v1029 = vpack.c.b16 %v966, %v966
      %v1030 = vpack.c.b16 %v967, %v967
      %v1031 = vpack.c.b16 %v968, %v968
      %v1032 = vpack.c.b16 %v969, %v969
      %v1033 = vpack.c.b16 %v970, %v970
      %v1034 = vpack.c.b16 %v971, %v971
      %v1035 = vpack.c.b16 %v972, %v972
      %v1036 = vpack.c.b16 %v973, %v973
      %v1037 = vpack.c.b16 %v974, %v974
      %v1038 = vpack.c.b16 %v975, %v975
      %v1039 = vpack.c.b16 %v976, %v976
      %v1040 = vpack.c.b16 %v977, %v977
      %v1041 = vpack.c.b16 %v978, %v978
      %v1042 = vpack.c.b16 %v979, %v979
      %v1043 = vpack.c.b16 %v980, %v980
      %v1044 = vpack.c.b16 %v981, %v981
      %v1045 = vpack.c.b16 %v982, %v982
      %v1046 = vpack.c.b16 %v983, %v983
      %v1047 = vpack.c.b16 %v984, %v984
      %v1048 = vpack.c.b16 %v985, %v985
      %v1049 = vpack.c.b16 %v986, %v986
      %v1050 = vpack.c.b16 %v987, %v987
      %v1051 = vpack.c.b16 %v988, %v988
      %v1052 = vpack.c.b16 %v989, %v989
      %v1053 = vpack.c.b16 %v990, %v990
      %v1054 = vpack.c.b16 %v991, %v991
      %v1055 = vpack.c.b16 %v992, %v992
      %v1056 = vpack.c.b16 %v993, %v993
      %v1057 = vpack.c.b16 %v994, %v994
      %v1058 = vpack.c.b16 %v995, %v995
      %v1059 = vpack.c.b16 %v996, %v996
      %v1060 = vpack.c.b16 %v997, %v997
      %v1061 = vpack.c.b16 %v998, %v998
      %v1062 = vpack.c.b16 %v999, %v999
      %v1063 = vpack.c.b16 %v1000, %v1000
      %v1064 = vpack.c.b16 %v1001, %v1001
      %v1065 = vpack.c.b16 %v1002, %v1002
      %v1066 = vpack.c.b16 %v1003, %v1003
      %v1067 = vpack.c.b16 %v1004, %v1004
      %v1068 = vpack.c.b16 %v1005, %v1005
      %v1069 = vpack.c.b16 %v1006, %v1006
      %v1070 = vpack.c.b16 %v1007, %v1007
      %v1071 = vpack.c.b16 %v1008, %v1008
      %v1072 = vpack.c.b16 %v1009, %v1009
      %v1073 = vpack.c.b16 %v1010, %v1010
      %v1074 = vpack.c.b16 %v1011, %v1011
      %v1075 = vpack.c.b16 %v1012, %v1012
      %v1076 = vpack.c.b16 %v1013, %v1013
      %v1077 = vpack.c.b16 %v1014, %v1014
      %v1078 = vpack.c.b16 %v1015, %v1015
      %v1079 = vpack.c.b16 %v1016, %v1016
      %v1080 = vpack.c.b16 %v1017, %v1017
      %vm1144 = vcmask 60416
      %1145 = vst.msk [vmem:[%s172] sm:$0xf] %vm1144, %v1018
      %1146 = vst.msk [vmem:[%s172 + $0x4] sm:$0xf] %vm1144, %v1019
      %1147 = vst.msk [vmem:[%s172 + $0x8] sm:$0xf] %vm1144, %v1020
      %1148 = vst.msk [vmem:[%s172 + $0xc] sm:$0xf] %vm1144, %v1021
      %1149 = vst.msk [vmem:[%s172 + $0x10] sm:$0xf] %vm1144, %v1022
      %1150 = vst.msk [vmem:[%s172 + $0x14] sm:$0xf] %vm1144, %v1023
      %1151 = vst.msk [vmem:[%s172 + $0x18] sm:$0xf] %vm1144, %v1024
      %1152 = vst.msk [vmem:[%s172 + $0x1c] sm:$0xf] %vm1144, %v1025
      %1153 = vst.msk [vmem:[%s172 + $0x20] sm:$0xf] %vm1144, %v1026
      %1154 = vst.msk [vmem:[%s172 + $0x24] sm:$0xf] %vm1144, %v1027
      %1155 = vst.msk [vmem:[%s172 + $0x28] sm:$0xf] %vm1144, %v1028
      %1156 = vst.msk [vmem:[%s172 + $0x2c] sm:$0xf] %vm1144, %v1029
      %1157 = vst.msk [vmem:[%s172 + $0x30] sm:$0xf] %vm1144, %v1030
      %1158 = vst.msk [vmem:[%s172 + $0x34] sm:$0xf] %vm1144, %v1031
      %1159 = vst.msk [vmem:[%s172 + $0x38] sm:$0xf] %vm1144, %v1032
      %1160 = vst.msk [vmem:[%s172 + $0x3c] sm:$0xf] %vm1144, %v1033
      %1161 = vst.msk [vmem:[%s172 + $0x40] sm:$0xf] %vm1144, %v1034
      %1162 = vst.msk [vmem:[%s172 + $0x44] sm:$0xf] %vm1144, %v1035
      %1163 = vst.msk [vmem:[%s172 + $0x48] sm:$0xf] %vm1144, %v1036
      %1164 = vst.msk [vmem:[%s172 + $0x4c] sm:$0xf] %vm1144, %v1037
      %1165 = vst.msk [vmem:[%s172 + $0x50] sm:$0xf] %vm1144, %v1038
      %1166 = vst.msk [vmem:[%s172 + $0x54] sm:$0xf] %vm1144, %v1039
      %1167 = vst.msk [vmem:[%s172 + $0x58] sm:$0xf] %vm1144, %v1040
      %1168 = vst.msk [vmem:[%s172 + $0x5c] sm:$0xf] %vm1144, %v1041
      %1169 = vst.msk [vmem:[%s172 + $0x60] sm:$0xf] %vm1144, %v1042
      %1170 = vst.msk [vmem:[%s172 + $0x64] sm:$0xf] %vm1144, %v1043
      %1171 = vst.msk [vmem:[%s172 + $0x68] sm:$0xf] %vm1144, %v1044
      %1172 = vst.msk [vmem:[%s172 + $0x6c] sm:$0xf] %vm1144, %v1045
      %1173 = vst.msk [vmem:[%s172 + $0x70] sm:$0xf] %vm1144, %v1046
      %1174 = vst.msk [vmem:[%s172 + $0x74] sm:$0xf] %vm1144, %v1047
      %1175 = vst.msk [vmem:[%s172 + $0x78] sm:$0xf] %vm1144, %v1048
      %1176 = vst.msk [vmem:[%s172 + $0x7c] sm:$0xf] %vm1144, %v1049
      %1177 = vst.msk [vmem:[%s172 + $0x80] sm:$0xf] %vm1144, %v1050
      %1178 = vst.msk [vmem:[%s172 + $0x84] sm:$0xf] %vm1144, %v1051
      %1179 = vst.msk [vmem:[%s172 + $0x88] sm:$0xf] %vm1144, %v1052
      %1180 = vst.msk [vmem:[%s172 + $0x8c] sm:$0xf] %vm1144, %v1053
      %1181 = vst.msk [vmem:[%s172 + $0x90] sm:$0xf] %vm1144, %v1054
      %1182 = vst.msk [vmem:[%s172 + $0x94] sm:$0xf] %vm1144, %v1055
      %1183 = vst.msk [vmem:[%s172 + $0x98] sm:$0xf] %vm1144, %v1056
      %1184 = vst.msk [vmem:[%s172 + $0x9c] sm:$0xf] %vm1144, %v1057
      %1185 = vst.msk [vmem:[%s172 + $0xa0] sm:$0xf] %vm1144, %v1058
      %1186 = vst.msk [vmem:[%s172 + $0xa4] sm:$0xf] %vm1144, %v1059
      %1187 = vst.msk [vmem:[%s172 + $0xa8] sm:$0xf] %vm1144, %v1060
      %1188 = vst.msk [vmem:[%s172 + $0xac] sm:$0xf] %vm1144, %v1061
      %1189 = vst.msk [vmem:[%s172 + $0xb0] sm:$0xf] %vm1144, %v1062
      %1190 = vst.msk [vmem:[%s172 + $0xb4] sm:$0xf] %vm1144, %v1063
      %1191 = vst.msk [vmem:[%s172 + $0xb8] sm:$0xf] %vm1144, %v1064
      %1192 = vst.msk [vmem:[%s172 + $0xbc] sm:$0xf] %vm1144, %v1065
      %1193 = vst.msk [vmem:[%s172 + $0xc0] sm:$0xf] %vm1144, %v1066
      %1194 = vst.msk [vmem:[%s172 + $0xc4] sm:$0xf] %vm1144, %v1067
      %1195 = vst.msk [vmem:[%s172 + $0xc8] sm:$0xf] %vm1144, %v1068
      %1196 = vst.msk [vmem:[%s172 + $0xcc] sm:$0xf] %vm1144, %v1069
      %1197 = vst.msk [vmem:[%s172 + $0xd0] sm:$0xf] %vm1144, %v1070
      %1198 = vst.msk [vmem:[%s172 + $0xd4] sm:$0xf] %vm1144, %v1071
      %1199 = vst.msk [vmem:[%s172 + $0xd8] sm:$0xf] %vm1144, %v1072
      %1200 = vst.msk [vmem:[%s172 + $0xdc] sm:$0xf] %vm1144, %v1073
      %1201 = vst.msk [vmem:[%s172 + $0xe0] sm:$0xf] %vm1144, %v1074
      %1202 = vst.msk [vmem:[%s172 + $0xe4] sm:$0xf] %vm1144, %v1075
      %1203 = vst.msk [vmem:[%s172 + $0xe8] sm:$0xf] %vm1144, %v1076
      %1204 = vst.msk [vmem:[%s172 + $0xec] sm:$0xf] %vm1144, %v1077
      %1205 = vst.msk [vmem:[%s172 + $0xf0] sm:$0xf] %vm1144, %v1078
      %1206 = vst.msk [vmem:[%s172 + $0xf4] sm:$0xf] %vm1144, %v1079
      %1207 = vst.msk [vmem:[%s172 + $0xf8] sm:$0xf] %vm1144, %v1080
      %s1208 = smul.u32 63, %s14
      %p1209 = scmp.lt.s32.totalorder %s1208, 440
      %s1210 = scalar_select %p1209, %s1208, 440
      %s1211 = smul.addr %s1210, 4
      %s1212 = scalar_lea.vmem %s3, %s1211
      // Predicated region
      $region33: #{vae_forward.9} parent=31 // pred_check
        %p1213 = pneg %p100
      $region34: #{vae_forward.9} parent=31 // pred_check_branch
        %1215 = sbr.rel (%p1213) target = $region36
      $region35: #{vae_forward.9} parent=31 // pred_region
        %s1216 = smul.u32 63, %s14
      $region36: #{vae_forward.9} parent=31 // pred_fallthru
        _
    $region32: #{vae_forward.9} parent=5 // pred_fallthru
      _
    %p1217 = scmp.le.s32.totalorder 2, %s9
    // Predicated region
    $region37: #{vae_forward.9} parent=5 // pred_check
      %p1218 = pneg %p1217
    $region38: #{vae_forward.9} parent=5 // pred_check_branch
      %1220 = sbr.rel (%p1218) target = $region40
    $region39: #{vae_forward.9} parent=5 // pred_region
      %s1221 = ssub.s32 %s9, 2
      // Predicated region
      $region41: #{vae_forward.9} parent=39 // pred_check
        %p1222 = pneg %p106
      $region42: #{vae_forward.9} parent=39 // pred_check_branch
        %1224 = sbr.rel (%p1222) target = $region44
      $region43: #{vae_forward.9} parent=39 // pred_region
        %s1225 = smul.u32 63, %s15
        %p1226 = scmp.lt.s32.totalorder %s1225, 440
        %s1227 = scalar_select %p1226, %s1225, 440
        %s1228 = smul.addr %s1227, 4
        %s1229 = scalar_lea.vmem %s3, %s1228
      $region44: #{vae_forward.9} parent=39 // pred_fallthru
        _
    $region40: #{vae_forward.9} parent=5 // pred_fallthru
      _
  $region6: #{vae_forward.9} parent=0 // loop_footer
    %s13 = sadd.s32 1, %s9
  $region7: #{vae_forward.9} parent=0 // loop_footer_branch
    %8 = sbr.rel target = $region3
  $region8: #{vae_forward.9} parent=0 // loop_exit
    _

// kernel: vae_forward.10
$region0: #{vae_forward.10}
  #allocation0 [shape = 'u32[]', space=smem, size = 0x4, offset = 0x4, fixed_abs, tag = 'smem constant byte address 0x4 - core index']
  #allocation1 [shape = 'u32[144,128]{1,0:T(1,128)}', space=vmem, size = 0x12000, scoped, tag = 'internal scratch']
  %s0 = inlined_call_operand.vmem [shape: bf16[800,128], index: 0, kind: input, shape index: {}]
  %s1 = inlined_call_operand.vmem [shape: bf16[128,16], index: 1, kind: input, shape index: {}]
  %s2 = inlined_call_operand.vmem [shape: f32[1,16], index: 2, kind: input, shape index: {}]
  %s3 = inlined_call_operand.vmem [shape: bf16[800,16], index: 3, kind: output, shape index: {}]
  %s4 = sld [smem:[#allocation0]]
  $region45: #{vae_forward.10} parent=0
    _
  %s6 = ssub.s32 1, %s4
  %s7 = scalar_select 0, %s6, %s4
  loop: start=0, step=1, limit=4
  $region2: #{vae_forward.10} parent=0 // loop_pre_header
    _
  $region3: #{vae_forward.10} parent=0 // loop_header
    %s9 = sphi 0, %s13
    %p10 = scmp.ge.s32.totalorder %s9, 4
    %s19 = sphi 0, %s21
    %s22 = sphi 0, %s19
    %s23 = sphi 0, %s22
    %s39 = sphi 0, %s23
    %s43 = sphi 0, %s43
    %s45 = sphi 0, %s43
    %s46 = sphi 0, %s45
    %s60 = sphi 0, %s46
    %s64 = sphi 0, %s64
    %s66 = sphi 0, %s64
    %s67 = sphi 0, %s66
    %s81 = sphi 0, %s67
    %s87 = sphi 0, %s89
    %s90 = sphi 0, %s87
    %s91 = sphi 0, %s90
    %s107 = sphi 0, %s91
  $region4: #{vae_forward.10} parent=0 // loop_header_branch
    %12 = sbr.rel (%p10) target = $region8
  $region5: #{vae_forward.10} parent=0 // loop_body
    %s14 = ssub.s32 %s9, 1
    %s15 = ssub.s32 %s9, 2
    %s16 = sadd.s32 %s9, 1
    %s17 = ssub.s32 %s9, %s16
    %p18 = scmp.eq.s32.totalorder %s17, 0
    %s20 = sadd.s32 %s19, 1
    %s21 = scalar_select %p18, %s19, %s20
    %p24 = pneg %p18
    %p25 = scmp.eq.s32.totalorder %s9, 1
    %p26 = por %p24, %p25
    %p27 = scmp.ne.s32.totalorder %s19, %s22
    %p28 = scmp.eq.s32.totalorder %s9, 0
    %p29 = por %p27, %p28
    %p30 = scmp.ne.s32.totalorder %s19, %s22
    %p31 = scmp.eq.s32.totalorder %s14, 1
    %p32 = por %p30, %p31
    %p33 = scmp.ne.s32.totalorder %s22, %s23
    %p34 = scmp.eq.s32.totalorder %s14, 0
    %p35 = por %p33, %p34
    %p36 = scmp.ne.s32.totalorder %s22, %s23
    %p37 = scmp.eq.s32.totalorder %s15, 1
    %p38 = por %p36, %p37
    %p40 = scmp.ne.s32.totalorder %s23, %s39
    %p41 = scmp.eq.s32.totalorder %s15, 0
    %p42 = por %p40, %p41
    %s44 = sadd.s32 %s43, 1
    %p47 = scmp.eq.s32.totalorder %s9, 1
    %p48 = scmp.ne.s32.totalorder %s43, %s45
    %p49 = scmp.eq.s32.totalorder %s9, 0
    %p50 = por %p48, %p49
    %p51 = scmp.ne.s32.totalorder %s43, %s45
    %p52 = scmp.eq.s32.totalorder %s14, 1
    %p53 = por %p51, %p52
    %p54 = scmp.ne.s32.totalorder %s45, %s46
    %p55 = scmp.eq.s32.totalorder %s14, 0
    %p56 = por %p54, %p55
    %p57 = scmp.ne.s32.totalorder %s45, %s46
    %p58 = scmp.eq.s32.totalorder %s15, 1
    %p59 = por %p57, %p58
    %p61 = scmp.ne.s32.totalorder %s46, %s60
    %p62 = scmp.eq.s32.totalorder %s15, 0
    %p63 = por %p61, %p62
    %s65 = sadd.s32 %s64, 1
    %p68 = scmp.eq.s32.totalorder %s9, 1
    %p69 = scmp.ne.s32.totalorder %s64, %s66
    %p70 = scmp.eq.s32.totalorder %s9, 0
    %p71 = por %p69, %p70
    %p72 = scmp.ne.s32.totalorder %s64, %s66
    %p73 = scmp.eq.s32.totalorder %s14, 1
    %p74 = por %p72, %p73
    %p75 = scmp.ne.s32.totalorder %s66, %s67
    %p76 = scmp.eq.s32.totalorder %s14, 0
    %p77 = por %p75, %p76
    %p78 = scmp.ne.s32.totalorder %s66, %s67
    %p79 = scmp.eq.s32.totalorder %s15, 1
    %p80 = por %p78, %p79
    %p82 = scmp.ne.s32.totalorder %s67, %s81
    %p83 = scmp.eq.s32.totalorder %s15, 0
    %p84 = por %p82, %p83
    %s85 = ssub.s32 %s9, %s16
    %p86 = scmp.eq.s32.totalorder %s85, 0
    %s88 = sadd.s32 %s87, 1
    %s89 = scalar_select %p86, %s87, %s88
    %p92 = pneg %p86
    %p93 = scmp.eq.s32.totalorder %s9, 1
    %p94 = por %p92, %p93
    %p95 = scmp.ne.s32.totalorder %s87, %s90
    %p96 = scmp.eq.s32.totalorder %s9, 0
    %p97 = por %p95, %p96
    %p98 = scmp.ne.s32.totalorder %s87, %s90
    %p99 = scmp.eq.s32.totalorder %s14, 1
    %p100 = por %p98, %p99
    %p101 = scmp.ne.s32.totalorder %s90, %s91
    %p102 = scmp.eq.s32.totalorder %s14, 0
    %p103 = por %p101, %p102
    %p104 = scmp.ne.s32.totalorder %s90, %s91
    %p105 = scmp.eq.s32.totalorder %s15, 1
    %p106 = por %p104, %p105
    %p108 = scmp.ne.s32.totalorder %s91, %s107
    %p109 = scmp.eq.s32.totalorder %s15, 0
    %p110 = por %p108, %p109
    %p111 = scmp.le.s32.totalorder 1, %s9
    %p112 = scmp.lt.s32.totalorder %s9, 3
    %p113 = pnand %p111, %p112
    %p114 = pneg %p113
    // Predicated region
    $region9: #{vae_forward.10} parent=5 // pred_check
      _
    $region10: #{vae_forward.10} parent=5 // pred_check_branch
      %116 = sbr.rel (%p113) target = $region12
    $region11: #{vae_forward.10} parent=5 // pred_region
      %s117 = ssub.s32 %s9, 1
      // Predicated region
      $region13: #{vae_forward.10} parent=11 // pred_check
        %p118 = pneg %p56
      $region14: #{vae_forward.10} parent=11 // pred_check_branch
        %120 = sbr.rel (%p118) target = $region16
      $region15: #{vae_forward.10} parent=11 // pred_region
        _
      $region16: #{vae_forward.10} parent=11 // pred_fallthru
        _
      // Predicated region
      $region17: #{vae_forward.10} parent=11 // pred_check
        %p121 = pneg %p77
      $region18: #{vae_forward.10} parent=11 // pred_check_branch
        %123 = sbr.rel (%p121) target = $region20
      $region19: #{vae_forward.10} parent=11 // pred_region
        _
      $region20: #{vae_forward.10} parent=11 // pred_fallthru
        _
    $region12: #{vae_forward.10} parent=5 // pred_fallthru
      _
    %p124 = scmp.lt.s32.totalorder %s9, 2
    // Predicated region
    $region21: #{vae_forward.10} parent=5 // pred_check
      %p125 = pneg %p124
    $region22: #{vae_forward.10} parent=5 // pred_check_branch
      %127 = sbr.rel (%p125) target = $region24
    $region23: #{vae_forward.10} parent=5 // pred_region
      // Predicated region
      $region25: #{vae_forward.10} parent=23 // pred_check
        %p128 = pneg %p29
      $region26: #{vae_forward.10} parent=23 // pred_check_branch
        %130 = sbr.rel (%p128) target = $region28
      $region27: #{vae_forward.10} parent=23 // pred_region
        %s131 = smul.u32 50, %s9
        %p132 = scmp.lt.s32.totalorder %s131, 99
        %s133 = scalar_select %p132, %s131, 99
        %s134 = smul.addr %s133, 4
        %s135 = scalar_lea.vmem %s0, %s134
        %s136 = smul.u32 50, %s9
      $region28: #{vae_forward.10} parent=23 // pred_fallthru
        _
    $region24: #{vae_forward.10} parent=5 // pred_fallthru
      _
    %p137 = scmp.le.s32.totalorder 1, %s9
    %p138 = scmp.lt.s32.totalorder %s9, 3
    %p139 = pnand %p137, %p138
    %p140 = pneg %p139
    // Predicated region
    $region29: #{vae_forward.10} parent=5 // pred_check
      _
    $region30: #{vae_forward.10} parent=5 // pred_check_branch
      %142 = sbr.rel (%p139) target = $region32
    $region31: #{vae_forward.10} parent=5 // pred_region
      %s143 = ssub.s32 %s9, 1
      %s144 = smul.u32 50, %s14
      %p145 = scmp.lt.s32.totalorder %s144, 99
      %s146 = scalar_select %p145, %s144, 99
      %s147 = smul.addr %s146, 4
      %s148 = scalar_lea.vmem %s0, %s147
      %p149 = pneg %p35
      %p150 = pneg %p32
      %p151 = pneg %p56
      %p152 = pneg %p53
      %p153 = pneg %p77
      %p154 = pneg %p74
      %p155 = pneg %p103
      %p156 = pneg %p100
      %s157 = smul.u32 50, %s14
      %p158 = scmp.lt.s32.totalorder %s157, 99
      %s159 = scalar_select %p158, %s157, 99
      %s160 = smul.addr %s159, 4
      %s161 = scalar_lea.vmem %s3, %s160
      %s162 = smul.u32 50, %s14
      %p163 = scmp.lt.s32.totalorder %s162, 99
      %s164 = scalar_select %p163, %s162, 99
      %s165 = smul.addr %s164, 4
      %s166 = scalar_lea.vmem %s0, %s165
      %s167 = smul.u32 50, %s14
      %s168 = smul.u32 50, %s14
      %p169 = scmp.lt.s32.totalorder %s168, 99
      %s170 = scalar_select %p169, %s168, 99
      %s171 = smul.addr %s170, 4
      %s172 = scalar_lea.vmem %s3, %s171
      %s173 = smul.u32 50, %s14
      %v175 = vld [vmem:[%s166] sm:$0xf]
      %v176 = vld [vmem:[%s166 + $0x4] sm:$0xf]
      %v177 = vld [vmem:[%s166 + $0x8] sm:$0xf]
      %v178 = vld [vmem:[%s166 + $0xc] sm:$0xf]
      %v179 = vld [vmem:[%s166 + $0x10] sm:$0xf]
      %v180 = vld [vmem:[%s166 + $0x14] sm:$0xf]
      %v181 = vld [vmem:[%s166 + $0x18] sm:$0xf]
      %v182 = vld [vmem:[%s166 + $0x1c] sm:$0xf]
      %v183 = vld [vmem:[%s166 + $0x20] sm:$0xf]
      %v184 = vld [vmem:[%s166 + $0x24] sm:$0xf]
      %v185 = vld [vmem:[%s166 + $0x28] sm:$0xf]
      %v186 = vld [vmem:[%s166 + $0x2c] sm:$0xf]
      %v187 = vld [vmem:[%s166 + $0x30] sm:$0xf]
      %v188 = vld [vmem:[%s166 + $0x34] sm:$0xf]
      %v189 = vld [vmem:[%s166 + $0x38] sm:$0xf]
      %v190 = vld [vmem:[%s166 + $0x3c] sm:$0xf]
      %v191 = vld [vmem:[%s166 + $0x40] sm:$0xf]
      %v192 = vld [vmem:[%s166 + $0x44] sm:$0xf]
      %v193 = vld [vmem:[%s166 + $0x48] sm:$0xf]
      %v194 = vld [vmem:[%s166 + $0x4c] sm:$0xf]
      %v195 = vld [vmem:[%s166 + $0x50] sm:$0xf]
      %v196 = vld [vmem:[%s166 + $0x54] sm:$0xf]
      %v197 = vld [vmem:[%s166 + $0x58] sm:$0xf]
      %v198 = vld [vmem:[%s166 + $0x5c] sm:$0xf]
      %v199 = vld [vmem:[%s166 + $0x60] sm:$0xf]
      %v200 = vld [vmem:[%s166 + $0x64] sm:$0xf]
      %v201 = vld [vmem:[%s166 + $0x68] sm:$0xf]
      %v202 = vld [vmem:[%s166 + $0x6c] sm:$0xf]
      %v203 = vld [vmem:[%s166 + $0x70] sm:$0xf]
      %v204 = vld [vmem:[%s166 + $0x74] sm:$0xf]
      %v205 = vld [vmem:[%s166 + $0x78] sm:$0xf]
      %v206 = vld [vmem:[%s166 + $0x7c] sm:$0xf]
      %v207 = vld [vmem:[%s166 + $0x80] sm:$0xf]
      %v208 = vld [vmem:[%s166 + $0x84] sm:$0xf]
      %v209 = vld [vmem:[%s166 + $0x88] sm:$0xf]
      %v210 = vld [vmem:[%s166 + $0x8c] sm:$0xf]
      %v211 = vld [vmem:[%s166 + $0x90] sm:$0xf]
      %v212 = vld [vmem:[%s166 + $0x94] sm:$0xf]
      %v213 = vld [vmem:[%s166 + $0x98] sm:$0xf]
      %v214 = vld [vmem:[%s166 + $0x9c] sm:$0xf]
      %v215 = vld [vmem:[%s166 + $0xa0] sm:$0xf]
      %v216 = vld [vmem:[%s166 + $0xa4] sm:$0xf]
      %v217 = vld [vmem:[%s166 + $0xa8] sm:$0xf]
      %v218 = vld [vmem:[%s166 + $0xac] sm:$0xf]
      %v219 = vld [vmem:[%s166 + $0xb0] sm:$0xf]
      %v220 = vld [vmem:[%s166 + $0xb4] sm:$0xf]
      %v221 = vld [vmem:[%s166 + $0xb8] sm:$0xf]
      %v222 = vld [vmem:[%s166 + $0xbc] sm:$0xf]
      %v223 = vld [vmem:[%s166 + $0xc0] sm:$0xf]
      %v224 = vld [vmem:[%s166 + $0xc4] sm:$0xf]
      %v225 = vld [vmem:[%s1] sm:$0xf]
      %v226 = vld [vmem:[%s1 + $0x4] sm:$0xf]
      %v227 = vld [vmem:[%s1 + $0x8] sm:$0xf]
      %v228 = vld [vmem:[%s1 + $0xc] sm:$0xf]
      %v229 = vld [vmem:[%s1 + $0x10] sm:$0xf]
      %v230 = vld [vmem:[%s1 + $0x14] sm:$0xf]
      %v231 = vld [vmem:[%s1 + $0x18] sm:$0xf]
      %v232 = vld [vmem:[%s1 + $0x1c] sm:$0xf]
      %v233 = vld [vmem:[%s1 + $0x20] sm:$0xf]
      %v234 = vld [vmem:[%s1 + $0x24] sm:$0xf]
      %v235 = vld [vmem:[%s1 + $0x28] sm:$0xf]
      %v236 = vld [vmem:[%s1 + $0x2c] sm:$0xf]
      %v237 = vld [vmem:[%s1 + $0x30] sm:$0xf]
      %v238 = vld [vmem:[%s1 + $0x34] sm:$0xf]
      %v239 = vld [vmem:[%s1 + $0x38] sm:$0xf]
      %v240 = vld [vmem:[%s1 + $0x3c] sm:$0xf]
      %v241 = vld [vmem:[%s2] sm:$0x1]
      %v243 = vlaneseq
      %v244 = vshrl.u32 %v243, 7
      %v245 = vsub.s32 0, %v244
      %v246 = vrot.slane %v241, %v245
      %v298 = vunpack.c.l.b16 %v175
      %v299 = vunpack.c.l.b16 %v176
      %v300 = vunpack.c.l.b16 %v177
      %v301 = vunpack.c.l.b16 %v178
      %v302 = vunpack.c.l.b16 %v179
      %v303 = vunpack.c.l.b16 %v180
      %v304 = vunpack.c.l.b16 %v181
      %v305 = vunpack.c.l.b16 %v182
      %v306 = vunpack.c.l.b16 %v183
      %v307 = vunpack.c.l.b16 %v184
      %v308 = vunpack.c.l.b16 %v185
      %v309 = vunpack.c.l.b16 %v186
      %v310 = vunpack.c.l.b16 %v187
      %v311 = vunpack.c.l.b16 %v188
      %v312 = vunpack.c.l.b16 %v189
      %v313 = vunpack.c.l.b16 %v190
      %v314 = vunpack.c.l.b16 %v191
      %v315 = vunpack.c.l.b16 %v192
      %v316 = vunpack.c.l.b16 %v193
      %v317 = vunpack.c.l.b16 %v194
      %v318 = vunpack.c.l.b16 %v195
      %v319 = vunpack.c.l.b16 %v196
      %v320 = vunpack.c.l.b16 %v197
      %v321 = vunpack.c.l.b16 %v198
      %v322 = vunpack.c.l.b16 %v199
      %v323 = vunpack.c.l.b16 %v200
      %v324 = vunpack.c.l.b16 %v201
      %v325 = vunpack.c.l.b16 %v202
      %v326 = vunpack.c.l.b16 %v203
      %v327 = vunpack.c.l.b16 %v204
      %v328 = vunpack.c.l.b16 %v205
      %v329 = vunpack.c.l.b16 %v206
      %v330 = vunpack.c.l.b16 %v207
      %v331 = vunpack.c.l.b16 %v208
      %v332 = vunpack.c.l.b16 %v209
      %v333 = vunpack.c.l.b16 %v210
      %v334 = vunpack.c.l.b16 %v211
      %v335 = vunpack.c.l.b16 %v212
      %v336 = vunpack.c.l.b16 %v213
      %v337 = vunpack.c.l.b16 %v214
      %v338 = vunpack.c.l.b16 %v215
      %v339 = vunpack.c.l.b16 %v216
      %v340 = vunpack.c.l.b16 %v217
      %v341 = vunpack.c.l.b16 %v218
      %v342 = vunpack.c.l.b16 %v219
      %v343 = vunpack.c.l.b16 %v220
      %v344 = vunpack.c.l.b16 %v221
      %v345 = vunpack.c.l.b16 %v222
      %v346 = vunpack.c.l.b16 %v223
      %v347 = vunpack.c.l.b16 %v224
      %v348 = vpack.c.b16 %v299, %v298
      %v349 = vpack.c.b16 %v301, %v300
      %v350 = vpack.c.b16 %v303, %v302
      %v351 = vpack.c.b16 %v305, %v304
      %v352 = vpack.c.b16 %v307, %v306
      %v353 = vpack.c.b16 %v309, %v308
      %v354 = vpack.c.b16 %v311, %v310
      %v355 = vpack.c.b16 %v313, %v312
      %v356 = vpack.c.b16 %v315, %v314
      %v357 = vpack.c.b16 %v317, %v316
      %v358 = vpack.c.b16 %v319, %v318
      %v359 = vpack.c.b16 %v321, %v320
      %v360 = vpack.c.b16 %v323, %v322
      %v361 = vpack.c.b16 %v325, %v324
      %v362 = vpack.c.b16 %v327, %v326
      %v363 = vpack.c.b16 %v329, %v328
      %v364 = vpack.c.b16 %v331, %v330
      %v365 = vpack.c.b16 %v333, %v332
      %v366 = vpack.c.b16 %v335, %v334
      %v367 = vpack.c.b16 %v337, %v336
      %v368 = vpack.c.b16 %v339, %v338
      %v369 = vpack.c.b16 %v341, %v340
      %v370 = vpack.c.b16 %v343, %v342
      %v371 = vpack.c.b16 %v345, %v344
      %v372 = vpack.c.b16 %v347, %v346
      %v414 = vunpack.c.l.b16 %v225
      %v415 = vunpack.c.l.b16 %v226
      %v416 = vunpack.c.l.b16 %v227
      %v417 = vunpack.c.l.b16 %v228
      %v418 = vunpack.c.l.b16 %v229
      %v419 = vunpack.c.l.b16 %v230
      %v420 = vunpack.c.l.b16 %v231
      %v421 = vunpack.c.l.b16 %v232
      %v422 = vunpack.c.l.b16 %v233
      %v423 = vunpack.c.l.b16 %v234
      %v424 = vunpack.c.l.b16 %v235
      %v425 = vunpack.c.l.b16 %v236
      %v426 = vunpack.c.l.b16 %v237
      %v427 = vunpack.c.l.b16 %v238
      %v428 = vunpack.c.l.b16 %v239
      %v429 = vunpack.c.l.b16 %v240
      %v430 = vpack.c.b16 %v415, %v414
      %v431 = vpack.c.b16 %v417, %v416
      %v432 = vpack.c.b16 %v419, %v418
      %v433 = vpack.c.b16 %v421, %v420
      %v434 = vpack.c.b16 %v423, %v422
      %v435 = vpack.c.b16 %v425, %v424
      %v436 = vpack.c.b16 %v427, %v426
      %v437 = vpack.c.b16 %v429, %v428
      %446 = vmatprep.subr.bf16.mxu0 0
      %447 = vmatpush1.bf16.msra.mxu0 %v430
      %448 = vmatprep.subr.bf16.mxu0 0
      %449 = vmatpush1.bf16.msra.mxu0 %v431
      %450 = vmatprep.subr.bf16.mxu0 0
      %451 = vmatpush1.bf16.msra.mxu0 %v432
      %452 = vmatprep.subr.bf16.mxu0 0
      %453 = vmatpush1.bf16.msra.mxu0 %v433
      %454 = vmatprep.subr.bf16.mxu0 0
      %455 = vmatpush1.bf16.msra.mxu0 %v434
      %456 = vmatprep.subr.bf16.mxu0 0
      %457 = vmatpush1.bf16.msra.mxu0 %v435
      %458 = vmatprep.subr.bf16.mxu0 0
      %459 = vmatpush1.bf16.msra.mxu0 %v436
      %460 = vmatprep.subr.bf16.mxu0 0
      %461 = vmatpush1.bf16.msra.mxu0 %v437
      %462 = vmatprep.subr.bf16.mxu0 0
      %463 = vmatpush1.bf16.msra.mxu0 0
      %464 = vmatprep.subr.bf16.mxu0 0
      %465 = vmatpush1.bf16.msra.mxu0 0
      %466 = vmatprep.subr.bf16.mxu0 0
      %467 = vmatpush1.bf16.msra.mxu0 0
      %468 = vmatprep.subr.bf16.mxu0 0
      %469 = vmatpush1.bf16.msra.mxu0 0
      %470 = vmatprep.subr.bf16.mxu0 0
      %471 = vmatpush1.bf16.msra.mxu0 0
      %472 = vmatprep.subr.bf16.mxu0 0
      %473 = vmatpush1.bf16.msra.mxu0 0
      %474 = vmatprep.subr.bf16.mxu0 0
      %475 = vmatpush1.bf16.msra.mxu0 0
      %476 = vmatprep.subr.bf16.mxu0 0
      %477 = vmatpush1.bf16.msra.mxu0 0
      %478 = vmatprep.mubr.bf16.mxu0 0
      %479 = vmatmul.mubr.bf16.gmra.mrb[0].mxu0 %v348
      %v480 = vpop.f32.mrb[0].mxu0
      %v481 = vadd.f32 %v246, %v480
      %v482 = vpop.f32.mrb[0].mxu0
      %v483 = vpop.f32.mrb[0].mxu0
      %v484 = vadd.f32 %v246, %v483
      %v485 = vpop.f32.mrb[0].mxu0
      %486 = vmatprep.mubr.bf16.mxu0 0
      %487 = vmatmul.mubr.bf16.gmra.mrb[0].mxu0 %v349
      %v488 = vpop.f32.mrb[0].mxu0
      %v489 = vadd.f32 %v246, %v488
      %v490 = vpop.f32.mrb[0].mxu0
      %v491 = vpop.f32.mrb[0].mxu0
      %v492 = vadd.f32 %v246, %v491
      %v493 = vpop.f32.mrb[0].mxu0
      %494 = vmatprep.mubr.bf16.mxu0 0
      %495 = vmatmul.mubr.bf16.gmra.mrb[0].mxu0 %v350
      %v496 = vpop.f32.mrb[0].mxu0
      %v497 = vadd.f32 %v246, %v496
      %v498 = vpop.f32.mrb[0].mxu0
      %v499 = vpop.f32.mrb[0].mxu0
      %v500 = vadd.f32 %v246, %v499
      %v501 = vpop.f32.mrb[0].mxu0
      %502 = vmatprep.mubr.bf16.mxu0 0
      %503 = vmatmul.mubr.bf16.gmra.mrb[0].mxu0 %v351
      %v504 = vpop.f32.mrb[0].mxu0
      %v505 = vadd.f32 %v246, %v504
      %v506 = vpop.f32.mrb[0].mxu0
      %v507 = vpop.f32.mrb[0].mxu0
      %v508 = vadd.f32 %v246, %v507
      %v509 = vpop.f32.mrb[0].mxu0
      %510 = vmatprep.mubr.bf16.mxu0 0
      %511 = vmatmul.mubr.bf16.gmra.mrb[0].mxu0 %v352
      %v512 = vpop.f32.mrb[0].mxu0
      %v513 = vadd.f32 %v246, %v512
      %v514 = vpop.f32.mrb[0].mxu0
      %v515 = vpop.f32.mrb[0].mxu0
      %v516 = vadd.f32 %v246, %v515
      %v517 = vpop.f32.mrb[0].mxu0
      %518 = vmatprep.mubr.bf16.mxu0 0
      %519 = vmatmul.mubr.bf16.gmra.mrb[0].mxu0 %v353
      %v520 = vpop.f32.mrb[0].mxu0
      %v521 = vadd.f32 %v246, %v520
      %v522 = vpop.f32.mrb[0].mxu0
      %v523 = vpop.f32.mrb[0].mxu0
      %v524 = vadd.f32 %v246, %v523
      %v525 = vpop.f32.mrb[0].mxu0
      %526 = vmatprep.mubr.bf16.mxu0 0
      %527 = vmatmul.mubr.bf16.gmra.mrb[0].mxu0 %v354
      %v528 = vpop.f32.mrb[0].mxu0
      %v529 = vadd.f32 %v246, %v528
      %v530 = vpop.f32.mrb[0].mxu0
      %v531 = vpop.f32.mrb[0].mxu0
      %v532 = vadd.f32 %v246, %v531
      %v533 = vpop.f32.mrb[0].mxu0
      %534 = vmatprep.mubr.bf16.mxu0 0
      %535 = vmatmul.mubr.bf16.gmra.mrb[0].mxu0 %v355
      %v536 = vpop.f32.mrb[0].mxu0
      %v537 = vadd.f32 %v246, %v536
      %v538 = vpop.f32.mrb[0].mxu0
      %v539 = vpop.f32.mrb[0].mxu0
      %v540 = vadd.f32 %v246, %v539
      %v541 = vpop.f32.mrb[0].mxu0
      %542 = vmatprep.mubr.bf16.mxu0 0
      %543 = vmatmul.mubr.bf16.gmra.mrb[0].mxu0 %v356
      %v544 = vpop.f32.mrb[0].mxu0
      %v545 = vadd.f32 %v246, %v544
      %v546 = vpop.f32.mrb[0].mxu0
      %v547 = vpop.f32.mrb[0].mxu0
      %v548 = vadd.f32 %v246, %v547
      %v549 = vpop.f32.mrb[0].mxu0
      %550 = vmatprep.mubr.bf16.mxu0 0
      %551 = vmatmul.mubr.bf16.gmra.mrb[0].mxu0 %v357
      %v552 = vpop.f32.mrb[0].mxu0
      %v553 = vadd.f32 %v246, %v552
      %v554 = vpop.f32.mrb[0].mxu0
      %v555 = vpop.f32.mrb[0].mxu0
      %v556 = vadd.f32 %v246, %v555
      %v557 = vpop.f32.mrb[0].mxu0
      %558 = vmatprep.mubr.bf16.mxu0 0
      %559 = vmatmul.mubr.bf16.gmra.mrb[0].mxu0 %v358
      %v560 = vpop.f32.mrb[0].mxu0
      %v561 = vadd.f32 %v246, %v560
      %v562 = vpop.f32.mrb[0].mxu0
      %v563 = vpop.f32.mrb[0].mxu0
      %v564 = vadd.f32 %v246, %v563
      %v565 = vpop.f32.mrb[0].mxu0
      %566 = vmatprep.mubr.bf16.mxu0 0
      %567 = vmatmul.mubr.bf16.gmra.mrb[0].mxu0 %v359
      %v568 = vpop.f32.mrb[0].mxu0
      %v569 = vadd.f32 %v246, %v568
      %v570 = vpop.f32.mrb[0].mxu0
      %v571 = vpop.f32.mrb[0].mxu0
      %v572 = vadd.f32 %v246, %v571
      %v573 = vpop.f32.mrb[0].mxu0
      %574 = vmatprep.mubr.bf16.mxu0 0
      %575 = vmatmul.mubr.bf16.gmra.mrb[0].mxu0 %v360
      %v576 = vpop.f32.mrb[0].mxu0
      %v577 = vadd.f32 %v246, %v576
      %v578 = vpop.f32.mrb[0].mxu0
      %v579 = vpop.f32.mrb[0].mxu0
      %v580 = vadd.f32 %v246, %v579
      %v581 = vpop.f32.mrb[0].mxu0
      %582 = vmatprep.mubr.bf16.mxu0 0
      %583 = vmatmul.mubr.bf16.gmra.mrb[0].mxu0 %v361
      %v584 = vpop.f32.mrb[0].mxu0
      %v585 = vadd.f32 %v246, %v584
      %v586 = vpop.f32.mrb[0].mxu0
      %v587 = vpop.f32.mrb[0].mxu0
      %v588 = vadd.f32 %v246, %v587
      %v589 = vpop.f32.mrb[0].mxu0
      %590 = vmatprep.mubr.bf16.mxu0 0
      %591 = vmatmul.mubr.bf16.gmra.mrb[0].mxu0 %v362
      %v592 = vpop.f32.mrb[0].mxu0
      %v593 = vadd.f32 %v246, %v592
      %v594 = vpop.f32.mrb[0].mxu0
      %v595 = vpop.f32.mrb[0].mxu0
      %v596 = vadd.f32 %v246, %v595
      %v597 = vpop.f32.mrb[0].mxu0
      %598 = vmatprep.mubr.bf16.mxu0 0
      %599 = vmatmul.mubr.bf16.gmra.mrb[0].mxu0 %v363
      %v600 = vpop.f32.mrb[0].mxu0
      %v601 = vadd.f32 %v246, %v600
      %v602 = vpop.f32.mrb[0].mxu0
      %v603 = vpop.f32.mrb[0].mxu0
      %v604 = vadd.f32 %v246, %v603
      %v605 = vpop.f32.mrb[0].mxu0
      %606 = vmatprep.mubr.bf16.mxu0 0
      %607 = vmatmul.mubr.bf16.gmra.mrb[0].mxu0 %v364
      %v608 = vpop.f32.mrb[0].mxu0
      %v609 = vadd.f32 %v246, %v608
      %v610 = vpop.f32.mrb[0].mxu0
      %v611 = vpop.f32.mrb[0].mxu0
      %v612 = vadd.f32 %v246, %v611
      %v613 = vpop.f32.mrb[0].mxu0
      %614 = vmatprep.mubr.bf16.mxu0 0
      %615 = vmatmul.mubr.bf16.gmra.mrb[0].mxu0 %v365
      %v616 = vpop.f32.mrb[0].mxu0
      %v617 = vadd.f32 %v246, %v616
      %v618 = vpop.f32.mrb[0].mxu0
      %v619 = vpop.f32.mrb[0].mxu0
      %v620 = vadd.f32 %v246, %v619
      %v621 = vpop.f32.mrb[0].mxu0
      %622 = vmatprep.mubr.bf16.mxu0 0
      %623 = vmatmul.mubr.bf16.gmra.mrb[0].mxu0 %v366
      %v624 = vpop.f32.mrb[0].mxu0
      %v625 = vadd.f32 %v246, %v624
      %v626 = vpop.f32.mrb[0].mxu0
      %v627 = vpop.f32.mrb[0].mxu0
      %v628 = vadd.f32 %v246, %v627
      %v629 = vpop.f32.mrb[0].mxu0
      %630 = vmatprep.mubr.bf16.mxu0 0
      %631 = vmatmul.mubr.bf16.gmra.mrb[0].mxu0 %v367
      %v632 = vpop.f32.mrb[0].mxu0
      %v633 = vadd.f32 %v246, %v632
      %v634 = vpop.f32.mrb[0].mxu0
      %v635 = vpop.f32.mrb[0].mxu0
      %v636 = vadd.f32 %v246, %v635
      %v637 = vpop.f32.mrb[0].mxu0
      %638 = vmatprep.mubr.bf16.mxu0 0
      %639 = vmatmul.mubr.bf16.gmra.mrb[0].mxu0 %v368
      %v640 = vpop.f32.mrb[0].mxu0
      %v641 = vadd.f32 %v246, %v640
      %v642 = vpop.f32.mrb[0].mxu0
      %v643 = vpop.f32.mrb[0].mxu0
      %v644 = vadd.f32 %v246, %v643
      %v645 = vpop.f32.mrb[0].mxu0
      %646 = vmatprep.mubr.bf16.mxu0 0
      %647 = vmatmul.mubr.bf16.gmra.mrb[0].mxu0 %v369
      %v648 = vpop.f32.mrb[0].mxu0
      %v649 = vadd.f32 %v246, %v648
      %v650 = vpop.f32.mrb[0].mxu0
      %v651 = vpop.f32.mrb[0].mxu0
      %v652 = vadd.f32 %v246, %v651
      %v653 = vpop.f32.mrb[0].mxu0
      %654 = vmatprep.mubr.bf16.mxu0 0
      %655 = vmatmul.mubr.bf16.gmra.mrb[0].mxu0 %v370
      %v656 = vpop.f32.mrb[0].mxu0
      %v657 = vadd.f32 %v246, %v656
      %v658 = vpop.f32.mrb[0].mxu0
      %v659 = vpop.f32.mrb[0].mxu0
      %v660 = vadd.f32 %v246, %v659
      %v661 = vpop.f32.mrb[0].mxu0
      %662 = vmatprep.mubr.bf16.mxu0 0
      %663 = vmatmul.mubr.bf16.gmra.mrb[0].mxu0 %v371
      %v664 = vpop.f32.mrb[0].mxu0
      %v665 = vadd.f32 %v246, %v664
      %v666 = vpop.f32.mrb[0].mxu0
      %v667 = vpop.f32.mrb[0].mxu0
      %v668 = vadd.f32 %v246, %v667
      %v669 = vpop.f32.mrb[0].mxu0
      %670 = vmatprep.mubr.bf16.mxu0 0
      %671 = vmatmul.mubr.bf16.gmra.mrb[0].mxu0 %v372
      %v672 = vpop.f32.mrb[0].mxu0
      %v673 = vadd.f32 %v246, %v672
      %v674 = vpop.f32.mrb[0].mxu0
      %v675 = vpop.f32.mrb[0].mxu0
      %v676 = vadd.f32 %v246, %v675
      %v677 = vpop.f32.mrb[0].mxu0
      %678 = vdwg.mxu0
      %v679 = vmax.f32 %v481, 0.0
      %v680 = vmax.f32 %v484, 0.0
      %v681 = vmax.f32 %v489, 0.0
      %v682 = vmax.f32 %v492, 0.0
      %v683 = vmax.f32 %v497, 0.0
      %v684 = vmax.f32 %v500, 0.0
      %v685 = vmax.f32 %v505, 0.0
      %v686 = vmax.f32 %v508, 0.0
      %v687 = vmax.f32 %v513, 0.0
      %v688 = vmax.f32 %v516, 0.0
      %v689 = vmax.f32 %v521, 0.0
      %v690 = vmax.f32 %v524, 0.0
      %v691 = vmax.f32 %v529, 0.0
      %v692 = vmax.f32 %v532, 0.0
      %v693 = vmax.f32 %v537, 0.0
      %v694 = vmax.f32 %v540, 0.0
      %v695 = vmax.f32 %v545, 0.0
      %v696 = vmax.f32 %v548, 0.0
      %v697 = vmax.f32 %v553, 0.0
      %v698 = vmax.f32 %v556, 0.0
      %v699 = vmax.f32 %v561, 0.0
      %v700 = vmax.f32 %v564, 0.0
      %v701 = vmax.f32 %v569, 0.0
      %v702 = vmax.f32 %v572, 0.0
      %v703 = vmax.f32 %v577, 0.0
      %v704 = vmax.f32 %v580, 0.0
      %v705 = vmax.f32 %v585, 0.0
      %v706 = vmax.f32 %v588, 0.0
      %v707 = vmax.f32 %v593, 0.0
      %v708 = vmax.f32 %v596, 0.0
      %v709 = vmax.f32 %v601, 0.0
      %v710 = vmax.f32 %v604, 0.0
      %v711 = vmax.f32 %v609, 0.0
      %v712 = vmax.f32 %v612, 0.0
      %v713 = vmax.f32 %v617, 0.0
      %v714 = vmax.f32 %v620, 0.0
      %v715 = vmax.f32 %v625, 0.0
      %v716 = vmax.f32 %v628, 0.0
      %v717 = vmax.f32 %v633, 0.0
      %v718 = vmax.f32 %v636, 0.0
      %v719 = vmax.f32 %v641, 0.0
      %v720 = vmax.f32 %v644, 0.0
      %v721 = vmax.f32 %v649, 0.0
      %v722 = vmax.f32 %v652, 0.0
      %v723 = vmax.f32 %v657, 0.0
      %v724 = vmax.f32 %v660, 0.0
      %v725 = vmax.f32 %v665, 0.0
      %v726 = vmax.f32 %v668, 0.0
      %v727 = vmax.f32 %v673, 0.0
      %v728 = vmax.f32 %v676, 0.0
      %v729 = vpack.c.bf16 %v680, %v679
      %v730 = vpack.c.bf16 %v682, %v681
      %v731 = vpack.c.bf16 %v684, %v683
      %v732 = vpack.c.bf16 %v686, %v685
      %v733 = vpack.c.bf16 %v688, %v687
      %v734 = vpack.c.bf16 %v690, %v689
      %v735 = vpack.c.bf16 %v692, %v691
      %v736 = vpack.c.bf16 %v694, %v693
      %v737 = vpack.c.bf16 %v696, %v695
      %v738 = vpack.c.bf16 %v698, %v697
      %v739 = vpack.c.bf16 %v700, %v699
      %v740 = vpack.c.bf16 %v702, %v701
      %v741 = vpack.c.bf16 %v704, %v703
      %v742 = vpack.c.bf16 %v706, %v705
      %v743 = vpack.c.bf16 %v708, %v707
      %v744 = vpack.c.bf16 %v710, %v709
      %v745 = vpack.c.bf16 %v712, %v711
      %v746 = vpack.c.bf16 %v714, %v713
      %v747 = vpack.c.bf16 %v716, %v715
      %v748 = vpack.c.bf16 %v718, %v717
      %v749 = vpack.c.bf16 %v720, %v719
      %v750 = vpack.c.bf16 %v722, %v721
      %v751 = vpack.c.bf16 %v724, %v723
      %v752 = vpack.c.bf16 %v726, %v725
      %v753 = vpack.c.bf16 %v728, %v727
      %v779 = vunpack.c.l.b16 %v729
      %v780 = vunpack.c.h.b16 %v729
      %v781 = vunpack.c.l.b16 %v730
      %v782 = vunpack.c.h.b16 %v730
      %v783 = vunpack.c.l.b16 %v731
      %v784 = vunpack.c.h.b16 %v731
      %v785 = vunpack.c.l.b16 %v732
      %v786 = vunpack.c.h.b16 %v732
      %v787 = vunpack.c.l.b16 %v733
      %v788 = vunpack.c.h.b16 %v733
      %v789 = vunpack.c.l.b16 %v734
      %v790 = vunpack.c.h.b16 %v734
      %v791 = vunpack.c.l.b16 %v735
      %v792 = vunpack.c.h.b16 %v735
      %v793 = vunpack.c.l.b16 %v736
      %v794 = vunpack.c.h.b16 %v736
      %v795 = vunpack.c.l.b16 %v737
      %v796 = vunpack.c.h.b16 %v737
      %v797 = vunpack.c.l.b16 %v738
      %v798 = vunpack.c.h.b16 %v738
      %v799 = vunpack.c.l.b16 %v739
      %v800 = vunpack.c.h.b16 %v739
      %v801 = vunpack.c.l.b16 %v740
      %v802 = vunpack.c.h.b16 %v740
      %v803 = vunpack.c.l.b16 %v741
      %v804 = vunpack.c.h.b16 %v741
      %v805 = vunpack.c.l.b16 %v742
      %v806 = vunpack.c.h.b16 %v742
      %v807 = vunpack.c.l.b16 %v743
      %v808 = vunpack.c.h.b16 %v743
      %v809 = vunpack.c.l.b16 %v744
      %v810 = vunpack.c.h.b16 %v744
      %v811 = vunpack.c.l.b16 %v745
      %v812 = vunpack.c.h.b16 %v745
      %v813 = vunpack.c.l.b16 %v746
      %v814 = vunpack.c.h.b16 %v746
      %v815 = vunpack.c.l.b16 %v747
      %v816 = vunpack.c.h.b16 %v747
      %v817 = vunpack.c.l.b16 %v748
      %v818 = vunpack.c.h.b16 %v748
      %v819 = vunpack.c.l.b16 %v749
      %v820 = vunpack.c.h.b16 %v749
      %v821 = vunpack.c.l.b16 %v750
      %v822 = vunpack.c.h.b16 %v750
      %v823 = vunpack.c.l.b16 %v751
      %v824 = vunpack.c.h.b16 %v751
      %v825 = vunpack.c.l.b16 %v752
      %v826 = vunpack.c.h.b16 %v752
      %v827 = vunpack.c.l.b16 %v753
      %v828 = vunpack.c.h.b16 %v753
      %v829 = vpack.c.b16 %v779, %v779
      %v830 = vpack.c.b16 %v780, %v780
      %v831 = vpack.c.b16 %v781, %v781
      %v832 = vpack.c.b16 %v782, %v782
      %v833 = vpack.c.b16 %v783, %v783
      %v834 = vpack.c.b16 %v784, %v784
      %v835 = vpack.c.b16 %v785, %v785
      %v836 = vpack.c.b16 %v786, %v786
      %v837 = vpack.c.b16 %v787, %v787
      %v838 = vpack.c.b16 %v788, %v788
      %v839 = vpack.c.b16 %v789, %v789
      %v840 = vpack.c.b16 %v790, %v790
      %v841 = vpack.c.b16 %v791, %v791
      %v842 = vpack.c.b16 %v792, %v792
      %v843 = vpack.c.b16 %v793, %v793
      %v844 = vpack.c.b16 %v794, %v794
      %v845 = vpack.c.b16 %v795, %v795
      %v846 = vpack.c.b16 %v796, %v796
      %v847 = vpack.c.b16 %v797, %v797
      %v848 = vpack.c.b16 %v798, %v798
      %v849 = vpack.c.b16 %v799, %v799
      %v850 = vpack.c.b16 %v800, %v800
      %v851 = vpack.c.b16 %v801, %v801
      %v852 = vpack.c.b16 %v802, %v802
      %v853 = vpack.c.b16 %v803, %v803
      %v854 = vpack.c.b16 %v804, %v804
      %v855 = vpack.c.b16 %v805, %v805
      %v856 = vpack.c.b16 %v806, %v806
      %v857 = vpack.c.b16 %v807, %v807
      %v858 = vpack.c.b16 %v808, %v808
      %v859 = vpack.c.b16 %v809, %v809
      %v860 = vpack.c.b16 %v810, %v810
      %v861 = vpack.c.b16 %v811, %v811
      %v862 = vpack.c.b16 %v812, %v812
      %v863 = vpack.c.b16 %v813, %v813
      %v864 = vpack.c.b16 %v814, %v814
      %v865 = vpack.c.b16 %v815, %v815
      %v866 = vpack.c.b16 %v816, %v816
      %v867 = vpack.c.b16 %v817, %v817
      %v868 = vpack.c.b16 %v818, %v818
      %v869 = vpack.c.b16 %v819, %v819
      %v870 = vpack.c.b16 %v820, %v820
      %v871 = vpack.c.b16 %v821, %v821
      %v872 = vpack.c.b16 %v822, %v822
      %v873 = vpack.c.b16 %v823, %v823
      %v874 = vpack.c.b16 %v824, %v824
      %v875 = vpack.c.b16 %v825, %v825
      %v876 = vpack.c.b16 %v826, %v826
      %v877 = vpack.c.b16 %v827, %v827
      %v878 = vpack.c.b16 %v828, %v828
      %vm929 = vcmask 125952
      %930 = vst.msk [vmem:[%s172] sm:$0xf] %vm929, %v829
      %931 = vst.msk [vmem:[%s172 + $0x4] sm:$0xf] %vm929, %v830
      %932 = vst.msk [vmem:[%s172 + $0x8] sm:$0xf] %vm929, %v831
      %933 = vst.msk [vmem:[%s172 + $0xc] sm:$0xf] %vm929, %v832
      %934 = vst.msk [vmem:[%s172 + $0x10] sm:$0xf] %vm929, %v833
      %935 = vst.msk [vmem:[%s172 + $0x14] sm:$0xf] %vm929, %v834
      %936 = vst.msk [vmem:[%s172 + $0x18] sm:$0xf] %vm929, %v835
      %937 = vst.msk [vmem:[%s172 + $0x1c] sm:$0xf] %vm929, %v836
      %938 = vst.msk [vmem:[%s172 + $0x20] sm:$0xf] %vm929, %v837
      %939 = vst.msk [vmem:[%s172 + $0x24] sm:$0xf] %vm929, %v838
      %940 = vst.msk [vmem:[%s172 + $0x28] sm:$0xf] %vm929, %v839
      %941 = vst.msk [vmem:[%s172 + $0x2c] sm:$0xf] %vm929, %v840
      %942 = vst.msk [vmem:[%s172 + $0x30] sm:$0xf] %vm929, %v841
      %943 = vst.msk [vmem:[%s172 + $0x34] sm:$0xf] %vm929, %v842
      %944 = vst.msk [vmem:[%s172 + $0x38] sm:$0xf] %vm929, %v843
      %945 = vst.msk [vmem:[%s172 + $0x3c] sm:$0xf] %vm929, %v844
      %946 = vst.msk [vmem:[%s172 + $0x40] sm:$0xf] %vm929, %v845
      %947 = vst.msk [vmem:[%s172 + $0x44] sm:$0xf] %vm929, %v846
      %948 = vst.msk [vmem:[%s172 + $0x48] sm:$0xf] %vm929, %v847
      %949 = vst.msk [vmem:[%s172 + $0x4c] sm:$0xf] %vm929, %v848
      %950 = vst.msk [vmem:[%s172 + $0x50] sm:$0xf] %vm929, %v849
      %951 = vst.msk [vmem:[%s172 + $0x54] sm:$0xf] %vm929, %v850
      %952 = vst.msk [vmem:[%s172 + $0x58] sm:$0xf] %vm929, %v851
      %953 = vst.msk [vmem:[%s172 + $0x5c] sm:$0xf] %vm929, %v852
      %954 = vst.msk [vmem:[%s172 + $0x60] sm:$0xf] %vm929, %v853
      %955 = vst.msk [vmem:[%s172 + $0x64] sm:$0xf] %vm929, %v854
      %956 = vst.msk [vmem:[%s172 + $0x68] sm:$0xf] %vm929, %v855
      %957 = vst.msk [vmem:[%s172 + $0x6c] sm:$0xf] %vm929, %v856
      %958 = vst.msk [vmem:[%s172 + $0x70] sm:$0xf] %vm929, %v857
      %959 = vst.msk [vmem:[%s172 + $0x74] sm:$0xf] %vm929, %v858
      %960 = vst.msk [vmem:[%s172 + $0x78] sm:$0xf] %vm929, %v859
      %961 = vst.msk [vmem:[%s172 + $0x7c] sm:$0xf] %vm929, %v860
      %962 = vst.msk [vmem:[%s172 + $0x80] sm:$0xf] %vm929, %v861
      %963 = vst.msk [vmem:[%s172 + $0x84] sm:$0xf] %vm929, %v862
      %964 = vst.msk [vmem:[%s172 + $0x88] sm:$0xf] %vm929, %v863
      %965 = vst.msk [vmem:[%s172 + $0x8c] sm:$0xf] %vm929, %v864
      %966 = vst.msk [vmem:[%s172 + $0x90] sm:$0xf] %vm929, %v865
      %967 = vst.msk [vmem:[%s172 + $0x94] sm:$0xf] %vm929, %v866
      %968 = vst.msk [vmem:[%s172 + $0x98] sm:$0xf] %vm929, %v867
      %969 = vst.msk [vmem:[%s172 + $0x9c] sm:$0xf] %vm929, %v868
      %970 = vst.msk [vmem:[%s172 + $0xa0] sm:$0xf] %vm929, %v869
      %971 = vst.msk [vmem:[%s172 + $0xa4] sm:$0xf] %vm929, %v870
      %972 = vst.msk [vmem:[%s172 + $0xa8] sm:$0xf] %vm929, %v871
      %973 = vst.msk [vmem:[%s172 + $0xac] sm:$0xf] %vm929, %v872
      %974 = vst.msk [vmem:[%s172 + $0xb0] sm:$0xf] %vm929, %v873
      %975 = vst.msk [vmem:[%s172 + $0xb4] sm:$0xf] %vm929, %v874
      %976 = vst.msk [vmem:[%s172 + $0xb8] sm:$0xf] %vm929, %v875
      %977 = vst.msk [vmem:[%s172 + $0xbc] sm:$0xf] %vm929, %v876
      %978 = vst.msk [vmem:[%s172 + $0xc0] sm:$0xf] %vm929, %v877
      %979 = vst.msk [vmem:[%s172 + $0xc4] sm:$0xf] %vm929, %v878
      %s980 = smul.u32 50, %s14
      %p981 = scmp.lt.s32.totalorder %s980, 99
      %s982 = scalar_select %p981, %s980, 99
      %s983 = smul.addr %s982, 4
      %s984 = scalar_lea.vmem %s3, %s983
      // Predicated region
      $region33: #{vae_forward.10} parent=31 // pred_check
        %p985 = pneg %p100
      $region34: #{vae_forward.10} parent=31 // pred_check_branch
        %987 = sbr.rel (%p985) target = $region36
      $region35: #{vae_forward.10} parent=31 // pred_region
        %s988 = smul.u32 50, %s14
      $region36: #{vae_forward.10} parent=31 // pred_fallthru
        _
    $region32: #{vae_forward.10} parent=5 // pred_fallthru
      _
    %p989 = scmp.le.s32.totalorder 2, %s9
    // Predicated region
    $region37: #{vae_forward.10} parent=5 // pred_check
      %p990 = pneg %p989
    $region38: #{vae_forward.10} parent=5 // pred_check_branch
      %992 = sbr.rel (%p990) target = $region40
    $region39: #{vae_forward.10} parent=5 // pred_region
      %s993 = ssub.s32 %s9, 2
      // Predicated region
      $region41: #{vae_forward.10} parent=39 // pred_check
        %p994 = pneg %p106
      $region42: #{vae_forward.10} parent=39 // pred_check_branch
        %996 = sbr.rel (%p994) target = $region44
      $region43: #{vae_forward.10} parent=39 // pred_region
        %s997 = smul.u32 50, %s15
        %p998 = scmp.lt.s32.totalorder %s997, 99
        %s999 = scalar_select %p998, %s997, 99
        %s1000 = smul.addr %s999, 4
        %s1001 = scalar_lea.vmem %s3, %s1000
      $region44: #{vae_forward.10} parent=39 // pred_fallthru
        _
    $region40: #{vae_forward.10} parent=5 // pred_fallthru
      _
  $region6: #{vae_forward.10} parent=0 // loop_footer
    %s13 = sadd.s32 1, %s9
  $region7: #{vae_forward.10} parent=0 // loop_footer_branch
    %8 = sbr.rel target = $region3
  $region8: #{vae_forward.10} parent=0 // loop_exit
    _

// kernel: vae_forward.11
$region0: #{vae_forward.11}
  #allocation0 [shape = 'u32[]', space=smem, size = 0x4, offset = 0x4, fixed_abs, tag = 'smem constant byte address 0x4 - core index']
  #allocation1 [shape = 'u32[144,128]{1,0:T(1,128)}', space=vmem, size = 0x12000, scoped, tag = 'internal scratch']
  %s0 = inlined_call_operand.vmem [shape: bf16[168,256], index: 0, kind: input, shape index: {}]
  %s1 = inlined_call_operand.vmem [shape: bf16[256,32], index: 1, kind: input, shape index: {}]
  %s2 = inlined_call_operand.vmem [shape: f32[1,32], index: 2, kind: input, shape index: {}]
  %s3 = inlined_call_operand.vmem [shape: bf16[168,32], index: 3, kind: output, shape index: {}]
  %s4 = sld [smem:[#allocation0]]
  $region45: #{vae_forward.11} parent=0
    _
  %s6 = ssub.s32 1, %s4
  %s7 = scalar_select 0, %s6, %s4
  loop: start=0, step=1, limit=5
  $region2: #{vae_forward.11} parent=0 // loop_pre_header
    _
  $region3: #{vae_forward.11} parent=0 // loop_header
    %s9 = sphi 0, %s13
    %p10 = scmp.ge.s32.totalorder %s9, 5
    %s19 = sphi 0, %s21
    %s22 = sphi 0, %s19
    %s23 = sphi 0, %s22
    %s39 = sphi 0, %s23
    %s43 = sphi 0, %s43
    %s45 = sphi 0, %s43
    %s46 = sphi 0, %s45
    %s60 = sphi 0, %s46
    %s64 = sphi 0, %s64
    %s66 = sphi 0, %s64
    %s67 = sphi 0, %s66
    %s81 = sphi 0, %s67
    %s87 = sphi 0, %s89
    %s90 = sphi 0, %s87
    %s91 = sphi 0, %s90
    %s107 = sphi 0, %s91
  $region4: #{vae_forward.11} parent=0 // loop_header_branch
    %12 = sbr.rel (%p10) target = $region8
  $region5: #{vae_forward.11} parent=0 // loop_body
    %s14 = ssub.s32 %s9, 1
    %s15 = ssub.s32 %s9, 2
    %s16 = sadd.s32 %s9, 1
    %s17 = ssub.s32 %s9, %s16
    %p18 = scmp.eq.s32.totalorder %s17, 0
    %s20 = sadd.s32 %s19, 1
    %s21 = scalar_select %p18, %s19, %s20
    %p24 = pneg %p18
    %p25 = scmp.eq.s32.totalorder %s9, 2
    %p26 = por %p24, %p25
    %p27 = scmp.ne.s32.totalorder %s19, %s22
    %p28 = scmp.eq.s32.totalorder %s9, 0
    %p29 = por %p27, %p28
    %p30 = scmp.ne.s32.totalorder %s19, %s22
    %p31 = scmp.eq.s32.totalorder %s14, 2
    %p32 = por %p30, %p31
    %p33 = scmp.ne.s32.totalorder %s22, %s23
    %p34 = scmp.eq.s32.totalorder %s14, 0
    %p35 = por %p33, %p34
    %p36 = scmp.ne.s32.totalorder %s22, %s23
    %p37 = scmp.eq.s32.totalorder %s15, 2
    %p38 = por %p36, %p37
    %p40 = scmp.ne.s32.totalorder %s23, %s39
    %p41 = scmp.eq.s32.totalorder %s15, 0
    %p42 = por %p40, %p41
    %s44 = sadd.s32 %s43, 1
    %p47 = scmp.eq.s32.totalorder %s9, 2
    %p48 = scmp.ne.s32.totalorder %s43, %s45
    %p49 = scmp.eq.s32.totalorder %s9, 0
    %p50 = por %p48, %p49
    %p51 = scmp.ne.s32.totalorder %s43, %s45
    %p52 = scmp.eq.s32.totalorder %s14, 2
    %p53 = por %p51, %p52
    %p54 = scmp.ne.s32.totalorder %s45, %s46
    %p55 = scmp.eq.s32.totalorder %s14, 0
    %p56 = por %p54, %p55
    %p57 = scmp.ne.s32.totalorder %s45, %s46
    %p58 = scmp.eq.s32.totalorder %s15, 2
    %p59 = por %p57, %p58
    %p61 = scmp.ne.s32.totalorder %s46, %s60
    %p62 = scmp.eq.s32.totalorder %s15, 0
    %p63 = por %p61, %p62
    %s65 = sadd.s32 %s64, 1
    %p68 = scmp.eq.s32.totalorder %s9, 2
    %p69 = scmp.ne.s32.totalorder %s64, %s66
    %p70 = scmp.eq.s32.totalorder %s9, 0
    %p71 = por %p69, %p70
    %p72 = scmp.ne.s32.totalorder %s64, %s66
    %p73 = scmp.eq.s32.totalorder %s14, 2
    %p74 = por %p72, %p73
    %p75 = scmp.ne.s32.totalorder %s66, %s67
    %p76 = scmp.eq.s32.totalorder %s14, 0
    %p77 = por %p75, %p76
    %p78 = scmp.ne.s32.totalorder %s66, %s67
    %p79 = scmp.eq.s32.totalorder %s15, 2
    %p80 = por %p78, %p79
    %p82 = scmp.ne.s32.totalorder %s67, %s81
    %p83 = scmp.eq.s32.totalorder %s15, 0
    %p84 = por %p82, %p83
    %s85 = ssub.s32 %s9, %s16
    %p86 = scmp.eq.s32.totalorder %s85, 0
    %s88 = sadd.s32 %s87, 1
    %s89 = scalar_select %p86, %s87, %s88
    %p92 = pneg %p86
    %p93 = scmp.eq.s32.totalorder %s9, 2
    %p94 = por %p92, %p93
    %p95 = scmp.ne.s32.totalorder %s87, %s90
    %p96 = scmp.eq.s32.totalorder %s9, 0
    %p97 = por %p95, %p96
    %p98 = scmp.ne.s32.totalorder %s87, %s90
    %p99 = scmp.eq.s32.totalorder %s14, 2
    %p100 = por %p98, %p99
    %p101 = scmp.ne.s32.totalorder %s90, %s91
    %p102 = scmp.eq.s32.totalorder %s14, 0
    %p103 = por %p101, %p102
    %p104 = scmp.ne.s32.totalorder %s90, %s91
    %p105 = scmp.eq.s32.totalorder %s15, 2
    %p106 = por %p104, %p105
    %p108 = scmp.ne.s32.totalorder %s91, %s107
    %p109 = scmp.eq.s32.totalorder %s15, 0
    %p110 = por %p108, %p109
    %p111 = scmp.le.s32.totalorder 1, %s9
    %p112 = scmp.lt.s32.totalorder %s9, 4
    %p113 = pnand %p111, %p112
    %p114 = pneg %p113
    // Predicated region
    $region9: #{vae_forward.11} parent=5 // pred_check
      _
    $region10: #{vae_forward.11} parent=5 // pred_check_branch
      %116 = sbr.rel (%p113) target = $region12
    $region11: #{vae_forward.11} parent=5 // pred_region
      %s117 = ssub.s32 %s9, 1
      // Predicated region
      $region13: #{vae_forward.11} parent=11 // pred_check
        %p118 = pneg %p56
      $region14: #{vae_forward.11} parent=11 // pred_check_branch
        %120 = sbr.rel (%p118) target = $region16
      $region15: #{vae_forward.11} parent=11 // pred_region
        _
      $region16: #{vae_forward.11} parent=11 // pred_fallthru
        _
      // Predicated region
      $region17: #{vae_forward.11} parent=11 // pred_check
        %p121 = pneg %p77
      $region18: #{vae_forward.11} parent=11 // pred_check_branch
        %123 = sbr.rel (%p121) target = $region20
      $region19: #{vae_forward.11} parent=11 // pred_region
        _
      $region20: #{vae_forward.11} parent=11 // pred_fallthru
        _
    $region12: #{vae_forward.11} parent=5 // pred_fallthru
      _
    %p124 = scmp.lt.s32.totalorder %s9, 3
    // Predicated region
    $region21: #{vae_forward.11} parent=5 // pred_check
      %p125 = pneg %p124
    $region22: #{vae_forward.11} parent=5 // pred_check_branch
      %127 = sbr.rel (%p125) target = $region24
    $region23: #{vae_forward.11} parent=5 // pred_region
      // Predicated region
      $region25: #{vae_forward.11} parent=23 // pred_check
        %p128 = pneg %p29
      $region26: #{vae_forward.11} parent=23 // pred_check_branch
        %130 = sbr.rel (%p128) target = $region28
      $region27: #{vae_forward.11} parent=23 // pred_region
        %s131 = smul.u32 7, %s9
        %p132 = scmp.lt.s32.totalorder %s131, 20
        %s133 = scalar_select %p132, %s131, 20
        %s134 = smul.addr %s133, 2
        %s135 = smul.addr %s134, 4
        %s136 = scalar_lea.vmem %s0, %s135
        %s137 = smul.u32 7, %s9
      $region28: #{vae_forward.11} parent=23 // pred_fallthru
        _
    $region24: #{vae_forward.11} parent=5 // pred_fallthru
      _
    %p138 = scmp.le.s32.totalorder 1, %s9
    %p139 = scmp.lt.s32.totalorder %s9, 4
    %p140 = pnand %p138, %p139
    %p141 = pneg %p140
    // Predicated region
    $region29: #{vae_forward.11} parent=5 // pred_check
      _
    $region30: #{vae_forward.11} parent=5 // pred_check_branch
      %143 = sbr.rel (%p140) target = $region32
    $region31: #{vae_forward.11} parent=5 // pred_region
      %s144 = ssub.s32 %s9, 1
      %s145 = smul.u32 7, %s14
      %p146 = scmp.lt.s32.totalorder %s145, 20
      %s147 = scalar_select %p146, %s145, 20
      %s148 = smul.addr %s147, 2
      %s149 = smul.addr %s148, 4
      %s150 = scalar_lea.vmem %s0, %s149
      %p151 = pneg %p35
      %p152 = pneg %p32
      %p153 = pneg %p56
      %p154 = pneg %p53
      %p155 = pneg %p77
      %p156 = pneg %p74
      %p157 = pneg %p103
      %p158 = pneg %p100
      %s159 = smul.u32 7, %s14
      %p160 = scmp.lt.s32.totalorder %s159, 20
      %s161 = scalar_select %p160, %s159, 20
      %s162 = smul.addr %s161, 4
      %s163 = scalar_lea.vmem %s3, %s162
      %s164 = smul.u32 7, %s14
      %p165 = scmp.lt.s32.totalorder %s164, 20
      %s166 = scalar_select %p165, %s164, 20
      %s167 = smul.addr %s166, 2
      %s168 = smul.addr %s167, 4
      %s169 = scalar_lea.vmem %s0, %s168
      %s170 = smul.u32 7, %s14
      %s171 = smul.u32 7, %s14
      %p172 = scmp.lt.s32.totalorder %s171, 20
      %s173 = scalar_select %p172, %s171, 20
      %s174 = smul.addr %s173, 4
      %s175 = scalar_lea.vmem %s3, %s174
      %s176 = smul.u32 7, %s14
      %v178 = vld [vmem:[%s169] sm:$0xff]
      %v179 = vld [vmem:[%s169 + $0x8] sm:$0xff]
      %v180 = vld [vmem:[%s169 + $0x10] sm:$0xff]
      %v181 = vld [vmem:[%s169 + $0x18] sm:$0xff]
      %v182 = vld [vmem:[%s169 + $0x20] sm:$0xff]
      %v183 = vld [vmem:[%s169 + $0x28] sm:$0xff]
      %v184 = vld [vmem:[%s169 + $0x30] sm:$0xff]
      %v185 = vld [vmem:[%s1] sm:$0xf]
      %v186 = vld [vmem:[%s1 + $0x4] sm:$0xf]
      %v187 = vld [vmem:[%s1 + $0x8] sm:$0xf]
      %v188 = vld [vmem:[%s1 + $0xc] sm:$0xf]
      %v189 = vld [vmem:[%s1 + $0x10] sm:$0xf]
      %v190 = vld [vmem:[%s1 + $0x14] sm:$0xf]
      %v191 = vld [vmem:[%s1 + $0x18] sm:$0xf]
      %v192 = vld [vmem:[%s1 + $0x1c] sm:$0xf]
      %v193 = vld [vmem:[%s1 + $0x20] sm:$0xf]
      %v194 = vld [vmem:[%s1 + $0x24] sm:$0xf]
      %v195 = vld [vmem:[%s1 + $0x28] sm:$0xf]
      %v196 = vld [vmem:[%s1 + $0x2c] sm:$0xf]
      %v197 = vld [vmem:[%s1 + $0x30] sm:$0xf]
      %v198 = vld [vmem:[%s1 + $0x34] sm:$0xf]
      %v199 = vld [vmem:[%s1 + $0x38] sm:$0xf]
      %v200 = vld [vmem:[%s1 + $0x3c] sm:$0xf]
      %v201 = vld [vmem:[%s1 + $0x40] sm:$0xf]
      %v202 = vld [vmem:[%s1 + $0x44] sm:$0xf]
      %v203 = vld [vmem:[%s1 + $0x48] sm:$0xf]
      %v204 = vld [vmem:[%s1 + $0x4c] sm:$0xf]
      %v205 = vld [vmem:[%s1 + $0x50] sm:$0xf]
      %v206 = vld [vmem:[%s1 + $0x54] sm:$0xf]
      %v207 = vld [vmem:[%s1 + $0x58] sm:$0xf]
      %v208 = vld [vmem:[%s1 + $0x5c] sm:$0xf]
      %v209 = vld [vmem:[%s1 + $0x60] sm:$0xf]
      %v210 = vld [vmem:[%s1 + $0x64] sm:$0xf]
      %v211 = vld [vmem:[%s1 + $0x68] sm:$0xf]
      %v212 = vld [vmem:[%s1 + $0x6c] sm:$0xf]
      %v213 = vld [vmem:[%s1 + $0x70] sm:$0xf]
      %v214 = vld [vmem:[%s1 + $0x74] sm:$0xf]
      %v215 = vld [vmem:[%s1 + $0x78] sm:$0xf]
      %v216 = vld [vmem:[%s1 + $0x7c] sm:$0xf]
      %v217 = vld [vmem:[%s2] sm:$0x1]
      %v219 = vlaneseq
      %v220 = vshrl.u32 %v219, 7
      %v221 = vsub.s32 0, %v220
      %v222 = vrot.slane %v217, %v221
      %v231 = vunpack.c.l.b16 %v178
      %v232 = vunpack.c.h.b16 %v178
      %v233 = vunpack.c.l.b16 %v179
      %v234 = vunpack.c.h.b16 %v179
      %v235 = vunpack.c.l.b16 %v180
      %v236 = vunpack.c.h.b16 %v180
      %v237 = vunpack.c.l.b16 %v181
      %v238 = vunpack.c.h.b16 %v181
      %v239 = vunpack.c.l.b16 %v182
      %v240 = vunpack.c.h.b16 %v182
      %v241 = vunpack.c.l.b16 %v183
      %v242 = vunpack.c.h.b16 %v183
      %v243 = vunpack.c.l.b16 %v184
      %v244 = vunpack.c.h.b16 %v184
      %v245 = vpack.c.b16 %v233, %v231
      %v246 = vpack.c.b16 %v234, %v232
      %v247 = vpack.c.b16 %v237, %v235
      %v248 = vpack.c.b16 %v238, %v236
      %v249 = vpack.c.b16 %v241, %v239
      %v250 = vpack.c.b16 %v242, %v240
      %v251 = vpack.c.b16 %v243, %v243
      %v252 = vpack.c.b16 %v244, %v244
      %v293 = vunpack.c.l.b16 %v185
      %v294 = vunpack.c.l.b16 %v186
      %v295 = vunpack.c.l.b16 %v187
      %v296 = vunpack.c.l.b16 %v188
      %v297 = vunpack.c.l.b16 %v189
      %v298 = vunpack.c.l.b16 %v190
      %v299 = vunpack.c.l.b16 %v191
      %v300 = vunpack.c.l.b16 %v192
      %v301 = vunpack.c.l.b16 %v193
      %v302 = vunpack.c.l.b16 %v194
      %v303 = vunpack.c.l.b16 %v195
      %v304 = vunpack.c.l.b16 %v196
      %v305 = vunpack.c.l.b16 %v197
      %v306 = vunpack.c.l.b16 %v198
      %v307 = vunpack.c.l.b16 %v199
      %v308 = vunpack.c.l.b16 %v200
      %v309 = vunpack.c.l.b16 %v201
      %v310 = vunpack.c.l.b16 %v202
      %v311 = vunpack.c.l.b16 %v203
      %v312 = vunpack.c.l.b16 %v204
      %v313 = vunpack.c.l.b16 %v205
      %v314 = vunpack.c.l.b16 %v206
      %v315 = vunpack.c.l.b16 %v207
      %v316 = vunpack.c.l.b16 %v208
      %v317 = vunpack.c.l.b16 %v209
      %v318 = vunpack.c.l.b16 %v210
      %v319 = vunpack.c.l.b16 %v211
      %v320 = vunpack.c.l.b16 %v212
      %v321 = vunpack.c.l.b16 %v213
      %v322 = vunpack.c.l.b16 %v214
      %v323 = vunpack.c.l.b16 %v215
      %v324 = vunpack.c.l.b16 %v216
      %v325 = vpack.c.b16 %v294, %v293
      %v326 = vpack.c.b16 %v296, %v295
      %v327 = vpack.c.b16 %v298, %v297
      %v328 = vpack.c.b16 %v300, %v299
      %v329 = vpack.c.b16 %v302, %v301
      %v330 = vpack.c.b16 %v304, %v303
      %v331 = vpack.c.b16 %v306, %v305
      %v332 = vpack.c.b16 %v308, %v307
      %v333 = vpack.c.b16 %v310, %v309
      %v334 = vpack.c.b16 %v312, %v311
      %v335 = vpack.c.b16 %v314, %v313
      %v336 = vpack.c.b16 %v316, %v315
      %v337 = vpack.c.b16 %v318, %v317
      %v338 = vpack.c.b16 %v320, %v319
      %v339 = vpack.c.b16 %v322, %v321
      %v340 = vpack.c.b16 %v324, %v323
      %357 = vmatprep.subr.bf16.mxu0 0
      %358 = vmatpush1.bf16.msra.mxu0 %v325
      %359 = vmatprep.subr.bf16.mxu0 0
      %360 = vmatpush1.bf16.msra.mxu0 %v326
      %361 = vmatprep.subr.bf16.mxu0 0
      %362 = vmatpush1.bf16.msra.mxu0 %v327
      %363 = vmatprep.subr.bf16.mxu0 0
      %364 = vmatpush1.bf16.msra.mxu0 %v328
      %365 = vmatprep.subr.bf16.mxu0 0
      %366 = vmatpush1.bf16.msra.mxu0 %v329
      %367 = vmatprep.subr.bf16.mxu0 0
      %368 = vmatpush1.bf16.msra.mxu0 %v330
      %369 = vmatprep.subr.bf16.mxu0 0
      %370 = vmatpush1.bf16.msra.mxu0 %v331
      %371 = vmatprep.subr.bf16.mxu0 0
      %372 = vmatpush1.bf16.msra.mxu0 %v332
      %373 = vmatprep.subr.bf16.mxu0 0
      %374 = vmatpush1.bf16.msra.mxu0 %v333
      %375 = vmatprep.subr.bf16.mxu0 0
      %376 = vmatpush1.bf16.msra.mxu0 %v334
      %377 = vmatprep.subr.bf16.mxu0 0
      %378 = vmatpush1.bf16.msra.mxu0 %v335
      %379 = vmatprep.subr.bf16.mxu0 0
      %380 = vmatpush1.bf16.msra.mxu0 %v336
      %381 = vmatprep.subr.bf16.mxu0 0
      %382 = vmatpush1.bf16.msra.mxu0 %v337
      %383 = vmatprep.subr.bf16.mxu0 0
      %384 = vmatpush1.bf16.msra.mxu0 %v338
      %385 = vmatprep.subr.bf16.mxu0 0
      %386 = vmatpush1.bf16.msra.mxu0 %v339
      %387 = vmatprep.subr.bf16.mxu0 0
      %388 = vmatpush1.bf16.msra.mxu0 %v340
      %389 = vmatprep.mubr.bf16.mxu0 %v246
      %390 = vmatmul.mubr.bf16.gmra.mrb[0].mxu0 %v245
      %v391 = vpop.f32.mrb[0].mxu0
      %v392 = vadd.f32 %v222, %v391
      %v393 = vpop.f32.mrb[0].mxu0
      %v394 = vpop.f32.mrb[0].mxu0
      %v395 = vadd.f32 %v222, %v394
      %v396 = vpop.f32.mrb[0].mxu0
      %397 = vmatprep.mubr.bf16.mxu0 %v248
      %398 = vmatmul.mubr.bf16.gmra.mrb[0].mxu0 %v247
      %v399 = vpop.f32.mrb[0].mxu0
      %v400 = vadd.f32 %v222, %v399
      %v401 = vpop.f32.mrb[0].mxu0
      %v402 = vpop.f32.mrb[0].mxu0
      %v403 = vadd.f32 %v222, %v402
      %v404 = vpop.f32.mrb[0].mxu0
      %405 = vmatprep.mubr.bf16.mxu0 %v250
      %406 = vmatmul.mubr.bf16.gmra.mrb[0].mxu0 %v249
      %v407 = vpop.f32.mrb[0].mxu0
      %v408 = vadd.f32 %v222, %v407
      %v409 = vpop.f32.mrb[0].mxu0
      %v410 = vpop.f32.mrb[0].mxu0
      %v411 = vadd.f32 %v222, %v410
      %v412 = vpop.f32.mrb[0].mxu0
      %413 = vmatprep.mubr.bf16.mxu0 %v252
      %414 = vmatmul.mubr.bf16.gmra.mrb[0].mxu0 %v251
      %v415 = vpop.f32.mrb[0].mxu0
      %v416 = vadd.f32 %v222, %v415
      %v417 = vpop.f32.mrb[0].mxu0
      %v418 = vpop.f32.mrb[0].mxu0
      %v419 = vpop.f32.mrb[0].mxu0
      %420 = vdwg.mxu0
      %v421 = vmax.f32 %v392, 0.0
      %v422 = vmax.f32 %v395, 0.0
      %v423 = vmax.f32 %v400, 0.0
      %v424 = vmax.f32 %v403, 0.0
      %v425 = vmax.f32 %v408, 0.0
      %v426 = vmax.f32 %v411, 0.0
      %v427 = vmax.f32 %v416, 0.0
      %v428 = vpack.c.bf16 %v422, %v421
      %v429 = vpack.c.bf16 %v424, %v423
      %v430 = vpack.c.bf16 %v426, %v425
      %v431 = vpack.c.bf16 %v427, %v427
      %v436 = vunpack.c.l.b16 %v428
      %v437 = vunpack.c.h.b16 %v428
      %v438 = vunpack.c.l.b16 %v429
      %v439 = vunpack.c.h.b16 %v429
      %v440 = vunpack.c.l.b16 %v430
      %v441 = vunpack.c.h.b16 %v430
      %v442 = vunpack.c.l.b16 %v431
      %v443 = vpack.c.b16 %v436, %v436
      %v444 = vpack.c.b16 %v437, %v437
      %v445 = vpack.c.b16 %v438, %v438
      %v446 = vpack.c.b16 %v439, %v439
      %v447 = vpack.c.b16 %v440, %v440
      %v448 = vpack.c.b16 %v441, %v441
      %v449 = vpack.c.b16 %v442, %v442
      %vm457 = vcmask 257024
      %458 = vst.msk [vmem:[%s175] sm:$0xf] %vm457, %v443
      %459 = vst.msk [vmem:[%s175 + $0x4] sm:$0xf] %vm457, %v444
      %460 = vst.msk [vmem:[%s175 + $0x8] sm:$0xf] %vm457, %v445
      %461 = vst.msk [vmem:[%s175 + $0xc] sm:$0xf] %vm457, %v446
      %462 = vst.msk [vmem:[%s175 + $0x10] sm:$0xf] %vm457, %v447
      %463 = vst.msk [vmem:[%s175 + $0x14] sm:$0xf] %vm457, %v448
      %464 = vst.msk [vmem:[%s175 + $0x18] sm:$0xf] %vm457, %v449
      %s465 = smul.u32 7, %s14
      %p466 = scmp.lt.s32.totalorder %s465, 20
      %s467 = scalar_select %p466, %s465, 20
      %s468 = smul.addr %s467, 4
      %s469 = scalar_lea.vmem %s3, %s468
      // Predicated region
      $region33: #{vae_forward.11} parent=31 // pred_check
        %p470 = pneg %p100
      $region34: #{vae_forward.11} parent=31 // pred_check_branch
        %472 = sbr.rel (%p470) target = $region36
      $region35: #{vae_forward.11} parent=31 // pred_region
        %s473 = smul.u32 7, %s14
      $region36: #{vae_forward.11} parent=31 // pred_fallthru
        _
    $region32: #{vae_forward.11} parent=5 // pred_fallthru
      _
    %p474 = scmp.le.s32.totalorder 2, %s9
    // Predicated region
    $region37: #{vae_forward.11} parent=5 // pred_check
      %p475 = pneg %p474
    $region38: #{vae_forward.11} parent=5 // pred_check_branch
      %477 = sbr.rel (%p475) target = $region40
    $region39: #{vae_forward.11} parent=5 // pred_region
      %s478 = ssub.s32 %s9, 2
      // Predicated region
      $region41: #{vae_forward.11} parent=39 // pred_check
        %p479 = pneg %p106
      $region42: #{vae_forward.11} parent=39 // pred_check_branch
        %481 = sbr.rel (%p479) target = $region44
      $region43: #{vae_forward.11} parent=39 // pred_region
        %s482 = smul.u32 7, %s15
        %p483 = scmp.lt.s32.totalorder %s482, 20
        %s484 = scalar_select %p483, %s482, 20
        %s485 = smul.addr %s484, 4
        %s486 = scalar_lea.vmem %s3, %s485
      $region44: #{vae_forward.11} parent=39 // pred_fallthru
        _
    $region40: #{vae_forward.11} parent=5 // pred_fallthru
      _
  $region6: #{vae_forward.11} parent=0 // loop_footer
    %s13 = sadd.s32 1, %s9
  $region7: #{vae_forward.11} parent=0 // loop_footer_branch
    %8 = sbr.rel target = $region3
  $region8: #{vae_forward.11} parent=0 // loop_exit
    _

// kernel: vae_forward.12
$region0: #{vae_forward.12}
  #allocation0 [shape = 'u32[]', space=smem, size = 0x4, offset = 0x4, fixed_abs, tag = 'smem constant byte address 0x4 - core index']
  #allocation1 [shape = 'u32[144,128]{1,0:T(1,128)}', space=vmem, size = 0x12000, scoped, tag = 'internal scratch']
  %s0 = inlined_call_operand.vmem [shape: bf16[32,288], index: 0, kind: input, shape index: {}]
  %s1 = inlined_call_operand.vmem [shape: bf16[288,64], index: 1, kind: input, shape index: {}]
  %s2 = inlined_call_operand.vmem [shape: f32[1,64], index: 2, kind: input, shape index: {}]
  %s3 = inlined_call_operand.vmem [shape: bf16[32,64], index: 3, kind: output, shape index: {}]
  %s4 = sld [smem:[#allocation0]]
  $region45: #{vae_forward.12} parent=0
    _
  %s6 = ssub.s32 1, %s4
  %s7 = scalar_select 0, %s6, %s4
  loop: start=0, step=1, limit=4
  $region2: #{vae_forward.12} parent=0 // loop_pre_header
    _
  $region3: #{vae_forward.12} parent=0 // loop_header
    %s9 = sphi 0, %s13
    %p10 = scmp.ge.s32.totalorder %s9, 4
    %s19 = sphi 0, %s21
    %s22 = sphi 0, %s19
    %s23 = sphi 0, %s22
    %s39 = sphi 0, %s23
    %s43 = sphi 0, %s43
    %s45 = sphi 0, %s43
    %s46 = sphi 0, %s45
    %s60 = sphi 0, %s46
    %s64 = sphi 0, %s64
    %s66 = sphi 0, %s64
    %s67 = sphi 0, %s66
    %s81 = sphi 0, %s67
    %s87 = sphi 0, %s89
    %s90 = sphi 0, %s87
    %s91 = sphi 0, %s90
    %s107 = sphi 0, %s91
  $region4: #{vae_forward.12} parent=0 // loop_header_branch
    %12 = sbr.rel (%p10) target = $region8
  $region5: #{vae_forward.12} parent=0 // loop_body
    %s14 = ssub.s32 %s9, 1
    %s15 = ssub.s32 %s9, 2
    %s16 = sadd.s32 %s9, 1
    %s17 = ssub.s32 %s9, %s16
    %p18 = scmp.eq.s32.totalorder %s17, 0
    %s20 = sadd.s32 %s19, 1
    %s21 = scalar_select %p18, %s19, %s20
    %p24 = pneg %p18
    %p25 = scmp.eq.s32.totalorder %s9, 1
    %p26 = por %p24, %p25
    %p27 = scmp.ne.s32.totalorder %s19, %s22
    %p28 = scmp.eq.s32.totalorder %s9, 0
    %p29 = por %p27, %p28
    %p30 = scmp.ne.s32.totalorder %s19, %s22
    %p31 = scmp.eq.s32.totalorder %s14, 1
    %p32 = por %p30, %p31
    %p33 = scmp.ne.s32.totalorder %s22, %s23
    %p34 = scmp.eq.s32.totalorder %s14, 0
    %p35 = por %p33, %p34
    %p36 = scmp.ne.s32.totalorder %s22, %s23
    %p37 = scmp.eq.s32.totalorder %s15, 1
    %p38 = por %p36, %p37
    %p40 = scmp.ne.s32.totalorder %s23, %s39
    %p41 = scmp.eq.s32.totalorder %s15, 0
    %p42 = por %p40, %p41
    %s44 = sadd.s32 %s43, 1
    %p47 = scmp.eq.s32.totalorder %s9, 1
    %p48 = scmp.ne.s32.totalorder %s43, %s45
    %p49 = scmp.eq.s32.totalorder %s9, 0
    %p50 = por %p48, %p49
    %p51 = scmp.ne.s32.totalorder %s43, %s45
    %p52 = scmp.eq.s32.totalorder %s14, 1
    %p53 = por %p51, %p52
    %p54 = scmp.ne.s32.totalorder %s45, %s46
    %p55 = scmp.eq.s32.totalorder %s14, 0
    %p56 = por %p54, %p55
    %p57 = scmp.ne.s32.totalorder %s45, %s46
    %p58 = scmp.eq.s32.totalorder %s15, 1
    %p59 = por %p57, %p58
    %p61 = scmp.ne.s32.totalorder %s46, %s60
    %p62 = scmp.eq.s32.totalorder %s15, 0
    %p63 = por %p61, %p62
    %s65 = sadd.s32 %s64, 1
    %p68 = scmp.eq.s32.totalorder %s9, 1
    %p69 = scmp.ne.s32.totalorder %s64, %s66
    %p70 = scmp.eq.s32.totalorder %s9, 0
    %p71 = por %p69, %p70
    %p72 = scmp.ne.s32.totalorder %s64, %s66
    %p73 = scmp.eq.s32.totalorder %s14, 1
    %p74 = por %p72, %p73
    %p75 = scmp.ne.s32.totalorder %s66, %s67
    %p76 = scmp.eq.s32.totalorder %s14, 0
    %p77 = por %p75, %p76
    %p78 = scmp.ne.s32.totalorder %s66, %s67
    %p79 = scmp.eq.s32.totalorder %s15, 1
    %p80 = por %p78, %p79
    %p82 = scmp.ne.s32.totalorder %s67, %s81
    %p83 = scmp.eq.s32.totalorder %s15, 0
    %p84 = por %p82, %p83
    %s85 = ssub.s32 %s9, %s16
    %p86 = scmp.eq.s32.totalorder %s85, 0
    %s88 = sadd.s32 %s87, 1
    %s89 = scalar_select %p86, %s87, %s88
    %p92 = pneg %p86
    %p93 = scmp.eq.s32.totalorder %s9, 1
    %p94 = por %p92, %p93
    %p95 = scmp.ne.s32.totalorder %s87, %s90
    %p96 = scmp.eq.s32.totalorder %s9, 0
    %p97 = por %p95, %p96
    %p98 = scmp.ne.s32.totalorder %s87, %s90
    %p99 = scmp.eq.s32.totalorder %s14, 1
    %p100 = por %p98, %p99
    %p101 = scmp.ne.s32.totalorder %s90, %s91
    %p102 = scmp.eq.s32.totalorder %s14, 0
    %p103 = por %p101, %p102
    %p104 = scmp.ne.s32.totalorder %s90, %s91
    %p105 = scmp.eq.s32.totalorder %s15, 1
    %p106 = por %p104, %p105
    %p108 = scmp.ne.s32.totalorder %s91, %s107
    %p109 = scmp.eq.s32.totalorder %s15, 0
    %p110 = por %p108, %p109
    %p111 = scmp.le.s32.totalorder 1, %s9
    %p112 = scmp.lt.s32.totalorder %s9, 3
    %p113 = pnand %p111, %p112
    %p114 = pneg %p113
    // Predicated region
    $region9: #{vae_forward.12} parent=5 // pred_check
      _
    $region10: #{vae_forward.12} parent=5 // pred_check_branch
      %116 = sbr.rel (%p113) target = $region12
    $region11: #{vae_forward.12} parent=5 // pred_region
      %s117 = ssub.s32 %s9, 1
      // Predicated region
      $region13: #{vae_forward.12} parent=11 // pred_check
        %p118 = pneg %p56
      $region14: #{vae_forward.12} parent=11 // pred_check_branch
        %120 = sbr.rel (%p118) target = $region16
      $region15: #{vae_forward.12} parent=11 // pred_region
        _
      $region16: #{vae_forward.12} parent=11 // pred_fallthru
        _
      // Predicated region
      $region17: #{vae_forward.12} parent=11 // pred_check
        %p121 = pneg %p77
      $region18: #{vae_forward.12} parent=11 // pred_check_branch
        %123 = sbr.rel (%p121) target = $region20
      $region19: #{vae_forward.12} parent=11 // pred_region
        _
      $region20: #{vae_forward.12} parent=11 // pred_fallthru
        _
    $region12: #{vae_forward.12} parent=5 // pred_fallthru
      _
    %p124 = scmp.lt.s32.totalorder %s9, 2
    // Predicated region
    $region21: #{vae_forward.12} parent=5 // pred_check
      %p125 = pneg %p124
    $region22: #{vae_forward.12} parent=5 // pred_check_branch
      %127 = sbr.rel (%p125) target = $region24
    $region23: #{vae_forward.12} parent=5 // pred_region
      // Predicated region
      $region25: #{vae_forward.12} parent=23 // pred_check
        %p128 = pneg %p29
      $region26: #{vae_forward.12} parent=23 // pred_check_branch
        %130 = sbr.rel (%p128) target = $region28
      $region27: #{vae_forward.12} parent=23 // pred_region
        %s131 = smul.u32 2, %s9
        %p132 = scmp.lt.s32.totalorder %s131, 3
        %s133 = scalar_select %p132, %s131, 3
        %s134 = smul.addr %s133, 3
        %s135 = smul.addr %s134, 4
        %s136 = scalar_lea.vmem %s0, %s135
        %s137 = smul.u32 2, %s9
      $region28: #{vae_forward.12} parent=23 // pred_fallthru
        _
    $region24: #{vae_forward.12} parent=5 // pred_fallthru
      _
    %p138 = scmp.le.s32.totalorder 1, %s9
    %p139 = scmp.lt.s32.totalorder %s9, 3
    %p140 = pnand %p138, %p139
    %p141 = pneg %p140
    // Predicated region
    $region29: #{vae_forward.12} parent=5 // pred_check
      _
    $region30: #{vae_forward.12} parent=5 // pred_check_branch
      %143 = sbr.rel (%p140) target = $region32
    $region31: #{vae_forward.12} parent=5 // pred_region
      %s144 = ssub.s32 %s9, 1
      %s145 = smul.u32 2, %s14
      %p146 = scmp.lt.s32.totalorder %s145, 3
      %s147 = scalar_select %p146, %s145, 3
      %s148 = smul.addr %s147, 3
      %s149 = smul.addr %s148, 4
      %s150 = scalar_lea.vmem %s0, %s149
      %p151 = pneg %p35
      %p152 = pneg %p32
      %p153 = pneg %p56
      %p154 = pneg %p53
      %p155 = pneg %p77
      %p156 = pneg %p74
      %p157 = pneg %p103
      %p158 = pneg %p100
      %s159 = smul.u32 2, %s14
      %p160 = scmp.lt.s32.totalorder %s159, 3
      %s161 = scalar_select %p160, %s159, 3
      %s162 = smul.addr %s161, 4
      %s163 = scalar_lea.vmem %s3, %s162
      %s164 = smul.u32 2, %s14
      %p165 = scmp.lt.s32.totalorder %s164, 3
      %s166 = scalar_select %p165, %s164, 3
      %s167 = smul.addr %s166, 3
      %s168 = smul.addr %s167, 4
      %s169 = scalar_lea.vmem %s0, %s168
      %s170 = smul.u32 2, %s14
      %s171 = smul.u32 2, %s14
      %p172 = scmp.lt.s32.totalorder %s171, 3
      %s173 = scalar_select %p172, %s171, 3
      %s174 = smul.addr %s173, 4
      %s175 = scalar_lea.vmem %s3, %s174
      %s176 = smul.u32 2, %s14
      %v178 = vld [vmem:[%s169] sm:$0xff]
      %v179 = vld [vmem:[%s169 + $0x8] sm:$0xf]
      %v180 = vld [vmem:[%s169 + $0xc] sm:$0xff]
      %v181 = vld [vmem:[%s169 + $0x14] sm:$0xf]
      %v182 = vld [vmem:[%s1] sm:$0xf]
      %v183 = vld [vmem:[%s1 + $0x4] sm:$0xf]
      %v184 = vld [vmem:[%s1 + $0x8] sm:$0xf]
      %v185 = vld [vmem:[%s1 + $0xc] sm:$0xf]
      %v186 = vld [vmem:[%s1 + $0x10] sm:$0xf]
      %v187 = vld [vmem:[%s1 + $0x14] sm:$0xf]
      %v188 = vld [vmem:[%s1 + $0x18] sm:$0xf]
      %v189 = vld [vmem:[%s1 + $0x1c] sm:$0xf]
      %v190 = vld [vmem:[%s1 + $0x20] sm:$0xf]
      %v191 = vld [vmem:[%s1 + $0x24] sm:$0xf]
      %v192 = vld [vmem:[%s1 + $0x28] sm:$0xf]
      %v193 = vld [vmem:[%s1 + $0x2c] sm:$0xf]
      %v194 = vld [vmem:[%s1 + $0x30] sm:$0xf]
      %v195 = vld [vmem:[%s1 + $0x34] sm:$0xf]
      %v196 = vld [vmem:[%s1 + $0x38] sm:$0xf]
      %v197 = vld [vmem:[%s1 + $0x3c] sm:$0xf]
      %v198 = vld [vmem:[%s1 + $0x40] sm:$0xf]
      %v199 = vld [vmem:[%s1 + $0x44] sm:$0xf]
      %v200 = vld [vmem:[%s1 + $0x48] sm:$0xf]
      %v201 = vld [vmem:[%s1 + $0x4c] sm:$0xf]
      %v202 = vld [vmem:[%s1 + $0x50] sm:$0xf]
      %v203 = vld [vmem:[%s1 + $0x54] sm:$0xf]
      %v204 = vld [vmem:[%s1 + $0x58] sm:$0xf]
      %v205 = vld [vmem:[%s1 + $0x5c] sm:$0xf]
      %v206 = vld [vmem:[%s1 + $0x60] sm:$0xf]
      %v207 = vld [vmem:[%s1 + $0x64] sm:$0xf]
      %v208 = vld [vmem:[%s1 + $0x68] sm:$0xf]
      %v209 = vld [vmem:[%s1 + $0x6c] sm:$0xf]
      %v210 = vld [vmem:[%s1 + $0x70] sm:$0xf]
      %v211 = vld [vmem:[%s1 + $0x74] sm:$0xf]
      %v212 = vld [vmem:[%s1 + $0x78] sm:$0xf]
      %v213 = vld [vmem:[%s1 + $0x7c] sm:$0xf]
      %v214 = vld [vmem:[%s1 + $0x80] sm:$0xf]
      %v215 = vld [vmem:[%s1 + $0x84] sm:$0xf]
      %v216 = vld [vmem:[%s1 + $0x88] sm:$0xf]
      %v217 = vld [vmem:[%s1 + $0x8c] sm:$0xf]
      %v218 = vld [vmem:[%s2] sm:$0x1]
      %v220 = vlaneseq
      %v221 = vshrl.u32 %v220, 7
      %v222 = vsub.s32 0, %v221
      %v223 = vrot.slane %v218, %v222
      %v229 = vunpack.c.l.b16 %v178
      %v230 = vunpack.c.h.b16 %v178
      %v231 = vunpack.c.l.b16 %v179
      %v232 = vunpack.c.l.b16 %v180
      %v233 = vunpack.c.h.b16 %v180
      %v234 = vunpack.c.l.b16 %v181
      %v235 = vpack.c.b16 %v232, %v229
      %v236 = vpack.c.b16 %v233, %v230
      %v237 = vpack.c.b16 %v234, %v231
      %v276 = vunpack.c.l.b16 %v182
      %v277 = vunpack.c.l.b16 %v183
      %v278 = vunpack.c.l.b16 %v184
      %v279 = vunpack.c.l.b16 %v185
      %v280 = vunpack.c.l.b16 %v186
      %v281 = vunpack.c.l.b16 %v187
      %v282 = vunpack.c.l.b16 %v188
      %v283 = vunpack.c.l.b16 %v189
      %v284 = vunpack.c.l.b16 %v190
      %v285 = vunpack.c.l.b16 %v191
      %v286 = vunpack.c.l.b16 %v192
      %v287 = vunpack.c.l.b16 %v193
      %v288 = vunpack.c.l.b16 %v194
      %v289 = vunpack.c.l.b16 %v195
      %v290 = vunpack.c.l.b16 %v196
      %v291 = vunpack.c.l.b16 %v197
      %v292 = vunpack.c.l.b16 %v198
      %v293 = vunpack.c.l.b16 %v199
      %v294 = vunpack.c.l.b16 %v200
      %v295 = vunpack.c.l.b16 %v201
      %v296 = vunpack.c.l.b16 %v202
      %v297 = vunpack.c.l.b16 %v203
      %v298 = vunpack.c.l.b16 %v204
      %v299 = vunpack.c.l.b16 %v205
      %v300 = vunpack.c.l.b16 %v206
      %v301 = vunpack.c.l.b16 %v207
      %v302 = vunpack.c.l.b16 %v208
      %v303 = vunpack.c.l.b16 %v209
      %v304 = vunpack.c.l.b16 %v210
      %v305 = vunpack.c.l.b16 %v211
      %v306 = vunpack.c.l.b16 %v212
      %v307 = vunpack.c.l.b16 %v213
      %v308 = vunpack.c.l.b16 %v214
      %v309 = vunpack.c.l.b16 %v215
      %v310 = vunpack.c.l.b16 %v216
      %v311 = vunpack.c.l.b16 %v217
      %v312 = vpack.c.b16 %v277, %v276
      %v313 = vpack.c.b16 %v279, %v278
      %v314 = vpack.c.b16 %v281, %v280
      %v315 = vpack.c.b16 %v283, %v282
      %v316 = vpack.c.b16 %v285, %v284
      %v317 = vpack.c.b16 %v287, %v286
      %v318 = vpack.c.b16 %v289, %v288
      %v319 = vpack.c.b16 %v291, %v290
      %v320 = vpack.c.b16 %v293, %v292
      %v321 = vpack.c.b16 %v295, %v294
      %v322 = vpack.c.b16 %v297, %v296
      %v323 = vpack.c.b16 %v299, %v298
      %v324 = vpack.c.b16 %v301, %v300
      %v325 = vpack.c.b16 %v303, %v302
      %v326 = vpack.c.b16 %v305, %v304
      %v327 = vpack.c.b16 %v307, %v306
      %v328 = vpack.c.b16 %v309, %v308
      %v329 = vpack.c.b16 %v311, %v310
      %vm348 = vcmask 261120
      %v350 = vsel %vm348, %v237, 0
      %352 = vmatprep.subr.bf16.mxu0 0
      %353 = vmatpush1.bf16.msra.mxu0 %v312
      %354 = vmatprep.subr.bf16.mxu0 0
      %355 = vmatpush1.bf16.msra.mxu0 %v313
      %356 = vmatprep.subr.bf16.mxu0 0
      %357 = vmatpush1.bf16.msra.mxu0 %v314
      %358 = vmatprep.subr.bf16.mxu0 0
      %359 = vmatpush1.bf16.msra.mxu0 %v315
      %360 = vmatprep.subr.bf16.mxu0 0
      %361 = vmatpush1.bf16.msra.mxu0 %v316
      %362 = vmatprep.subr.bf16.mxu0 0
      %363 = vmatpush1.bf16.msra.mxu0 %v317
      %364 = vmatprep.subr.bf16.mxu0 0
      %365 = vmatpush1.bf16.msra.mxu0 %v318
      %366 = vmatprep.subr.bf16.mxu0 0
      %367 = vmatpush1.bf16.msra.mxu0 %v319
      %368 = vmatprep.subr.bf16.mxu0 0
      %369 = vmatpush1.bf16.msra.mxu0 %v320
      %370 = vmatprep.subr.bf16.mxu0 0
      %371 = vmatpush1.bf16.msra.mxu0 %v321
      %372 = vmatprep.subr.bf16.mxu0 0
      %373 = vmatpush1.bf16.msra.mxu0 %v322
      %374 = vmatprep.subr.bf16.mxu0 0
      %375 = vmatpush1.bf16.msra.mxu0 %v323
      %376 = vmatprep.subr.bf16.mxu0 0
      %377 = vmatpush1.bf16.msra.mxu0 %v324
      %378 = vmatprep.subr.bf16.mxu0 0
      %379 = vmatpush1.bf16.msra.mxu0 %v325
      %380 = vmatprep.subr.bf16.mxu0 0
      %381 = vmatpush1.bf16.msra.mxu0 %v326
      %382 = vmatprep.subr.bf16.mxu0 0
      %383 = vmatpush1.bf16.msra.mxu0 %v327
      %384 = vmatprep.mubr.bf16.mxu0 %v236
      %385 = vmatmul.mubr.bf16.gmra.mrb[0].mxu0 %v235
      %v386 = vpop.f32.mrb[0].mxu0
      %v387 = vadd.f32 %v223, %v386
      %v388 = vpop.f32.mrb[0].mxu0
      %v389 = vpop.f32.mrb[0].mxu0
      %v390 = vadd.f32 %v223, %v389
      %v391 = vpop.f32.mrb[0].mxu0
      %392 = vdwg.mxu0
      %393 = vmatprep.subr.bf16.mxu0 0
      %394 = vmatpush1.bf16.msra.mxu0 %v328
      %395 = vmatprep.subr.bf16.mxu0 0
      %396 = vmatpush1.bf16.msra.mxu0 %v329
      %397 = vmatprep.subr.bf16.mxu0 0
      %398 = vmatpush1.bf16.msra.mxu0 0
      %399 = vmatprep.subr.bf16.mxu0 0
      %400 = vmatpush1.bf16.msra.mxu0 0
      %401 = vmatprep.subr.bf16.mxu0 0
      %402 = vmatpush1.bf16.msra.mxu0 0
      %403 = vmatprep.subr.bf16.mxu0 0
      %404 = vmatpush1.bf16.msra.mxu0 0
      %405 = vmatprep.subr.bf16.mxu0 0
      %406 = vmatpush1.bf16.msra.mxu0 0
      %407 = vmatprep.subr.bf16.mxu0 0
      %408 = vmatpush1.bf16.msra.mxu0 0
      %409 = vmatprep.subr.bf16.mxu0 0
      %410 = vmatpush1.bf16.msra.mxu0 0
      %411 = vmatprep.subr.bf16.mxu0 0
      %412 = vmatpush1.bf16.msra.mxu0 0
      %413 = vmatprep.subr.bf16.mxu0 0
      %414 = vmatpush1.bf16.msra.mxu0 0
      %415 = vmatprep.subr.bf16.mxu0 0
      %416 = vmatpush1.bf16.msra.mxu0 0
      %417 = vmatprep.subr.bf16.mxu0 0
      %418 = vmatpush1.bf16.msra.mxu0 0
      %419 = vmatprep.subr.bf16.mxu0 0
      %420 = vmatpush1.bf16.msra.mxu0 0
      %421 = vmatprep.subr.bf16.mxu0 0
      %422 = vmatpush1.bf16.msra.mxu0 0
      %423 = vmatprep.subr.bf16.mxu0 0
      %424 = vmatpush1.bf16.msra.mxu0 0
      %425 = vmatprep.mubr.bf16.mxu0 0
      %426 = vmatmul.mubr.bf16.gmra.mrb[0].mxu0 %v350
      %v427 = vpop.f32.mrb[0].mxu0
      %v428 = vadd.f32 %v387, %v427
      %v429 = vpop.f32.mrb[0].mxu0
      %v430 = vpop.f32.mrb[0].mxu0
      %v431 = vadd.f32 %v390, %v430
      %v432 = vpop.f32.mrb[0].mxu0
      %433 = vdwg.mxu0
      %v434 = vmax.f32 %v428, 0.0
      %v435 = vmax.f32 %v431, 0.0
      %v436 = vpack.c.bf16 %v435, %v434
      %v438 = vunpack.c.l.b16 %v436
      %v439 = vunpack.c.h.b16 %v436
      %v440 = vpack.c.b16 %v438, %v438
      %v441 = vpack.c.b16 %v439, %v439
      %vm444 = vcmask 519168
      %445 = vst.msk [vmem:[%s175] sm:$0xf] %vm444, %v440
      %446 = vst.msk [vmem:[%s175 + $0x4] sm:$0xf] %vm444, %v441
      %s447 = smul.u32 2, %s14
      %p448 = scmp.lt.s32.totalorder %s447, 3
      %s449 = scalar_select %p448, %s447, 3
      %s450 = smul.addr %s449, 4
      %s451 = scalar_lea.vmem %s3, %s450
      // Predicated region
      $region33: #{vae_forward.12} parent=31 // pred_check
        %p452 = pneg %p100
      $region34: #{vae_forward.12} parent=31 // pred_check_branch
        %454 = sbr.rel (%p452) target = $region36
      $region35: #{vae_forward.12} parent=31 // pred_region
        %s455 = smul.u32 2, %s14
      $region36: #{vae_forward.12} parent=31 // pred_fallthru
        _
    $region32: #{vae_forward.12} parent=5 // pred_fallthru
      _
    %p456 = scmp.le.s32.totalorder 2, %s9
    // Predicated region
    $region37: #{vae_forward.12} parent=5 // pred_check
      %p457 = pneg %p456
    $region38: #{vae_forward.12} parent=5 // pred_check_branch
      %459 = sbr.rel (%p457) target = $region40
    $region39: #{vae_forward.12} parent=5 // pred_region
      %s460 = ssub.s32 %s9, 2
      // Predicated region
      $region41: #{vae_forward.12} parent=39 // pred_check
        %p461 = pneg %p106
      $region42: #{vae_forward.12} parent=39 // pred_check_branch
        %463 = sbr.rel (%p461) target = $region44
      $region43: #{vae_forward.12} parent=39 // pred_region
        %s464 = smul.u32 2, %s15
        %p465 = scmp.lt.s32.totalorder %s464, 3
        %s466 = scalar_select %p465, %s464, 3
        %s467 = smul.addr %s466, 4
        %s468 = scalar_lea.vmem %s3, %s467
      $region44: #{vae_forward.12} parent=39 // pred_fallthru
        _
    $region40: #{vae_forward.12} parent=5 // pred_fallthru
      _
  $region6: #{vae_forward.12} parent=0 // loop_footer
    %s13 = sadd.s32 1, %s9
  $region7: #{vae_forward.12} parent=0 // loop_footer_branch
    %8 = sbr.rel target = $region3
  $region8: #{vae_forward.12} parent=0 // loop_exit
    _

// kernel: vae_forward.14
$region0: #{vae_forward.14}
  #allocation0 [shape = 'u32[]', space=smem, size = 0x4, offset = 0x4, fixed_abs, tag = 'smem constant byte address 0x4 - core index']
  #allocation1 [shape = 'u32[144,128]{1,0:T(1,128)}', space=vmem, size = 0x12000, scoped, tag = 'internal scratch']
  %s0 = inlined_call_operand.vmem [shape: bf16[32,64], index: 0, kind: input, shape index: {}]
  %s1 = inlined_call_operand.vmem [shape: bf16[64,288], index: 1, kind: input, shape index: {}]
  %s2 = inlined_call_operand.vmem [shape: f32[1,288], index: 2, kind: input, shape index: {}]
  %s3 = inlined_call_operand.vmem [shape: bf16[32,288], index: 3, kind: output, shape index: {}]
  %s4 = sld [smem:[#allocation0]]
  $region45: #{vae_forward.14} parent=0
    _
  %s6 = ssub.s32 1, %s4
  %s7 = scalar_select 0, %s6, %s4
  loop: start=0, step=1, limit=4
  $region2: #{vae_forward.14} parent=0 // loop_pre_header
    _
  $region3: #{vae_forward.14} parent=0 // loop_header
    %s9 = sphi 0, %s13
    %p10 = scmp.ge.s32.totalorder %s9, 4
    %s19 = sphi 0, %s21
    %s22 = sphi 0, %s19
    %s23 = sphi 0, %s22
    %s39 = sphi 0, %s23
    %s43 = sphi 0, %s43
    %s45 = sphi 0, %s43
    %s46 = sphi 0, %s45
    %s60 = sphi 0, %s46
    %s64 = sphi 0, %s64
    %s66 = sphi 0, %s64
    %s67 = sphi 0, %s66
    %s81 = sphi 0, %s67
    %s87 = sphi 0, %s89
    %s90 = sphi 0, %s87
    %s91 = sphi 0, %s90
    %s107 = sphi 0, %s91
  $region4: #{vae_forward.14} parent=0 // loop_header_branch
    %12 = sbr.rel (%p10) target = $region8
  $region5: #{vae_forward.14} parent=0 // loop_body
    %s14 = ssub.s32 %s9, 1
    %s15 = ssub.s32 %s9, 2
    %s16 = sadd.s32 %s9, 1
    %s17 = ssub.s32 %s9, %s16
    %p18 = scmp.eq.s32.totalorder %s17, 0
    %s20 = sadd.s32 %s19, 1
    %s21 = scalar_select %p18, %s19, %s20
    %p24 = pneg %p18
    %p25 = scmp.eq.s32.totalorder %s9, 1
    %p26 = por %p24, %p25
    %p27 = scmp.ne.s32.totalorder %s19, %s22
    %p28 = scmp.eq.s32.totalorder %s9, 0
    %p29 = por %p27, %p28
    %p30 = scmp.ne.s32.totalorder %s19, %s22
    %p31 = scmp.eq.s32.totalorder %s14, 1
    %p32 = por %p30, %p31
    %p33 = scmp.ne.s32.totalorder %s22, %s23
    %p34 = scmp.eq.s32.totalorder %s14, 0
    %p35 = por %p33, %p34
    %p36 = scmp.ne.s32.totalorder %s22, %s23
    %p37 = scmp.eq.s32.totalorder %s15, 1
    %p38 = por %p36, %p37
    %p40 = scmp.ne.s32.totalorder %s23, %s39
    %p41 = scmp.eq.s32.totalorder %s15, 0
    %p42 = por %p40, %p41
    %s44 = sadd.s32 %s43, 1
    %p47 = scmp.eq.s32.totalorder %s9, 1
    %p48 = scmp.ne.s32.totalorder %s43, %s45
    %p49 = scmp.eq.s32.totalorder %s9, 0
    %p50 = por %p48, %p49
    %p51 = scmp.ne.s32.totalorder %s43, %s45
    %p52 = scmp.eq.s32.totalorder %s14, 1
    %p53 = por %p51, %p52
    %p54 = scmp.ne.s32.totalorder %s45, %s46
    %p55 = scmp.eq.s32.totalorder %s14, 0
    %p56 = por %p54, %p55
    %p57 = scmp.ne.s32.totalorder %s45, %s46
    %p58 = scmp.eq.s32.totalorder %s15, 1
    %p59 = por %p57, %p58
    %p61 = scmp.ne.s32.totalorder %s46, %s60
    %p62 = scmp.eq.s32.totalorder %s15, 0
    %p63 = por %p61, %p62
    %s65 = sadd.s32 %s64, 1
    %p68 = scmp.eq.s32.totalorder %s9, 1
    %p69 = scmp.ne.s32.totalorder %s64, %s66
    %p70 = scmp.eq.s32.totalorder %s9, 0
    %p71 = por %p69, %p70
    %p72 = scmp.ne.s32.totalorder %s64, %s66
    %p73 = scmp.eq.s32.totalorder %s14, 1
    %p74 = por %p72, %p73
    %p75 = scmp.ne.s32.totalorder %s66, %s67
    %p76 = scmp.eq.s32.totalorder %s14, 0
    %p77 = por %p75, %p76
    %p78 = scmp.ne.s32.totalorder %s66, %s67
    %p79 = scmp.eq.s32.totalorder %s15, 1
    %p80 = por %p78, %p79
    %p82 = scmp.ne.s32.totalorder %s67, %s81
    %p83 = scmp.eq.s32.totalorder %s15, 0
    %p84 = por %p82, %p83
    %s85 = ssub.s32 %s9, %s16
    %p86 = scmp.eq.s32.totalorder %s85, 0
    %s88 = sadd.s32 %s87, 1
    %s89 = scalar_select %p86, %s87, %s88
    %p92 = pneg %p86
    %p93 = scmp.eq.s32.totalorder %s9, 1
    %p94 = por %p92, %p93
    %p95 = scmp.ne.s32.totalorder %s87, %s90
    %p96 = scmp.eq.s32.totalorder %s9, 0
    %p97 = por %p95, %p96
    %p98 = scmp.ne.s32.totalorder %s87, %s90
    %p99 = scmp.eq.s32.totalorder %s14, 1
    %p100 = por %p98, %p99
    %p101 = scmp.ne.s32.totalorder %s90, %s91
    %p102 = scmp.eq.s32.totalorder %s14, 0
    %p103 = por %p101, %p102
    %p104 = scmp.ne.s32.totalorder %s90, %s91
    %p105 = scmp.eq.s32.totalorder %s15, 1
    %p106 = por %p104, %p105
    %p108 = scmp.ne.s32.totalorder %s91, %s107
    %p109 = scmp.eq.s32.totalorder %s15, 0
    %p110 = por %p108, %p109
    %p111 = scmp.le.s32.totalorder 1, %s9
    %p112 = scmp.lt.s32.totalorder %s9, 3
    %p113 = pnand %p111, %p112
    %p114 = pneg %p113
    // Predicated region
    $region9: #{vae_forward.14} parent=5 // pred_check
      _
    $region10: #{vae_forward.14} parent=5 // pred_check_branch
      %116 = sbr.rel (%p113) target = $region12
    $region11: #{vae_forward.14} parent=5 // pred_region
      %s117 = ssub.s32 %s9, 1
      // Predicated region
      $region13: #{vae_forward.14} parent=11 // pred_check
        %p118 = pneg %p56
      $region14: #{vae_forward.14} parent=11 // pred_check_branch
        %120 = sbr.rel (%p118) target = $region16
      $region15: #{vae_forward.14} parent=11 // pred_region
        _
      $region16: #{vae_forward.14} parent=11 // pred_fallthru
        _
      // Predicated region
      $region17: #{vae_forward.14} parent=11 // pred_check
        %p121 = pneg %p77
      $region18: #{vae_forward.14} parent=11 // pred_check_branch
        %123 = sbr.rel (%p121) target = $region20
      $region19: #{vae_forward.14} parent=11 // pred_region
        _
      $region20: #{vae_forward.14} parent=11 // pred_fallthru
        _
    $region12: #{vae_forward.14} parent=5 // pred_fallthru
      _
    %p124 = scmp.lt.s32.totalorder %s9, 2
    // Predicated region
    $region21: #{vae_forward.14} parent=5 // pred_check
      %p125 = pneg %p124
    $region22: #{vae_forward.14} parent=5 // pred_check_branch
      %127 = sbr.rel (%p125) target = $region24
    $region23: #{vae_forward.14} parent=5 // pred_region
      // Predicated region
      $region25: #{vae_forward.14} parent=23 // pred_check
        %p128 = pneg %p29
      $region26: #{vae_forward.14} parent=23 // pred_check_branch
        %130 = sbr.rel (%p128) target = $region28
      $region27: #{vae_forward.14} parent=23 // pred_region
        %s131 = smul.u32 2, %s9
        %p132 = scmp.lt.s32.totalorder %s131, 3
        %s133 = scalar_select %p132, %s131, 3
        %s134 = smul.addr %s133, 4
        %s135 = scalar_lea.vmem %s0, %s134
        %s136 = smul.u32 2, %s9
      $region28: #{vae_forward.14} parent=23 // pred_fallthru
        _
    $region24: #{vae_forward.14} parent=5 // pred_fallthru
      _
    %p137 = scmp.le.s32.totalorder 1, %s9
    %p138 = scmp.lt.s32.totalorder %s9, 3
    %p139 = pnand %p137, %p138
    %p140 = pneg %p139
    // Predicated region
    $region29: #{vae_forward.14} parent=5 // pred_check
      _
    $region30: #{vae_forward.14} parent=5 // pred_check_branch
      %142 = sbr.rel (%p139) target = $region32
    $region31: #{vae_forward.14} parent=5 // pred_region
      %s143 = ssub.s32 %s9, 1
      %s144 = smul.u32 2, %s14
      %p145 = scmp.lt.s32.totalorder %s144, 3
      %s146 = scalar_select %p145, %s144, 3
      %s147 = smul.addr %s146, 4
      %s148 = scalar_lea.vmem %s0, %s147
      %p149 = pneg %p35
      %p150 = pneg %p32
      %p151 = pneg %p56
      %p152 = pneg %p53
      %p153 = pneg %p77
      %p154 = pneg %p74
      %p155 = pneg %p103
      %p156 = pneg %p100
      %s157 = smul.u32 2, %s14
      %p158 = scmp.lt.s32.totalorder %s157, 3
      %s159 = scalar_select %p158, %s157, 3
      %s160 = smul.addr %s159, 3
      %s161 = smul.addr %s160, 4
      %s162 = scalar_lea.vmem %s3, %s161
      %s163 = smul.u32 2, %s14
      %p164 = scmp.lt.s32.totalorder %s163, 3
      %s165 = scalar_select %p164, %s163, 3
      %s166 = smul.addr %s165, 4
      %s167 = scalar_lea.vmem %s0, %s166
      %s168 = smul.u32 2, %s14
      %s169 = smul.u32 2, %s14
      %p170 = scmp.lt.s32.totalorder %s169, 3
      %s171 = scalar_select %p170, %s169, 3
      %s172 = smul.addr %s171, 3
      %s173 = smul.addr %s172, 4
      %s174 = scalar_lea.vmem %s3, %s173
      %s175 = smul.u32 2, %s14
      %v177 = vld [vmem:[%s167] sm:$0xf]
      %v178 = vld [vmem:[%s167 + $0x4] sm:$0xf]
      %v179 = vld [vmem:[%s1] sm:$0xff]
      %v180 = vld [vmem:[%s1 + $0x8] sm:$0xf]
      %v181 = vld [vmem:[%s1 + $0xc] sm:$0xff]
      %v182 = vld [vmem:[%s1 + $0x14] sm:$0xf]
      %v183 = vld [vmem:[%s1 + $0x18] sm:$0xff]
      %v184 = vld [vmem:[%s1 + $0x20] sm:$0xf]
      %v185 = vld [vmem:[%s1 + $0x24] sm:$0xff]
      %v186 = vld [vmem:[%s1 + $0x2c] sm:$0xf]
      %v187 = vld [vmem:[%s1 + $0x30] sm:$0xff]
      %v188 = vld [vmem:[%s1 + $0x38] sm:$0xf]
      %v189 = vld [vmem:[%s1 + $0x3c] sm:$0xff]
      %v190 = vld [vmem:[%s1 + $0x44] sm:$0xf]
      %v191 = vld [vmem:[%s1 + $0x48] sm:$0xff]
      %v192 = vld [vmem:[%s1 + $0x50] sm:$0xf]
      %v193 = vld [vmem:[%s1 + $0x54] sm:$0xff]
      %v194 = vld [vmem:[%s1 + $0x5c] sm:$0xf]
      %v195 = vld [vmem:[%s2] sm:$0x7]
      %v197 = vlaneseq
      %v198 = vshrl.u32 %v197, 7
      %v199 = vsub.s32 0, %v198
      %v200 = vrot.slane %v195, %v199
      %v201 = vlaneseq
      %v202 = vshrl.u32 %v201, 7
      %v203 = vsub.s32 1, %v202
      %v204 = vrot.slane %v195, %v203
      %v205 = vlaneseq
      %v206 = vshrl.u32 %v205, 7
      %v207 = vsub.s32 2, %v206
      %v208 = vrot.slane %v195, %v207
      %v214 = vunpack.c.l.b16 %v177
      %v215 = vunpack.c.l.b16 %v178
      %v216 = vpack.c.b16 %v215, %v214
      %v233 = vunpack.c.l.b16 %v179
      %v234 = vunpack.c.h.b16 %v179
      %v235 = vunpack.c.l.b16 %v180
      %v236 = vunpack.c.l.b16 %v181
      %v237 = vunpack.c.h.b16 %v181
      %v238 = vunpack.c.l.b16 %v182
      %v239 = vunpack.c.l.b16 %v183
      %v240 = vunpack.c.h.b16 %v183
      %v241 = vunpack.c.l.b16 %v184
      %v242 = vunpack.c.l.b16 %v185
      %v243 = vunpack.c.h.b16 %v185
      %v244 = vunpack.c.l.b16 %v186
      %v245 = vunpack.c.l.b16 %v187
      %v246 = vunpack.c.h.b16 %v187
      %v247 = vunpack.c.l.b16 %v188
      %v248 = vunpack.c.l.b16 %v189
      %v249 = vunpack.c.h.b16 %v189
      %v250 = vunpack.c.l.b16 %v190
      %v251 = vunpack.c.l.b16 %v191
      %v252 = vunpack.c.h.b16 %v191
      %v253 = vunpack.c.l.b16 %v192
      %v254 = vunpack.c.l.b16 %v193
      %v255 = vunpack.c.h.b16 %v193
      %v256 = vunpack.c.l.b16 %v194
      %v257 = vpack.c.b16 %v236, %v233
      %v258 = vpack.c.b16 %v237, %v234
      %v259 = vpack.c.b16 %v238, %v235
      %v260 = vpack.c.b16 %v242, %v239
      %v261 = vpack.c.b16 %v243, %v240
      %v262 = vpack.c.b16 %v244, %v241
      %v263 = vpack.c.b16 %v248, %v245
      %v264 = vpack.c.b16 %v249, %v246
      %v265 = vpack.c.b16 %v250, %v247
      %v266 = vpack.c.b16 %v254, %v251
      %v267 = vpack.c.b16 %v255, %v252
      %v268 = vpack.c.b16 %v256, %v253
      %vm281 = vcmask 523264
      %v283 = vsel %vm281, %v216, 0
      %285 = vmatprep.subr.bf16.mxu0 %v258
      %286 = vmatpush1.bf16.msra.mxu0 %v257
      %287 = vmatprep.subr.bf16.mxu0 %v261
      %288 = vmatpush1.bf16.msra.mxu0 %v260
      %289 = vmatprep.subr.bf16.mxu0 %v264
      %290 = vmatpush1.bf16.msra.mxu0 %v263
      %291 = vmatprep.subr.bf16.mxu0 %v267
      %292 = vmatpush1.bf16.msra.mxu0 %v266
      %293 = vmatprep.subr.bf16.mxu0 0
      %294 = vmatpush1.bf16.msra.mxu0 0
      %295 = vmatprep.subr.bf16.mxu0 0
      %296 = vmatpush1.bf16.msra.mxu0 0
      %297 = vmatprep.subr.bf16.mxu0 0
      %298 = vmatpush1.bf16.msra.mxu0 0
      %299 = vmatprep.subr.bf16.mxu0 0
      %300 = vmatpush1.bf16.msra.mxu0 0
      %301 = vmatprep.subr.bf16.mxu0 0
      %302 = vmatpush1.bf16.msra.mxu0 0
      %303 = vmatprep.subr.bf16.mxu0 0
      %304 = vmatpush1.bf16.msra.mxu0 0
      %305 = vmatprep.subr.bf16.mxu0 0
      %306 = vmatpush1.bf16.msra.mxu0 0
      %307 = vmatprep.subr.bf16.mxu0 0
      %308 = vmatpush1.bf16.msra.mxu0 0
      %309 = vmatprep.subr.bf16.mxu0 0
      %310 = vmatpush1.bf16.msra.mxu0 0
      %311 = vmatprep.subr.bf16.mxu0 0
      %312 = vmatpush1.bf16.msra.mxu0 0
      %313 = vmatprep.subr.bf16.mxu0 0
      %314 = vmatpush1.bf16.msra.mxu0 0
      %315 = vmatprep.subr.bf16.mxu0 0
      %316 = vmatpush1.bf16.msra.mxu0 0
      %317 = vmatprep.mubr.bf16.mxu0 0
      %318 = vmatmul.mubr.bf16.gmra.mrb[0].mxu0 %v283
      %v319 = vpop.f32.mrb[0].mxu0
      %v320 = vadd.f32 %v200, %v319
      %v321 = vpop.f32.mrb[0].mxu0
      %v322 = vadd.f32 %v204, %v321
      %v323 = vpop.f32.mrb[0].mxu0
      %v324 = vadd.f32 %v200, %v323
      %v325 = vpop.f32.mrb[0].mxu0
      %v326 = vadd.f32 %v204, %v325
      %327 = vdwg.mxu0
      %328 = vmatprep.subr.bf16.mxu0 0
      %329 = vmatpush1.bf16.msra.mxu0 %v259
      %330 = vmatprep.subr.bf16.mxu0 0
      %331 = vmatpush1.bf16.msra.mxu0 %v262
      %332 = vmatprep.subr.bf16.mxu0 0
      %333 = vmatpush1.bf16.msra.mxu0 %v265
      %334 = vmatprep.subr.bf16.mxu0 0
      %335 = vmatpush1.bf16.msra.mxu0 %v268
      %336 = vmatprep.subr.bf16.mxu0 0
      %337 = vmatpush1.bf16.msra.mxu0 0
      %338 = vmatprep.subr.bf16.mxu0 0
      %339 = vmatpush1.bf16.msra.mxu0 0
      %340 = vmatprep.subr.bf16.mxu0 0
      %341 = vmatpush1.bf16.msra.mxu0 0
      %342 = vmatprep.subr.bf16.mxu0 0
      %343 = vmatpush1.bf16.msra.mxu0 0
      %344 = vmatprep.subr.bf16.mxu0 0
      %345 = vmatpush1.bf16.msra.mxu0 0
      %346 = vmatprep.subr.bf16.mxu0 0
      %347 = vmatpush1.bf16.msra.mxu0 0
      %348 = vmatprep.subr.bf16.mxu0 0
      %349 = vmatpush1.bf16.msra.mxu0 0
      %350 = vmatprep.subr.bf16.mxu0 0
      %351 = vmatpush1.bf16.msra.mxu0 0
      %352 = vmatprep.subr.bf16.mxu0 0
      %353 = vmatpush1.bf16.msra.mxu0 0
      %354 = vmatprep.subr.bf16.mxu0 0
      %355 = vmatpush1.bf16.msra.mxu0 0
      %356 = vmatprep.subr.bf16.mxu0 0
      %357 = vmatpush1.bf16.msra.mxu0 0
      %358 = vmatprep.subr.bf16.mxu0 0
      %359 = vmatpush1.bf16.msra.mxu0 0
      %360 = vmatprep.mubr.bf16.mxu0 0
      %361 = vmatmul.mubr.bf16.gmra.mrb[0].mxu0 %v283
      %v362 = vpop.f32.mrb[0].mxu0
      %v363 = vadd.f32 %v208, %v362
      %v364 = vpop.f32.mrb[0].mxu0
      %v365 = vpop.f32.mrb[0].mxu0
      %v366 = vadd.f32 %v208, %v365
      %v367 = vpop.f32.mrb[0].mxu0
      %368 = vdwg.mxu0
      %v369 = vpack.c.bf16 %v324, %v320
      %v370 = vpack.c.bf16 %v326, %v322
      %v371 = vpack.c.bf16 %v366, %v363
      %v375 = vunpack.c.l.b16 %v369
      %v376 = vunpack.c.l.b16 %v370
      %v377 = vunpack.c.l.b16 %v371
      %v378 = vunpack.c.h.b16 %v369
      %v379 = vunpack.c.h.b16 %v370
      %v380 = vunpack.c.h.b16 %v371
      %v381 = vpack.c.b16 %v376, %v375
      %v382 = vpack.c.b16 %v377, %v377
      %v383 = vpack.c.b16 %v379, %v378
      %v384 = vpack.c.b16 %v380, %v380
      %389 = vst [vmem:[%s174] sm:$0xff] %v381
      %vm390 = vcmask 257024
      %391 = vst.msk [vmem:[%s174 + $0x8] sm:$0xf] %vm390, %v382
      %392 = vst [vmem:[%s174 + $0xc] sm:$0xff] %v383
      %393 = vst.msk [vmem:[%s174 + $0x14] sm:$0xf] %vm390, %v384
      %s394 = smul.u32 2, %s14
      %p395 = scmp.lt.s32.totalorder %s394, 3
      %s396 = scalar_select %p395, %s394, 3
      %s397 = smul.addr %s396, 3
      %s398 = smul.addr %s397, 4
      %s399 = scalar_lea.vmem %s3, %s398
      // Predicated region
      $region33: #{vae_forward.14} parent=31 // pred_check
        %p400 = pneg %p100
      $region34: #{vae_forward.14} parent=31 // pred_check_branch
        %402 = sbr.rel (%p400) target = $region36
      $region35: #{vae_forward.14} parent=31 // pred_region
        %s403 = smul.u32 2, %s14
      $region36: #{vae_forward.14} parent=31 // pred_fallthru
        _
    $region32: #{vae_forward.14} parent=5 // pred_fallthru
      _
    %p404 = scmp.le.s32.totalorder 2, %s9
    // Predicated region
    $region37: #{vae_forward.14} parent=5 // pred_check
      %p405 = pneg %p404
    $region38: #{vae_forward.14} parent=5 // pred_check_branch
      %407 = sbr.rel (%p405) target = $region40
    $region39: #{vae_forward.14} parent=5 // pred_region
      %s408 = ssub.s32 %s9, 2
      // Predicated region
      $region41: #{vae_forward.14} parent=39 // pred_check
        %p409 = pneg %p106
      $region42: #{vae_forward.14} parent=39 // pred_check_branch
        %411 = sbr.rel (%p409) target = $region44
      $region43: #{vae_forward.14} parent=39 // pred_region
        %s412 = smul.u32 2, %s15
        %p413 = scmp.lt.s32.totalorder %s412, 3
        %s414 = scalar_select %p413, %s412, 3
        %s415 = smul.addr %s414, 3
        %s416 = smul.addr %s415, 4
        %s417 = scalar_lea.vmem %s3, %s416
      $region44: #{vae_forward.14} parent=39 // pred_fallthru
        _
    $region40: #{vae_forward.14} parent=5 // pred_fallthru
      _
  $region6: #{vae_forward.14} parent=0 // loop_footer
    %s13 = sadd.s32 1, %s9
  $region7: #{vae_forward.14} parent=0 // loop_footer_branch
    %8 = sbr.rel target = $region3
  $region8: #{vae_forward.14} parent=0 // loop_exit
    _

// kernel: vae_forward.13
$region0: #{vae_forward.13}
  #allocation0 [shape = 'u32[]', space=smem, size = 0x4, offset = 0x4, fixed_abs, tag = 'smem constant byte address 0x4 - core index']
  #allocation1 [shape = 'u32[144,128]{1,0:T(1,128)}', space=vmem, size = 0x12000, scoped, tag = 'internal scratch']
  %s0 = inlined_call_operand.vmem [shape: bf16[8,1024], index: 0, kind: input, shape index: {}]
  %s1 = inlined_call_operand.vmem [shape: f32[8,16], index: 1, kind: input, shape index: {}]
  %s2 = inlined_call_operand.vmem [shape: bf16[1024,64], index: 2, kind: input, shape index: {}]
  %s3 = inlined_call_operand.vmem [shape: f32[1,64], index: 3, kind: input, shape index: {}]
  %s4 = inlined_call_operand.vmem [shape: bf16[64,64], index: 4, kind: input, shape index: {}]
  %s5 = inlined_call_operand.vmem [shape: f32[1,64], index: 5, kind: input, shape index: {}]
  %s6 = inlined_call_operand.vmem [shape: bf16[64,64], index: 6, kind: input, shape index: {}]
  %s7 = inlined_call_operand.vmem [shape: f32[1,64], index: 7, kind: input, shape index: {}]
  %s8 = inlined_call_operand.vmem [shape: bf16[64,16], index: 8, kind: input, shape index: {}]
  %s9 = inlined_call_operand.vmem [shape: f32[1,16], index: 9, kind: input, shape index: {}]
  %s10 = inlined_call_operand.vmem [shape: bf16[64,16], index: 10, kind: input, shape index: {}]
  %s11 = inlined_call_operand.vmem [shape: f32[1,16], index: 11, kind: input, shape index: {}]
  %s12 = inlined_call_operand.vmem [shape: bf16[16,64], index: 12, kind: input, shape index: {}]
  %s13 = inlined_call_operand.vmem [shape: f32[1,64], index: 13, kind: input, shape index: {}]
  %s14 = inlined_call_operand.vmem [shape: bf16[64,64], index: 14, kind: input, shape index: {}]
  %s15 = inlined_call_operand.vmem [shape: f32[1,64], index: 15, kind: input, shape index: {}]
  %s16 = inlined_call_operand.vmem [shape: bf16[64,64], index: 16, kind: input, shape index: {}]
  %s17 = inlined_call_operand.vmem [shape: f32[1,64], index: 17, kind: input, shape index: {}]
  %s18 = inlined_call_operand.vmem [shape: bf16[64,1024], index: 18, kind: input, shape index: {}]
  %s19 = inlined_call_operand.vmem [shape: f32[1,1024], index: 19, kind: input, shape index: {}]
  %s20 = inlined_call_operand.hbm [shape: f32[8,16], index: 20, kind: output, shape index: {0}]
  %s21 = inlined_call_operand.hbm [shape: f32[8,16], index: 21, kind: output, shape index: {1}]
  %s22 = inlined_call_operand.hbm [shape: f32[8,64], index: 22, kind: output, shape index: {2}]
  %s23 = inlined_call_operand.vmem [shape: bf16[8,1024], index: 23, kind: output, shape index: {3}]
  %24 = xla_tuple %s20, %s21, %s22, %s23
  %s25 = sld [smem:[#allocation0]]
  $region114: #{vae_forward.13} parent=0
    _
  %s27 = ssub.s32 1, %s25
  %s28 = scalar_select 0, %s27, %s25
  $region1: #{vae_forward.13} parent=0
    #allocation2 [shape = 'u8[4096]{0}', space=vmem, size = 0x1000, scoped, tag = 'output window, operand 0, single buffered']
    #allocation3 [shape = 's32[1]{0}', space=sflag, size = 0x4, scoped, tag = 'scoped memory for vae_forward.13']
    #allocation4 [shape = 'u8[4096]{0}', space=vmem, size = 0x1000, scoped, tag = 'output window, operand 1, single buffered']
    #allocation5 [shape = 's32[1]{0}', space=sflag, size = 0x4, scoped, tag = 'scoped memory for vae_forward.13']
    #allocation6 [shape = 'u8[4096]{0}', space=vmem, size = 0x1000, scoped, tag = 'output window, operand 2, single buffered']
    %29 = vsyncpa [#allocation3], 0
    %30 = vsyncpa [#allocation5], 0
    // Predicated region
    $region2: #{vae_forward.13} parent=1 // pred_check
      _
    $region3: #{vae_forward.13} parent=1 // pred_check_branch
      %32 = sbr.rel (0) target = $region5
    $region4: #{vae_forward.13} parent=1 // pred_region
      _
    $region5: #{vae_forward.13} parent=1 // pred_fallthru
      _
    // Predicated region
    $region6: #{vae_forward.13} parent=1 // pred_check
      _
    $region7: #{vae_forward.13} parent=1 // pred_check_branch
      %34 = sbr.rel (0) target = $region9
    $region8: #{vae_forward.13} parent=1 // pred_region
      _
    $region9: #{vae_forward.13} parent=1 // pred_fallthru
      _
    // Predicated region
    $region10: #{vae_forward.13} parent=1 // pred_check
      _
    $region11: #{vae_forward.13} parent=1 // pred_check_branch
      %36 = sbr.rel (0) target = $region13
    $region12: #{vae_forward.13} parent=1 // pred_region
      _
    $region13: #{vae_forward.13} parent=1 // pred_fallthru
      _
    // Predicated region
    $region14: #{vae_forward.13} parent=1 // pred_check
      _
    $region15: #{vae_forward.13} parent=1 // pred_check_branch
      %38 = sbr.rel (0) target = $region17
    $region16: #{vae_forward.13} parent=1 // pred_region
      _
    $region17: #{vae_forward.13} parent=1 // pred_fallthru
      _
    // Predicated region
    $region18: #{vae_forward.13} parent=1 // pred_check
      _
    $region19: #{vae_forward.13} parent=1 // pred_check_branch
      %40 = sbr.rel (0) target = $region21
    $region20: #{vae_forward.13} parent=1 // pred_region
      _
    $region21: #{vae_forward.13} parent=1 // pred_fallthru
      _
    // Predicated region
    $region22: #{vae_forward.13} parent=1 // pred_check
      _
    $region23: #{vae_forward.13} parent=1 // pred_check_branch
      %42 = sbr.rel (0) target = $region25
    $region24: #{vae_forward.13} parent=1 // pred_region
      _
    $region25: #{vae_forward.13} parent=1 // pred_fallthru
      _
    // Predicated region
    $region26: #{vae_forward.13} parent=1 // pred_check
      _
    $region27: #{vae_forward.13} parent=1 // pred_check_branch
      %44 = sbr.rel (0) target = $region29
    $region28: #{vae_forward.13} parent=1 // pred_region
      _
    $region29: #{vae_forward.13} parent=1 // pred_fallthru
      _
    // Predicated region
    $region30: #{vae_forward.13} parent=1 // pred_check
      _
    $region31: #{vae_forward.13} parent=1 // pred_check_branch
      %46 = sbr.rel (0) target = $region33
    $region32: #{vae_forward.13} parent=1 // pred_region
      _
    $region33: #{vae_forward.13} parent=1 // pred_fallthru
      _
    // Predicated region
    $region34: #{vae_forward.13} parent=1 // pred_check
      _
    $region35: #{vae_forward.13} parent=1 // pred_check_branch
      %48 = sbr.rel (0) target = $region37
    $region36: #{vae_forward.13} parent=1 // pred_region
      _
    $region37: #{vae_forward.13} parent=1 // pred_fallthru
      _
    // Predicated region
    $region38: #{vae_forward.13} parent=1 // pred_check
      _
    $region39: #{vae_forward.13} parent=1 // pred_check_branch
      %50 = sbr.rel (0) target = $region41
    $region40: #{vae_forward.13} parent=1 // pred_region
      _
    $region41: #{vae_forward.13} parent=1 // pred_fallthru
      _
    // Predicated region
    $region42: #{vae_forward.13} parent=1 // pred_check
      _
    $region43: #{vae_forward.13} parent=1 // pred_check_branch
      %52 = sbr.rel (0) target = $region45
    $region44: #{vae_forward.13} parent=1 // pred_region
      _
    $region45: #{vae_forward.13} parent=1 // pred_fallthru
      _
    // Predicated region
    $region46: #{vae_forward.13} parent=1 // pred_check
      _
    $region47: #{vae_forward.13} parent=1 // pred_check_branch
      %54 = sbr.rel (0) target = $region49
    $region48: #{vae_forward.13} parent=1 // pred_region
      _
    $region49: #{vae_forward.13} parent=1 // pred_fallthru
      _
    // Predicated region
    $region50: #{vae_forward.13} parent=1 // pred_check
      _
    $region51: #{vae_forward.13} parent=1 // pred_check_branch
      %56 = sbr.rel (0) target = $region53
    $region52: #{vae_forward.13} parent=1 // pred_region
      _
    $region53: #{vae_forward.13} parent=1 // pred_fallthru
      _
    // Predicated region
    $region54: #{vae_forward.13} parent=1 // pred_check
      _
    $region55: #{vae_forward.13} parent=1 // pred_check_branch
      %58 = sbr.rel (0) target = $region57
    $region56: #{vae_forward.13} parent=1 // pred_region
      _
    $region57: #{vae_forward.13} parent=1 // pred_fallthru
      _
    // Predicated region
    $region58: #{vae_forward.13} parent=1 // pred_check
      _
    $region59: #{vae_forward.13} parent=1 // pred_check_branch
      %60 = sbr.rel (0) target = $region61
    $region60: #{vae_forward.13} parent=1 // pred_region
      _
    $region61: #{vae_forward.13} parent=1 // pred_fallthru
      _
    // Predicated region
    $region62: #{vae_forward.13} parent=1 // pred_check
      _
    $region63: #{vae_forward.13} parent=1 // pred_check_branch
      %62 = sbr.rel (0) target = $region65
    $region64: #{vae_forward.13} parent=1 // pred_region
      _
    $region65: #{vae_forward.13} parent=1 // pred_fallthru
      _
    // Predicated region
    $region66: #{vae_forward.13} parent=1 // pred_check
      _
    $region67: #{vae_forward.13} parent=1 // pred_check_branch
      %64 = sbr.rel (0) target = $region69
    $region68: #{vae_forward.13} parent=1 // pred_region
      _
    $region69: #{vae_forward.13} parent=1 // pred_fallthru
      _
    // Predicated region
    $region70: #{vae_forward.13} parent=1 // pred_check
      _
    $region71: #{vae_forward.13} parent=1 // pred_check_branch
      %66 = sbr.rel (0) target = $region73
    $region72: #{vae_forward.13} parent=1 // pred_region
      _
    $region73: #{vae_forward.13} parent=1 // pred_fallthru
      _
    // Predicated region
    $region74: #{vae_forward.13} parent=1 // pred_check
      _
    $region75: #{vae_forward.13} parent=1 // pred_check_branch
      %68 = sbr.rel (0) target = $region77
    $region76: #{vae_forward.13} parent=1 // pred_region
      _
    $region77: #{vae_forward.13} parent=1 // pred_fallthru
      _
    // Predicated region
    $region78: #{vae_forward.13} parent=1 // pred_check
      _
    $region79: #{vae_forward.13} parent=1 // pred_check_branch
      %70 = sbr.rel (0) target = $region81
    $region80: #{vae_forward.13} parent=1 // pred_region
      _
    $region81: #{vae_forward.13} parent=1 // pred_fallthru
      _
    %v72 = vld [vmem:[%s0] sm:$0xff]
    %v73 = vld [vmem:[%s0 + $0x8] sm:$0xff]
    %v74 = vld [vmem:[%s0 + $0x10] sm:$0xff]
    %v75 = vld [vmem:[%s0 + $0x18] sm:$0xff]
    %v76 = vld [vmem:[%s2] sm:$0xf]
    %v77 = vld [vmem:[%s2 + $0x4] sm:$0xf]
    %v78 = vld [vmem:[%s2 + $0x8] sm:$0xf]
    %v79 = vld [vmem:[%s2 + $0xc] sm:$0xf]
    %v80 = vld [vmem:[%s2 + $0x10] sm:$0xf]
    %v81 = vld [vmem:[%s2 + $0x14] sm:$0xf]
    %v82 = vld [vmem:[%s2 + $0x18] sm:$0xf]
    %v83 = vld [vmem:[%s2 + $0x1c] sm:$0xf]
    %v84 = vld [vmem:[%s2 + $0x20] sm:$0xf]
    %v85 = vld [vmem:[%s2 + $0x24] sm:$0xf]
    %v86 = vld [vmem:[%s2 + $0x28] sm:$0xf]
    %v87 = vld [vmem:[%s2 + $0x2c] sm:$0xf]
    %v88 = vld [vmem:[%s2 + $0x30] sm:$0xf]
    %v89 = vld [vmem:[%s2 + $0x34] sm:$0xf]
    %v90 = vld [vmem:[%s2 + $0x38] sm:$0xf]
    %v91 = vld [vmem:[%s2 + $0x3c] sm:$0xf]
    %v92 = vld [vmem:[%s2 + $0x40] sm:$0xf]
    %v93 = vld [vmem:[%s2 + $0x44] sm:$0xf]
    %v94 = vld [vmem:[%s2 + $0x48] sm:$0xf]
    %v95 = vld [vmem:[%s2 + $0x4c] sm:$0xf]
    %v96 = vld [vmem:[%s2 + $0x50] sm:$0xf]
    %v97 = vld [vmem:[%s2 + $0x54] sm:$0xf]
    %v98 = vld [vmem:[%s2 + $0x58] sm:$0xf]
    %v99 = vld [vmem:[%s2 + $0x5c] sm:$0xf]
    %v100 = vld [vmem:[%s2 + $0x60] sm:$0xf]
    %v101 = vld [vmem:[%s2 + $0x64] sm:$0xf]
    %v102 = vld [vmem:[%s2 + $0x68] sm:$0xf]
    %v103 = vld [vmem:[%s2 + $0x6c] sm:$0xf]
    %v104 = vld [vmem:[%s2 + $0x70] sm:$0xf]
    %v105 = vld [vmem:[%s2 + $0x74] sm:$0xf]
    %v106 = vld [vmem:[%s2 + $0x78] sm:$0xf]
    %v107 = vld [vmem:[%s2 + $0x7c] sm:$0xf]
    %v108 = vld [vmem:[%s2 + $0x80] sm:$0xf]
    %v109 = vld [vmem:[%s2 + $0x84] sm:$0xf]
    %v110 = vld [vmem:[%s2 + $0x88] sm:$0xf]
    %v111 = vld [vmem:[%s2 + $0x8c] sm:$0xf]
    %v112 = vld [vmem:[%s2 + $0x90] sm:$0xf]
    %v113 = vld [vmem:[%s2 + $0x94] sm:$0xf]
    %v114 = vld [vmem:[%s2 + $0x98] sm:$0xf]
    %v115 = vld [vmem:[%s2 + $0x9c] sm:$0xf]
    %v116 = vld [vmem:[%s2 + $0xa0] sm:$0xf]
    %v117 = vld [vmem:[%s2 + $0xa4] sm:$0xf]
    %v118 = vld [vmem:[%s2 + $0xa8] sm:$0xf]
    %v119 = vld [vmem:[%s2 + $0xac] sm:$0xf]
    %v120 = vld [vmem:[%s2 + $0xb0] sm:$0xf]
    %v121 = vld [vmem:[%s2 + $0xb4] sm:$0xf]
    %v122 = vld [vmem:[%s2 + $0xb8] sm:$0xf]
    %v123 = vld [vmem:[%s2 + $0xbc] sm:$0xf]
    %v124 = vld [vmem:[%s2 + $0xc0] sm:$0xf]
    %v125 = vld [vmem:[%s2 + $0xc4] sm:$0xf]
    %v126 = vld [vmem:[%s2 + $0xc8] sm:$0xf]
    %v127 = vld [vmem:[%s2 + $0xcc] sm:$0xf]
    %v128 = vld [vmem:[%s2 + $0xd0] sm:$0xf]
    %v129 = vld [vmem:[%s2 + $0xd4] sm:$0xf]
    %v130 = vld [vmem:[%s2 + $0xd8] sm:$0xf]
    %v131 = vld [vmem:[%s2 + $0xdc] sm:$0xf]
    %v132 = vld [vmem:[%s2 + $0xe0] sm:$0xf]
    %v133 = vld [vmem:[%s2 + $0xe4] sm:$0xf]
    %v134 = vld [vmem:[%s2 + $0xe8] sm:$0xf]
    %v135 = vld [vmem:[%s2 + $0xec] sm:$0xf]
    %v136 = vld [vmem:[%s2 + $0xf0] sm:$0xf]
    %v137 = vld [vmem:[%s2 + $0xf4] sm:$0xf]
    %v138 = vld [vmem:[%s2 + $0xf8] sm:$0xf]
    %v139 = vld [vmem:[%s2 + $0xfc] sm:$0xf]
    %v140 = vld [vmem:[%s2 + $0x100] sm:$0xf]
    %v141 = vld [vmem:[%s2 + $0x104] sm:$0xf]
    %v142 = vld [vmem:[%s2 + $0x108] sm:$0xf]
    %v143 = vld [vmem:[%s2 + $0x10c] sm:$0xf]
    %v144 = vld [vmem:[%s2 + $0x110] sm:$0xf]
    %v145 = vld [vmem:[%s2 + $0x114] sm:$0xf]
    %v146 = vld [vmem:[%s2 + $0x118] sm:$0xf]
    %v147 = vld [vmem:[%s2 + $0x11c] sm:$0xf]
    %v148 = vld [vmem:[%s2 + $0x120] sm:$0xf]
    %v149 = vld [vmem:[%s2 + $0x124] sm:$0xf]
    %v150 = vld [vmem:[%s2 + $0x128] sm:$0xf]
    %v151 = vld [vmem:[%s2 + $0x12c] sm:$0xf]
    %v152 = vld [vmem:[%s2 + $0x130] sm:$0xf]
    %v153 = vld [vmem:[%s2 + $0x134] sm:$0xf]
    %v154 = vld [vmem:[%s2 + $0x138] sm:$0xf]
    %v155 = vld [vmem:[%s2 + $0x13c] sm:$0xf]
    %v156 = vld [vmem:[%s2 + $0x140] sm:$0xf]
    %v157 = vld [vmem:[%s2 + $0x144] sm:$0xf]
    %v158 = vld [vmem:[%s2 + $0x148] sm:$0xf]
    %v159 = vld [vmem:[%s2 + $0x14c] sm:$0xf]
    %v160 = vld [vmem:[%s2 + $0x150] sm:$0xf]
    %v161 = vld [vmem:[%s2 + $0x154] sm:$0xf]
    %v162 = vld [vmem:[%s2 + $0x158] sm:$0xf]
    %v163 = vld [vmem:[%s2 + $0x15c] sm:$0xf]
    %v164 = vld [vmem:[%s2 + $0x160] sm:$0xf]
    %v165 = vld [vmem:[%s2 + $0x164] sm:$0xf]
    %v166 = vld [vmem:[%s2 + $0x168] sm:$0xf]
    %v167 = vld [vmem:[%s2 + $0x16c] sm:$0xf]
    %v168 = vld [vmem:[%s2 + $0x170] sm:$0xf]
    %v169 = vld [vmem:[%s2 + $0x174] sm:$0xf]
    %v170 = vld [vmem:[%s2 + $0x178] sm:$0xf]
    %v171 = vld [vmem:[%s2 + $0x17c] sm:$0xf]
    %v172 = vld [vmem:[%s2 + $0x180] sm:$0xf]
    %v173 = vld [vmem:[%s2 + $0x184] sm:$0xf]
    %v174 = vld [vmem:[%s2 + $0x188] sm:$0xf]
    %v175 = vld [vmem:[%s2 + $0x18c] sm:$0xf]
    %v176 = vld [vmem:[%s2 + $0x190] sm:$0xf]
    %v177 = vld [vmem:[%s2 + $0x194] sm:$0xf]
    %v178 = vld [vmem:[%s2 + $0x198] sm:$0xf]
    %v179 = vld [vmem:[%s2 + $0x19c] sm:$0xf]
    %v180 = vld [vmem:[%s2 + $0x1a0] sm:$0xf]
    %v181 = vld [vmem:[%s2 + $0x1a4] sm:$0xf]
    %v182 = vld [vmem:[%s2 + $0x1a8] sm:$0xf]
    %v183 = vld [vmem:[%s2 + $0x1ac] sm:$0xf]
    %v184 = vld [vmem:[%s2 + $0x1b0] sm:$0xf]
    %v185 = vld [vmem:[%s2 + $0x1b4] sm:$0xf]
    %v186 = vld [vmem:[%s2 + $0x1b8] sm:$0xf]
    %v187 = vld [vmem:[%s2 + $0x1bc] sm:$0xf]
    %v188 = vld [vmem:[%s2 + $0x1c0] sm:$0xf]
    %v189 = vld [vmem:[%s2 + $0x1c4] sm:$0xf]
    %v190 = vld [vmem:[%s2 + $0x1c8] sm:$0xf]
    %v191 = vld [vmem:[%s2 + $0x1cc] sm:$0xf]
    %v192 = vld [vmem:[%s2 + $0x1d0] sm:$0xf]
    %v193 = vld [vmem:[%s2 + $0x1d4] sm:$0xf]
    %v194 = vld [vmem:[%s2 + $0x1d8] sm:$0xf]
    %v195 = vld [vmem:[%s2 + $0x1dc] sm:$0xf]
    %v196 = vld [vmem:[%s2 + $0x1e0] sm:$0xf]
    %v197 = vld [vmem:[%s2 + $0x1e4] sm:$0xf]
    %v198 = vld [vmem:[%s2 + $0x1e8] sm:$0xf]
    %v199 = vld [vmem:[%s2 + $0x1ec] sm:$0xf]
    %v200 = vld [vmem:[%s2 + $0x1f0] sm:$0xf]
    %v201 = vld [vmem:[%s2 + $0x1f4] sm:$0xf]
    %v202 = vld [vmem:[%s2 + $0x1f8] sm:$0xf]
    %v203 = vld [vmem:[%s2 + $0x1fc] sm:$0xf]
    %v204 = vld [vmem:[%s3] sm:$0x1]
    %v206 = vlaneseq
    %v207 = vshrl.u32 %v206, 7
    %v208 = vsub.s32 0, %v207
    %v209 = vrot.slane %v204, %v208
    %v215 = vunpack.c.l.b16 %v72
    %v216 = vunpack.c.h.b16 %v72
    %v217 = vunpack.c.l.b16 %v73
    %v218 = vunpack.c.h.b16 %v73
    %v219 = vunpack.c.l.b16 %v74
    %v220 = vunpack.c.h.b16 %v74
    %v221 = vunpack.c.l.b16 %v75
    %v222 = vunpack.c.h.b16 %v75
    %v223 = vpack.c.b16 %v215, %v215
    %v224 = vpack.c.b16 %v216, %v216
    %v225 = vpack.c.b16 %v217, %v217
    %v226 = vpack.c.b16 %v218, %v218
    %v227 = vpack.c.b16 %v219, %v219
    %v228 = vpack.c.b16 %v220, %v220
    %v229 = vpack.c.b16 %v221, %v221
    %v230 = vpack.c.b16 %v222, %v222
    %v367 = vunpack.c.l.b16 %v76
    %v368 = vunpack.c.l.b16 %v77
    %v369 = vunpack.c.l.b16 %v78
    %v370 = vunpack.c.l.b16 %v79
    %v371 = vunpack.c.l.b16 %v80
    %v372 = vunpack.c.l.b16 %v81
    %v373 = vunpack.c.l.b16 %v82
    %v374 = vunpack.c.l.b16 %v83
    %v375 = vunpack.c.l.b16 %v84
    %v376 = vunpack.c.l.b16 %v85
    %v377 = vunpack.c.l.b16 %v86
    %v378 = vunpack.c.l.b16 %v87
    %v379 = vunpack.c.l.b16 %v88
    %v380 = vunpack.c.l.b16 %v89
    %v381 = vunpack.c.l.b16 %v90
    %v382 = vunpack.c.l.b16 %v91
    %v383 = vunpack.c.l.b16 %v92
    %v384 = vunpack.c.l.b16 %v93
    %v385 = vunpack.c.l.b16 %v94
    %v386 = vunpack.c.l.b16 %v95
    %v387 = vunpack.c.l.b16 %v96
    %v388 = vunpack.c.l.b16 %v97
    %v389 = vunpack.c.l.b16 %v98
    %v390 = vunpack.c.l.b16 %v99
    %v391 = vunpack.c.l.b16 %v100
    %v392 = vunpack.c.l.b16 %v101
    %v393 = vunpack.c.l.b16 %v102
    %v394 = vunpack.c.l.b16 %v103
    %v395 = vunpack.c.l.b16 %v104
    %v396 = vunpack.c.l.b16 %v105
    %v397 = vunpack.c.l.b16 %v106
    %v398 = vunpack.c.l.b16 %v107
    %v399 = vunpack.c.l.b16 %v108
    %v400 = vunpack.c.l.b16 %v109
    %v401 = vunpack.c.l.b16 %v110
    %v402 = vunpack.c.l.b16 %v111
    %v403 = vunpack.c.l.b16 %v112
    %v404 = vunpack.c.l.b16 %v113
    %v405 = vunpack.c.l.b16 %v114
    %v406 = vunpack.c.l.b16 %v115
    %v407 = vunpack.c.l.b16 %v116
    %v408 = vunpack.c.l.b16 %v117
    %v409 = vunpack.c.l.b16 %v118
    %v410 = vunpack.c.l.b16 %v119
    %v411 = vunpack.c.l.b16 %v120
    %v412 = vunpack.c.l.b16 %v121
    %v413 = vunpack.c.l.b16 %v122
    %v414 = vunpack.c.l.b16 %v123
    %v415 = vunpack.c.l.b16 %v124
    %v416 = vunpack.c.l.b16 %v125
    %v417 = vunpack.c.l.b16 %v126
    %v418 = vunpack.c.l.b16 %v127
    %v419 = vunpack.c.l.b16 %v128
    %v420 = vunpack.c.l.b16 %v129
    %v421 = vunpack.c.l.b16 %v130
    %v422 = vunpack.c.l.b16 %v131
    %v423 = vunpack.c.l.b16 %v132
    %v424 = vunpack.c.l.b16 %v133
    %v425 = vunpack.c.l.b16 %v134
    %v426 = vunpack.c.l.b16 %v135
    %v427 = vunpack.c.l.b16 %v136
    %v428 = vunpack.c.l.b16 %v137
    %v429 = vunpack.c.l.b16 %v138
    %v430 = vunpack.c.l.b16 %v139
    %v431 = vunpack.c.l.b16 %v140
    %v432 = vunpack.c.l.b16 %v141
    %v433 = vunpack.c.l.b16 %v142
    %v434 = vunpack.c.l.b16 %v143
    %v435 = vunpack.c.l.b16 %v144
    %v436 = vunpack.c.l.b16 %v145
    %v437 = vunpack.c.l.b16 %v146
    %v438 = vunpack.c.l.b16 %v147
    %v439 = vunpack.c.l.b16 %v148
    %v440 = vunpack.c.l.b16 %v149
    %v441 = vunpack.c.l.b16 %v150
    %v442 = vunpack.c.l.b16 %v151
    %v443 = vunpack.c.l.b16 %v152
    %v444 = vunpack.c.l.b16 %v153
    %v445 = vunpack.c.l.b16 %v154
    %v446 = vunpack.c.l.b16 %v155
    %v447 = vunpack.c.l.b16 %v156
    %v448 = vunpack.c.l.b16 %v157
    %v449 = vunpack.c.l.b16 %v158
    %v450 = vunpack.c.l.b16 %v159
    %v451 = vunpack.c.l.b16 %v160
    %v452 = vunpack.c.l.b16 %v161
    %v453 = vunpack.c.l.b16 %v162
    %v454 = vunpack.c.l.b16 %v163
    %v455 = vunpack.c.l.b16 %v164
    %v456 = vunpack.c.l.b16 %v165
    %v457 = vunpack.c.l.b16 %v166
    %v458 = vunpack.c.l.b16 %v167
    %v459 = vunpack.c.l.b16 %v168
    %v460 = vunpack.c.l.b16 %v169
    %v461 = vunpack.c.l.b16 %v170
    %v462 = vunpack.c.l.b16 %v171
    %v463 = vunpack.c.l.b16 %v172
    %v464 = vunpack.c.l.b16 %v173
    %v465 = vunpack.c.l.b16 %v174
    %v466 = vunpack.c.l.b16 %v175
    %v467 = vunpack.c.l.b16 %v176
    %v468 = vunpack.c.l.b16 %v177
    %v469 = vunpack.c.l.b16 %v178
    %v470 = vunpack.c.l.b16 %v179
    %v471 = vunpack.c.l.b16 %v180
    %v472 = vunpack.c.l.b16 %v181
    %v473 = vunpack.c.l.b16 %v182
    %v474 = vunpack.c.l.b16 %v183
    %v475 = vunpack.c.l.b16 %v184
    %v476 = vunpack.c.l.b16 %v185
    %v477 = vunpack.c.l.b16 %v186
    %v478 = vunpack.c.l.b16 %v187
    %v479 = vunpack.c.l.b16 %v188
    %v480 = vunpack.c.l.b16 %v189
    %v481 = vunpack.c.l.b16 %v190
    %v482 = vunpack.c.l.b16 %v191
    %v483 = vunpack.c.l.b16 %v192
    %v484 = vunpack.c.l.b16 %v193
    %v485 = vunpack.c.l.b16 %v194
    %v486 = vunpack.c.l.b16 %v195
    %v487 = vunpack.c.l.b16 %v196
    %v488 = vunpack.c.l.b16 %v197
    %v489 = vunpack.c.l.b16 %v198
    %v490 = vunpack.c.l.b16 %v199
    %v491 = vunpack.c.l.b16 %v200
    %v492 = vunpack.c.l.b16 %v201
    %v493 = vunpack.c.l.b16 %v202
    %v494 = vunpack.c.l.b16 %v203
    %v495 = vpack.c.b16 %v368, %v367
    %v496 = vpack.c.b16 %v370, %v369
    %v497 = vpack.c.b16 %v372, %v371
    %v498 = vpack.c.b16 %v374, %v373
    %v499 = vpack.c.b16 %v376, %v375
    %v500 = vpack.c.b16 %v378, %v377
    %v501 = vpack.c.b16 %v380, %v379
    %v502 = vpack.c.b16 %v382, %v381
    %v503 = vpack.c.b16 %v384, %v383
    %v504 = vpack.c.b16 %v386, %v385
    %v505 = vpack.c.b16 %v388, %v387
    %v506 = vpack.c.b16 %v390, %v389
    %v507 = vpack.c.b16 %v392, %v391
    %v508 = vpack.c.b16 %v394, %v393
    %v509 = vpack.c.b16 %v396, %v395
    %v510 = vpack.c.b16 %v398, %v397
    %v511 = vpack.c.b16 %v400, %v399
    %v512 = vpack.c.b16 %v402, %v401
    %v513 = vpack.c.b16 %v404, %v403
    %v514 = vpack.c.b16 %v406, %v405
    %v515 = vpack.c.b16 %v408, %v407
    %v516 = vpack.c.b16 %v410, %v409
    %v517 = vpack.c.b16 %v412, %v411
    %v518 = vpack.c.b16 %v414, %v413
    %v519 = vpack.c.b16 %v416, %v415
    %v520 = vpack.c.b16 %v418, %v417
    %v521 = vpack.c.b16 %v420, %v419
    %v522 = vpack.c.b16 %v422, %v421
    %v523 = vpack.c.b16 %v424, %v423
    %v524 = vpack.c.b16 %v426, %v425
    %v525 = vpack.c.b16 %v428, %v427
    %v526 = vpack.c.b16 %v430, %v429
    %v527 = vpack.c.b16 %v432, %v431
    %v528 = vpack.c.b16 %v434, %v433
    %v529 = vpack.c.b16 %v436, %v435
    %v530 = vpack.c.b16 %v438, %v437
    %v531 = vpack.c.b16 %v440, %v439
    %v532 = vpack.c.b16 %v442, %v441
    %v533 = vpack.c.b16 %v444, %v443
    %v534 = vpack.c.b16 %v446, %v445
    %v535 = vpack.c.b16 %v448, %v447
    %v536 = vpack.c.b16 %v450, %v449
    %v537 = vpack.c.b16 %v452, %v451
    %v538 = vpack.c.b16 %v454, %v453
    %v539 = vpack.c.b16 %v456, %v455
    %v540 = vpack.c.b16 %v458, %v457
    %v541 = vpack.c.b16 %v460, %v459
    %v542 = vpack.c.b16 %v462, %v461
    %v543 = vpack.c.b16 %v464, %v463
    %v544 = vpack.c.b16 %v466, %v465
    %v545 = vpack.c.b16 %v468, %v467
    %v546 = vpack.c.b16 %v470, %v469
    %v547 = vpack.c.b16 %v472, %v471
    %v548 = vpack.c.b16 %v474, %v473
    %v549 = vpack.c.b16 %v476, %v475
    %v550 = vpack.c.b16 %v478, %v477
    %v551 = vpack.c.b16 %v480, %v479
    %v552 = vpack.c.b16 %v482, %v481
    %v553 = vpack.c.b16 %v484, %v483
    %v554 = vpack.c.b16 %v486, %v485
    %v555 = vpack.c.b16 %v488, %v487
    %v556 = vpack.c.b16 %v490, %v489
    %v557 = vpack.c.b16 %v492, %v491
    %v558 = vpack.c.b16 %v494, %v493
    %623 = vmatprep.subr.bf16.mxu0 0
    %624 = vmatpush1.bf16.msra.mxu0 %v495
    %625 = vmatprep.subr.bf16.mxu0 0
    %626 = vmatpush1.bf16.msra.mxu0 %v496
    %627 = vmatprep.subr.bf16.mxu0 0
    %628 = vmatpush1.bf16.msra.mxu0 %v497
    %629 = vmatprep.subr.bf16.mxu0 0
    %630 = vmatpush1.bf16.msra.mxu0 %v498
    %631 = vmatprep.subr.bf16.mxu0 0
    %632 = vmatpush1.bf16.msra.mxu0 %v499
    %633 = vmatprep.subr.bf16.mxu0 0
    %634 = vmatpush1.bf16.msra.mxu0 %v500
    %635 = vmatprep.subr.bf16.mxu0 0
    %636 = vmatpush1.bf16.msra.mxu0 %v501
    %637 = vmatprep.subr.bf16.mxu0 0
    %638 = vmatpush1.bf16.msra.mxu0 %v502
    %639 = vmatprep.subr.bf16.mxu0 0
    %640 = vmatpush1.bf16.msra.mxu0 %v503
    %641 = vmatprep.subr.bf16.mxu0 0
    %642 = vmatpush1.bf16.msra.mxu0 %v504
    %643 = vmatprep.subr.bf16.mxu0 0
    %644 = vmatpush1.bf16.msra.mxu0 %v505
    %645 = vmatprep.subr.bf16.mxu0 0
    %646 = vmatpush1.bf16.msra.mxu0 %v506
    %647 = vmatprep.subr.bf16.mxu0 0
    %648 = vmatpush1.bf16.msra.mxu0 %v507
    %649 = vmatprep.subr.bf16.mxu0 0
    %650 = vmatpush1.bf16.msra.mxu0 %v508
    %651 = vmatprep.subr.bf16.mxu0 0
    %652 = vmatpush1.bf16.msra.mxu0 %v509
    %653 = vmatprep.subr.bf16.mxu0 0
    %654 = vmatpush1.bf16.msra.mxu0 %v510
    %655 = vmatprep.mubr.bf16.mxu0 %v224
    %656 = vmatmul.mubr.bf16.gmra.mrb[0].mxu0 %v223
    %v657 = vpop.f32.mrb[0].mxu0
    %v658 = vadd.f32 %v209, %v657
    %v659 = vpop.f32.mrb[0].mxu0
    %v660 = vpop.f32.mrb[0].mxu0
    %v661 = vpop.f32.mrb[0].mxu0
    %662 = vdwg.mxu0
    %663 = vmatprep.subr.bf16.mxu0 0
    %664 = vmatpush1.bf16.msra.mxu0 %v511
    %665 = vmatprep.subr.bf16.mxu0 0
    %666 = vmatpush1.bf16.msra.mxu0 %v512
    %667 = vmatprep.subr.bf16.mxu0 0
    %668 = vmatpush1.bf16.msra.mxu0 %v513
    %669 = vmatprep.subr.bf16.mxu0 0
    %670 = vmatpush1.bf16.msra.mxu0 %v514
    %671 = vmatprep.subr.bf16.mxu0 0
    %672 = vmatpush1.bf16.msra.mxu0 %v515
    %673 = vmatprep.subr.bf16.mxu0 0
    %674 = vmatpush1.bf16.msra.mxu0 %v516
    %675 = vmatprep.subr.bf16.mxu0 0
    %676 = vmatpush1.bf16.msra.mxu0 %v517
    %677 = vmatprep.subr.bf16.mxu0 0
    %678 = vmatpush1.bf16.msra.mxu0 %v518
    %679 = vmatprep.subr.bf16.mxu0 0
    %680 = vmatpush1.bf16.msra.mxu0 %v519
    %681 = vmatprep.subr.bf16.mxu0 0
    %682 = vmatpush1.bf16.msra.mxu0 %v520
    %683 = vmatprep.subr.bf16.mxu0 0
    %684 = vmatpush1.bf16.msra.mxu0 %v521
    %685 = vmatprep.subr.bf16.mxu0 0
    %686 = vmatpush1.bf16.msra.mxu0 %v522
    %687 = vmatprep.subr.bf16.mxu0 0
    %688 = vmatpush1.bf16.msra.mxu0 %v523
    %689 = vmatprep.subr.bf16.mxu0 0
    %690 = vmatpush1.bf16.msra.mxu0 %v524
    %691 = vmatprep.subr.bf16.mxu0 0
    %692 = vmatpush1.bf16.msra.mxu0 %v525
    %693 = vmatprep.subr.bf16.mxu0 0
    %694 = vmatpush1.bf16.msra.mxu0 %v526
    %695 = vmatprep.mubr.bf16.mxu0 %v226
    %696 = vmatmul.mubr.bf16.gmra.mrb[0].mxu0 %v225
    %v697 = vpop.f32.mrb[0].mxu0
    %v698 = vadd.f32 %v658, %v697
    %v699 = vpop.f32.mrb[0].mxu0
    %v700 = vpop.f32.mrb[0].mxu0
    %v701 = vpop.f32.mrb[0].mxu0
    %702 = vdwg.mxu0
    %703 = vmatprep.subr.bf16.mxu0 0
    %704 = vmatpush1.bf16.msra.mxu0 %v527
    %705 = vmatprep.subr.bf16.mxu0 0
    %706 = vmatpush1.bf16.msra.mxu0 %v528
    %707 = vmatprep.subr.bf16.mxu0 0
    %708 = vmatpush1.bf16.msra.mxu0 %v529
    %709 = vmatprep.subr.bf16.mxu0 0
    %710 = vmatpush1.bf16.msra.mxu0 %v530
    %711 = vmatprep.subr.bf16.mxu0 0
    %712 = vmatpush1.bf16.msra.mxu0 %v531
    %713 = vmatprep.subr.bf16.mxu0 0
    %714 = vmatpush1.bf16.msra.mxu0 %v532
    %715 = vmatprep.subr.bf16.mxu0 0
    %716 = vmatpush1.bf16.msra.mxu0 %v533
    %717 = vmatprep.subr.bf16.mxu0 0
    %718 = vmatpush1.bf16.msra.mxu0 %v534
    %719 = vmatprep.subr.bf16.mxu0 0
    %720 = vmatpush1.bf16.msra.mxu0 %v535
    %721 = vmatprep.subr.bf16.mxu0 0
    %722 = vmatpush1.bf16.msra.mxu0 %v536
    %723 = vmatprep.subr.bf16.mxu0 0
    %724 = vmatpush1.bf16.msra.mxu0 %v537
    %725 = vmatprep.subr.bf16.mxu0 0
    %726 = vmatpush1.bf16.msra.mxu0 %v538
    %727 = vmatprep.subr.bf16.mxu0 0
    %728 = vmatpush1.bf16.msra.mxu0 %v539
    %729 = vmatprep.subr.bf16.mxu0 0
    %730 = vmatpush1.bf16.msra.mxu0 %v540
    %731 = vmatprep.subr.bf16.mxu0 0
    %732 = vmatpush1.bf16.msra.mxu0 %v541
    %733 = vmatprep.subr.bf16.mxu0 0
    %734 = vmatpush1.bf16.msra.mxu0 %v542
    %735 = vmatprep.mubr.bf16.mxu0 %v228
    %736 = vmatmul.mubr.bf16.gmra.mrb[0].mxu0 %v227
    %v737 = vpop.f32.mrb[0].mxu0
    %v738 = vadd.f32 %v698, %v737
    %v739 = vpop.f32.mrb[0].mxu0
    %v740 = vpop.f32.mrb[0].mxu0
    %v741 = vpop.f32.mrb[0].mxu0
    %742 = vdwg.mxu0
    %743 = vmatprep.subr.bf16.mxu0 0
    %744 = vmatpush1.bf16.msra.mxu0 %v543
    %745 = vmatprep.subr.bf16.mxu0 0
    %746 = vmatpush1.bf16.msra.mxu0 %v544
    %747 = vmatprep.subr.bf16.mxu0 0
    %748 = vmatpush1.bf16.msra.mxu0 %v545
    %749 = vmatprep.subr.bf16.mxu0 0
    %750 = vmatpush1.bf16.msra.mxu0 %v546
    %751 = vmatprep.subr.bf16.mxu0 0
    %752 = vmatpush1.bf16.msra.mxu0 %v547
    %753 = vmatprep.subr.bf16.mxu0 0
    %754 = vmatpush1.bf16.msra.mxu0 %v548
    %755 = vmatprep.subr.bf16.mxu0 0
    %756 = vmatpush1.bf16.msra.mxu0 %v549
    %757 = vmatprep.subr.bf16.mxu0 0
    %758 = vmatpush1.bf16.msra.mxu0 %v550
    %759 = vmatprep.subr.bf16.mxu0 0
    %760 = vmatpush1.bf16.msra.mxu0 %v551
    %761 = vmatprep.subr.bf16.mxu0 0
    %762 = vmatpush1.bf16.msra.mxu0 %v552
    %763 = vmatprep.subr.bf16.mxu0 0
    %764 = vmatpush1.bf16.msra.mxu0 %v553
    %765 = vmatprep.subr.bf16.mxu0 0
    %766 = vmatpush1.bf16.msra.mxu0 %v554
    %767 = vmatprep.subr.bf16.mxu0 0
    %768 = vmatpush1.bf16.msra.mxu0 %v555
    %769 = vmatprep.subr.bf16.mxu0 0
    %770 = vmatpush1.bf16.msra.mxu0 %v556
    %771 = vmatprep.subr.bf16.mxu0 0
    %772 = vmatpush1.bf16.msra.mxu0 %v557
    %773 = vmatprep.subr.bf16.mxu0 0
    %774 = vmatpush1.bf16.msra.mxu0 %v558
    %775 = vmatprep.mubr.bf16.mxu0 %v230
    %776 = vmatmul.mubr.bf16.gmra.mrb[0].mxu0 %v229
    %v777 = vpop.f32.mrb[0].mxu0
    %v778 = vadd.f32 %v738, %v777
    %v779 = vpop.f32.mrb[0].mxu0
    %v780 = vpop.f32.mrb[0].mxu0
    %v781 = vpop.f32.mrb[0].mxu0
    %782 = vdwg.mxu0
    %v783 = vmax.f32 %v778, 0.0
    %v784 = vpack.c.bf16 %v783, %v783
    %v785 = vld [vmem:[%s4] sm:$0xf]
    %v786 = vld [vmem:[%s4 + $0x4] sm:$0xf]
    %v787 = vld [vmem:[%s4 + $0x8] sm:$0xf]
    %v788 = vld [vmem:[%s4 + $0xc] sm:$0xf]
    %v789 = vld [vmem:[%s4 + $0x10] sm:$0xf]
    %v790 = vld [vmem:[%s4 + $0x14] sm:$0xf]
    %v791 = vld [vmem:[%s4 + $0x18] sm:$0xf]
    %v792 = vld [vmem:[%s4 + $0x1c] sm:$0xf]
    %v793 = vld [vmem:[%s5] sm:$0x1]
    %v795 = vlaneseq
    %v796 = vshrl.u32 %v795, 7
    %v797 = vsub.s32 0, %v796
    %v798 = vrot.slane %v793, %v797
    %v808 = vunpack.c.l.b16 %v785
    %v809 = vunpack.c.l.b16 %v786
    %v810 = vunpack.c.l.b16 %v787
    %v811 = vunpack.c.l.b16 %v788
    %v812 = vunpack.c.l.b16 %v789
    %v813 = vunpack.c.l.b16 %v790
    %v814 = vunpack.c.l.b16 %v791
    %v815 = vunpack.c.l.b16 %v792
    %v816 = vpack.c.b16 %v809, %v808
    %v817 = vpack.c.b16 %v811, %v810
    %v818 = vpack.c.b16 %v813, %v812
    %v819 = vpack.c.b16 %v815, %v814
    %vm824 = vcmask 523264
    %v826 = vsel %vm824, %v784, 0
    %828 = vmatprep.subr.bf16.mxu0 0
    %829 = vmatpush1.bf16.msra.mxu0 %v816
    %830 = vmatprep.subr.bf16.mxu0 0
    %831 = vmatpush1.bf16.msra.mxu0 %v817
    %832 = vmatprep.subr.bf16.mxu0 0
    %833 = vmatpush1.bf16.msra.mxu0 %v818
    %834 = vmatprep.subr.bf16.mxu0 0
    %835 = vmatpush1.bf16.msra.mxu0 %v819
    %836 = vmatprep.subr.bf16.mxu0 0
    %837 = vmatpush1.bf16.msra.mxu0 0
    %838 = vmatprep.subr.bf16.mxu0 0
    %839 = vmatpush1.bf16.msra.mxu0 0
    %840 = vmatprep.subr.bf16.mxu0 0
    %841 = vmatpush1.bf16.msra.mxu0 0
    %842 = vmatprep.subr.bf16.mxu0 0
    %843 = vmatpush1.bf16.msra.mxu0 0
    %844 = vmatprep.subr.bf16.mxu0 0
    %845 = vmatpush1.bf16.msra.mxu0 0
    %846 = vmatprep.subr.bf16.mxu0 0
    %847 = vmatpush1.bf16.msra.mxu0 0
    %848 = vmatprep.subr.bf16.mxu0 0
    %849 = vmatpush1.bf16.msra.mxu0 0
    %850 = vmatprep.subr.bf16.mxu0 0
    %851 = vmatpush1.bf16.msra.mxu0 0
    %852 = vmatprep.subr.bf16.mxu0 0
    %853 = vmatpush1.bf16.msra.mxu0 0
    %854 = vmatprep.subr.bf16.mxu0 0
    %855 = vmatpush1.bf16.msra.mxu0 0
    %856 = vmatprep.subr.bf16.mxu0 0
    %857 = vmatpush1.bf16.msra.mxu0 0
    %858 = vmatprep.subr.bf16.mxu0 0
    %859 = vmatpush1.bf16.msra.mxu0 0
    %860 = vmatprep.mubr.bf16.mxu0 0
    %861 = vmatmul.mubr.bf16.gmra.mrb[0].mxu0 %v826
    %v862 = vpop.f32.mrb[0].mxu0
    %v863 = vadd.f32 %v798, %v862
    %v864 = vpop.f32.mrb[0].mxu0
    %v865 = vpop.f32.mrb[0].mxu0
    %v866 = vpop.f32.mrb[0].mxu0
    %867 = vdwg.mxu0
    %v868 = vmax.f32 %v863, 0.0
    %v869 = vpack.c.bf16 %v868, %v868
    %v870 = vld [vmem:[%s6] sm:$0xf]
    %v871 = vld [vmem:[%s6 + $0x4] sm:$0xf]
    %v872 = vld [vmem:[%s6 + $0x8] sm:$0xf]
    %v873 = vld [vmem:[%s6 + $0xc] sm:$0xf]
    %v874 = vld [vmem:[%s6 + $0x10] sm:$0xf]
    %v875 = vld [vmem:[%s6 + $0x14] sm:$0xf]
    %v876 = vld [vmem:[%s6 + $0x18] sm:$0xf]
    %v877 = vld [vmem:[%s6 + $0x1c] sm:$0xf]
    %v878 = vld [vmem:[%s7] sm:$0x1]
    %v880 = vlaneseq
    %v881 = vshrl.u32 %v880, 7
    %v882 = vsub.s32 0, %v881
    %v883 = vrot.slane %v878, %v882
    %v893 = vunpack.c.l.b16 %v870
    %v894 = vunpack.c.l.b16 %v871
    %v895 = vunpack.c.l.b16 %v872
    %v896 = vunpack.c.l.b16 %v873
    %v897 = vunpack.c.l.b16 %v874
    %v898 = vunpack.c.l.b16 %v875
    %v899 = vunpack.c.l.b16 %v876
    %v900 = vunpack.c.l.b16 %v877
    %v901 = vpack.c.b16 %v894, %v893
    %v902 = vpack.c.b16 %v896, %v895
    %v903 = vpack.c.b16 %v898, %v897
    %v904 = vpack.c.b16 %v900, %v899
    %v910 = vsel %vm824, %v869, 0
    %912 = vmatprep.subr.bf16.mxu0 0
    %913 = vmatpush1.bf16.msra.mxu0 %v901
    %914 = vmatprep.subr.bf16.mxu0 0
    %915 = vmatpush1.bf16.msra.mxu0 %v902
    %916 = vmatprep.subr.bf16.mxu0 0
    %917 = vmatpush1.bf16.msra.mxu0 %v903
    %918 = vmatprep.subr.bf16.mxu0 0
    %919 = vmatpush1.bf16.msra.mxu0 %v904
    %920 = vmatprep.subr.bf16.mxu0 0
    %921 = vmatpush1.bf16.msra.mxu0 0
    %922 = vmatprep.subr.bf16.mxu0 0
    %923 = vmatpush1.bf16.msra.mxu0 0
    %924 = vmatprep.subr.bf16.mxu0 0
    %925 = vmatpush1.bf16.msra.mxu0 0
    %926 = vmatprep.subr.bf16.mxu0 0
    %927 = vmatpush1.bf16.msra.mxu0 0
    %928 = vmatprep.subr.bf16.mxu0 0
    %929 = vmatpush1.bf16.msra.mxu0 0
    %930 = vmatprep.subr.bf16.mxu0 0
    %931 = vmatpush1.bf16.msra.mxu0 0
    %932 = vmatprep.subr.bf16.mxu0 0
    %933 = vmatpush1.bf16.msra.mxu0 0
    %934 = vmatprep.subr.bf16.mxu0 0
    %935 = vmatpush1.bf16.msra.mxu0 0
    %936 = vmatprep.subr.bf16.mxu0 0
    %937 = vmatpush1.bf16.msra.mxu0 0
    %938 = vmatprep.subr.bf16.mxu0 0
    %939 = vmatpush1.bf16.msra.mxu0 0
    %940 = vmatprep.subr.bf16.mxu0 0
    %941 = vmatpush1.bf16.msra.mxu0 0
    %942 = vmatprep.subr.bf16.mxu0 0
    %943 = vmatpush1.bf16.msra.mxu0 0
    %944 = vmatprep.mubr.bf16.mxu0 0
    %945 = vmatmul.mubr.bf16.gmra.mrb[0].mxu0 %v910
    %v946 = vpop.f32.mrb[0].mxu0
    %v947 = vadd.f32 %v883, %v946
    %v948 = vpop.f32.mrb[0].mxu0
    %v949 = vpop.f32.mrb[0].mxu0
    %v950 = vpop.f32.mrb[0].mxu0
    %951 = vdwg.mxu0
    %v952 = vpack.c.bf16 %v947, %v947
    %v953 = vld [vmem:[%s8] sm:$0xf]
    %v954 = vld [vmem:[%s8 + $0x4] sm:$0xf]
    %v955 = vld [vmem:[%s8 + $0x8] sm:$0xf]
    %v956 = vld [vmem:[%s8 + $0xc] sm:$0xf]
    %v957 = vld [vmem:[%s8 + $0x10] sm:$0xf]
    %v958 = vld [vmem:[%s8 + $0x14] sm:$0xf]
    %v959 = vld [vmem:[%s8 + $0x18] sm:$0xf]
    %v960 = vld [vmem:[%s8 + $0x1c] sm:$0xf]
    %v961 = vld [vmem:[%s9] sm:$0x1]
    %v963 = vlaneseq
    %v964 = vshrl.u32 %v963, 7
    %v965 = vsub.s32 0, %v964
    %v966 = vrot.slane %v961, %v965
    %v976 = vunpack.c.l.b16 %v953
    %v977 = vunpack.c.l.b16 %v954
    %v978 = vunpack.c.l.b16 %v955
    %v979 = vunpack.c.l.b16 %v956
    %v980 = vunpack.c.l.b16 %v957
    %v981 = vunpack.c.l.b16 %v958
    %v982 = vunpack.c.l.b16 %v959
    %v983 = vunpack.c.l.b16 %v960
    %v984 = vpack.c.b16 %v977, %v976
    %v985 = vpack.c.b16 %v979, %v978
    %v986 = vpack.c.b16 %v981, %v980
    %v987 = vpack.c.b16 %v983, %v982
    %v993 = vsel %vm824, %v952, 0
    %995 = vmatprep.subr.bf16.mxu0 0
    %996 = vmatpush1.bf16.msra.mxu0 %v984
    %997 = vmatprep.subr.bf16.mxu0 0
    %998 = vmatpush1.bf16.msra.mxu0 %v985
    %999 = vmatprep.subr.bf16.mxu0 0
    %1000 = vmatpush1.bf16.msra.mxu0 %v986
    %1001 = vmatprep.subr.bf16.mxu0 0
    %1002 = vmatpush1.bf16.msra.mxu0 %v987
    %1003 = vmatprep.subr.bf16.mxu0 0
    %1004 = vmatpush1.bf16.msra.mxu0 0
    %1005 = vmatprep.subr.bf16.mxu0 0
    %1006 = vmatpush1.bf16.msra.mxu0 0
    %1007 = vmatprep.subr.bf16.mxu0 0
    %1008 = vmatpush1.bf16.msra.mxu0 0
    %1009 = vmatprep.subr.bf16.mxu0 0
    %1010 = vmatpush1.bf16.msra.mxu0 0
    %1011 = vmatprep.subr.bf16.mxu0 0
    %1012 = vmatpush1.bf16.msra.mxu0 0
    %1013 = vmatprep.subr.bf16.mxu0 0
    %1014 = vmatpush1.bf16.msra.mxu0 0
    %1015 = vmatprep.subr.bf16.mxu0 0
    %1016 = vmatpush1.bf16.msra.mxu0 0
    %1017 = vmatprep.subr.bf16.mxu0 0
    %1018 = vmatpush1.bf16.msra.mxu0 0
    %1019 = vmatprep.subr.bf16.mxu0 0
    %1020 = vmatpush1.bf16.msra.mxu0 0
    %1021 = vmatprep.subr.bf16.mxu0 0
    %1022 = vmatpush1.bf16.msra.mxu0 0
    %1023 = vmatprep.subr.bf16.mxu0 0
    %1024 = vmatpush1.bf16.msra.mxu0 0
    %1025 = vmatprep.subr.bf16.mxu0 0
    %1026 = vmatpush1.bf16.msra.mxu0 0
    %1027 = vmatprep.mubr.bf16.mxu0 0
    %1028 = vmatmul.mubr.bf16.gmra.mrb[0].mxu0 %v993
    %v1029 = vpop.f32.mrb[0].mxu0
    %v1030 = vadd.f32 %v966, %v1029
    %v1031 = vpop.f32.mrb[0].mxu0
    %v1032 = vpop.f32.mrb[0].mxu0
    %v1033 = vpop.f32.mrb[0].mxu0
    %1034 = vdwg.mxu0
    %v1035 = vld [vmem:[%s10] sm:$0xf]
    %v1036 = vld [vmem:[%s10 + $0x4] sm:$0xf]
    %v1037 = vld [vmem:[%s10 + $0x8] sm:$0xf]
    %v1038 = vld [vmem:[%s10 + $0xc] sm:$0xf]
    %v1039 = vld [vmem:[%s10 + $0x10] sm:$0xf]
    %v1040 = vld [vmem:[%s10 + $0x14] sm:$0xf]
    %v1041 = vld [vmem:[%s10 + $0x18] sm:$0xf]
    %v1042 = vld [vmem:[%s10 + $0x1c] sm:$0xf]
    %v1043 = vld [vmem:[%s11] sm:$0x1]
    %v1045 = vlaneseq
    %v1046 = vshrl.u32 %v1045, 7
    %v1047 = vsub.s32 0, %v1046
    %v1048 = vrot.slane %v1043, %v1047
    %v1058 = vunpack.c.l.b16 %v1035
    %v1059 = vunpack.c.l.b16 %v1036
    %v1060 = vunpack.c.l.b16 %v1037
    %v1061 = vunpack.c.l.b16 %v1038
    %v1062 = vunpack.c.l.b16 %v1039
    %v1063 = vunpack.c.l.b16 %v1040
    %v1064 = vunpack.c.l.b16 %v1041
    %v1065 = vunpack.c.l.b16 %v1042
    %v1066 = vpack.c.b16 %v1059, %v1058
    %v1067 = vpack.c.b16 %v1061, %v1060
    %v1068 = vpack.c.b16 %v1063, %v1062
    %v1069 = vpack.c.b16 %v1065, %v1064
    %1074 = vmatprep.subr.bf16.mxu0 0
    %1075 = vmatpush1.bf16.msra.mxu0 %v1066
    %1076 = vmatprep.subr.bf16.mxu0 0
    %1077 = vmatpush1.bf16.msra.mxu0 %v1067
    %1078 = vmatprep.subr.bf16.mxu0 0
    %1079 = vmatpush1.bf16.msra.mxu0 %v1068
    %1080 = vmatprep.subr.bf16.mxu0 0
    %1081 = vmatpush1.bf16.msra.mxu0 %v1069
    %1082 = vmatprep.subr.bf16.mxu0 0
    %1083 = vmatpush1.bf16.msra.mxu0 0
    %1084 = vmatprep.subr.bf16.mxu0 0
    %1085 = vmatpush1.bf16.msra.mxu0 0
    %1086 = vmatprep.subr.bf16.mxu0 0
    %1087 = vmatpush1.bf16.msra.mxu0 0
    %1088 = vmatprep.subr.bf16.mxu0 0
    %1089 = vmatpush1.bf16.msra.mxu0 0
    %1090 = vmatprep.subr.bf16.mxu0 0
    %1091 = vmatpush1.bf16.msra.mxu0 0
    %1092 = vmatprep.subr.bf16.mxu0 0
    %1093 = vmatpush1.bf16.msra.mxu0 0
    %1094 = vmatprep.subr.bf16.mxu0 0
    %1095 = vmatpush1.bf16.msra.mxu0 0
    %1096 = vmatprep.subr.bf16.mxu0 0
    %1097 = vmatpush1.bf16.msra.mxu0 0
    %1098 = vmatprep.subr.bf16.mxu0 0
    %1099 = vmatpush1.bf16.msra.mxu0 0
    %1100 = vmatprep.subr.bf16.mxu0 0
    %1101 = vmatpush1.bf16.msra.mxu0 0
    %1102 = vmatprep.subr.bf16.mxu0 0
    %1103 = vmatpush1.bf16.msra.mxu0 0
    %1104 = vmatprep.subr.bf16.mxu0 0
    %1105 = vmatpush1.bf16.msra.mxu0 0
    %1106 = vmatprep.mubr.bf16.mxu0 0
    %1107 = vmatmul.mubr.bf16.gmra.mrb[0].mxu0 %v993
    %v1108 = vpop.f32.mrb[0].mxu0
    %v1109 = vadd.f32 %v1048, %v1108
    %v1110 = vpop.f32.mrb[0].mxu0
    %v1111 = vpop.f32.mrb[0].mxu0
    %v1112 = vpop.f32.mrb[0].mxu0
    %1113 = vdwg.mxu0
    %v1114 = vld [vmem:[%s1] sm:$0xff]
    %v1115 = vmul.f32 %v1109, 0.5
    %v1116 = vmul.f32 %v1115, 1.442695
    %v1117 = vpow.pop %v1116
    %v1118 = vmul.f32 %v1114, %v1117
    %v1119 = vadd.f32 %v1030, %v1118
    %v1120 = vpack.c.bf16 %v1119, %v1119
    %v1121 = vld [vmem:[%s12] sm:$0xf]
    %v1122 = vld [vmem:[%s12 + $0x4] sm:$0xf]
    %v1123 = vld [vmem:[%s13] sm:$0x1]
    %v1125 = vlaneseq
    %v1126 = vshrl.u32 %v1125, 7
    %v1127 = vsub.s32 0, %v1126
    %v1128 = vrot.slane %v1123, %v1127
    %v1132 = vunpack.c.l.b16 %v1121
    %v1133 = vunpack.c.l.b16 %v1122
    %v1134 = vpack.c.b16 %v1133, %v1132
    %vm1136 = vcmask 130048
    %v1138 = vsel %vm1136, %v1120, 0
    %1140 = vmatprep.subr.bf16.mxu0 0
    %1141 = vmatpush1.bf16.msra.mxu0 %v1134
    %1142 = vmatprep.subr.bf16.mxu0 0
    %1143 = vmatpush1.bf16.msra.mxu0 0
    %1144 = vmatprep.subr.bf16.mxu0 0
    %1145 = vmatpush1.bf16.msra.mxu0 0
    %1146 = vmatprep.subr.bf16.mxu0 0
    %1147 = vmatpush1.bf16.msra.mxu0 0
    %1148 = vmatprep.subr.bf16.mxu0 0
    %1149 = vmatpush1.bf16.msra.mxu0 0
    %1150 = vmatprep.subr.bf16.mxu0 0
    %1151 = vmatpush1.bf16.msra.mxu0 0
    %1152 = vmatprep.subr.bf16.mxu0 0
    %1153 = vmatpush1.bf16.msra.mxu0 0
    %1154 = vmatprep.subr.bf16.mxu0 0
    %1155 = vmatpush1.bf16.msra.mxu0 0
    %1156 = vmatprep.subr.bf16.mxu0 0
    %1157 = vmatpush1.bf16.msra.mxu0 0
    %1158 = vmatprep.subr.bf16.mxu0 0
    %1159 = vmatpush1.bf16.msra.mxu0 0
    %1160 = vmatprep.subr.bf16.mxu0 0
    %1161 = vmatpush1.bf16.msra.mxu0 0
    %1162 = vmatprep.subr.bf16.mxu0 0
    %1163 = vmatpush1.bf16.msra.mxu0 0
    %1164 = vmatprep.subr.bf16.mxu0 0
    %1165 = vmatpush1.bf16.msra.mxu0 0
    %1166 = vmatprep.subr.bf16.mxu0 0
    %1167 = vmatpush1.bf16.msra.mxu0 0
    %1168 = vmatprep.subr.bf16.mxu0 0
    %1169 = vmatpush1.bf16.msra.mxu0 0
    %1170 = vmatprep.subr.bf16.mxu0 0
    %1171 = vmatpush1.bf16.msra.mxu0 0
    %1172 = vmatprep.mubr.bf16.mxu0 0
    %1173 = vmatmul.mubr.bf16.gmra.mrb[0].mxu0 %v1138
    %v1174 = vpop.f32.mrb[0].mxu0
    %v1175 = vadd.f32 %v1128, %v1174
    %v1176 = vpop.f32.mrb[0].mxu0
    %v1177 = vpop.f32.mrb[0].mxu0
    %v1178 = vpop.f32.mrb[0].mxu0
    %1179 = vdwg.mxu0
    %v1180 = vmax.f32 %v1175, 0.0
    %v1181 = vpack.c.bf16 %v1180, %v1180
    %v1182 = vld [vmem:[%s14] sm:$0xf]
    %v1183 = vld [vmem:[%s14 + $0x4] sm:$0xf]
    %v1184 = vld [vmem:[%s14 + $0x8] sm:$0xf]
    %v1185 = vld [vmem:[%s14 + $0xc] sm:$0xf]
    %v1186 = vld [vmem:[%s14 + $0x10] sm:$0xf]
    %v1187 = vld [vmem:[%s14 + $0x14] sm:$0xf]
    %v1188 = vld [vmem:[%s14 + $0x18] sm:$0xf]
    %v1189 = vld [vmem:[%s14 + $0x1c] sm:$0xf]
    %v1190 = vld [vmem:[%s15] sm:$0x1]
    %v1192 = vlaneseq
    %v1193 = vshrl.u32 %v1192, 7
    %v1194 = vsub.s32 0, %v1193
    %v1195 = vrot.slane %v1190, %v1194
    %v1205 = vunpack.c.l.b16 %v1182
    %v1206 = vunpack.c.l.b16 %v1183
    %v1207 = vunpack.c.l.b16 %v1184
    %v1208 = vunpack.c.l.b16 %v1185
    %v1209 = vunpack.c.l.b16 %v1186
    %v1210 = vunpack.c.l.b16 %v1187
    %v1211 = vunpack.c.l.b16 %v1188
    %v1212 = vunpack.c.l.b16 %v1189
    %v1213 = vpack.c.b16 %v1206, %v1205
    %v1214 = vpack.c.b16 %v1208, %v1207
    %v1215 = vpack.c.b16 %v1210, %v1209
    %v1216 = vpack.c.b16 %v1212, %v1211
    %v1222 = vsel %vm824, %v1181, 0
    %1224 = vmatprep.subr.bf16.mxu0 0
    %1225 = vmatpush1.bf16.msra.mxu0 %v1213
    %1226 = vmatprep.subr.bf16.mxu0 0
    %1227 = vmatpush1.bf16.msra.mxu0 %v1214
    %1228 = vmatprep.subr.bf16.mxu0 0
    %1229 = vmatpush1.bf16.msra.mxu0 %v1215
    %1230 = vmatprep.subr.bf16.mxu0 0
    %1231 = vmatpush1.bf16.msra.mxu0 %v1216
    %1232 = vmatprep.subr.bf16.mxu0 0
    %1233 = vmatpush1.bf16.msra.mxu0 0
    %1234 = vmatprep.subr.bf16.mxu0 0
    %1235 = vmatpush1.bf16.msra.mxu0 0
    %1236 = vmatprep.subr.bf16.mxu0 0
    %1237 = vmatpush1.bf16.msra.mxu0 0
    %1238 = vmatprep.subr.bf16.mxu0 0
    %1239 = vmatpush1.bf16.msra.mxu0 0
    %1240 = vmatprep.subr.bf16.mxu0 0
    %1241 = vmatpush1.bf16.msra.mxu0 0
    %1242 = vmatprep.subr.bf16.mxu0 0
    %1243 = vmatpush1.bf16.msra.mxu0 0
    %1244 = vmatprep.subr.bf16.mxu0 0
    %1245 = vmatpush1.bf16.msra.mxu0 0
    %1246 = vmatprep.subr.bf16.mxu0 0
    %1247 = vmatpush1.bf16.msra.mxu0 0
    %1248 = vmatprep.subr.bf16.mxu0 0
    %1249 = vmatpush1.bf16.msra.mxu0 0
    %1250 = vmatprep.subr.bf16.mxu0 0
    %1251 = vmatpush1.bf16.msra.mxu0 0
    %1252 = vmatprep.subr.bf16.mxu0 0
    %1253 = vmatpush1.bf16.msra.mxu0 0
    %1254 = vmatprep.subr.bf16.mxu0 0
    %1255 = vmatpush1.bf16.msra.mxu0 0
    %1256 = vmatprep.mubr.bf16.mxu0 0
    %1257 = vmatmul.mubr.bf16.gmra.mrb[0].mxu0 %v1222
    %v1258 = vpop.f32.mrb[0].mxu0
    %v1259 = vadd.f32 %v1195, %v1258
    %v1260 = vpop.f32.mrb[0].mxu0
    %v1261 = vpop.f32.mrb[0].mxu0
    %v1262 = vpop.f32.mrb[0].mxu0
    %1263 = vdwg.mxu0
    %v1264 = vmax.f32 %v1259, 0.0
    %v1265 = vpack.c.bf16 %v1264, %v1264
    %v1266 = vld [vmem:[%s16] sm:$0xf]
    %v1267 = vld [vmem:[%s16 + $0x4] sm:$0xf]
    %v1268 = vld [vmem:[%s16 + $0x8] sm:$0xf]
    %v1269 = vld [vmem:[%s16 + $0xc] sm:$0xf]
    %v1270 = vld [vmem:[%s16 + $0x10] sm:$0xf]
    %v1271 = vld [vmem:[%s16 + $0x14] sm:$0xf]
    %v1272 = vld [vmem:[%s16 + $0x18] sm:$0xf]
    %v1273 = vld [vmem:[%s16 + $0x1c] sm:$0xf]
    %v1274 = vld [vmem:[%s17] sm:$0x1]
    %v1276 = vlaneseq
    %v1277 = vshrl.u32 %v1276, 7
    %v1278 = vsub.s32 0, %v1277
    %v1279 = vrot.slane %v1274, %v1278
    %v1289 = vunpack.c.l.b16 %v1266
    %v1290 = vunpack.c.l.b16 %v1267
    %v1291 = vunpack.c.l.b16 %v1268
    %v1292 = vunpack.c.l.b16 %v1269
    %v1293 = vunpack.c.l.b16 %v1270
    %v1294 = vunpack.c.l.b16 %v1271
    %v1295 = vunpack.c.l.b16 %v1272
    %v1296 = vunpack.c.l.b16 %v1273
    %v1297 = vpack.c.b16 %v1290, %v1289
    %v1298 = vpack.c.b16 %v1292, %v1291
    %v1299 = vpack.c.b16 %v1294, %v1293
    %v1300 = vpack.c.b16 %v1296, %v1295
    %v1306 = vsel %vm824, %v1265, 0
    %1308 = vmatprep.subr.bf16.mxu0 0
    %1309 = vmatpush1.bf16.msra.mxu0 %v1297
    %1310 = vmatprep.subr.bf16.mxu0 0
    %1311 = vmatpush1.bf16.msra.mxu0 %v1298
    %1312 = vmatprep.subr.bf16.mxu0 0
    %1313 = vmatpush1.bf16.msra.mxu0 %v1299
    %1314 = vmatprep.subr.bf16.mxu0 0
    %1315 = vmatpush1.bf16.msra.mxu0 %v1300
    %1316 = vmatprep.subr.bf16.mxu0 0
    %1317 = vmatpush1.bf16.msra.mxu0 0
    %1318 = vmatprep.subr.bf16.mxu0 0
    %1319 = vmatpush1.bf16.msra.mxu0 0
    %1320 = vmatprep.subr.bf16.mxu0 0
    %1321 = vmatpush1.bf16.msra.mxu0 0
    %1322 = vmatprep.subr.bf16.mxu0 0
    %1323 = vmatpush1.bf16.msra.mxu0 0
    %1324 = vmatprep.subr.bf16.mxu0 0
    %1325 = vmatpush1.bf16.msra.mxu0 0
    %1326 = vmatprep.subr.bf16.mxu0 0
    %1327 = vmatpush1.bf16.msra.mxu0 0
    %1328 = vmatprep.subr.bf16.mxu0 0
    %1329 = vmatpush1.bf16.msra.mxu0 0
    %1330 = vmatprep.subr.bf16.mxu0 0
    %1331 = vmatpush1.bf16.msra.mxu0 0
    %1332 = vmatprep.subr.bf16.mxu0 0
    %1333 = vmatpush1.bf16.msra.mxu0 0
    %1334 = vmatprep.subr.bf16.mxu0 0
    %1335 = vmatpush1.bf16.msra.mxu0 0
    %1336 = vmatprep.subr.bf16.mxu0 0
    %1337 = vmatpush1.bf16.msra.mxu0 0
    %1338 = vmatprep.subr.bf16.mxu0 0
    %1339 = vmatpush1.bf16.msra.mxu0 0
    %1340 = vmatprep.mubr.bf16.mxu0 0
    %1341 = vmatmul.mubr.bf16.gmra.mrb[0].mxu0 %v1306
    %v1342 = vpop.f32.mrb[0].mxu0
    %v1343 = vadd.f32 %v1279, %v1342
    %v1344 = vpop.f32.mrb[0].mxu0
    %v1345 = vpop.f32.mrb[0].mxu0
    %v1346 = vpop.f32.mrb[0].mxu0
    %1347 = vdwg.mxu0
    %v1348 = vpack.c.bf16 %v1343, %v1343
    %v1349 = vld [vmem:[%s18] sm:$0xff]
    %v1350 = vld [vmem:[%s18 + $0x8] sm:$0xff]
    %v1351 = vld [vmem:[%s18 + $0x10] sm:$0xff]
    %v1352 = vld [vmem:[%s18 + $0x18] sm:$0xff]
    %v1353 = vld [vmem:[%s18 + $0x20] sm:$0xff]
    %v1354 = vld [vmem:[%s18 + $0x28] sm:$0xff]
    %v1355 = vld [vmem:[%s18 + $0x30] sm:$0xff]
    %v1356 = vld [vmem:[%s18 + $0x38] sm:$0xff]
    %v1357 = vld [vmem:[%s18 + $0x40] sm:$0xff]
    %v1358 = vld [vmem:[%s18 + $0x48] sm:$0xff]
    %v1359 = vld [vmem:[%s18 + $0x50] sm:$0xff]
    %v1360 = vld [vmem:[%s18 + $0x58] sm:$0xff]
    %v1361 = vld [vmem:[%s18 + $0x60] sm:$0xff]
    %v1362 = vld [vmem:[%s18 + $0x68] sm:$0xff]
    %v1363 = vld [vmem:[%s18 + $0x70] sm:$0xff]
    %v1364 = vld [vmem:[%s18 + $0x78] sm:$0xff]
    %v1365 = vld [vmem:[%s18 + $0x80] sm:$0xff]
    %v1366 = vld [vmem:[%s18 + $0x88] sm:$0xff]
    %v1367 = vld [vmem:[%s18 + $0x90] sm:$0xff]
    %v1368 = vld [vmem:[%s18 + $0x98] sm:$0xff]
    %v1369 = vld [vmem:[%s18 + $0xa0] sm:$0xff]
    %v1370 = vld [vmem:[%s18 + $0xa8] sm:$0xff]
    %v1371 = vld [vmem:[%s18 + $0xb0] sm:$0xff]
    %v1372 = vld [vmem:[%s18 + $0xb8] sm:$0xff]
    %v1373 = vld [vmem:[%s18 + $0xc0] sm:$0xff]
    %v1374 = vld [vmem:[%s18 + $0xc8] sm:$0xff]
    %v1375 = vld [vmem:[%s18 + $0xd0] sm:$0xff]
    %v1376 = vld [vmem:[%s18 + $0xd8] sm:$0xff]
    %v1377 = vld [vmem:[%s18 + $0xe0] sm:$0xff]
    %v1378 = vld [vmem:[%s18 + $0xe8] sm:$0xff]
    %v1379 = vld [vmem:[%s18 + $0xf0] sm:$0xff]
    %v1380 = vld [vmem:[%s18 + $0xf8] sm:$0xff]
    %v1381 = vld [vmem:[%s19] sm:$0xff]
    %v1383 = vlaneseq
    %v1384 = vshrl.u32 %v1383, 7
    %v1385 = vsub.s32 0, %v1384
    %v1386 = vrot.slane %v1381, %v1385
    %v1387 = vlaneseq
    %v1388 = vshrl.u32 %v1387, 7
    %v1389 = vsub.s32 1, %v1388
    %v1390 = vrot.slane %v1381, %v1389
    %v1391 = vlaneseq
    %v1392 = vshrl.u32 %v1391, 7
    %v1393 = vsub.s32 2, %v1392
    %v1394 = vrot.slane %v1381, %v1393
    %v1395 = vlaneseq
    %v1396 = vshrl.u32 %v1395, 7
    %v1397 = vsub.s32 3, %v1396
    %v1398 = vrot.slane %v1381, %v1397
    %v1399 = vlaneseq
    %v1400 = vshrl.u32 %v1399, 7
    %v1401 = vsub.s32 4, %v1400
    %v1402 = vrot.slane %v1381, %v1401
    %v1403 = vlaneseq
    %v1404 = vshrl.u32 %v1403, 7
    %v1405 = vsub.s32 5, %v1404
    %v1406 = vrot.slane %v1381, %v1405
    %v1407 = vlaneseq
    %v1408 = vshrl.u32 %v1407, 7
    %v1409 = vsub.s32 6, %v1408
    %v1410 = vrot.slane %v1381, %v1409
    %v1411 = vlaneseq
    %v1412 = vshrl.u32 %v1411, 7
    %v1413 = vsub.s32 7, %v1412
    %v1414 = vrot.slane %v1381, %v1413
    %v1455 = vunpack.c.l.b16 %v1349
    %v1456 = vunpack.c.h.b16 %v1349
    %v1457 = vunpack.c.l.b16 %v1350
    %v1458 = vunpack.c.h.b16 %v1350
    %v1459 = vunpack.c.l.b16 %v1351
    %v1460 = vunpack.c.h.b16 %v1351
    %v1461 = vunpack.c.l.b16 %v1352
    %v1462 = vunpack.c.h.b16 %v1352
    %v1463 = vunpack.c.l.b16 %v1353
    %v1464 = vunpack.c.h.b16 %v1353
    %v1465 = vunpack.c.l.b16 %v1354
    %v1466 = vunpack.c.h.b16 %v1354
    %v1467 = vunpack.c.l.b16 %v1355
    %v1468 = vunpack.c.h.b16 %v1355
    %v1469 = vunpack.c.l.b16 %v1356
    %v1470 = vunpack.c.h.b16 %v1356
    %v1471 = vunpack.c.l.b16 %v1357
    %v1472 = vunpack.c.h.b16 %v1357
    %v1473 = vunpack.c.l.b16 %v1358
    %v1474 = vunpack.c.h.b16 %v1358
    %v1475 = vunpack.c.l.b16 %v1359
    %v1476 = vunpack.c.h.b16 %v1359
    %v1477 = vunpack.c.l.b16 %v1360
    %v1478 = vunpack.c.h.b16 %v1360
    %v1479 = vunpack.c.l.b16 %v1361
    %v1480 = vunpack.c.h.b16 %v1361
    %v1481 = vunpack.c.l.b16 %v1362
    %v1482 = vunpack.c.h.b16 %v1362
    %v1483 = vunpack.c.l.b16 %v1363
    %v1484 = vunpack.c.h.b16 %v1363
    %v1485 = vunpack.c.l.b16 %v1364
    %v1486 = vunpack.c.h.b16 %v1364
    %v1487 = vunpack.c.l.b16 %v1365
    %v1488 = vunpack.c.h.b16 %v1365
    %v1489 = vunpack.c.l.b16 %v1366
    %v1490 = vunpack.c.h.b16 %v1366
    %v1491 = vunpack.c.l.b16 %v1367
    %v1492 = vunpack.c.h.b16 %v1367
    %v1493 = vunpack.c.l.b16 %v1368
    %v1494 = vunpack.c.h.b16 %v1368
    %v1495 = vunpack.c.l.b16 %v1369
    %v1496 = vunpack.c.h.b16 %v1369
    %v1497 = vunpack.c.l.b16 %v1370
    %v1498 = vunpack.c.h.b16 %v1370
    %v1499 = vunpack.c.l.b16 %v1371
    %v1500 = vunpack.c.h.b16 %v1371
    %v1501 = vunpack.c.l.b16 %v1372
    %v1502 = vunpack.c.h.b16 %v1372
    %v1503 = vunpack.c.l.b16 %v1373
    %v1504 = vunpack.c.h.b16 %v1373
    %v1505 = vunpack.c.l.b16 %v1374
    %v1506 = vunpack.c.h.b16 %v1374
    %v1507 = vunpack.c.l.b16 %v1375
    %v1508 = vunpack.c.h.b16 %v1375
    %v1509 = vunpack.c.l.b16 %v1376
    %v1510 = vunpack.c.h.b16 %v1376
    %v1511 = vunpack.c.l.b16 %v1377
    %v1512 = vunpack.c.h.b16 %v1377
    %v1513 = vunpack.c.l.b16 %v1378
    %v1514 = vunpack.c.h.b16 %v1378
    %v1515 = vunpack.c.l.b16 %v1379
    %v1516 = vunpack.c.h.b16 %v1379
    %v1517 = vunpack.c.l.b16 %v1380
    %v1518 = vunpack.c.h.b16 %v1380
    %v1519 = vpack.c.b16 %v1463, %v1455
    %v1520 = vpack.c.b16 %v1464, %v1456
    %v1521 = vpack.c.b16 %v1465, %v1457
    %v1522 = vpack.c.b16 %v1466, %v1458
    %v1523 = vpack.c.b16 %v1467, %v1459
    %v1524 = vpack.c.b16 %v1468, %v1460
    %v1525 = vpack.c.b16 %v1469, %v1461
    %v1526 = vpack.c.b16 %v1470, %v1462
    %v1527 = vpack.c.b16 %v1479, %v1471
    %v1528 = vpack.c.b16 %v1480, %v1472
    %v1529 = vpack.c.b16 %v1481, %v1473
    %v1530 = vpack.c.b16 %v1482, %v1474
    %v1531 = vpack.c.b16 %v1483, %v1475
    %v1532 = vpack.c.b16 %v1484, %v1476
    %v1533 = vpack.c.b16 %v1485, %v1477
    %v1534 = vpack.c.b16 %v1486, %v1478
    %v1535 = vpack.c.b16 %v1495, %v1487
    %v1536 = vpack.c.b16 %v1496, %v1488
    %v1537 = vpack.c.b16 %v1497, %v1489
    %v1538 = vpack.c.b16 %v1498, %v1490
    %v1539 = vpack.c.b16 %v1499, %v1491
    %v1540 = vpack.c.b16 %v1500, %v1492
    %v1541 = vpack.c.b16 %v1501, %v1493
    %v1542 = vpack.c.b16 %v1502, %v1494
    %v1543 = vpack.c.b16 %v1511, %v1503
    %v1544 = vpack.c.b16 %v1512, %v1504
    %v1545 = vpack.c.b16 %v1513, %v1505
    %v1546 = vpack.c.b16 %v1514, %v1506
    %v1547 = vpack.c.b16 %v1515, %v1507
    %v1548 = vpack.c.b16 %v1516, %v1508
    %v1549 = vpack.c.b16 %v1517, %v1509
    %v1550 = vpack.c.b16 %v1518, %v1510
    %v1584 = vsel %vm824, %v1348, 0
    %1586 = vmatprep.subr.bf16.mxu0 %v1520
    %1587 = vmatpush1.bf16.msra.mxu0 %v1519
    %1588 = vmatprep.subr.bf16.mxu0 %v1528
    %1589 = vmatpush1.bf16.msra.mxu0 %v1527
    %1590 = vmatprep.subr.bf16.mxu0 %v1536
    %1591 = vmatpush1.bf16.msra.mxu0 %v1535
    %1592 = vmatprep.subr.bf16.mxu0 %v1544
    %1593 = vmatpush1.bf16.msra.mxu0 %v1543
    %1594 = vmatprep.subr.bf16.mxu0 0
    %1595 = vmatpush1.bf16.msra.mxu0 0
    %1596 = vmatprep.subr.bf16.mxu0 0
    %1597 = vmatpush1.bf16.msra.mxu0 0
    %1598 = vmatprep.subr.bf16.mxu0 0
    %1599 = vmatpush1.bf16.msra.mxu0 0
    %1600 = vmatprep.subr.bf16.mxu0 0
    %1601 = vmatpush1.bf16.msra.mxu0 0
    %1602 = vmatprep.subr.bf16.mxu0 0
    %1603 = vmatpush1.bf16.msra.mxu0 0
    %1604 = vmatprep.subr.bf16.mxu0 0
    %1605 = vmatpush1.bf16.msra.mxu0 0
    %1606 = vmatprep.subr.bf16.mxu0 0
    %1607 = vmatpush1.bf16.msra.mxu0 0
    %1608 = vmatprep.subr.bf16.mxu0 0
    %1609 = vmatpush1.bf16.msra.mxu0 0
    %1610 = vmatprep.subr.bf16.mxu0 0
    %1611 = vmatpush1.bf16.msra.mxu0 0
    %1612 = vmatprep.subr.bf16.mxu0 0
    %1613 = vmatpush1.bf16.msra.mxu0 0
    %1614 = vmatprep.subr.bf16.mxu0 0
    %1615 = vmatpush1.bf16.msra.mxu0 0
    %1616 = vmatprep.subr.bf16.mxu0 0
    %1617 = vmatpush1.bf16.msra.mxu0 0
    %1618 = vmatprep.mubr.bf16.mxu0 0
    %1619 = vmatmul.mubr.bf16.gmra.mrb[0].mxu0 %v1584
    %v1620 = vpop.f32.mrb[0].mxu0
    %v1621 = vadd.f32 %v1386, %v1620
    %v1622 = vpop.f32.mrb[0].mxu0
    %v1623 = vadd.f32 %v1390, %v1622
    %v1624 = vpop.f32.mrb[0].mxu0
    %v1625 = vpop.f32.mrb[0].mxu0
    %1626 = vdwg.mxu0
    %1627 = vmatprep.subr.bf16.mxu0 %v1522
    %1628 = vmatpush1.bf16.msra.mxu0 %v1521
    %1629 = vmatprep.subr.bf16.mxu0 %v1530
    %1630 = vmatpush1.bf16.msra.mxu0 %v1529
    %1631 = vmatprep.subr.bf16.mxu0 %v1538
    %1632 = vmatpush1.bf16.msra.mxu0 %v1537
    %1633 = vmatprep.subr.bf16.mxu0 %v1546
    %1634 = vmatpush1.bf16.msra.mxu0 %v1545
    %1635 = vmatprep.subr.bf16.mxu0 0
    %1636 = vmatpush1.bf16.msra.mxu0 0
    %1637 = vmatprep.subr.bf16.mxu0 0
    %1638 = vmatpush1.bf16.msra.mxu0 0
    %1639 = vmatprep.subr.bf16.mxu0 0
    %1640 = vmatpush1.bf16.msra.mxu0 0
    %1641 = vmatprep.subr.bf16.mxu0 0
    %1642 = vmatpush1.bf16.msra.mxu0 0
    %1643 = vmatprep.subr.bf16.mxu0 0
    %1644 = vmatpush1.bf16.msra.mxu0 0
    %1645 = vmatprep.subr.bf16.mxu0 0
    %1646 = vmatpush1.bf16.msra.mxu0 0
    %1647 = vmatprep.subr.bf16.mxu0 0
    %1648 = vmatpush1.bf16.msra.mxu0 0
    %1649 = vmatprep.subr.bf16.mxu0 0
    %1650 = vmatpush1.bf16.msra.mxu0 0
    %1651 = vmatprep.subr.bf16.mxu0 0
    %1652 = vmatpush1.bf16.msra.mxu0 0
    %1653 = vmatprep.subr.bf16.mxu0 0
    %1654 = vmatpush1.bf16.msra.mxu0 0
    %1655 = vmatprep.subr.bf16.mxu0 0
    %1656 = vmatpush1.bf16.msra.mxu0 0
    %1657 = vmatprep.subr.bf16.mxu0 0
    %1658 = vmatpush1.bf16.msra.mxu0 0
    %1659 = vmatprep.mubr.bf16.mxu0 0
    %1660 = vmatmul.mubr.bf16.gmra.mrb[0].mxu0 %v1584
    %v1661 = vpop.f32.mrb[0].mxu0
    %v1662 = vadd.f32 %v1394, %v1661
    %v1663 = vpop.f32.mrb[0].mxu0
    %v1664 = vadd.f32 %v1398, %v1663
    %v1665 = vpop.f32.mrb[0].mxu0
    %v1666 = vpop.f32.mrb[0].mxu0
    %1667 = vdwg.mxu0
    %1668 = vmatprep.subr.bf16.mxu0 %v1524
    %1669 = vmatpush1.bf16.msra.mxu0 %v1523
    %1670 = vmatprep.subr.bf16.mxu0 %v1532
    %1671 = vmatpush1.bf16.msra.mxu0 %v1531
    %1672 = vmatprep.subr.bf16.mxu0 %v1540
    %1673 = vmatpush1.bf16.msra.mxu0 %v1539
    %1674 = vmatprep.subr.bf16.mxu0 %v1548
    %1675 = vmatpush1.bf16.msra.mxu0 %v1547
    %1676 = vmatprep.subr.bf16.mxu0 0
    %1677 = vmatpush1.bf16.msra.mxu0 0
    %1678 = vmatprep.subr.bf16.mxu0 0
    %1679 = vmatpush1.bf16.msra.mxu0 0
    %1680 = vmatprep.subr.bf16.mxu0 0
    %1681 = vmatpush1.bf16.msra.mxu0 0
    %1682 = vmatprep.subr.bf16.mxu0 0
    %1683 = vmatpush1.bf16.msra.mxu0 0
    %1684 = vmatprep.subr.bf16.mxu0 0
    %1685 = vmatpush1.bf16.msra.mxu0 0
    %1686 = vmatprep.subr.bf16.mxu0 0
    %1687 = vmatpush1.bf16.msra.mxu0 0
    %1688 = vmatprep.subr.bf16.mxu0 0
    %1689 = vmatpush1.bf16.msra.mxu0 0
    %1690 = vmatprep.subr.bf16.mxu0 0
    %1691 = vmatpush1.bf16.msra.mxu0 0
    %1692 = vmatprep.subr.bf16.mxu0 0
    %1693 = vmatpush1.bf16.msra.mxu0 0
    %1694 = vmatprep.subr.bf16.mxu0 0
    %1695 = vmatpush1.bf16.msra.mxu0 0
    %1696 = vmatprep.subr.bf16.mxu0 0
    %1697 = vmatpush1.bf16.msra.mxu0 0
    %1698 = vmatprep.subr.bf16.mxu0 0
    %1699 = vmatpush1.bf16.msra.mxu0 0
    %1700 = vmatprep.mubr.bf16.mxu0 0
    %1701 = vmatmul.mubr.bf16.gmra.mrb[0].mxu0 %v1584
    %v1702 = vpop.f32.mrb[0].mxu0
    %v1703 = vadd.f32 %v1402, %v1702
    %v1704 = vpop.f32.mrb[0].mxu0
    %v1705 = vadd.f32 %v1406, %v1704
    %v1706 = vpop.f32.mrb[0].mxu0
    %v1707 = vpop.f32.mrb[0].mxu0
    %1708 = vdwg.mxu0
    %1709 = vmatprep.subr.bf16.mxu0 %v1526
    %1710 = vmatpush1.bf16.msra.mxu0 %v1525
    %1711 = vmatprep.subr.bf16.mxu0 %v1534
    %1712 = vmatpush1.bf16.msra.mxu0 %v1533
    %1713 = vmatprep.subr.bf16.mxu0 %v1542
    %1714 = vmatpush1.bf16.msra.mxu0 %v1541
    %1715 = vmatprep.subr.bf16.mxu0 %v1550
    %1716 = vmatpush1.bf16.msra.mxu0 %v1549
    %1717 = vmatprep.subr.bf16.mxu0 0
    %1718 = vmatpush1.bf16.msra.mxu0 0
    %1719 = vmatprep.subr.bf16.mxu0 0
    %1720 = vmatpush1.bf16.msra.mxu0 0
    %1721 = vmatprep.subr.bf16.mxu0 0
    %1722 = vmatpush1.bf16.msra.mxu0 0
    %1723 = vmatprep.subr.bf16.mxu0 0
    %1724 = vmatpush1.bf16.msra.mxu0 0
    %1725 = vmatprep.subr.bf16.mxu0 0
    %1726 = vmatpush1.bf16.msra.mxu0 0
    %1727 = vmatprep.subr.bf16.mxu0 0
    %1728 = vmatpush1.bf16.msra.mxu0 0
    %1729 = vmatprep.subr.bf16.mxu0 0
    %1730 = vmatpush1.bf16.msra.mxu0 0
    %1731 = vmatprep.subr.bf16.mxu0 0
    %1732 = vmatpush1.bf16.msra.mxu0 0
    %1733 = vmatprep.subr.bf16.mxu0 0
    %1734 = vmatpush1.bf16.msra.mxu0 0
    %1735 = vmatprep.subr.bf16.mxu0 0
    %1736 = vmatpush1.bf16.msra.mxu0 0
    %1737 = vmatprep.subr.bf16.mxu0 0
    %1738 = vmatpush1.bf16.msra.mxu0 0
    %1739 = vmatprep.subr.bf16.mxu0 0
    %1740 = vmatpush1.bf16.msra.mxu0 0
    %1741 = vmatprep.mubr.bf16.mxu0 0
    %1742 = vmatmul.mubr.bf16.gmra.mrb[0].mxu0 %v1584
    %v1743 = vpop.f32.mrb[0].mxu0
    %v1744 = vadd.f32 %v1410, %v1743
    %v1745 = vpop.f32.mrb[0].mxu0
    %v1746 = vadd.f32 %v1414, %v1745
    %v1747 = vpop.f32.mrb[0].mxu0
    %v1748 = vpop.f32.mrb[0].mxu0
    %1749 = vdwg.mxu0
    %v1750 = vmax.f32 %v1621, 0.0
    %v1751 = vmax.f32 %v1623, 0.0
    %v1752 = vmax.f32 %v1662, 0.0
    %v1753 = vmax.f32 %v1664, 0.0
    %v1754 = vmax.f32 %v1703, 0.0
    %v1755 = vmax.f32 %v1705, 0.0
    %v1756 = vmax.f32 %v1744, 0.0
    %v1757 = vmax.f32 %v1746, 0.0
    %1758 = vst.msk [vmem:[#allocation2] sm:$0xff] %vm1136, %v1030
    %1759 = vst.msk [vmem:[#allocation4] sm:$0xff] %vm1136, %v1109
    %1760 = vst.msk [vmem:[#allocation6] sm:$0xff] %vm824, %v1343
    %v1761 = vpack.c.bf16 %v1750, %v1750
    %v1762 = vpack.c.bf16 %v1751, %v1751
    %v1763 = vpack.c.bf16 %v1752, %v1752
    %v1764 = vpack.c.bf16 %v1753, %v1753
    %v1765 = vpack.c.bf16 %v1754, %v1754
    %v1766 = vpack.c.bf16 %v1755, %v1755
    %v1767 = vpack.c.bf16 %v1756, %v1756
    %v1768 = vpack.c.bf16 %v1757, %v1757
    %v1777 = vunpack.c.l.b16 %v1761
    %v1778 = vunpack.c.l.b16 %v1762
    %v1779 = vunpack.c.l.b16 %v1763
    %v1780 = vunpack.c.l.b16 %v1764
    %v1781 = vunpack.c.l.b16 %v1765
    %v1782 = vunpack.c.l.b16 %v1766
    %v1783 = vunpack.c.l.b16 %v1767
    %v1784 = vunpack.c.l.b16 %v1768
    %v1785 = vpack.c.b16 %v1778, %v1777
    %v1786 = vpack.c.b16 %v1780, %v1779
    %v1787 = vpack.c.b16 %v1782, %v1781
    %v1788 = vpack.c.b16 %v1784, %v1783
    %1793 = vst [vmem:[%s23] sm:$0xff] %v1785
    %1794 = vst [vmem:[%s23 + $0x8] sm:$0xff] %v1786
    %1795 = vst [vmem:[%s23 + $0x10] sm:$0xff] %v1787
    %1796 = vst [vmem:[%s23 + $0x18] sm:$0xff] %v1788
    // Predicated region
    $region82: #{vae_forward.13} parent=1 // pred_check
      _
    $region83: #{vae_forward.13} parent=1 // pred_check_branch
      %1798 = sbr.rel (0) target = $region85
    $region84: #{vae_forward.13} parent=1 // pred_region
      %s1800 = ssub.s32 128, 128
      %1801 = vsyncadd [#allocation3], %s1800
      %s1803 = sshll.u32 [#allocation2], 4
      %s1804 = int_to_ptr.vmem [resolvable:$true] %s1803
      %1806 = dma.vmem_to_hbm [thread:$0]  %s1804, 128, %s20, [#allocation3]
    $region85: #{vae_forward.13} parent=1 // pred_fallthru
      _
    // Predicated region
    $region86: #{vae_forward.13} parent=1 // pred_check
      _
    $region87: #{vae_forward.13} parent=1 // pred_check_branch
      %1808 = sbr.rel (0) target = $region89
    $region88: #{vae_forward.13} parent=1 // pred_region
      %s1810 = ssub.s32 128, 128
      %1811 = vsyncadd [#allocation5], %s1810
      %s1813 = sshll.u32 [#allocation4], 4
      %s1814 = int_to_ptr.vmem [resolvable:$true] %s1813
      %1816 = dma.vmem_to_hbm [thread:$0]  %s1814, 128, %s21, [#allocation5]
    $region89: #{vae_forward.13} parent=1 // pred_fallthru
      _
    // Predicated region
    $region90: #{vae_forward.13} parent=1 // pred_check
      _
    $region91: #{vae_forward.13} parent=1 // pred_check_branch
      %1818 = sbr.rel (0) target = $region93
    $region92: #{vae_forward.13} parent=1 // pred_region
      %s1820 = ssub.s32 128, 128
      %1821 = vsyncadd [#allocation5], %s1820
      %s1823 = sshll.u32 [#allocation6], 4
      %s1824 = int_to_ptr.vmem [resolvable:$true] %s1823
      %1826 = dma.vmem_to_hbm [thread:$0]  %s1824, 128, %s22, [#allocation5]
    $region93: #{vae_forward.13} parent=1 // pred_fallthru
      _
    // Predicated region
    $region94: #{vae_forward.13} parent=1 // pred_check
      _
    $region95: #{vae_forward.13} parent=1 // pred_check_branch
      %1828 = sbr.rel (0) target = $region97
    $region96: #{vae_forward.13} parent=1 // pred_region
      _
    $region97: #{vae_forward.13} parent=1 // pred_fallthru
      _
    // Predicated region
    $region98: #{vae_forward.13} parent=1 // pred_check
      _
    $region99: #{vae_forward.13} parent=1 // pred_check_branch
      %1830 = sbr.rel (0) target = $region101
    $region100: #{vae_forward.13} parent=1 // pred_region
      %1831 = dma.done [#allocation3], 128
    $region101: #{vae_forward.13} parent=1 // pred_fallthru
      _
    // Predicated region
    $region102: #{vae_forward.13} parent=1 // pred_check
      _
    $region103: #{vae_forward.13} parent=1 // pred_check_branch
      %1833 = sbr.rel (0) target = $region105
    $region104: #{vae_forward.13} parent=1 // pred_region
      %1834 = dma.done [#allocation5], 128
    $region105: #{vae_forward.13} parent=1 // pred_fallthru
      _
    // Predicated region
    $region106: #{vae_forward.13} parent=1 // pred_check
      _
    $region107: #{vae_forward.13} parent=1 // pred_check_branch
      %1836 = sbr.rel (0) target = $region109
    $region108: #{vae_forward.13} parent=1 // pred_region
      %1837 = dma.done [#allocation5], 128
    $region109: #{vae_forward.13} parent=1 // pred_fallthru
      _
    // Predicated region
    $region110: #{vae_forward.13} parent=1 // pred_check
      _
    $region111: #{vae_forward.13} parent=1 // pred_check_branch
      %1839 = sbr.rel (0) target = $region113
    $region112: #{vae_forward.13} parent=1 // pred_region
      _
    $region113: #{vae_forward.13} parent=1 // pred_fallthru
      _
    %1840 = vsyncpa [#allocation3], 1
    %1841 = vsyncpa [#allocation5], 1

// kernel: vae_forward.15
$region0: #{vae_forward.15}
  #allocation0 [shape = 'u32[]', space=smem, size = 0x4, offset = 0x4, fixed_abs, tag = 'smem constant byte address 0x4 - core index']
  #allocation1 [shape = 'u32[144,128]{1,0:T(1,128)}', space=vmem, size = 0x12000, scoped, tag = 'internal scratch']
  %s0 = inlined_call_operand.vmem [shape: bf16[168,32], index: 0, kind: input, shape index: {}]
  %s1 = inlined_call_operand.vmem [shape: bf16[32,256], index: 1, kind: input, shape index: {}]
  %s2 = inlined_call_operand.vmem [shape: f32[1,256], index: 2, kind: input, shape index: {}]
  %s3 = inlined_call_operand.vmem [shape: bf16[168,256], index: 3, kind: output, shape index: {}]
  %s4 = sld [smem:[#allocation0]]
  $region45: #{vae_forward.15} parent=0
    _
  %s6 = ssub.s32 1, %s4
  %s7 = scalar_select 0, %s6, %s4
  loop: start=0, step=1, limit=5
  $region2: #{vae_forward.15} parent=0 // loop_pre_header
    _
  $region3: #{vae_forward.15} parent=0 // loop_header
    %s9 = sphi 0, %s13
    %p10 = scmp.ge.s32.totalorder %s9, 5
    %s19 = sphi 0, %s21
    %s22 = sphi 0, %s19
    %s23 = sphi 0, %s22
    %s39 = sphi 0, %s23
    %s43 = sphi 0, %s43
    %s45 = sphi 0, %s43
    %s46 = sphi 0, %s45
    %s60 = sphi 0, %s46
    %s64 = sphi 0, %s64
    %s66 = sphi 0, %s64
    %s67 = sphi 0, %s66
    %s81 = sphi 0, %s67
    %s87 = sphi 0, %s89
    %s90 = sphi 0, %s87
    %s91 = sphi 0, %s90
    %s107 = sphi 0, %s91
  $region4: #{vae_forward.15} parent=0 // loop_header_branch
    %12 = sbr.rel (%p10) target = $region8
  $region5: #{vae_forward.15} parent=0 // loop_body
    %s14 = ssub.s32 %s9, 1
    %s15 = ssub.s32 %s9, 2
    %s16 = sadd.s32 %s9, 1
    %s17 = ssub.s32 %s9, %s16
    %p18 = scmp.eq.s32.totalorder %s17, 0
    %s20 = sadd.s32 %s19, 1
    %s21 = scalar_select %p18, %s19, %s20
    %p24 = pneg %p18
    %p25 = scmp.eq.s32.totalorder %s9, 2
    %p26 = por %p24, %p25
    %p27 = scmp.ne.s32.totalorder %s19, %s22
    %p28 = scmp.eq.s32.totalorder %s9, 0
    %p29 = por %p27, %p28
    %p30 = scmp.ne.s32.totalorder %s19, %s22
    %p31 = scmp.eq.s32.totalorder %s14, 2
    %p32 = por %p30, %p31
    %p33 = scmp.ne.s32.totalorder %s22, %s23
    %p34 = scmp.eq.s32.totalorder %s14, 0
    %p35 = por %p33, %p34
    %p36 = scmp.ne.s32.totalorder %s22, %s23
    %p37 = scmp.eq.s32.totalorder %s15, 2
    %p38 = por %p36, %p37
    %p40 = scmp.ne.s32.totalorder %s23, %s39
    %p41 = scmp.eq.s32.totalorder %s15, 0
    %p42 = por %p40, %p41
    %s44 = sadd.s32 %s43, 1
    %p47 = scmp.eq.s32.totalorder %s9, 2
    %p48 = scmp.ne.s32.totalorder %s43, %s45
    %p49 = scmp.eq.s32.totalorder %s9, 0
    %p50 = por %p48, %p49
    %p51 = scmp.ne.s32.totalorder %s43, %s45
    %p52 = scmp.eq.s32.totalorder %s14, 2
    %p53 = por %p51, %p52
    %p54 = scmp.ne.s32.totalorder %s45, %s46
    %p55 = scmp.eq.s32.totalorder %s14, 0
    %p56 = por %p54, %p55
    %p57 = scmp.ne.s32.totalorder %s45, %s46
    %p58 = scmp.eq.s32.totalorder %s15, 2
    %p59 = por %p57, %p58
    %p61 = scmp.ne.s32.totalorder %s46, %s60
    %p62 = scmp.eq.s32.totalorder %s15, 0
    %p63 = por %p61, %p62
    %s65 = sadd.s32 %s64, 1
    %p68 = scmp.eq.s32.totalorder %s9, 2
    %p69 = scmp.ne.s32.totalorder %s64, %s66
    %p70 = scmp.eq.s32.totalorder %s9, 0
    %p71 = por %p69, %p70
    %p72 = scmp.ne.s32.totalorder %s64, %s66
    %p73 = scmp.eq.s32.totalorder %s14, 2
    %p74 = por %p72, %p73
    %p75 = scmp.ne.s32.totalorder %s66, %s67
    %p76 = scmp.eq.s32.totalorder %s14, 0
    %p77 = por %p75, %p76
    %p78 = scmp.ne.s32.totalorder %s66, %s67
    %p79 = scmp.eq.s32.totalorder %s15, 2
    %p80 = por %p78, %p79
    %p82 = scmp.ne.s32.totalorder %s67, %s81
    %p83 = scmp.eq.s32.totalorder %s15, 0
    %p84 = por %p82, %p83
    %s85 = ssub.s32 %s9, %s16
    %p86 = scmp.eq.s32.totalorder %s85, 0
    %s88 = sadd.s32 %s87, 1
    %s89 = scalar_select %p86, %s87, %s88
    %p92 = pneg %p86
    %p93 = scmp.eq.s32.totalorder %s9, 2
    %p94 = por %p92, %p93
    %p95 = scmp.ne.s32.totalorder %s87, %s90
    %p96 = scmp.eq.s32.totalorder %s9, 0
    %p97 = por %p95, %p96
    %p98 = scmp.ne.s32.totalorder %s87, %s90
    %p99 = scmp.eq.s32.totalorder %s14, 2
    %p100 = por %p98, %p99
    %p101 = scmp.ne.s32.totalorder %s90, %s91
    %p102 = scmp.eq.s32.totalorder %s14, 0
    %p103 = por %p101, %p102
    %p104 = scmp.ne.s32.totalorder %s90, %s91
    %p105 = scmp.eq.s32.totalorder %s15, 2
    %p106 = por %p104, %p105
    %p108 = scmp.ne.s32.totalorder %s91, %s107
    %p109 = scmp.eq.s32.totalorder %s15, 0
    %p110 = por %p108, %p109
    %p111 = scmp.le.s32.totalorder 1, %s9
    %p112 = scmp.lt.s32.totalorder %s9, 4
    %p113 = pnand %p111, %p112
    %p114 = pneg %p113
    // Predicated region
    $region9: #{vae_forward.15} parent=5 // pred_check
      _
    $region10: #{vae_forward.15} parent=5 // pred_check_branch
      %116 = sbr.rel (%p113) target = $region12
    $region11: #{vae_forward.15} parent=5 // pred_region
      %s117 = ssub.s32 %s9, 1
      // Predicated region
      $region13: #{vae_forward.15} parent=11 // pred_check
        %p118 = pneg %p56
      $region14: #{vae_forward.15} parent=11 // pred_check_branch
        %120 = sbr.rel (%p118) target = $region16
      $region15: #{vae_forward.15} parent=11 // pred_region
        _
      $region16: #{vae_forward.15} parent=11 // pred_fallthru
        _
      // Predicated region
      $region17: #{vae_forward.15} parent=11 // pred_check
        %p121 = pneg %p77
      $region18: #{vae_forward.15} parent=11 // pred_check_branch
        %123 = sbr.rel (%p121) target = $region20
      $region19: #{vae_forward.15} parent=11 // pred_region
        _
      $region20: #{vae_forward.15} parent=11 // pred_fallthru
        _
    $region12: #{vae_forward.15} parent=5 // pred_fallthru
      _
    %p124 = scmp.lt.s32.totalorder %s9, 3
    // Predicated region
    $region21: #{vae_forward.15} parent=5 // pred_check
      %p125 = pneg %p124
    $region22: #{vae_forward.15} parent=5 // pred_check_branch
      %127 = sbr.rel (%p125) target = $region24
    $region23: #{vae_forward.15} parent=5 // pred_region
      // Predicated region
      $region25: #{vae_forward.15} parent=23 // pred_check
        %p128 = pneg %p29
      $region26: #{vae_forward.15} parent=23 // pred_check_branch
        %130 = sbr.rel (%p128) target = $region28
      $region27: #{vae_forward.15} parent=23 // pred_region
        %s131 = smul.u32 7, %s9
        %p132 = scmp.lt.s32.totalorder %s131, 20
        %s133 = scalar_select %p132, %s131, 20
        %s134 = smul.addr %s133, 4
        %s135 = scalar_lea.vmem %s0, %s134
        %s136 = smul.u32 7, %s9
      $region28: #{vae_forward.15} parent=23 // pred_fallthru
        _
    $region24: #{vae_forward.15} parent=5 // pred_fallthru
      _
    %p137 = scmp.le.s32.totalorder 1, %s9
    %p138 = scmp.lt.s32.totalorder %s9, 4
    %p139 = pnand %p137, %p138
    %p140 = pneg %p139
    // Predicated region
    $region29: #{vae_forward.15} parent=5 // pred_check
      _
    $region30: #{vae_forward.15} parent=5 // pred_check_branch
      %142 = sbr.rel (%p139) target = $region32
    $region31: #{vae_forward.15} parent=5 // pred_region
      %s143 = ssub.s32 %s9, 1
      %s144 = smul.u32 7, %s14
      %p145 = scmp.lt.s32.totalorder %s144, 20
      %s146 = scalar_select %p145, %s144, 20
      %s147 = smul.addr %s146, 4
      %s148 = scalar_lea.vmem %s0, %s147
      %p149 = pneg %p35
      %p150 = pneg %p32
      %p151 = pneg %p56
      %p152 = pneg %p53
      %p153 = pneg %p77
      %p154 = pneg %p74
      %p155 = pneg %p103
      %p156 = pneg %p100
      %s157 = smul.u32 7, %s14
      %p158 = scmp.lt.s32.totalorder %s157, 20
      %s159 = scalar_select %p158, %s157, 20
      %s160 = smul.addr %s159, 2
      %s161 = smul.addr %s160, 4
      %s162 = scalar_lea.vmem %s3, %s161
      %s163 = smul.u32 7, %s14
      %p164 = scmp.lt.s32.totalorder %s163, 20
      %s165 = scalar_select %p164, %s163, 20
      %s166 = smul.addr %s165, 4
      %s167 = scalar_lea.vmem %s0, %s166
      %s168 = smul.u32 7, %s14
      %s169 = smul.u32 7, %s14
      %p170 = scmp.lt.s32.totalorder %s169, 20
      %s171 = scalar_select %p170, %s169, 20
      %s172 = smul.addr %s171, 2
      %s173 = smul.addr %s172, 4
      %s174 = scalar_lea.vmem %s3, %s173
      %s175 = smul.u32 7, %s14
      %v177 = vld [vmem:[%s167] sm:$0xf]
      %v178 = vld [vmem:[%s167 + $0x4] sm:$0xf]
      %v179 = vld [vmem:[%s167 + $0x8] sm:$0xf]
      %v180 = vld [vmem:[%s167 + $0xc] sm:$0xf]
      %v181 = vld [vmem:[%s167 + $0x10] sm:$0xf]
      %v182 = vld [vmem:[%s167 + $0x14] sm:$0xf]
      %v183 = vld [vmem:[%s167 + $0x18] sm:$0xf]
      %v184 = vld [vmem:[%s1] sm:$0xff]
      %v185 = vld [vmem:[%s1 + $0x8] sm:$0xff]
      %v186 = vld [vmem:[%s1 + $0x10] sm:$0xff]
      %v187 = vld [vmem:[%s1 + $0x18] sm:$0xff]
      %v188 = vld [vmem:[%s2] sm:$0x3]
      %v190 = vlaneseq
      %v191 = vshrl.u32 %v190, 7
      %v192 = vsub.s32 0, %v191
      %v193 = vrot.slane %v188, %v192
      %v194 = vlaneseq
      %v195 = vshrl.u32 %v194, 7
      %v196 = vsub.s32 1, %v195
      %v197 = vrot.slane %v188, %v196
      %v207 = vunpack.c.l.b16 %v177
      %v208 = vunpack.c.l.b16 %v178
      %v209 = vunpack.c.l.b16 %v179
      %v210 = vunpack.c.l.b16 %v180
      %v211 = vunpack.c.l.b16 %v181
      %v212 = vunpack.c.l.b16 %v182
      %v213 = vunpack.c.l.b16 %v183
      %v214 = vpack.c.b16 %v208, %v207
      %v215 = vpack.c.b16 %v210, %v209
      %v216 = vpack.c.b16 %v212, %v211
      %v217 = vpack.c.b16 %v213, %v213
      %v222 = vunpack.c.l.b16 %v184
      %v223 = vunpack.c.h.b16 %v184
      %v224 = vunpack.c.l.b16 %v185
      %v225 = vunpack.c.h.b16 %v185
      %v226 = vunpack.c.l.b16 %v186
      %v227 = vunpack.c.h.b16 %v186
      %v228 = vunpack.c.l.b16 %v187
      %v229 = vunpack.c.h.b16 %v187
      %v230 = vpack.c.b16 %v224, %v222
      %v231 = vpack.c.b16 %v225, %v223
      %v232 = vpack.c.b16 %v228, %v226
      %v233 = vpack.c.b16 %v229, %v227
      %vm238 = vcmask 261120
      %v240 = vsel %vm238, %v214, 0
      %v243 = vsel %vm238, %v215, 0
      %v246 = vsel %vm238, %v216, 0
      %v249 = vsel %vm238, %v217, 0
      %251 = vmatprep.subr.bf16.mxu0 %v231
      %252 = vmatpush1.bf16.msra.mxu0 %v230
      %253 = vmatprep.subr.bf16.mxu0 %v233
      %254 = vmatpush1.bf16.msra.mxu0 %v232
      %255 = vmatprep.subr.bf16.mxu0 0
      %256 = vmatpush1.bf16.msra.mxu0 0
      %257 = vmatprep.subr.bf16.mxu0 0
      %258 = vmatpush1.bf16.msra.mxu0 0
      %259 = vmatprep.subr.bf16.mxu0 0
      %260 = vmatpush1.bf16.msra.mxu0 0
      %261 = vmatprep.subr.bf16.mxu0 0
      %262 = vmatpush1.bf16.msra.mxu0 0
      %263 = vmatprep.subr.bf16.mxu0 0
      %264 = vmatpush1.bf16.msra.mxu0 0
      %265 = vmatprep.subr.bf16.mxu0 0
      %266 = vmatpush1.bf16.msra.mxu0 0
      %267 = vmatprep.subr.bf16.mxu0 0
      %268 = vmatpush1.bf16.msra.mxu0 0
      %269 = vmatprep.subr.bf16.mxu0 0
      %270 = vmatpush1.bf16.msra.mxu0 0
      %271 = vmatprep.subr.bf16.mxu0 0
      %272 = vmatpush1.bf16.msra.mxu0 0
      %273 = vmatprep.subr.bf16.mxu0 0
      %274 = vmatpush1.bf16.msra.mxu0 0
      %275 = vmatprep.subr.bf16.mxu0 0
      %276 = vmatpush1.bf16.msra.mxu0 0
      %277 = vmatprep.subr.bf16.mxu0 0
      %278 = vmatpush1.bf16.msra.mxu0 0
      %279 = vmatprep.subr.bf16.mxu0 0
      %280 = vmatpush1.bf16.msra.mxu0 0
      %281 = vmatprep.subr.bf16.mxu0 0
      %282 = vmatpush1.bf16.msra.mxu0 0
      %283 = vmatprep.mubr.bf16.mxu0 0
      %284 = vmatmul.mubr.bf16.gmra.mrb[0].mxu0 %v240
      %v285 = vpop.f32.mrb[0].mxu0
      %v286 = vadd.f32 %v193, %v285
      %v287 = vpop.f32.mrb[0].mxu0
      %v288 = vadd.f32 %v197, %v287
      %v289 = vpop.f32.mrb[0].mxu0
      %v290 = vadd.f32 %v193, %v289
      %v291 = vpop.f32.mrb[0].mxu0
      %v292 = vadd.f32 %v197, %v291
      %293 = vmatprep.mubr.bf16.mxu0 0
      %294 = vmatmul.mubr.bf16.gmra.mrb[0].mxu0 %v243
      %v295 = vpop.f32.mrb[0].mxu0
      %v296 = vadd.f32 %v193, %v295
      %v297 = vpop.f32.mrb[0].mxu0
      %v298 = vadd.f32 %v197, %v297
      %v299 = vpop.f32.mrb[0].mxu0
      %v300 = vadd.f32 %v193, %v299
      %v301 = vpop.f32.mrb[0].mxu0
      %v302 = vadd.f32 %v197, %v301
      %303 = vmatprep.mubr.bf16.mxu0 0
      %304 = vmatmul.mubr.bf16.gmra.mrb[0].mxu0 %v246
      %v305 = vpop.f32.mrb[0].mxu0
      %v306 = vadd.f32 %v193, %v305
      %v307 = vpop.f32.mrb[0].mxu0
      %v308 = vadd.f32 %v197, %v307
      %v309 = vpop.f32.mrb[0].mxu0
      %v310 = vadd.f32 %v193, %v309
      %v311 = vpop.f32.mrb[0].mxu0
      %v312 = vadd.f32 %v197, %v311
      %313 = vmatprep.mubr.bf16.mxu0 0
      %314 = vmatmul.mubr.bf16.gmra.mrb[0].mxu0 %v249
      %v315 = vpop.f32.mrb[0].mxu0
      %v316 = vadd.f32 %v193, %v315
      %v317 = vpop.f32.mrb[0].mxu0
      %v318 = vadd.f32 %v197, %v317
      %v319 = vpop.f32.mrb[0].mxu0
      %v320 = vpop.f32.mrb[0].mxu0
      %321 = vdwg.mxu0
      %v322 = vpack.c.bf16 %v290, %v286
      %v323 = vpack.c.bf16 %v292, %v288
      %v324 = vpack.c.bf16 %v300, %v296
      %v325 = vpack.c.bf16 %v302, %v298
      %v326 = vpack.c.bf16 %v310, %v306
      %v327 = vpack.c.bf16 %v312, %v308
      %v328 = vpack.c.bf16 %v316, %v316
      %v329 = vpack.c.bf16 %v318, %v318
      %v338 = vunpack.c.l.b16 %v322
      %v339 = vunpack.c.l.b16 %v323
      %v340 = vunpack.c.h.b16 %v322
      %v341 = vunpack.c.h.b16 %v323
      %v342 = vunpack.c.l.b16 %v324
      %v343 = vunpack.c.l.b16 %v325
      %v344 = vunpack.c.h.b16 %v324
      %v345 = vunpack.c.h.b16 %v325
      %v346 = vunpack.c.l.b16 %v326
      %v347 = vunpack.c.l.b16 %v327
      %v348 = vunpack.c.h.b16 %v326
      %v349 = vunpack.c.h.b16 %v327
      %v350 = vunpack.c.l.b16 %v328
      %v351 = vunpack.c.l.b16 %v329
      %v352 = vpack.c.b16 %v339, %v338
      %v353 = vpack.c.b16 %v341, %v340
      %v354 = vpack.c.b16 %v343, %v342
      %v355 = vpack.c.b16 %v345, %v344
      %v356 = vpack.c.b16 %v347, %v346
      %v357 = vpack.c.b16 %v349, %v348
      %v358 = vpack.c.b16 %v351, %v350
      %366 = vst [vmem:[%s174] sm:$0xff] %v352
      %367 = vst [vmem:[%s174 + $0x8] sm:$0xff] %v353
      %368 = vst [vmem:[%s174 + $0x10] sm:$0xff] %v354
      %369 = vst [vmem:[%s174 + $0x18] sm:$0xff] %v355
      %370 = vst [vmem:[%s174 + $0x20] sm:$0xff] %v356
      %371 = vst [vmem:[%s174 + $0x28] sm:$0xff] %v357
      %372 = vst [vmem:[%s174 + $0x30] sm:$0xff] %v358
      %s373 = smul.u32 7, %s14
      %p374 = scmp.lt.s32.totalorder %s373, 20
      %s375 = scalar_select %p374, %s373, 20
      %s376 = smul.addr %s375, 2
      %s377 = smul.addr %s376, 4
      %s378 = scalar_lea.vmem %s3, %s377
      // Predicated region
      $region33: #{vae_forward.15} parent=31 // pred_check
        %p379 = pneg %p100
      $region34: #{vae_forward.15} parent=31 // pred_check_branch
        %381 = sbr.rel (%p379) target = $region36
      $region35: #{vae_forward.15} parent=31 // pred_region
        %s382 = smul.u32 7, %s14
      $region36: #{vae_forward.15} parent=31 // pred_fallthru
        _
    $region32: #{vae_forward.15} parent=5 // pred_fallthru
      _
    %p383 = scmp.le.s32.totalorder 2, %s9
    // Predicated region
    $region37: #{vae_forward.15} parent=5 // pred_check
      %p384 = pneg %p383
    $region38: #{vae_forward.15} parent=5 // pred_check_branch
      %386 = sbr.rel (%p384) target = $region40
    $region39: #{vae_forward.15} parent=5 // pred_region
      %s387 = ssub.s32 %s9, 2
      // Predicated region
      $region41: #{vae_forward.15} parent=39 // pred_check
        %p388 = pneg %p106
      $region42: #{vae_forward.15} parent=39 // pred_check_branch
        %390 = sbr.rel (%p388) target = $region44
      $region43: #{vae_forward.15} parent=39 // pred_region
        %s391 = smul.u32 7, %s15
        %p392 = scmp.lt.s32.totalorder %s391, 20
        %s393 = scalar_select %p392, %s391, 20
        %s394 = smul.addr %s393, 2
        %s395 = smul.addr %s394, 4
        %s396 = scalar_lea.vmem %s3, %s395
      $region44: #{vae_forward.15} parent=39 // pred_fallthru
        _
    $region40: #{vae_forward.15} parent=5 // pred_fallthru
      _
  $region6: #{vae_forward.15} parent=0 // loop_footer
    %s13 = sadd.s32 1, %s9
  $region7: #{vae_forward.15} parent=0 // loop_footer_branch
    %8 = sbr.rel target = $region3
  $region8: #{vae_forward.15} parent=0 // loop_exit
    _

// kernel: vae_forward.16
$region0: #{vae_forward.16}
  #allocation0 [shape = 'u32[]', space=smem, size = 0x4, offset = 0x4, fixed_abs, tag = 'smem constant byte address 0x4 - core index']
  #allocation1 [shape = 'u32[144,128]{1,0:T(1,128)}', space=vmem, size = 0x12000, scoped, tag = 'internal scratch']
  %s0 = inlined_call_operand.vmem [shape: bf16[800,16], index: 0, kind: input, shape index: {}]
  %s1 = inlined_call_operand.vmem [shape: bf16[16,128], index: 1, kind: input, shape index: {}]
  %s2 = inlined_call_operand.vmem [shape: f32[1,128], index: 2, kind: input, shape index: {}]
  %s3 = inlined_call_operand.vmem [shape: bf16[800,128], index: 3, kind: output, shape index: {}]
  %s4 = sld [smem:[#allocation0]]
  $region45: #{vae_forward.16} parent=0
    _
  %s6 = ssub.s32 1, %s4
  %s7 = scalar_select 0, %s6, %s4
  loop: start=0, step=1, limit=4
  $region2: #{vae_forward.16} parent=0 // loop_pre_header
    _
  $region3: #{vae_forward.16} parent=0 // loop_header
    %s9 = sphi 0, %s13
    %p10 = scmp.ge.s32.totalorder %s9, 4
    %s19 = sphi 0, %s21
    %s22 = sphi 0, %s19
    %s23 = sphi 0, %s22
    %s39 = sphi 0, %s23
    %s43 = sphi 0, %s43
    %s45 = sphi 0, %s43
    %s46 = sphi 0, %s45
    %s60 = sphi 0, %s46
    %s64 = sphi 0, %s64
    %s66 = sphi 0, %s64
    %s67 = sphi 0, %s66
    %s81 = sphi 0, %s67
    %s87 = sphi 0, %s89
    %s90 = sphi 0, %s87
    %s91 = sphi 0, %s90
    %s107 = sphi 0, %s91
  $region4: #{vae_forward.16} parent=0 // loop_header_branch
    %12 = sbr.rel (%p10) target = $region8
  $region5: #{vae_forward.16} parent=0 // loop_body
    %s14 = ssub.s32 %s9, 1
    %s15 = ssub.s32 %s9, 2
    %s16 = sadd.s32 %s9, 1
    %s17 = ssub.s32 %s9, %s16
    %p18 = scmp.eq.s32.totalorder %s17, 0
    %s20 = sadd.s32 %s19, 1
    %s21 = scalar_select %p18, %s19, %s20
    %p24 = pneg %p18
    %p25 = scmp.eq.s32.totalorder %s9, 1
    %p26 = por %p24, %p25
    %p27 = scmp.ne.s32.totalorder %s19, %s22
    %p28 = scmp.eq.s32.totalorder %s9, 0
    %p29 = por %p27, %p28
    %p30 = scmp.ne.s32.totalorder %s19, %s22
    %p31 = scmp.eq.s32.totalorder %s14, 1
    %p32 = por %p30, %p31
    %p33 = scmp.ne.s32.totalorder %s22, %s23
    %p34 = scmp.eq.s32.totalorder %s14, 0
    %p35 = por %p33, %p34
    %p36 = scmp.ne.s32.totalorder %s22, %s23
    %p37 = scmp.eq.s32.totalorder %s15, 1
    %p38 = por %p36, %p37
    %p40 = scmp.ne.s32.totalorder %s23, %s39
    %p41 = scmp.eq.s32.totalorder %s15, 0
    %p42 = por %p40, %p41
    %s44 = sadd.s32 %s43, 1
    %p47 = scmp.eq.s32.totalorder %s9, 1
    %p48 = scmp.ne.s32.totalorder %s43, %s45
    %p49 = scmp.eq.s32.totalorder %s9, 0
    %p50 = por %p48, %p49
    %p51 = scmp.ne.s32.totalorder %s43, %s45
    %p52 = scmp.eq.s32.totalorder %s14, 1
    %p53 = por %p51, %p52
    %p54 = scmp.ne.s32.totalorder %s45, %s46
    %p55 = scmp.eq.s32.totalorder %s14, 0
    %p56 = por %p54, %p55
    %p57 = scmp.ne.s32.totalorder %s45, %s46
    %p58 = scmp.eq.s32.totalorder %s15, 1
    %p59 = por %p57, %p58
    %p61 = scmp.ne.s32.totalorder %s46, %s60
    %p62 = scmp.eq.s32.totalorder %s15, 0
    %p63 = por %p61, %p62
    %s65 = sadd.s32 %s64, 1
    %p68 = scmp.eq.s32.totalorder %s9, 1
    %p69 = scmp.ne.s32.totalorder %s64, %s66
    %p70 = scmp.eq.s32.totalorder %s9, 0
    %p71 = por %p69, %p70
    %p72 = scmp.ne.s32.totalorder %s64, %s66
    %p73 = scmp.eq.s32.totalorder %s14, 1
    %p74 = por %p72, %p73
    %p75 = scmp.ne.s32.totalorder %s66, %s67
    %p76 = scmp.eq.s32.totalorder %s14, 0
    %p77 = por %p75, %p76
    %p78 = scmp.ne.s32.totalorder %s66, %s67
    %p79 = scmp.eq.s32.totalorder %s15, 1
    %p80 = por %p78, %p79
    %p82 = scmp.ne.s32.totalorder %s67, %s81
    %p83 = scmp.eq.s32.totalorder %s15, 0
    %p84 = por %p82, %p83
    %s85 = ssub.s32 %s9, %s16
    %p86 = scmp.eq.s32.totalorder %s85, 0
    %s88 = sadd.s32 %s87, 1
    %s89 = scalar_select %p86, %s87, %s88
    %p92 = pneg %p86
    %p93 = scmp.eq.s32.totalorder %s9, 1
    %p94 = por %p92, %p93
    %p95 = scmp.ne.s32.totalorder %s87, %s90
    %p96 = scmp.eq.s32.totalorder %s9, 0
    %p97 = por %p95, %p96
    %p98 = scmp.ne.s32.totalorder %s87, %s90
    %p99 = scmp.eq.s32.totalorder %s14, 1
    %p100 = por %p98, %p99
    %p101 = scmp.ne.s32.totalorder %s90, %s91
    %p102 = scmp.eq.s32.totalorder %s14, 0
    %p103 = por %p101, %p102
    %p104 = scmp.ne.s32.totalorder %s90, %s91
    %p105 = scmp.eq.s32.totalorder %s15, 1
    %p106 = por %p104, %p105
    %p108 = scmp.ne.s32.totalorder %s91, %s107
    %p109 = scmp.eq.s32.totalorder %s15, 0
    %p110 = por %p108, %p109
    %p111 = scmp.le.s32.totalorder 1, %s9
    %p112 = scmp.lt.s32.totalorder %s9, 3
    %p113 = pnand %p111, %p112
    %p114 = pneg %p113
    // Predicated region
    $region9: #{vae_forward.16} parent=5 // pred_check
      _
    $region10: #{vae_forward.16} parent=5 // pred_check_branch
      %116 = sbr.rel (%p113) target = $region12
    $region11: #{vae_forward.16} parent=5 // pred_region
      %s117 = ssub.s32 %s9, 1
      // Predicated region
      $region13: #{vae_forward.16} parent=11 // pred_check
        %p118 = pneg %p56
      $region14: #{vae_forward.16} parent=11 // pred_check_branch
        %120 = sbr.rel (%p118) target = $region16
      $region15: #{vae_forward.16} parent=11 // pred_region
        _
      $region16: #{vae_forward.16} parent=11 // pred_fallthru
        _
      // Predicated region
      $region17: #{vae_forward.16} parent=11 // pred_check
        %p121 = pneg %p77
      $region18: #{vae_forward.16} parent=11 // pred_check_branch
        %123 = sbr.rel (%p121) target = $region20
      $region19: #{vae_forward.16} parent=11 // pred_region
        _
      $region20: #{vae_forward.16} parent=11 // pred_fallthru
        _
    $region12: #{vae_forward.16} parent=5 // pred_fallthru
      _
    %p124 = scmp.lt.s32.totalorder %s9, 2
    // Predicated region
    $region21: #{vae_forward.16} parent=5 // pred_check
      %p125 = pneg %p124
    $region22: #{vae_forward.16} parent=5 // pred_check_branch
      %127 = sbr.rel (%p125) target = $region24
    $region23: #{vae_forward.16} parent=5 // pred_region
      // Predicated region
      $region25: #{vae_forward.16} parent=23 // pred_check
        %p128 = pneg %p29
      $region26: #{vae_forward.16} parent=23 // pred_check_branch
        %130 = sbr.rel (%p128) target = $region28
      $region27: #{vae_forward.16} parent=23 // pred_region
        %s131 = smul.u32 50, %s9
        %p132 = scmp.lt.s32.totalorder %s131, 99
        %s133 = scalar_select %p132, %s131, 99
        %s134 = smul.addr %s133, 4
        %s135 = scalar_lea.vmem %s0, %s134
        %s136 = smul.u32 50, %s9
      $region28: #{vae_forward.16} parent=23 // pred_fallthru
        _
    $region24: #{vae_forward.16} parent=5 // pred_fallthru
      _
    %p137 = scmp.le.s32.totalorder 1, %s9
    %p138 = scmp.lt.s32.totalorder %s9, 3
    %p139 = pnand %p137, %p138
    %p140 = pneg %p139
    // Predicated region
    $region29: #{vae_forward.16} parent=5 // pred_check
      _
    $region30: #{vae_forward.16} parent=5 // pred_check_branch
      %142 = sbr.rel (%p139) target = $region32
    $region31: #{vae_forward.16} parent=5 // pred_region
      %s143 = ssub.s32 %s9, 1
      %s144 = smul.u32 50, %s14
      %p145 = scmp.lt.s32.totalorder %s144, 99
      %s146 = scalar_select %p145, %s144, 99
      %s147 = smul.addr %s146, 4
      %s148 = scalar_lea.vmem %s0, %s147
      %p149 = pneg %p35
      %p150 = pneg %p32
      %p151 = pneg %p56
      %p152 = pneg %p53
      %p153 = pneg %p77
      %p154 = pneg %p74
      %p155 = pneg %p103
      %p156 = pneg %p100
      %s157 = smul.u32 50, %s14
      %p158 = scmp.lt.s32.totalorder %s157, 99
      %s159 = scalar_select %p158, %s157, 99
      %s160 = smul.addr %s159, 4
      %s161 = scalar_lea.vmem %s3, %s160
      %s162 = smul.u32 50, %s14
      %p163 = scmp.lt.s32.totalorder %s162, 99
      %s164 = scalar_select %p163, %s162, 99
      %s165 = smul.addr %s164, 4
      %s166 = scalar_lea.vmem %s0, %s165
      %s167 = smul.u32 50, %s14
      %s168 = smul.u32 50, %s14
      %p169 = scmp.lt.s32.totalorder %s168, 99
      %s170 = scalar_select %p169, %s168, 99
      %s171 = smul.addr %s170, 4
      %s172 = scalar_lea.vmem %s3, %s171
      %s173 = smul.u32 50, %s14
      %v175 = vld [vmem:[%s166] sm:$0xf]
      %v176 = vld [vmem:[%s166 + $0x4] sm:$0xf]
      %v177 = vld [vmem:[%s166 + $0x8] sm:$0xf]
      %v178 = vld [vmem:[%s166 + $0xc] sm:$0xf]
      %v179 = vld [vmem:[%s166 + $0x10] sm:$0xf]
      %v180 = vld [vmem:[%s166 + $0x14] sm:$0xf]
      %v181 = vld [vmem:[%s166 + $0x18] sm:$0xf]
      %v182 = vld [vmem:[%s166 + $0x1c] sm:$0xf]
      %v183 = vld [vmem:[%s166 + $0x20] sm:$0xf]
      %v184 = vld [vmem:[%s166 + $0x24] sm:$0xf]
      %v185 = vld [vmem:[%s166 + $0x28] sm:$0xf]
      %v186 = vld [vmem:[%s166 + $0x2c] sm:$0xf]
      %v187 = vld [vmem:[%s166 + $0x30] sm:$0xf]
      %v188 = vld [vmem:[%s166 + $0x34] sm:$0xf]
      %v189 = vld [vmem:[%s166 + $0x38] sm:$0xf]
      %v190 = vld [vmem:[%s166 + $0x3c] sm:$0xf]
      %v191 = vld [vmem:[%s166 + $0x40] sm:$0xf]
      %v192 = vld [vmem:[%s166 + $0x44] sm:$0xf]
      %v193 = vld [vmem:[%s166 + $0x48] sm:$0xf]
      %v194 = vld [vmem:[%s166 + $0x4c] sm:$0xf]
      %v195 = vld [vmem:[%s166 + $0x50] sm:$0xf]
      %v196 = vld [vmem:[%s166 + $0x54] sm:$0xf]
      %v197 = vld [vmem:[%s166 + $0x58] sm:$0xf]
      %v198 = vld [vmem:[%s166 + $0x5c] sm:$0xf]
      %v199 = vld [vmem:[%s166 + $0x60] sm:$0xf]
      %v200 = vld [vmem:[%s166 + $0x64] sm:$0xf]
      %v201 = vld [vmem:[%s166 + $0x68] sm:$0xf]
      %v202 = vld [vmem:[%s166 + $0x6c] sm:$0xf]
      %v203 = vld [vmem:[%s166 + $0x70] sm:$0xf]
      %v204 = vld [vmem:[%s166 + $0x74] sm:$0xf]
      %v205 = vld [vmem:[%s166 + $0x78] sm:$0xf]
      %v206 = vld [vmem:[%s166 + $0x7c] sm:$0xf]
      %v207 = vld [vmem:[%s166 + $0x80] sm:$0xf]
      %v208 = vld [vmem:[%s166 + $0x84] sm:$0xf]
      %v209 = vld [vmem:[%s166 + $0x88] sm:$0xf]
      %v210 = vld [vmem:[%s166 + $0x8c] sm:$0xf]
      %v211 = vld [vmem:[%s166 + $0x90] sm:$0xf]
      %v212 = vld [vmem:[%s166 + $0x94] sm:$0xf]
      %v213 = vld [vmem:[%s166 + $0x98] sm:$0xf]
      %v214 = vld [vmem:[%s166 + $0x9c] sm:$0xf]
      %v215 = vld [vmem:[%s166 + $0xa0] sm:$0xf]
      %v216 = vld [vmem:[%s166 + $0xa4] sm:$0xf]
      %v217 = vld [vmem:[%s166 + $0xa8] sm:$0xf]
      %v218 = vld [vmem:[%s166 + $0xac] sm:$0xf]
      %v219 = vld [vmem:[%s166 + $0xb0] sm:$0xf]
      %v220 = vld [vmem:[%s166 + $0xb4] sm:$0xf]
      %v221 = vld [vmem:[%s166 + $0xb8] sm:$0xf]
      %v222 = vld [vmem:[%s166 + $0xbc] sm:$0xf]
      %v223 = vld [vmem:[%s166 + $0xc0] sm:$0xf]
      %v224 = vld [vmem:[%s166 + $0xc4] sm:$0xf]
      %v225 = vld [vmem:[%s1] sm:$0xf]
      %v226 = vld [vmem:[%s1 + $0x4] sm:$0xf]
      %v227 = vld [vmem:[%s2] sm:$0x1]
      %v229 = vlaneseq
      %v230 = vshrl.u32 %v229, 7
      %v231 = vsub.s32 0, %v230
      %v232 = vrot.slane %v227, %v231
      %v284 = vunpack.c.l.b16 %v175
      %v285 = vunpack.c.l.b16 %v176
      %v286 = vunpack.c.l.b16 %v177
      %v287 = vunpack.c.l.b16 %v178
      %v288 = vunpack.c.l.b16 %v179
      %v289 = vunpack.c.l.b16 %v180
      %v290 = vunpack.c.l.b16 %v181
      %v291 = vunpack.c.l.b16 %v182
      %v292 = vunpack.c.l.b16 %v183
      %v293 = vunpack.c.l.b16 %v184
      %v294 = vunpack.c.l.b16 %v185
      %v295 = vunpack.c.l.b16 %v186
      %v296 = vunpack.c.l.b16 %v187
      %v297 = vunpack.c.l.b16 %v188
      %v298 = vunpack.c.l.b16 %v189
      %v299 = vunpack.c.l.b16 %v190
      %v300 = vunpack.c.l.b16 %v191
      %v301 = vunpack.c.l.b16 %v192
      %v302 = vunpack.c.l.b16 %v193
      %v303 = vunpack.c.l.b16 %v194
      %v304 = vunpack.c.l.b16 %v195
      %v305 = vunpack.c.l.b16 %v196
      %v306 = vunpack.c.l.b16 %v197
      %v307 = vunpack.c.l.b16 %v198
      %v308 = vunpack.c.l.b16 %v199
      %v309 = vunpack.c.l.b16 %v200
      %v310 = vunpack.c.l.b16 %v201
      %v311 = vunpack.c.l.b16 %v202
      %v312 = vunpack.c.l.b16 %v203
      %v313 = vunpack.c.l.b16 %v204
      %v314 = vunpack.c.l.b16 %v205
      %v315 = vunpack.c.l.b16 %v206
      %v316 = vunpack.c.l.b16 %v207
      %v317 = vunpack.c.l.b16 %v208
      %v318 = vunpack.c.l.b16 %v209
      %v319 = vunpack.c.l.b16 %v210
      %v320 = vunpack.c.l.b16 %v211
      %v321 = vunpack.c.l.b16 %v212
      %v322 = vunpack.c.l.b16 %v213
      %v323 = vunpack.c.l.b16 %v214
      %v324 = vunpack.c.l.b16 %v215
      %v325 = vunpack.c.l.b16 %v216
      %v326 = vunpack.c.l.b16 %v217
      %v327 = vunpack.c.l.b16 %v218
      %v328 = vunpack.c.l.b16 %v219
      %v329 = vunpack.c.l.b16 %v220
      %v330 = vunpack.c.l.b16 %v221
      %v331 = vunpack.c.l.b16 %v222
      %v332 = vunpack.c.l.b16 %v223
      %v333 = vunpack.c.l.b16 %v224
      %v334 = vpack.c.b16 %v285, %v284
      %v335 = vpack.c.b16 %v287, %v286
      %v336 = vpack.c.b16 %v289, %v288
      %v337 = vpack.c.b16 %v291, %v290
      %v338 = vpack.c.b16 %v293, %v292
      %v339 = vpack.c.b16 %v295, %v294
      %v340 = vpack.c.b16 %v297, %v296
      %v341 = vpack.c.b16 %v299, %v298
      %v342 = vpack.c.b16 %v301, %v300
      %v343 = vpack.c.b16 %v303, %v302
      %v344 = vpack.c.b16 %v305, %v304
      %v345 = vpack.c.b16 %v307, %v306
      %v346 = vpack.c.b16 %v309, %v308
      %v347 = vpack.c.b16 %v311, %v310
      %v348 = vpack.c.b16 %v313, %v312
      %v349 = vpack.c.b16 %v315, %v314
      %v350 = vpack.c.b16 %v317, %v316
      %v351 = vpack.c.b16 %v319, %v318
      %v352 = vpack.c.b16 %v321, %v320
      %v353 = vpack.c.b16 %v323, %v322
      %v354 = vpack.c.b16 %v325, %v324
      %v355 = vpack.c.b16 %v327, %v326
      %v356 = vpack.c.b16 %v329, %v328
      %v357 = vpack.c.b16 %v331, %v330
      %v358 = vpack.c.b16 %v333, %v332
      %v361 = vunpack.c.l.b16 %v225
      %v362 = vunpack.c.l.b16 %v226
      %v363 = vpack.c.b16 %v362, %v361
      %vm365 = vcmask 130048
      %v367 = vsel %vm365, %v334, 0
      %v370 = vsel %vm365, %v335, 0
      %v373 = vsel %vm365, %v336, 0
      %v376 = vsel %vm365, %v337, 0
      %v379 = vsel %vm365, %v338, 0
      %v382 = vsel %vm365, %v339, 0
      %v385 = vsel %vm365, %v340, 0
      %v388 = vsel %vm365, %v341, 0
      %v391 = vsel %vm365, %v342, 0
      %v394 = vsel %vm365, %v343, 0
      %v397 = vsel %vm365, %v344, 0
      %v400 = vsel %vm365, %v345, 0
      %v403 = vsel %vm365, %v346, 0
      %v406 = vsel %vm365, %v347, 0
      %v409 = vsel %vm365, %v348, 0
      %v412 = vsel %vm365, %v349, 0
      %v415 = vsel %vm365, %v350, 0
      %v418 = vsel %vm365, %v351, 0
      %v421 = vsel %vm365, %v352, 0
      %v424 = vsel %vm365, %v353, 0
      %v427 = vsel %vm365, %v354, 0
      %v430 = vsel %vm365, %v355, 0
      %v433 = vsel %vm365, %v356, 0
      %v436 = vsel %vm365, %v357, 0
      %v439 = vsel %vm365, %v358, 0
      %441 = vmatprep.subr.bf16.mxu0 0
      %442 = vmatpush1.bf16.msra.mxu0 %v363
      %443 = vmatprep.subr.bf16.mxu0 0
      %444 = vmatpush1.bf16.msra.mxu0 0
      %445 = vmatprep.subr.bf16.mxu0 0
      %446 = vmatpush1.bf16.msra.mxu0 0
      %447 = vmatprep.subr.bf16.mxu0 0
      %448 = vmatpush1.bf16.msra.mxu0 0
      %449 = vmatprep.subr.bf16.mxu0 0
      %450 = vmatpush1.bf16.msra.mxu0 0
      %451 = vmatprep.subr.bf16.mxu0 0
      %452 = vmatpush1.bf16.msra.mxu0 0
      %453 = vmatprep.subr.bf16.mxu0 0
      %454 = vmatpush1.bf16.msra.mxu0 0
      %455 = vmatprep.subr.bf16.mxu0 0
      %456 = vmatpush1.bf16.msra.mxu0 0
      %457 = vmatprep.subr.bf16.mxu0 0
      %458 = vmatpush1.bf16.msra.mxu0 0
      %459 = vmatprep.subr.bf16.mxu0 0
      %460 = vmatpush1.bf16.msra.mxu0 0
      %461 = vmatprep.subr.bf16.mxu0 0
      %462 = vmatpush1.bf16.msra.mxu0 0
      %463 = vmatprep.subr.bf16.mxu0 0
      %464 = vmatpush1.bf16.msra.mxu0 0
      %465 = vmatprep.subr.bf16.mxu0 0
      %466 = vmatpush1.bf16.msra.mxu0 0
      %467 = vmatprep.subr.bf16.mxu0 0
      %468 = vmatpush1.bf16.msra.mxu0 0
      %469 = vmatprep.subr.bf16.mxu0 0
      %470 = vmatpush1.bf16.msra.mxu0 0
      %471 = vmatprep.subr.bf16.mxu0 0
      %472 = vmatpush1.bf16.msra.mxu0 0
      %473 = vmatprep.mubr.bf16.mxu0 0
      %474 = vmatmul.mubr.bf16.gmra.mrb[0].mxu0 %v367
      %v475 = vpop.f32.mrb[0].mxu0
      %v476 = vadd.f32 %v232, %v475
      %v477 = vpop.f32.mrb[0].mxu0
      %v478 = vpop.f32.mrb[0].mxu0
      %v479 = vadd.f32 %v232, %v478
      %v480 = vpop.f32.mrb[0].mxu0
      %481 = vmatprep.mubr.bf16.mxu0 0
      %482 = vmatmul.mubr.bf16.gmra.mrb[0].mxu0 %v370
      %v483 = vpop.f32.mrb[0].mxu0
      %v484 = vadd.f32 %v232, %v483
      %v485 = vpop.f32.mrb[0].mxu0
      %v486 = vpop.f32.mrb[0].mxu0
      %v487 = vadd.f32 %v232, %v486
      %v488 = vpop.f32.mrb[0].mxu0
      %489 = vmatprep.mubr.bf16.mxu0 0
      %490 = vmatmul.mubr.bf16.gmra.mrb[0].mxu0 %v373
      %v491 = vpop.f32.mrb[0].mxu0
      %v492 = vadd.f32 %v232, %v491
      %v493 = vpop.f32.mrb[0].mxu0
      %v494 = vpop.f32.mrb[0].mxu0
      %v495 = vadd.f32 %v232, %v494
      %v496 = vpop.f32.mrb[0].mxu0
      %497 = vmatprep.mubr.bf16.mxu0 0
      %498 = vmatmul.mubr.bf16.gmra.mrb[0].mxu0 %v376
      %v499 = vpop.f32.mrb[0].mxu0
      %v500 = vadd.f32 %v232, %v499
      %v501 = vpop.f32.mrb[0].mxu0
      %v502 = vpop.f32.mrb[0].mxu0
      %v503 = vadd.f32 %v232, %v502
      %v504 = vpop.f32.mrb[0].mxu0
      %505 = vmatprep.mubr.bf16.mxu0 0
      %506 = vmatmul.mubr.bf16.gmra.mrb[0].mxu0 %v379
      %v507 = vpop.f32.mrb[0].mxu0
      %v508 = vadd.f32 %v232, %v507
      %v509 = vpop.f32.mrb[0].mxu0
      %v510 = vpop.f32.mrb[0].mxu0
      %v511 = vadd.f32 %v232, %v510
      %v512 = vpop.f32.mrb[0].mxu0
      %513 = vmatprep.mubr.bf16.mxu0 0
      %514 = vmatmul.mubr.bf16.gmra.mrb[0].mxu0 %v382
      %v515 = vpop.f32.mrb[0].mxu0
      %v516 = vadd.f32 %v232, %v515
      %v517 = vpop.f32.mrb[0].mxu0
      %v518 = vpop.f32.mrb[0].mxu0
      %v519 = vadd.f32 %v232, %v518
      %v520 = vpop.f32.mrb[0].mxu0
      %521 = vmatprep.mubr.bf16.mxu0 0
      %522 = vmatmul.mubr.bf16.gmra.mrb[0].mxu0 %v385
      %v523 = vpop.f32.mrb[0].mxu0
      %v524 = vadd.f32 %v232, %v523
      %v525 = vpop.f32.mrb[0].mxu0
      %v526 = vpop.f32.mrb[0].mxu0
      %v527 = vadd.f32 %v232, %v526
      %v528 = vpop.f32.mrb[0].mxu0
      %529 = vmatprep.mubr.bf16.mxu0 0
      %530 = vmatmul.mubr.bf16.gmra.mrb[0].mxu0 %v388
      %v531 = vpop.f32.mrb[0].mxu0
      %v532 = vadd.f32 %v232, %v531
      %v533 = vpop.f32.mrb[0].mxu0
      %v534 = vpop.f32.mrb[0].mxu0
      %v535 = vadd.f32 %v232, %v534
      %v536 = vpop.f32.mrb[0].mxu0
      %537 = vmatprep.mubr.bf16.mxu0 0
      %538 = vmatmul.mubr.bf16.gmra.mrb[0].mxu0 %v391
      %v539 = vpop.f32.mrb[0].mxu0
      %v540 = vadd.f32 %v232, %v539
      %v541 = vpop.f32.mrb[0].mxu0
      %v542 = vpop.f32.mrb[0].mxu0
      %v543 = vadd.f32 %v232, %v542
      %v544 = vpop.f32.mrb[0].mxu0
      %545 = vmatprep.mubr.bf16.mxu0 0
      %546 = vmatmul.mubr.bf16.gmra.mrb[0].mxu0 %v394
      %v547 = vpop.f32.mrb[0].mxu0
      %v548 = vadd.f32 %v232, %v547
      %v549 = vpop.f32.mrb[0].mxu0
      %v550 = vpop.f32.mrb[0].mxu0
      %v551 = vadd.f32 %v232, %v550
      %v552 = vpop.f32.mrb[0].mxu0
      %553 = vmatprep.mubr.bf16.mxu0 0
      %554 = vmatmul.mubr.bf16.gmra.mrb[0].mxu0 %v397
      %v555 = vpop.f32.mrb[0].mxu0
      %v556 = vadd.f32 %v232, %v555
      %v557 = vpop.f32.mrb[0].mxu0
      %v558 = vpop.f32.mrb[0].mxu0
      %v559 = vadd.f32 %v232, %v558
      %v560 = vpop.f32.mrb[0].mxu0
      %561 = vmatprep.mubr.bf16.mxu0 0
      %562 = vmatmul.mubr.bf16.gmra.mrb[0].mxu0 %v400
      %v563 = vpop.f32.mrb[0].mxu0
      %v564 = vadd.f32 %v232, %v563
      %v565 = vpop.f32.mrb[0].mxu0
      %v566 = vpop.f32.mrb[0].mxu0
      %v567 = vadd.f32 %v232, %v566
      %v568 = vpop.f32.mrb[0].mxu0
      %569 = vmatprep.mubr.bf16.mxu0 0
      %570 = vmatmul.mubr.bf16.gmra.mrb[0].mxu0 %v403
      %v571 = vpop.f32.mrb[0].mxu0
      %v572 = vadd.f32 %v232, %v571
      %v573 = vpop.f32.mrb[0].mxu0
      %v574 = vpop.f32.mrb[0].mxu0
      %v575 = vadd.f32 %v232, %v574
      %v576 = vpop.f32.mrb[0].mxu0
      %577 = vmatprep.mubr.bf16.mxu0 0
      %578 = vmatmul.mubr.bf16.gmra.mrb[0].mxu0 %v406
      %v579 = vpop.f32.mrb[0].mxu0
      %v580 = vadd.f32 %v232, %v579
      %v581 = vpop.f32.mrb[0].mxu0
      %v582 = vpop.f32.mrb[0].mxu0
      %v583 = vadd.f32 %v232, %v582
      %v584 = vpop.f32.mrb[0].mxu0
      %585 = vmatprep.mubr.bf16.mxu0 0
      %586 = vmatmul.mubr.bf16.gmra.mrb[0].mxu0 %v409
      %v587 = vpop.f32.mrb[0].mxu0
      %v588 = vadd.f32 %v232, %v587
      %v589 = vpop.f32.mrb[0].mxu0
      %v590 = vpop.f32.mrb[0].mxu0
      %v591 = vadd.f32 %v232, %v590
      %v592 = vpop.f32.mrb[0].mxu0
      %593 = vmatprep.mubr.bf16.mxu0 0
      %594 = vmatmul.mubr.bf16.gmra.mrb[0].mxu0 %v412
      %v595 = vpop.f32.mrb[0].mxu0
      %v596 = vadd.f32 %v232, %v595
      %v597 = vpop.f32.mrb[0].mxu0
      %v598 = vpop.f32.mrb[0].mxu0
      %v599 = vadd.f32 %v232, %v598
      %v600 = vpop.f32.mrb[0].mxu0
      %601 = vmatprep.mubr.bf16.mxu0 0
      %602 = vmatmul.mubr.bf16.gmra.mrb[0].mxu0 %v415
      %v603 = vpop.f32.mrb[0].mxu0
      %v604 = vadd.f32 %v232, %v603
      %v605 = vpop.f32.mrb[0].mxu0
      %v606 = vpop.f32.mrb[0].mxu0
      %v607 = vadd.f32 %v232, %v606
      %v608 = vpop.f32.mrb[0].mxu0
      %609 = vmatprep.mubr.bf16.mxu0 0
      %610 = vmatmul.mubr.bf16.gmra.mrb[0].mxu0 %v418
      %v611 = vpop.f32.mrb[0].mxu0
      %v612 = vadd.f32 %v232, %v611
      %v613 = vpop.f32.mrb[0].mxu0
      %v614 = vpop.f32.mrb[0].mxu0
      %v615 = vadd.f32 %v232, %v614
      %v616 = vpop.f32.mrb[0].mxu0
      %617 = vmatprep.mubr.bf16.mxu0 0
      %618 = vmatmul.mubr.bf16.gmra.mrb[0].mxu0 %v421
      %v619 = vpop.f32.mrb[0].mxu0
      %v620 = vadd.f32 %v232, %v619
      %v621 = vpop.f32.mrb[0].mxu0
      %v622 = vpop.f32.mrb[0].mxu0
      %v623 = vadd.f32 %v232, %v622
      %v624 = vpop.f32.mrb[0].mxu0
      %625 = vmatprep.mubr.bf16.mxu0 0
      %626 = vmatmul.mubr.bf16.gmra.mrb[0].mxu0 %v424
      %v627 = vpop.f32.mrb[0].mxu0
      %v628 = vadd.f32 %v232, %v627
      %v629 = vpop.f32.mrb[0].mxu0
      %v630 = vpop.f32.mrb[0].mxu0
      %v631 = vadd.f32 %v232, %v630
      %v632 = vpop.f32.mrb[0].mxu0
      %633 = vmatprep.mubr.bf16.mxu0 0
      %634 = vmatmul.mubr.bf16.gmra.mrb[0].mxu0 %v427
      %v635 = vpop.f32.mrb[0].mxu0
      %v636 = vadd.f32 %v232, %v635
      %v637 = vpop.f32.mrb[0].mxu0
      %v638 = vpop.f32.mrb[0].mxu0
      %v639 = vadd.f32 %v232, %v638
      %v640 = vpop.f32.mrb[0].mxu0
      %641 = vmatprep.mubr.bf16.mxu0 0
      %642 = vmatmul.mubr.bf16.gmra.mrb[0].mxu0 %v430
      %v643 = vpop.f32.mrb[0].mxu0
      %v644 = vadd.f32 %v232, %v643
      %v645 = vpop.f32.mrb[0].mxu0
      %v646 = vpop.f32.mrb[0].mxu0
      %v647 = vadd.f32 %v232, %v646
      %v648 = vpop.f32.mrb[0].mxu0
      %649 = vmatprep.mubr.bf16.mxu0 0
      %650 = vmatmul.mubr.bf16.gmra.mrb[0].mxu0 %v433
      %v651 = vpop.f32.mrb[0].mxu0
      %v652 = vadd.f32 %v232, %v651
      %v653 = vpop.f32.mrb[0].mxu0
      %v654 = vpop.f32.mrb[0].mxu0
      %v655 = vadd.f32 %v232, %v654
      %v656 = vpop.f32.mrb[0].mxu0
      %657 = vmatprep.mubr.bf16.mxu0 0
      %658 = vmatmul.mubr.bf16.gmra.mrb[0].mxu0 %v436
      %v659 = vpop.f32.mrb[0].mxu0
      %v660 = vadd.f32 %v232, %v659
      %v661 = vpop.f32.mrb[0].mxu0
      %v662 = vpop.f32.mrb[0].mxu0
      %v663 = vadd.f32 %v232, %v662
      %v664 = vpop.f32.mrb[0].mxu0
      %665 = vmatprep.mubr.bf16.mxu0 0
      %666 = vmatmul.mubr.bf16.gmra.mrb[0].mxu0 %v439
      %v667 = vpop.f32.mrb[0].mxu0
      %v668 = vadd.f32 %v232, %v667
      %v669 = vpop.f32.mrb[0].mxu0
      %v670 = vpop.f32.mrb[0].mxu0
      %v671 = vadd.f32 %v232, %v670
      %v672 = vpop.f32.mrb[0].mxu0
      %673 = vdwg.mxu0
      %v674 = vpack.c.bf16 %v479, %v476
      %v675 = vpack.c.bf16 %v487, %v484
      %v676 = vpack.c.bf16 %v495, %v492
      %v677 = vpack.c.bf16 %v503, %v500
      %v678 = vpack.c.bf16 %v511, %v508
      %v679 = vpack.c.bf16 %v519, %v516
      %v680 = vpack.c.bf16 %v527, %v524
      %v681 = vpack.c.bf16 %v535, %v532
      %v682 = vpack.c.bf16 %v543, %v540
      %v683 = vpack.c.bf16 %v551, %v548
      %v684 = vpack.c.bf16 %v559, %v556
      %v685 = vpack.c.bf16 %v567, %v564
      %v686 = vpack.c.bf16 %v575, %v572
      %v687 = vpack.c.bf16 %v583, %v580
      %v688 = vpack.c.bf16 %v591, %v588
      %v689 = vpack.c.bf16 %v599, %v596
      %v690 = vpack.c.bf16 %v607, %v604
      %v691 = vpack.c.bf16 %v615, %v612
      %v692 = vpack.c.bf16 %v623, %v620
      %v693 = vpack.c.bf16 %v631, %v628
      %v694 = vpack.c.bf16 %v639, %v636
      %v695 = vpack.c.bf16 %v647, %v644
      %v696 = vpack.c.bf16 %v655, %v652
      %v697 = vpack.c.bf16 %v663, %v660
      %v698 = vpack.c.bf16 %v671, %v668
      %v724 = vunpack.c.l.b16 %v674
      %v725 = vunpack.c.h.b16 %v674
      %v726 = vunpack.c.l.b16 %v675
      %v727 = vunpack.c.h.b16 %v675
      %v728 = vunpack.c.l.b16 %v676
      %v729 = vunpack.c.h.b16 %v676
      %v730 = vunpack.c.l.b16 %v677
      %v731 = vunpack.c.h.b16 %v677
      %v732 = vunpack.c.l.b16 %v678
      %v733 = vunpack.c.h.b16 %v678
      %v734 = vunpack.c.l.b16 %v679
      %v735 = vunpack.c.h.b16 %v679
      %v736 = vunpack.c.l.b16 %v680
      %v737 = vunpack.c.h.b16 %v680
      %v738 = vunpack.c.l.b16 %v681
      %v739 = vunpack.c.h.b16 %v681
      %v740 = vunpack.c.l.b16 %v682
      %v741 = vunpack.c.h.b16 %v682
      %v742 = vunpack.c.l.b16 %v683
      %v743 = vunpack.c.h.b16 %v683
      %v744 = vunpack.c.l.b16 %v684
      %v745 = vunpack.c.h.b16 %v684
      %v746 = vunpack.c.l.b16 %v685
      %v747 = vunpack.c.h.b16 %v685
      %v748 = vunpack.c.l.b16 %v686
      %v749 = vunpack.c.h.b16 %v686
      %v750 = vunpack.c.l.b16 %v687
      %v751 = vunpack.c.h.b16 %v687
      %v752 = vunpack.c.l.b16 %v688
      %v753 = vunpack.c.h.b16 %v688
      %v754 = vunpack.c.l.b16 %v689
      %v755 = vunpack.c.h.b16 %v689
      %v756 = vunpack.c.l.b16 %v690
      %v757 = vunpack.c.h.b16 %v690
      %v758 = vunpack.c.l.b16 %v691
      %v759 = vunpack.c.h.b16 %v691
      %v760 = vunpack.c.l.b16 %v692
      %v761 = vunpack.c.h.b16 %v692
      %v762 = vunpack.c.l.b16 %v693
      %v763 = vunpack.c.h.b16 %v693
      %v764 = vunpack.c.l.b16 %v694
      %v765 = vunpack.c.h.b16 %v694
      %v766 = vunpack.c.l.b16 %v695
      %v767 = vunpack.c.h.b16 %v695
      %v768 = vunpack.c.l.b16 %v696
      %v769 = vunpack.c.h.b16 %v696
      %v770 = vunpack.c.l.b16 %v697
      %v771 = vunpack.c.h.b16 %v697
      %v772 = vunpack.c.l.b16 %v698
      %v773 = vunpack.c.h.b16 %v698
      %v774 = vpack.c.b16 %v724, %v724
      %v775 = vpack.c.b16 %v725, %v725
      %v776 = vpack.c.b16 %v726, %v726
      %v777 = vpack.c.b16 %v727, %v727
      %v778 = vpack.c.b16 %v728, %v728
      %v779 = vpack.c.b16 %v729, %v729
      %v780 = vpack.c.b16 %v730, %v730
      %v781 = vpack.c.b16 %v731, %v731
      %v782 = vpack.c.b16 %v732, %v732
      %v783 = vpack.c.b16 %v733, %v733
      %v784 = vpack.c.b16 %v734, %v734
      %v785 = vpack.c.b16 %v735, %v735
      %v786 = vpack.c.b16 %v736, %v736
      %v787 = vpack.c.b16 %v737, %v737
      %v788 = vpack.c.b16 %v738, %v738
      %v789 = vpack.c.b16 %v739, %v739
      %v790 = vpack.c.b16 %v740, %v740
      %v791 = vpack.c.b16 %v741, %v741
      %v792 = vpack.c.b16 %v742, %v742
      %v793 = vpack.c.b16 %v743, %v743
      %v794 = vpack.c.b16 %v744, %v744
      %v795 = vpack.c.b16 %v745, %v745
      %v796 = vpack.c.b16 %v746, %v746
      %v797 = vpack.c.b16 %v747, %v747
      %v798 = vpack.c.b16 %v748, %v748
      %v799 = vpack.c.b16 %v749, %v749
      %v800 = vpack.c.b16 %v750, %v750
      %v801 = vpack.c.b16 %v751, %v751
      %v802 = vpack.c.b16 %v752, %v752
      %v803 = vpack.c.b16 %v753, %v753
      %v804 = vpack.c.b16 %v754, %v754
      %v805 = vpack.c.b16 %v755, %v755
      %v806 = vpack.c.b16 %v756, %v756
      %v807 = vpack.c.b16 %v757, %v757
      %v808 = vpack.c.b16 %v758, %v758
      %v809 = vpack.c.b16 %v759, %v759
      %v810 = vpack.c.b16 %v760, %v760
      %v811 = vpack.c.b16 %v761, %v761
      %v812 = vpack.c.b16 %v762, %v762
      %v813 = vpack.c.b16 %v763, %v763
      %v814 = vpack.c.b16 %v764, %v764
      %v815 = vpack.c.b16 %v765, %v765
      %v816 = vpack.c.b16 %v766, %v766
      %v817 = vpack.c.b16 %v767, %v767
      %v818 = vpack.c.b16 %v768, %v768
      %v819 = vpack.c.b16 %v769, %v769
      %v820 = vpack.c.b16 %v770, %v770
      %v821 = vpack.c.b16 %v771, %v771
      %v822 = vpack.c.b16 %v772, %v772
      %v823 = vpack.c.b16 %v773, %v773
      %874 = vst [vmem:[%s172] sm:$0xf] %v774
      %875 = vst [vmem:[%s172 + $0x4] sm:$0xf] %v775
      %876 = vst [vmem:[%s172 + $0x8] sm:$0xf] %v776
      %877 = vst [vmem:[%s172 + $0xc] sm:$0xf] %v777
      %878 = vst [vmem:[%s172 + $0x10] sm:$0xf] %v778
      %879 = vst [vmem:[%s172 + $0x14] sm:$0xf] %v779
      %880 = vst [vmem:[%s172 + $0x18] sm:$0xf] %v780
      %881 = vst [vmem:[%s172 + $0x1c] sm:$0xf] %v781
      %882 = vst [vmem:[%s172 + $0x20] sm:$0xf] %v782
      %883 = vst [vmem:[%s172 + $0x24] sm:$0xf] %v783
      %884 = vst [vmem:[%s172 + $0x28] sm:$0xf] %v784
      %885 = vst [vmem:[%s172 + $0x2c] sm:$0xf] %v785
      %886 = vst [vmem:[%s172 + $0x30] sm:$0xf] %v786
      %887 = vst [vmem:[%s172 + $0x34] sm:$0xf] %v787
      %888 = vst [vmem:[%s172 + $0x38] sm:$0xf] %v788
      %889 = vst [vmem:[%s172 + $0x3c] sm:$0xf] %v789
      %890 = vst [vmem:[%s172 + $0x40] sm:$0xf] %v790
      %891 = vst [vmem:[%s172 + $0x44] sm:$0xf] %v791
      %892 = vst [vmem:[%s172 + $0x48] sm:$0xf] %v792
      %893 = vst [vmem:[%s172 + $0x4c] sm:$0xf] %v793
      %894 = vst [vmem:[%s172 + $0x50] sm:$0xf] %v794
      %895 = vst [vmem:[%s172 + $0x54] sm:$0xf] %v795
      %896 = vst [vmem:[%s172 + $0x58] sm:$0xf] %v796
      %897 = vst [vmem:[%s172 + $0x5c] sm:$0xf] %v797
      %898 = vst [vmem:[%s172 + $0x60] sm:$0xf] %v798
      %899 = vst [vmem:[%s172 + $0x64] sm:$0xf] %v799
      %900 = vst [vmem:[%s172 + $0x68] sm:$0xf] %v800
      %901 = vst [vmem:[%s172 + $0x6c] sm:$0xf] %v801
      %902 = vst [vmem:[%s172 + $0x70] sm:$0xf] %v802
      %903 = vst [vmem:[%s172 + $0x74] sm:$0xf] %v803
      %904 = vst [vmem:[%s172 + $0x78] sm:$0xf] %v804
      %905 = vst [vmem:[%s172 + $0x7c] sm:$0xf] %v805
      %906 = vst [vmem:[%s172 + $0x80] sm:$0xf] %v806
      %907 = vst [vmem:[%s172 + $0x84] sm:$0xf] %v807
      %908 = vst [vmem:[%s172 + $0x88] sm:$0xf] %v808
      %909 = vst [vmem:[%s172 + $0x8c] sm:$0xf] %v809
      %910 = vst [vmem:[%s172 + $0x90] sm:$0xf] %v810
      %911 = vst [vmem:[%s172 + $0x94] sm:$0xf] %v811
      %912 = vst [vmem:[%s172 + $0x98] sm:$0xf] %v812
      %913 = vst [vmem:[%s172 + $0x9c] sm:$0xf] %v813
      %914 = vst [vmem:[%s172 + $0xa0] sm:$0xf] %v814
      %915 = vst [vmem:[%s172 + $0xa4] sm:$0xf] %v815
      %916 = vst [vmem:[%s172 + $0xa8] sm:$0xf] %v816
      %917 = vst [vmem:[%s172 + $0xac] sm:$0xf] %v817
      %918 = vst [vmem:[%s172 + $0xb0] sm:$0xf] %v818
      %919 = vst [vmem:[%s172 + $0xb4] sm:$0xf] %v819
      %920 = vst [vmem:[%s172 + $0xb8] sm:$0xf] %v820
      %921 = vst [vmem:[%s172 + $0xbc] sm:$0xf] %v821
      %922 = vst [vmem:[%s172 + $0xc0] sm:$0xf] %v822
      %923 = vst [vmem:[%s172 + $0xc4] sm:$0xf] %v823
      %s924 = smul.u32 50, %s14
      %p925 = scmp.lt.s32.totalorder %s924, 99
      %s926 = scalar_select %p925, %s924, 99
      %s927 = smul.addr %s926, 4
      %s928 = scalar_lea.vmem %s3, %s927
      // Predicated region
      $region33: #{vae_forward.16} parent=31 // pred_check
        %p929 = pneg %p100
      $region34: #{vae_forward.16} parent=31 // pred_check_branch
        %931 = sbr.rel (%p929) target = $region36
      $region35: #{vae_forward.16} parent=31 // pred_region
        %s932 = smul.u32 50, %s14
      $region36: #{vae_forward.16} parent=31 // pred_fallthru
        _
    $region32: #{vae_forward.16} parent=5 // pred_fallthru
      _
    %p933 = scmp.le.s32.totalorder 2, %s9
    // Predicated region
    $region37: #{vae_forward.16} parent=5 // pred_check
      %p934 = pneg %p933
    $region38: #{vae_forward.16} parent=5 // pred_check_branch
      %936 = sbr.rel (%p934) target = $region40
    $region39: #{vae_forward.16} parent=5 // pred_region
      %s937 = ssub.s32 %s9, 2
      // Predicated region
      $region41: #{vae_forward.16} parent=39 // pred_check
        %p938 = pneg %p106
      $region42: #{vae_forward.16} parent=39 // pred_check_branch
        %940 = sbr.rel (%p938) target = $region44
      $region43: #{vae_forward.16} parent=39 // pred_region
        %s941 = smul.u32 50, %s15
        %p942 = scmp.lt.s32.totalorder %s941, 99
        %s943 = scalar_select %p942, %s941, 99
        %s944 = smul.addr %s943, 4
        %s945 = scalar_lea.vmem %s3, %s944
      $region44: #{vae_forward.16} parent=39 // pred_fallthru
        _
    $region40: #{vae_forward.16} parent=5 // pred_fallthru
      _
  $region6: #{vae_forward.16} parent=0 // loop_footer
    %s13 = sadd.s32 1, %s9
  $region7: #{vae_forward.16} parent=0 // loop_footer_branch
    %8 = sbr.rel target = $region3
  $region8: #{vae_forward.16} parent=0 // loop_exit
    _

// kernel: vae_forward.17
$region0: #{vae_forward.17}
  #allocation0 [shape = 'u32[]', space=smem, size = 0x4, offset = 0x4, fixed_abs, tag = 'smem constant byte address 0x4 - core index']
  #allocation1 [shape = 'u32[144,128]{1,0:T(1,128)}', space=vmem, size = 0x12000, scoped, tag = 'internal scratch']
  %s0 = inlined_call_operand.vmem [shape: bf16[3528,8], index: 0, kind: input, shape index: {}]
  %s1 = inlined_call_operand.vmem [shape: bf16[8,75], index: 1, kind: input, shape index: {}]
  %s2 = inlined_call_operand.vmem [shape: f32[1,75], index: 2, kind: input, shape index: {}]
  %s3 = inlined_call_operand.vmem [shape: bf16[3528,75], index: 3, kind: output, shape index: {}]
  %s4 = sld [smem:[#allocation0]]
  $region45: #{vae_forward.17} parent=0
    _
  %s6 = ssub.s32 1, %s4
  %s7 = scalar_select 0, %s6, %s4
  loop: start=0, step=1, limit=9
  $region2: #{vae_forward.17} parent=0 // loop_pre_header
    _
  $region3: #{vae_forward.17} parent=0 // loop_header
    %s9 = sphi 0, %s13
    %p10 = scmp.ge.s32.totalorder %s9, 9
    %s19 = sphi 0, %s21
    %s22 = sphi 0, %s19
    %s23 = sphi 0, %s22
    %s39 = sphi 0, %s23
    %s43 = sphi 0, %s43
    %s45 = sphi 0, %s43
    %s46 = sphi 0, %s45
    %s60 = sphi 0, %s46
    %s64 = sphi 0, %s64
    %s66 = sphi 0, %s64
    %s67 = sphi 0, %s66
    %s81 = sphi 0, %s67
    %s87 = sphi 0, %s89
    %s90 = sphi 0, %s87
    %s91 = sphi 0, %s90
    %s107 = sphi 0, %s91
  $region4: #{vae_forward.17} parent=0 // loop_header_branch
    %12 = sbr.rel (%p10) target = $region8
  $region5: #{vae_forward.17} parent=0 // loop_body
    %s14 = ssub.s32 %s9, 1
    %s15 = ssub.s32 %s9, 2
    %s16 = sadd.s32 %s9, 1
    %s17 = ssub.s32 %s9, %s16
    %p18 = scmp.eq.s32.totalorder %s17, 0
    %s20 = sadd.s32 %s19, 1
    %s21 = scalar_select %p18, %s19, %s20
    %p24 = pneg %p18
    %p25 = scmp.eq.s32.totalorder %s9, 6
    %p26 = por %p24, %p25
    %p27 = scmp.ne.s32.totalorder %s19, %s22
    %p28 = scmp.eq.s32.totalorder %s9, 0
    %p29 = por %p27, %p28
    %p30 = scmp.ne.s32.totalorder %s19, %s22
    %p31 = scmp.eq.s32.totalorder %s14, 6
    %p32 = por %p30, %p31
    %p33 = scmp.ne.s32.totalorder %s22, %s23
    %p34 = scmp.eq.s32.totalorder %s14, 0
    %p35 = por %p33, %p34
    %p36 = scmp.ne.s32.totalorder %s22, %s23
    %p37 = scmp.eq.s32.totalorder %s15, 6
    %p38 = por %p36, %p37
    %p40 = scmp.ne.s32.totalorder %s23, %s39
    %p41 = scmp.eq.s32.totalorder %s15, 0
    %p42 = por %p40, %p41
    %s44 = sadd.s32 %s43, 1
    %p47 = scmp.eq.s32.totalorder %s9, 6
    %p48 = scmp.ne.s32.totalorder %s43, %s45
    %p49 = scmp.eq.s32.totalorder %s9, 0
    %p50 = por %p48, %p49
    %p51 = scmp.ne.s32.totalorder %s43, %s45
    %p52 = scmp.eq.s32.totalorder %s14, 6
    %p53 = por %p51, %p52
    %p54 = scmp.ne.s32.totalorder %s45, %s46
    %p55 = scmp.eq.s32.totalorder %s14, 0
    %p56 = por %p54, %p55
    %p57 = scmp.ne.s32.totalorder %s45, %s46
    %p58 = scmp.eq.s32.totalorder %s15, 6
    %p59 = por %p57, %p58
    %p61 = scmp.ne.s32.totalorder %s46, %s60
    %p62 = scmp.eq.s32.totalorder %s15, 0
    %p63 = por %p61, %p62
    %s65 = sadd.s32 %s64, 1
    %p68 = scmp.eq.s32.totalorder %s9, 6
    %p69 = scmp.ne.s32.totalorder %s64, %s66
    %p70 = scmp.eq.s32.totalorder %s9, 0
    %p71 = por %p69, %p70
    %p72 = scmp.ne.s32.totalorder %s64, %s66
    %p73 = scmp.eq.s32.totalorder %s14, 6
    %p74 = por %p72, %p73
    %p75 = scmp.ne.s32.totalorder %s66, %s67
    %p76 = scmp.eq.s32.totalorder %s14, 0
    %p77 = por %p75, %p76
    %p78 = scmp.ne.s32.totalorder %s66, %s67
    %p79 = scmp.eq.s32.totalorder %s15, 6
    %p80 = por %p78, %p79
    %p82 = scmp.ne.s32.totalorder %s67, %s81
    %p83 = scmp.eq.s32.totalorder %s15, 0
    %p84 = por %p82, %p83
    %s85 = ssub.s32 %s9, %s16
    %p86 = scmp.eq.s32.totalorder %s85, 0
    %s88 = sadd.s32 %s87, 1
    %s89 = scalar_select %p86, %s87, %s88
    %p92 = pneg %p86
    %p93 = scmp.eq.s32.totalorder %s9, 6
    %p94 = por %p92, %p93
    %p95 = scmp.ne.s32.totalorder %s87, %s90
    %p96 = scmp.eq.s32.totalorder %s9, 0
    %p97 = por %p95, %p96
    %p98 = scmp.ne.s32.totalorder %s87, %s90
    %p99 = scmp.eq.s32.totalorder %s14, 6
    %p100 = por %p98, %p99
    %p101 = scmp.ne.s32.totalorder %s90, %s91
    %p102 = scmp.eq.s32.totalorder %s14, 0
    %p103 = por %p101, %p102
    %p104 = scmp.ne.s32.totalorder %s90, %s91
    %p105 = scmp.eq.s32.totalorder %s15, 6
    %p106 = por %p104, %p105
    %p108 = scmp.ne.s32.totalorder %s91, %s107
    %p109 = scmp.eq.s32.totalorder %s15, 0
    %p110 = por %p108, %p109
    %p111 = scmp.le.s32.totalorder 1, %s9
    %p112 = scmp.lt.s32.totalorder %s9, 8
    %p113 = pnand %p111, %p112
    %p114 = pneg %p113
    // Predicated region
    $region9: #{vae_forward.17} parent=5 // pred_check
      _
    $region10: #{vae_forward.17} parent=5 // pred_check_branch
      %116 = sbr.rel (%p113) target = $region12
    $region11: #{vae_forward.17} parent=5 // pred_region
      %s117 = ssub.s32 %s9, 1
      // Predicated region
      $region13: #{vae_forward.17} parent=11 // pred_check
        %p118 = pneg %p56
      $region14: #{vae_forward.17} parent=11 // pred_check_branch
        %120 = sbr.rel (%p118) target = $region16
      $region15: #{vae_forward.17} parent=11 // pred_region
        _
      $region16: #{vae_forward.17} parent=11 // pred_fallthru
        _
      // Predicated region
      $region17: #{vae_forward.17} parent=11 // pred_check
        %p121 = pneg %p77
      $region18: #{vae_forward.17} parent=11 // pred_check_branch
        %123 = sbr.rel (%p121) target = $region20
      $region19: #{vae_forward.17} parent=11 // pred_region
        _
      $region20: #{vae_forward.17} parent=11 // pred_fallthru
        _
    $region12: #{vae_forward.17} parent=5 // pred_fallthru
      _
    %p124 = scmp.lt.s32.totalorder %s9, 7
    // Predicated region
    $region21: #{vae_forward.17} parent=5 // pred_check
      %p125 = pneg %p124
    $region22: #{vae_forward.17} parent=5 // pred_check_branch
      %127 = sbr.rel (%p125) target = $region24
    $region23: #{vae_forward.17} parent=5 // pred_region
      // Predicated region
      $region25: #{vae_forward.17} parent=23 // pred_check
        %p128 = pneg %p29
      $region26: #{vae_forward.17} parent=23 // pred_check_branch
        %130 = sbr.rel (%p128) target = $region28
      $region27: #{vae_forward.17} parent=23 // pred_region
        %s131 = smul.u32 63, %s9
        %p132 = scmp.lt.s32.totalorder %s131, 440
        %s133 = scalar_select %p132, %s131, 440
        %s134 = smul.addr %s133, 4
        %s135 = scalar_lea.vmem %s0, %s134
        %s136 = smul.u32 63, %s9
      $region28: #{vae_forward.17} parent=23 // pred_fallthru
        _
    $region24: #{vae_forward.17} parent=5 // pred_fallthru
      _
    %p137 = scmp.le.s32.totalorder 1, %s9
    %p138 = scmp.lt.s32.totalorder %s9, 8
    %p139 = pnand %p137, %p138
    %p140 = pneg %p139
    // Predicated region
    $region29: #{vae_forward.17} parent=5 // pred_check
      _
    $region30: #{vae_forward.17} parent=5 // pred_check_branch
      %142 = sbr.rel (%p139) target = $region32
    $region31: #{vae_forward.17} parent=5 // pred_region
      %s143 = ssub.s32 %s9, 1
      %s144 = smul.u32 63, %s14
      %p145 = scmp.lt.s32.totalorder %s144, 440
      %s146 = scalar_select %p145, %s144, 440
      %s147 = smul.addr %s146, 4
      %s148 = scalar_lea.vmem %s0, %s147
      %p149 = pneg %p35
      %p150 = pneg %p32
      %p151 = pneg %p56
      %p152 = pneg %p53
      %p153 = pneg %p77
      %p154 = pneg %p74
      %p155 = pneg %p103
      %p156 = pneg %p100
      %s157 = smul.u32 63, %s14
      %p158 = scmp.lt.s32.totalorder %s157, 440
      %s159 = scalar_select %p158, %s157, 440
      %s160 = smul.addr %s159, 4
      %s161 = scalar_lea.vmem %s3, %s160
      %s162 = smul.u32 63, %s14
      %p163 = scmp.lt.s32.totalorder %s162, 440
      %s164 = scalar_select %p163, %s162, 440
      %s165 = smul.addr %s164, 4
      %s166 = scalar_lea.vmem %s0, %s165
      %s167 = smul.u32 63, %s14
      %s168 = smul.u32 63, %s14
      %p169 = scmp.lt.s32.totalorder %s168, 440
      %s170 = scalar_select %p169, %s168, 440
      %s171 = smul.addr %s170, 4
      %s172 = scalar_lea.vmem %s3, %s171
      %s173 = smul.u32 63, %s14
      %v175 = vld [vmem:[%s166] sm:$0xf]
      %v176 = vld [vmem:[%s166 + $0x4] sm:$0xf]
      %v177 = vld [vmem:[%s166 + $0x8] sm:$0xf]
      %v178 = vld [vmem:[%s166 + $0xc] sm:$0xf]
      %v179 = vld [vmem:[%s166 + $0x10] sm:$0xf]
      %v180 = vld [vmem:[%s166 + $0x14] sm:$0xf]
      %v181 = vld [vmem:[%s166 + $0x18] sm:$0xf]
      %v182 = vld [vmem:[%s166 + $0x1c] sm:$0xf]
      %v183 = vld [vmem:[%s166 + $0x20] sm:$0xf]
      %v184 = vld [vmem:[%s166 + $0x24] sm:$0xf]
      %v185 = vld [vmem:[%s166 + $0x28] sm:$0xf]
      %v186 = vld [vmem:[%s166 + $0x2c] sm:$0xf]
      %v187 = vld [vmem:[%s166 + $0x30] sm:$0xf]
      %v188 = vld [vmem:[%s166 + $0x34] sm:$0xf]
      %v189 = vld [vmem:[%s166 + $0x38] sm:$0xf]
      %v190 = vld [vmem:[%s166 + $0x3c] sm:$0xf]
      %v191 = vld [vmem:[%s166 + $0x40] sm:$0xf]
      %v192 = vld [vmem:[%s166 + $0x44] sm:$0xf]
      %v193 = vld [vmem:[%s166 + $0x48] sm:$0xf]
      %v194 = vld [vmem:[%s166 + $0x4c] sm:$0xf]
      %v195 = vld [vmem:[%s166 + $0x50] sm:$0xf]
      %v196 = vld [vmem:[%s166 + $0x54] sm:$0xf]
      %v197 = vld [vmem:[%s166 + $0x58] sm:$0xf]
      %v198 = vld [vmem:[%s166 + $0x5c] sm:$0xf]
      %v199 = vld [vmem:[%s166 + $0x60] sm:$0xf]
      %v200 = vld [vmem:[%s166 + $0x64] sm:$0xf]
      %v201 = vld [vmem:[%s166 + $0x68] sm:$0xf]
      %v202 = vld [vmem:[%s166 + $0x6c] sm:$0xf]
      %v203 = vld [vmem:[%s166 + $0x70] sm:$0xf]
      %v204 = vld [vmem:[%s166 + $0x74] sm:$0xf]
      %v205 = vld [vmem:[%s166 + $0x78] sm:$0xf]
      %v206 = vld [vmem:[%s166 + $0x7c] sm:$0xf]
      %v207 = vld [vmem:[%s166 + $0x80] sm:$0xf]
      %v208 = vld [vmem:[%s166 + $0x84] sm:$0xf]
      %v209 = vld [vmem:[%s166 + $0x88] sm:$0xf]
      %v210 = vld [vmem:[%s166 + $0x8c] sm:$0xf]
      %v211 = vld [vmem:[%s166 + $0x90] sm:$0xf]
      %v212 = vld [vmem:[%s166 + $0x94] sm:$0xf]
      %v213 = vld [vmem:[%s166 + $0x98] sm:$0xf]
      %v214 = vld [vmem:[%s166 + $0x9c] sm:$0xf]
      %v215 = vld [vmem:[%s166 + $0xa0] sm:$0xf]
      %v216 = vld [vmem:[%s166 + $0xa4] sm:$0xf]
      %v217 = vld [vmem:[%s166 + $0xa8] sm:$0xf]
      %v218 = vld [vmem:[%s166 + $0xac] sm:$0xf]
      %v219 = vld [vmem:[%s166 + $0xb0] sm:$0xf]
      %v220 = vld [vmem:[%s166 + $0xb4] sm:$0xf]
      %v221 = vld [vmem:[%s166 + $0xb8] sm:$0xf]
      %v222 = vld [vmem:[%s166 + $0xbc] sm:$0xf]
      %v223 = vld [vmem:[%s166 + $0xc0] sm:$0xf]
      %v224 = vld [vmem:[%s166 + $0xc4] sm:$0xf]
      %v225 = vld [vmem:[%s166 + $0xc8] sm:$0xf]
      %v226 = vld [vmem:[%s166 + $0xcc] sm:$0xf]
      %v227 = vld [vmem:[%s166 + $0xd0] sm:$0xf]
      %v228 = vld [vmem:[%s166 + $0xd4] sm:$0xf]
      %v229 = vld [vmem:[%s166 + $0xd8] sm:$0xf]
      %v230 = vld [vmem:[%s166 + $0xdc] sm:$0xf]
      %v231 = vld [vmem:[%s166 + $0xe0] sm:$0xf]
      %v232 = vld [vmem:[%s166 + $0xe4] sm:$0xf]
      %v233 = vld [vmem:[%s166 + $0xe8] sm:$0xf]
      %v234 = vld [vmem:[%s166 + $0xec] sm:$0xf]
      %v235 = vld [vmem:[%s166 + $0xf0] sm:$0xf]
      %v236 = vld [vmem:[%s166 + $0xf4] sm:$0xf]
      %v237 = vld [vmem:[%s166 + $0xf8] sm:$0xf]
      %v238 = vld [vmem:[%s1] sm:$0xf]
      %v239 = vld [vmem:[%s2] sm:$0x1]
      %v241 = vlaneseq
      %v242 = vshrl.u32 %v241, 7
      %v243 = vsub.s32 0, %v242
      %v244 = vrot.slane %v239, %v243
      %v309 = vunpack.c.l.b16 %v175
      %v310 = vunpack.c.l.b16 %v176
      %v311 = vunpack.c.l.b16 %v177
      %v312 = vunpack.c.l.b16 %v178
      %v313 = vunpack.c.l.b16 %v179
      %v314 = vunpack.c.l.b16 %v180
      %v315 = vunpack.c.l.b16 %v181
      %v316 = vunpack.c.l.b16 %v182
      %v317 = vunpack.c.l.b16 %v183
      %v318 = vunpack.c.l.b16 %v184
      %v319 = vunpack.c.l.b16 %v185
      %v320 = vunpack.c.l.b16 %v186
      %v321 = vunpack.c.l.b16 %v187
      %v322 = vunpack.c.l.b16 %v188
      %v323 = vunpack.c.l.b16 %v189
      %v324 = vunpack.c.l.b16 %v190
      %v325 = vunpack.c.l.b16 %v191
      %v326 = vunpack.c.l.b16 %v192
      %v327 = vunpack.c.l.b16 %v193
      %v328 = vunpack.c.l.b16 %v194
      %v329 = vunpack.c.l.b16 %v195
      %v330 = vunpack.c.l.b16 %v196
      %v331 = vunpack.c.l.b16 %v197
      %v332 = vunpack.c.l.b16 %v198
      %v333 = vunpack.c.l.b16 %v199
      %v334 = vunpack.c.l.b16 %v200
      %v335 = vunpack.c.l.b16 %v201
      %v336 = vunpack.c.l.b16 %v202
      %v337 = vunpack.c.l.b16 %v203
      %v338 = vunpack.c.l.b16 %v204
      %v339 = vunpack.c.l.b16 %v205
      %v340 = vunpack.c.l.b16 %v206
      %v341 = vunpack.c.l.b16 %v207
      %v342 = vunpack.c.l.b16 %v208
      %v343 = vunpack.c.l.b16 %v209
      %v344 = vunpack.c.l.b16 %v210
      %v345 = vunpack.c.l.b16 %v211
      %v346 = vunpack.c.l.b16 %v212
      %v347 = vunpack.c.l.b16 %v213
      %v348 = vunpack.c.l.b16 %v214
      %v349 = vunpack.c.l.b16 %v215
      %v350 = vunpack.c.l.b16 %v216
      %v351 = vunpack.c.l.b16 %v217
      %v352 = vunpack.c.l.b16 %v218
      %v353 = vunpack.c.l.b16 %v219
      %v354 = vunpack.c.l.b16 %v220
      %v355 = vunpack.c.l.b16 %v221
      %v356 = vunpack.c.l.b16 %v222
      %v357 = vunpack.c.l.b16 %v223
      %v358 = vunpack.c.l.b16 %v224
      %v359 = vunpack.c.l.b16 %v225
      %v360 = vunpack.c.l.b16 %v226
      %v361 = vunpack.c.l.b16 %v227
      %v362 = vunpack.c.l.b16 %v228
      %v363 = vunpack.c.l.b16 %v229
      %v364 = vunpack.c.l.b16 %v230
      %v365 = vunpack.c.l.b16 %v231
      %v366 = vunpack.c.l.b16 %v232
      %v367 = vunpack.c.l.b16 %v233
      %v368 = vunpack.c.l.b16 %v234
      %v369 = vunpack.c.l.b16 %v235
      %v370 = vunpack.c.l.b16 %v236
      %v371 = vunpack.c.l.b16 %v237
      %v372 = vpack.c.b16 %v310, %v309
      %v373 = vpack.c.b16 %v312, %v311
      %v374 = vpack.c.b16 %v314, %v313
      %v375 = vpack.c.b16 %v316, %v315
      %v376 = vpack.c.b16 %v318, %v317
      %v377 = vpack.c.b16 %v320, %v319
      %v378 = vpack.c.b16 %v322, %v321
      %v379 = vpack.c.b16 %v324, %v323
      %v380 = vpack.c.b16 %v326, %v325
      %v381 = vpack.c.b16 %v328, %v327
      %v382 = vpack.c.b16 %v330, %v329
      %v383 = vpack.c.b16 %v332, %v331
      %v384 = vpack.c.b16 %v334, %v333
      %v385 = vpack.c.b16 %v336, %v335
      %v386 = vpack.c.b16 %v338, %v337
      %v387 = vpack.c.b16 %v340, %v339
      %v388 = vpack.c.b16 %v342, %v341
      %v389 = vpack.c.b16 %v344, %v343
      %v390 = vpack.c.b16 %v346, %v345
      %v391 = vpack.c.b16 %v348, %v347
      %v392 = vpack.c.b16 %v350, %v349
      %v393 = vpack.c.b16 %v352, %v351
      %v394 = vpack.c.b16 %v354, %v353
      %v395 = vpack.c.b16 %v356, %v355
      %v396 = vpack.c.b16 %v358, %v357
      %v397 = vpack.c.b16 %v360, %v359
      %v398 = vpack.c.b16 %v362, %v361
      %v399 = vpack.c.b16 %v364, %v363
      %v400 = vpack.c.b16 %v366, %v365
      %v401 = vpack.c.b16 %v368, %v367
      %v402 = vpack.c.b16 %v370, %v369
      %v403 = vpack.c.b16 %v371, %v371
      %vm404 = vcmask 64512
      %v406 = vsel %vm404, %v372, 0
      %v409 = vsel %vm404, %v373, 0
      %v412 = vsel %vm404, %v374, 0
      %v415 = vsel %vm404, %v375, 0
      %v418 = vsel %vm404, %v376, 0
      %v421 = vsel %vm404, %v377, 0
      %v424 = vsel %vm404, %v378, 0
      %v427 = vsel %vm404, %v379, 0
      %v430 = vsel %vm404, %v380, 0
      %v433 = vsel %vm404, %v381, 0
      %v436 = vsel %vm404, %v382, 0
      %v439 = vsel %vm404, %v383, 0
      %v442 = vsel %vm404, %v384, 0
      %v445 = vsel %vm404, %v385, 0
      %v448 = vsel %vm404, %v386, 0
      %v451 = vsel %vm404, %v387, 0
      %v454 = vsel %vm404, %v388, 0
      %v457 = vsel %vm404, %v389, 0
      %v460 = vsel %vm404, %v390, 0
      %v463 = vsel %vm404, %v391, 0
      %v466 = vsel %vm404, %v392, 0
      %v469 = vsel %vm404, %v393, 0
      %v472 = vsel %vm404, %v394, 0
      %v475 = vsel %vm404, %v395, 0
      %v478 = vsel %vm404, %v396, 0
      %v481 = vsel %vm404, %v397, 0
      %v484 = vsel %vm404, %v398, 0
      %v487 = vsel %vm404, %v399, 0
      %v490 = vsel %vm404, %v400, 0
      %v493 = vsel %vm404, %v401, 0
      %v496 = vsel %vm404, %v402, 0
      %v499 = vsel %vm404, %v403, 0
      %vm501 = vcmask 1043456
      %v503 = vsel %vm501, %v238, 0
      %505 = vmatprep.subr.bf16.mxu0 0
      %506 = vmatpush1.bf16.msra.mxu0 %v503
      %507 = vmatprep.subr.bf16.mxu0 0
      %508 = vmatpush1.bf16.msra.mxu0 0
      %509 = vmatprep.subr.bf16.mxu0 0
      %510 = vmatpush1.bf16.msra.mxu0 0
      %511 = vmatprep.subr.bf16.mxu0 0
      %512 = vmatpush1.bf16.msra.mxu0 0
      %513 = vmatprep.subr.bf16.mxu0 0
      %514 = vmatpush1.bf16.msra.mxu0 0
      %515 = vmatprep.subr.bf16.mxu0 0
      %516 = vmatpush1.bf16.msra.mxu0 0
      %517 = vmatprep.subr.bf16.mxu0 0
      %518 = vmatpush1.bf16.msra.mxu0 0
      %519 = vmatprep.subr.bf16.mxu0 0
      %520 = vmatpush1.bf16.msra.mxu0 0
      %521 = vmatprep.subr.bf16.mxu0 0
      %522 = vmatpush1.bf16.msra.mxu0 0
      %523 = vmatprep.subr.bf16.mxu0 0
      %524 = vmatpush1.bf16.msra.mxu0 0
      %525 = vmatprep.subr.bf16.mxu0 0
      %526 = vmatpush1.bf16.msra.mxu0 0
      %527 = vmatprep.subr.bf16.mxu0 0
      %528 = vmatpush1.bf16.msra.mxu0 0
      %529 = vmatprep.subr.bf16.mxu0 0
      %530 = vmatpush1.bf16.msra.mxu0 0
      %531 = vmatprep.subr.bf16.mxu0 0
      %532 = vmatpush1.bf16.msra.mxu0 0
      %533 = vmatprep.subr.bf16.mxu0 0
      %534 = vmatpush1.bf16.msra.mxu0 0
      %535 = vmatprep.subr.bf16.mxu0 0
      %536 = vmatpush1.bf16.msra.mxu0 0
      %537 = vmatprep.mubr.bf16.mxu0 0
      %538 = vmatmul.mubr.bf16.gmra.mrb[0].mxu0 %v406
      %v539 = vpop.f32.mrb[0].mxu0
      %v540 = vadd.f32 %v244, %v539
      %v541 = vpop.f32.mrb[0].mxu0
      %v542 = vpop.f32.mrb[0].mxu0
      %v543 = vadd.f32 %v244, %v542
      %v544 = vpop.f32.mrb[0].mxu0
      %545 = vmatprep.mubr.bf16.mxu0 0
      %546 = vmatmul.mubr.bf16.gmra.mrb[0].mxu0 %v409
      %v547 = vpop.f32.mrb[0].mxu0
      %v548 = vadd.f32 %v244, %v547
      %v549 = vpop.f32.mrb[0].mxu0
      %v550 = vpop.f32.mrb[0].mxu0
      %v551 = vadd.f32 %v244, %v550
      %v552 = vpop.f32.mrb[0].mxu0
      %553 = vmatprep.mubr.bf16.mxu0 0
      %554 = vmatmul.mubr.bf16.gmra.mrb[0].mxu0 %v412
      %v555 = vpop.f32.mrb[0].mxu0
      %v556 = vadd.f32 %v244, %v555
      %v557 = vpop.f32.mrb[0].mxu0
      %v558 = vpop.f32.mrb[0].mxu0
      %v559 = vadd.f32 %v244, %v558
      %v560 = vpop.f32.mrb[0].mxu0
      %561 = vmatprep.mubr.bf16.mxu0 0
      %562 = vmatmul.mubr.bf16.gmra.mrb[0].mxu0 %v415
      %v563 = vpop.f32.mrb[0].mxu0
      %v564 = vadd.f32 %v244, %v563
      %v565 = vpop.f32.mrb[0].mxu0
      %v566 = vpop.f32.mrb[0].mxu0
      %v567 = vadd.f32 %v244, %v566
      %v568 = vpop.f32.mrb[0].mxu0
      %569 = vmatprep.mubr.bf16.mxu0 0
      %570 = vmatmul.mubr.bf16.gmra.mrb[0].mxu0 %v418
      %v571 = vpop.f32.mrb[0].mxu0
      %v572 = vadd.f32 %v244, %v571
      %v573 = vpop.f32.mrb[0].mxu0
      %v574 = vpop.f32.mrb[0].mxu0
      %v575 = vadd.f32 %v244, %v574
      %v576 = vpop.f32.mrb[0].mxu0
      %577 = vmatprep.mubr.bf16.mxu0 0
      %578 = vmatmul.mubr.bf16.gmra.mrb[0].mxu0 %v421
      %v579 = vpop.f32.mrb[0].mxu0
      %v580 = vadd.f32 %v244, %v579
      %v581 = vpop.f32.mrb[0].mxu0
      %v582 = vpop.f32.mrb[0].mxu0
      %v583 = vadd.f32 %v244, %v582
      %v584 = vpop.f32.mrb[0].mxu0
      %585 = vmatprep.mubr.bf16.mxu0 0
      %586 = vmatmul.mubr.bf16.gmra.mrb[0].mxu0 %v424
      %v587 = vpop.f32.mrb[0].mxu0
      %v588 = vadd.f32 %v244, %v587
      %v589 = vpop.f32.mrb[0].mxu0
      %v590 = vpop.f32.mrb[0].mxu0
      %v591 = vadd.f32 %v244, %v590
      %v592 = vpop.f32.mrb[0].mxu0
      %593 = vmatprep.mubr.bf16.mxu0 0
      %594 = vmatmul.mubr.bf16.gmra.mrb[0].mxu0 %v427
      %v595 = vpop.f32.mrb[0].mxu0
      %v596 = vadd.f32 %v244, %v595
      %v597 = vpop.f32.mrb[0].mxu0
      %v598 = vpop.f32.mrb[0].mxu0
      %v599 = vadd.f32 %v244, %v598
      %v600 = vpop.f32.mrb[0].mxu0
      %601 = vmatprep.mubr.bf16.mxu0 0
      %602 = vmatmul.mubr.bf16.gmra.mrb[0].mxu0 %v430
      %v603 = vpop.f32.mrb[0].mxu0
      %v604 = vadd.f32 %v244, %v603
      %v605 = vpop.f32.mrb[0].mxu0
      %v606 = vpop.f32.mrb[0].mxu0
      %v607 = vadd.f32 %v244, %v606
      %v608 = vpop.f32.mrb[0].mxu0
      %609 = vmatprep.mubr.bf16.mxu0 0
      %610 = vmatmul.mubr.bf16.gmra.mrb[0].mxu0 %v433
      %v611 = vpop.f32.mrb[0].mxu0
      %v612 = vadd.f32 %v244, %v611
      %v613 = vpop.f32.mrb[0].mxu0
      %v614 = vpop.f32.mrb[0].mxu0
      %v615 = vadd.f32 %v244, %v614
      %v616 = vpop.f32.mrb[0].mxu0
      %617 = vmatprep.mubr.bf16.mxu0 0
      %618 = vmatmul.mubr.bf16.gmra.mrb[0].mxu0 %v436
      %v619 = vpop.f32.mrb[0].mxu0
      %v620 = vadd.f32 %v244, %v619
      %v621 = vpop.f32.mrb[0].mxu0
      %v622 = vpop.f32.mrb[0].mxu0
      %v623 = vadd.f32 %v244, %v622
      %v624 = vpop.f32.mrb[0].mxu0
      %625 = vmatprep.mubr.bf16.mxu0 0
      %626 = vmatmul.mubr.bf16.gmra.mrb[0].mxu0 %v439
      %v627 = vpop.f32.mrb[0].mxu0
      %v628 = vadd.f32 %v244, %v627
      %v629 = vpop.f32.mrb[0].mxu0
      %v630 = vpop.f32.mrb[0].mxu0
      %v631 = vadd.f32 %v244, %v630
      %v632 = vpop.f32.mrb[0].mxu0
      %633 = vmatprep.mubr.bf16.mxu0 0
      %634 = vmatmul.mubr.bf16.gmra.mrb[0].mxu0 %v442
      %v635 = vpop.f32.mrb[0].mxu0
      %v636 = vadd.f32 %v244, %v635
      %v637 = vpop.f32.mrb[0].mxu0
      %v638 = vpop.f32.mrb[0].mxu0
      %v639 = vadd.f32 %v244, %v638
      %v640 = vpop.f32.mrb[0].mxu0
      %641 = vmatprep.mubr.bf16.mxu0 0
      %642 = vmatmul.mubr.bf16.gmra.mrb[0].mxu0 %v445
      %v643 = vpop.f32.mrb[0].mxu0
      %v644 = vadd.f32 %v244, %v643
      %v645 = vpop.f32.mrb[0].mxu0
      %v646 = vpop.f32.mrb[0].mxu0
      %v647 = vadd.f32 %v244, %v646
      %v648 = vpop.f32.mrb[0].mxu0
      %649 = vmatprep.mubr.bf16.mxu0 0
      %650 = vmatmul.mubr.bf16.gmra.mrb[0].mxu0 %v448
      %v651 = vpop.f32.mrb[0].mxu0
      %v652 = vadd.f32 %v244, %v651
      %v653 = vpop.f32.mrb[0].mxu0
      %v654 = vpop.f32.mrb[0].mxu0
      %v655 = vadd.f32 %v244, %v654
      %v656 = vpop.f32.mrb[0].mxu0
      %657 = vmatprep.mubr.bf16.mxu0 0
      %658 = vmatmul.mubr.bf16.gmra.mrb[0].mxu0 %v451
      %v659 = vpop.f32.mrb[0].mxu0
      %v660 = vadd.f32 %v244, %v659
      %v661 = vpop.f32.mrb[0].mxu0
      %v662 = vpop.f32.mrb[0].mxu0
      %v663 = vadd.f32 %v244, %v662
      %v664 = vpop.f32.mrb[0].mxu0
      %665 = vmatprep.mubr.bf16.mxu0 0
      %666 = vmatmul.mubr.bf16.gmra.mrb[0].mxu0 %v454
      %v667 = vpop.f32.mrb[0].mxu0
      %v668 = vadd.f32 %v244, %v667
      %v669 = vpop.f32.mrb[0].mxu0
      %v670 = vpop.f32.mrb[0].mxu0
      %v671 = vadd.f32 %v244, %v670
      %v672 = vpop.f32.mrb[0].mxu0
      %673 = vmatprep.mubr.bf16.mxu0 0
      %674 = vmatmul.mubr.bf16.gmra.mrb[0].mxu0 %v457
      %v675 = vpop.f32.mrb[0].mxu0
      %v676 = vadd.f32 %v244, %v675
      %v677 = vpop.f32.mrb[0].mxu0
      %v678 = vpop.f32.mrb[0].mxu0
      %v679 = vadd.f32 %v244, %v678
      %v680 = vpop.f32.mrb[0].mxu0
      %681 = vmatprep.mubr.bf16.mxu0 0
      %682 = vmatmul.mubr.bf16.gmra.mrb[0].mxu0 %v460
      %v683 = vpop.f32.mrb[0].mxu0
      %v684 = vadd.f32 %v244, %v683
      %v685 = vpop.f32.mrb[0].mxu0
      %v686 = vpop.f32.mrb[0].mxu0
      %v687 = vadd.f32 %v244, %v686
      %v688 = vpop.f32.mrb[0].mxu0
      %689 = vmatprep.mubr.bf16.mxu0 0
      %690 = vmatmul.mubr.bf16.gmra.mrb[0].mxu0 %v463
      %v691 = vpop.f32.mrb[0].mxu0
      %v692 = vadd.f32 %v244, %v691
      %v693 = vpop.f32.mrb[0].mxu0
      %v694 = vpop.f32.mrb[0].mxu0
      %v695 = vadd.f32 %v244, %v694
      %v696 = vpop.f32.mrb[0].mxu0
      %697 = vmatprep.mubr.bf16.mxu0 0
      %698 = vmatmul.mubr.bf16.gmra.mrb[0].mxu0 %v466
      %v699 = vpop.f32.mrb[0].mxu0
      %v700 = vadd.f32 %v244, %v699
      %v701 = vpop.f32.mrb[0].mxu0
      %v702 = vpop.f32.mrb[0].mxu0
      %v703 = vadd.f32 %v244, %v702
      %v704 = vpop.f32.mrb[0].mxu0
      %705 = vmatprep.mubr.bf16.mxu0 0
      %706 = vmatmul.mubr.bf16.gmra.mrb[0].mxu0 %v469
      %v707 = vpop.f32.mrb[0].mxu0
      %v708 = vadd.f32 %v244, %v707
      %v709 = vpop.f32.mrb[0].mxu0
      %v710 = vpop.f32.mrb[0].mxu0
      %v711 = vadd.f32 %v244, %v710
      %v712 = vpop.f32.mrb[0].mxu0
      %713 = vmatprep.mubr.bf16.mxu0 0
      %714 = vmatmul.mubr.bf16.gmra.mrb[0].mxu0 %v472
      %v715 = vpop.f32.mrb[0].mxu0
      %v716 = vadd.f32 %v244, %v715
      %v717 = vpop.f32.mrb[0].mxu0
      %v718 = vpop.f32.mrb[0].mxu0
      %v719 = vadd.f32 %v244, %v718
      %v720 = vpop.f32.mrb[0].mxu0
      %721 = vmatprep.mubr.bf16.mxu0 0
      %722 = vmatmul.mubr.bf16.gmra.mrb[0].mxu0 %v475
      %v723 = vpop.f32.mrb[0].mxu0
      %v724 = vadd.f32 %v244, %v723
      %v725 = vpop.f32.mrb[0].mxu0
      %v726 = vpop.f32.mrb[0].mxu0
      %v727 = vadd.f32 %v244, %v726
      %v728 = vpop.f32.mrb[0].mxu0
      %729 = vmatprep.mubr.bf16.mxu0 0
      %730 = vmatmul.mubr.bf16.gmra.mrb[0].mxu0 %v478
      %v731 = vpop.f32.mrb[0].mxu0
      %v732 = vadd.f32 %v244, %v731
      %v733 = vpop.f32.mrb[0].mxu0
      %v734 = vpop.f32.mrb[0].mxu0
      %v735 = vadd.f32 %v244, %v734
      %v736 = vpop.f32.mrb[0].mxu0
      %737 = vmatprep.mubr.bf16.mxu0 0
      %738 = vmatmul.mubr.bf16.gmra.mrb[0].mxu0 %v481
      %v739 = vpop.f32.mrb[0].mxu0
      %v740 = vadd.f32 %v244, %v739
      %v741 = vpop.f32.mrb[0].mxu0
      %v742 = vpop.f32.mrb[0].mxu0
      %v743 = vadd.f32 %v244, %v742
      %v744 = vpop.f32.mrb[0].mxu0
      %745 = vmatprep.mubr.bf16.mxu0 0
      %746 = vmatmul.mubr.bf16.gmra.mrb[0].mxu0 %v484
      %v747 = vpop.f32.mrb[0].mxu0
      %v748 = vadd.f32 %v244, %v747
      %v749 = vpop.f32.mrb[0].mxu0
      %v750 = vpop.f32.mrb[0].mxu0
      %v751 = vadd.f32 %v244, %v750
      %v752 = vpop.f32.mrb[0].mxu0
      %753 = vmatprep.mubr.bf16.mxu0 0
      %754 = vmatmul.mubr.bf16.gmra.mrb[0].mxu0 %v487
      %v755 = vpop.f32.mrb[0].mxu0
      %v756 = vadd.f32 %v244, %v755
      %v757 = vpop.f32.mrb[0].mxu0
      %v758 = vpop.f32.mrb[0].mxu0
      %v759 = vadd.f32 %v244, %v758
      %v760 = vpop.f32.mrb[0].mxu0
      %761 = vmatprep.mubr.bf16.mxu0 0
      %762 = vmatmul.mubr.bf16.gmra.mrb[0].mxu0 %v490
      %v763 = vpop.f32.mrb[0].mxu0
      %v764 = vadd.f32 %v244, %v763
      %v765 = vpop.f32.mrb[0].mxu0
      %v766 = vpop.f32.mrb[0].mxu0
      %v767 = vadd.f32 %v244, %v766
      %v768 = vpop.f32.mrb[0].mxu0
      %769 = vmatprep.mubr.bf16.mxu0 0
      %770 = vmatmul.mubr.bf16.gmra.mrb[0].mxu0 %v493
      %v771 = vpop.f32.mrb[0].mxu0
      %v772 = vadd.f32 %v244, %v771
      %v773 = vpop.f32.mrb[0].mxu0
      %v774 = vpop.f32.mrb[0].mxu0
      %v775 = vadd.f32 %v244, %v774
      %v776 = vpop.f32.mrb[0].mxu0
      %777 = vmatprep.mubr.bf16.mxu0 0
      %778 = vmatmul.mubr.bf16.gmra.mrb[0].mxu0 %v496
      %v779 = vpop.f32.mrb[0].mxu0
      %v780 = vadd.f32 %v244, %v779
      %v781 = vpop.f32.mrb[0].mxu0
      %v782 = vpop.f32.mrb[0].mxu0
      %v783 = vadd.f32 %v244, %v782
      %v784 = vpop.f32.mrb[0].mxu0
      %785 = vmatprep.mubr.bf16.mxu0 0
      %786 = vmatmul.mubr.bf16.gmra.mrb[0].mxu0 %v499
      %v787 = vpop.f32.mrb[0].mxu0
      %v788 = vadd.f32 %v244, %v787
      %v789 = vpop.f32.mrb[0].mxu0
      %v790 = vpop.f32.mrb[0].mxu0
      %v791 = vpop.f32.mrb[0].mxu0
      %792 = vdwg.mxu0
      %v793 = vpack.c.bf16 %v543, %v540
      %v794 = vpack.c.bf16 %v551, %v548
      %v795 = vpack.c.bf16 %v559, %v556
      %v796 = vpack.c.bf16 %v567, %v564
      %v797 = vpack.c.bf16 %v575, %v572
      %v798 = vpack.c.bf16 %v583, %v580
      %v799 = vpack.c.bf16 %v591, %v588
      %v800 = vpack.c.bf16 %v599, %v596
      %v801 = vpack.c.bf16 %v607, %v604
      %v802 = vpack.c.bf16 %v615, %v612
      %v803 = vpack.c.bf16 %v623, %v620
      %v804 = vpack.c.bf16 %v631, %v628
      %v805 = vpack.c.bf16 %v639, %v636
      %v806 = vpack.c.bf16 %v647, %v644
      %v807 = vpack.c.bf16 %v655, %v652
      %v808 = vpack.c.bf16 %v663, %v660
      %v809 = vpack.c.bf16 %v671, %v668
      %v810 = vpack.c.bf16 %v679, %v676
      %v811 = vpack.c.bf16 %v687, %v684
      %v812 = vpack.c.bf16 %v695, %v692
      %v813 = vpack.c.bf16 %v703, %v700
      %v814 = vpack.c.bf16 %v711, %v708
      %v815 = vpack.c.bf16 %v719, %v716
      %v816 = vpack.c.bf16 %v727, %v724
      %v817 = vpack.c.bf16 %v735, %v732
      %v818 = vpack.c.bf16 %v743, %v740
      %v819 = vpack.c.bf16 %v751, %v748
      %v820 = vpack.c.bf16 %v759, %v756
      %v821 = vpack.c.bf16 %v767, %v764
      %v822 = vpack.c.bf16 %v775, %v772
      %v823 = vpack.c.bf16 %v783, %v780
      %v824 = vpack.c.bf16 %v788, %v788
      %v857 = vunpack.c.l.b16 %v793
      %v858 = vunpack.c.h.b16 %v793
      %v859 = vunpack.c.l.b16 %v794
      %v860 = vunpack.c.h.b16 %v794
      %v861 = vunpack.c.l.b16 %v795
      %v862 = vunpack.c.h.b16 %v795
      %v863 = vunpack.c.l.b16 %v796
      %v864 = vunpack.c.h.b16 %v796
      %v865 = vunpack.c.l.b16 %v797
      %v866 = vunpack.c.h.b16 %v797
      %v867 = vunpack.c.l.b16 %v798
      %v868 = vunpack.c.h.b16 %v798
      %v869 = vunpack.c.l.b16 %v799
      %v870 = vunpack.c.h.b16 %v799
      %v871 = vunpack.c.l.b16 %v800
      %v872 = vunpack.c.h.b16 %v800
      %v873 = vunpack.c.l.b16 %v801
      %v874 = vunpack.c.h.b16 %v801
      %v875 = vunpack.c.l.b16 %v802
      %v876 = vunpack.c.h.b16 %v802
      %v877 = vunpack.c.l.b16 %v803
      %v878 = vunpack.c.h.b16 %v803
      %v879 = vunpack.c.l.b16 %v804
      %v880 = vunpack.c.h.b16 %v804
      %v881 = vunpack.c.l.b16 %v805
      %v882 = vunpack.c.h.b16 %v805
      %v883 = vunpack.c.l.b16 %v806
      %v884 = vunpack.c.h.b16 %v806
      %v885 = vunpack.c.l.b16 %v807
      %v886 = vunpack.c.h.b16 %v807
      %v887 = vunpack.c.l.b16 %v808
      %v888 = vunpack.c.h.b16 %v808
      %v889 = vunpack.c.l.b16 %v809
      %v890 = vunpack.c.h.b16 %v809
      %v891 = vunpack.c.l.b16 %v810
      %v892 = vunpack.c.h.b16 %v810
      %v893 = vunpack.c.l.b16 %v811
      %v894 = vunpack.c.h.b16 %v811
      %v895 = vunpack.c.l.b16 %v812
      %v896 = vunpack.c.h.b16 %v812
      %v897 = vunpack.c.l.b16 %v813
      %v898 = vunpack.c.h.b16 %v813
      %v899 = vunpack.c.l.b16 %v814
      %v900 = vunpack.c.h.b16 %v814
      %v901 = vunpack.c.l.b16 %v815
      %v902 = vunpack.c.h.b16 %v815
      %v903 = vunpack.c.l.b16 %v816
      %v904 = vunpack.c.h.b16 %v816
      %v905 = vunpack.c.l.b16 %v817
      %v906 = vunpack.c.h.b16 %v817
      %v907 = vunpack.c.l.b16 %v818
      %v908 = vunpack.c.h.b16 %v818
      %v909 = vunpack.c.l.b16 %v819
      %v910 = vunpack.c.h.b16 %v819
      %v911 = vunpack.c.l.b16 %v820
      %v912 = vunpack.c.h.b16 %v820
      %v913 = vunpack.c.l.b16 %v821
      %v914 = vunpack.c.h.b16 %v821
      %v915 = vunpack.c.l.b16 %v822
      %v916 = vunpack.c.h.b16 %v822
      %v917 = vunpack.c.l.b16 %v823
      %v918 = vunpack.c.h.b16 %v823
      %v919 = vunpack.c.l.b16 %v824
      %v920 = vpack.c.b16 %v857, %v857
      %v921 = vpack.c.b16 %v858, %v858
      %v922 = vpack.c.b16 %v859, %v859
      %v923 = vpack.c.b16 %v860, %v860
      %v924 = vpack.c.b16 %v861, %v861
      %v925 = vpack.c.b16 %v862, %v862
      %v926 = vpack.c.b16 %v863, %v863
      %v927 = vpack.c.b16 %v864, %v864
      %v928 = vpack.c.b16 %v865, %v865
      %v929 = vpack.c.b16 %v866, %v866
      %v930 = vpack.c.b16 %v867, %v867
      %v931 = vpack.c.b16 %v868, %v868
      %v932 = vpack.c.b16 %v869, %v869
      %v933 = vpack.c.b16 %v870, %v870
      %v934 = vpack.c.b16 %v871, %v871
      %v935 = vpack.c.b16 %v872, %v872
      %v936 = vpack.c.b16 %v873, %v873
      %v937 = vpack.c.b16 %v874, %v874
      %v938 = vpack.c.b16 %v875, %v875
      %v939 = vpack.c.b16 %v876, %v876
      %v940 = vpack.c.b16 %v877, %v877
      %v941 = vpack.c.b16 %v878, %v878
      %v942 = vpack.c.b16 %v879, %v879
      %v943 = vpack.c.b16 %v880, %v880
      %v944 = vpack.c.b16 %v881, %v881
      %v945 = vpack.c.b16 %v882, %v882
      %v946 = vpack.c.b16 %v883, %v883
      %v947 = vpack.c.b16 %v884, %v884
      %v948 = vpack.c.b16 %v885, %v885
      %v949 = vpack.c.b16 %v886, %v886
      %v950 = vpack.c.b16 %v887, %v887
      %v951 = vpack.c.b16 %v888, %v888
      %v952 = vpack.c.b16 %v889, %v889
      %v953 = vpack.c.b16 %v890, %v890
      %v954 = vpack.c.b16 %v891, %v891
      %v955 = vpack.c.b16 %v892, %v892
      %v956 = vpack.c.b16 %v893, %v893
      %v957 = vpack.c.b16 %v894, %v894
      %v958 = vpack.c.b16 %v895, %v895
      %v959 = vpack.c.b16 %v896, %v896
      %v960 = vpack.c.b16 %v897, %v897
      %v961 = vpack.c.b16 %v898, %v898
      %v962 = vpack.c.b16 %v899, %v899
      %v963 = vpack.c.b16 %v900, %v900
      %v964 = vpack.c.b16 %v901, %v901
      %v965 = vpack.c.b16 %v902, %v902
      %v966 = vpack.c.b16 %v903, %v903
      %v967 = vpack.c.b16 %v904, %v904
      %v968 = vpack.c.b16 %v905, %v905
      %v969 = vpack.c.b16 %v906, %v906
      %v970 = vpack.c.b16 %v907, %v907
      %v971 = vpack.c.b16 %v908, %v908
      %v972 = vpack.c.b16 %v909, %v909
      %v973 = vpack.c.b16 %v910, %v910
      %v974 = vpack.c.b16 %v911, %v911
      %v975 = vpack.c.b16 %v912, %v912
      %v976 = vpack.c.b16 %v913, %v913
      %v977 = vpack.c.b16 %v914, %v914
      %v978 = vpack.c.b16 %v915, %v915
      %v979 = vpack.c.b16 %v916, %v916
      %v980 = vpack.c.b16 %v917, %v917
      %v981 = vpack.c.b16 %v918, %v918
      %v982 = vpack.c.b16 %v919, %v919
      %vm1046 = vcmask 609280
      %1047 = vst.msk [vmem:[%s172] sm:$0xf] %vm1046, %v920
      %1048 = vst.msk [vmem:[%s172 + $0x4] sm:$0xf] %vm1046, %v921
      %1049 = vst.msk [vmem:[%s172 + $0x8] sm:$0xf] %vm1046, %v922
      %1050 = vst.msk [vmem:[%s172 + $0xc] sm:$0xf] %vm1046, %v923
      %1051 = vst.msk [vmem:[%s172 + $0x10] sm:$0xf] %vm1046, %v924
      %1052 = vst.msk [vmem:[%s172 + $0x14] sm:$0xf] %vm1046, %v925
      %1053 = vst.msk [vmem:[%s172 + $0x18] sm:$0xf] %vm1046, %v926
      %1054 = vst.msk [vmem:[%s172 + $0x1c] sm:$0xf] %vm1046, %v927
      %1055 = vst.msk [vmem:[%s172 + $0x20] sm:$0xf] %vm1046, %v928
      %1056 = vst.msk [vmem:[%s172 + $0x24] sm:$0xf] %vm1046, %v929
      %1057 = vst.msk [vmem:[%s172 + $0x28] sm:$0xf] %vm1046, %v930
      %1058 = vst.msk [vmem:[%s172 + $0x2c] sm:$0xf] %vm1046, %v931
      %1059 = vst.msk [vmem:[%s172 + $0x30] sm:$0xf] %vm1046, %v932
      %1060 = vst.msk [vmem:[%s172 + $0x34] sm:$0xf] %vm1046, %v933
      %1061 = vst.msk [vmem:[%s172 + $0x38] sm:$0xf] %vm1046, %v934
      %1062 = vst.msk [vmem:[%s172 + $0x3c] sm:$0xf] %vm1046, %v935
      %1063 = vst.msk [vmem:[%s172 + $0x40] sm:$0xf] %vm1046, %v936
      %1064 = vst.msk [vmem:[%s172 + $0x44] sm:$0xf] %vm1046, %v937
      %1065 = vst.msk [vmem:[%s172 + $0x48] sm:$0xf] %vm1046, %v938
      %1066 = vst.msk [vmem:[%s172 + $0x4c] sm:$0xf] %vm1046, %v939
      %1067 = vst.msk [vmem:[%s172 + $0x50] sm:$0xf] %vm1046, %v940
      %1068 = vst.msk [vmem:[%s172 + $0x54] sm:$0xf] %vm1046, %v941
      %1069 = vst.msk [vmem:[%s172 + $0x58] sm:$0xf] %vm1046, %v942
      %1070 = vst.msk [vmem:[%s172 + $0x5c] sm:$0xf] %vm1046, %v943
      %1071 = vst.msk [vmem:[%s172 + $0x60] sm:$0xf] %vm1046, %v944
      %1072 = vst.msk [vmem:[%s172 + $0x64] sm:$0xf] %vm1046, %v945
      %1073 = vst.msk [vmem:[%s172 + $0x68] sm:$0xf] %vm1046, %v946
      %1074 = vst.msk [vmem:[%s172 + $0x6c] sm:$0xf] %vm1046, %v947
      %1075 = vst.msk [vmem:[%s172 + $0x70] sm:$0xf] %vm1046, %v948
      %1076 = vst.msk [vmem:[%s172 + $0x74] sm:$0xf] %vm1046, %v949
      %1077 = vst.msk [vmem:[%s172 + $0x78] sm:$0xf] %vm1046, %v950
      %1078 = vst.msk [vmem:[%s172 + $0x7c] sm:$0xf] %vm1046, %v951
      %1079 = vst.msk [vmem:[%s172 + $0x80] sm:$0xf] %vm1046, %v952
      %1080 = vst.msk [vmem:[%s172 + $0x84] sm:$0xf] %vm1046, %v953
      %1081 = vst.msk [vmem:[%s172 + $0x88] sm:$0xf] %vm1046, %v954
      %1082 = vst.msk [vmem:[%s172 + $0x8c] sm:$0xf] %vm1046, %v955
      %1083 = vst.msk [vmem:[%s172 + $0x90] sm:$0xf] %vm1046, %v956
      %1084 = vst.msk [vmem:[%s172 + $0x94] sm:$0xf] %vm1046, %v957
      %1085 = vst.msk [vmem:[%s172 + $0x98] sm:$0xf] %vm1046, %v958
      %1086 = vst.msk [vmem:[%s172 + $0x9c] sm:$0xf] %vm1046, %v959
      %1087 = vst.msk [vmem:[%s172 + $0xa0] sm:$0xf] %vm1046, %v960
      %1088 = vst.msk [vmem:[%s172 + $0xa4] sm:$0xf] %vm1046, %v961
      %1089 = vst.msk [vmem:[%s172 + $0xa8] sm:$0xf] %vm1046, %v962
      %1090 = vst.msk [vmem:[%s172 + $0xac] sm:$0xf] %vm1046, %v963
      %1091 = vst.msk [vmem:[%s172 + $0xb0] sm:$0xf] %vm1046, %v964
      %1092 = vst.msk [vmem:[%s172 + $0xb4] sm:$0xf] %vm1046, %v965
      %1093 = vst.msk [vmem:[%s172 + $0xb8] sm:$0xf] %vm1046, %v966
      %1094 = vst.msk [vmem:[%s172 + $0xbc] sm:$0xf] %vm1046, %v967
      %1095 = vst.msk [vmem:[%s172 + $0xc0] sm:$0xf] %vm1046, %v968
      %1096 = vst.msk [vmem:[%s172 + $0xc4] sm:$0xf] %vm1046, %v969
      %1097 = vst.msk [vmem:[%s172 + $0xc8] sm:$0xf] %vm1046, %v970
      %1098 = vst.msk [vmem:[%s172 + $0xcc] sm:$0xf] %vm1046, %v971
      %1099 = vst.msk [vmem:[%s172 + $0xd0] sm:$0xf] %vm1046, %v972
      %1100 = vst.msk [vmem:[%s172 + $0xd4] sm:$0xf] %vm1046, %v973
      %1101 = vst.msk [vmem:[%s172 + $0xd8] sm:$0xf] %vm1046, %v974
      %1102 = vst.msk [vmem:[%s172 + $0xdc] sm:$0xf] %vm1046, %v975
      %1103 = vst.msk [vmem:[%s172 + $0xe0] sm:$0xf] %vm1046, %v976
      %1104 = vst.msk [vmem:[%s172 + $0xe4] sm:$0xf] %vm1046, %v977
      %1105 = vst.msk [vmem:[%s172 + $0xe8] sm:$0xf] %vm1046, %v978
      %1106 = vst.msk [vmem:[%s172 + $0xec] sm:$0xf] %vm1046, %v979
      %1107 = vst.msk [vmem:[%s172 + $0xf0] sm:$0xf] %vm1046, %v980
      %1108 = vst.msk [vmem:[%s172 + $0xf4] sm:$0xf] %vm1046, %v981
      %1109 = vst.msk [vmem:[%s172 + $0xf8] sm:$0xf] %vm1046, %v982
      %s1110 = smul.u32 63, %s14
      %p1111 = scmp.lt.s32.totalorder %s1110, 440
      %s1112 = scalar_select %p1111, %s1110, 440
      %s1113 = smul.addr %s1112, 4
      %s1114 = scalar_lea.vmem %s3, %s1113
      // Predicated region
      $region33: #{vae_forward.17} parent=31 // pred_check
        %p1115 = pneg %p100
      $region34: #{vae_forward.17} parent=31 // pred_check_branch
        %1117 = sbr.rel (%p1115) target = $region36
      $region35: #{vae_forward.17} parent=31 // pred_region
        %s1118 = smul.u32 63, %s14
      $region36: #{vae_forward.17} parent=31 // pred_fallthru
        _
    $region32: #{vae_forward.17} parent=5 // pred_fallthru
      _
    %p1119 = scmp.le.s32.totalorder 2, %s9
    // Predicated region
    $region37: #{vae_forward.17} parent=5 // pred_check
      %p1120 = pneg %p1119
    $region38: #{vae_forward.17} parent=5 // pred_check_branch
      %1122 = sbr.rel (%p1120) target = $region40
    $region39: #{vae_forward.17} parent=5 // pred_region
      %s1123 = ssub.s32 %s9, 2
      // Predicated region
      $region41: #{vae_forward.17} parent=39 // pred_check
        %p1124 = pneg %p106
      $region42: #{vae_forward.17} parent=39 // pred_check_branch
        %1126 = sbr.rel (%p1124) target = $region44
      $region43: #{vae_forward.17} parent=39 // pred_region
        %s1127 = smul.u32 63, %s15
        %p1128 = scmp.lt.s32.totalorder %s1127, 440
        %s1129 = scalar_select %p1128, %s1127, 440
        %s1130 = smul.addr %s1129, 4
        %s1131 = scalar_lea.vmem %s3, %s1130
      $region44: #{vae_forward.17} parent=39 // pred_fallthru
        _
    $region40: #{vae_forward.17} parent=5 // pred_fallthru
      _
  $region6: #{vae_forward.17} parent=0 // loop_footer
    %s13 = sadd.s32 1, %s9
  $region7: #{vae_forward.17} parent=0 // loop_footer_branch
    %8 = sbr.rel target = $region3
  $region8: #{vae_forward.17} parent=0 // loop_exit
    _

</llo_original>
